<compile_context>
chip_gen: v6e
topology: v6e:2x2x1
jax: 0.10.0
libtpu: 0.0.40
codegen_flags: <defaults>
</compile_context>

<pallas_src>
import functools

import numpy as np
import jax
import jax.numpy as jnp
from jax import lax
from jax.experimental import pallas as pl
from jax.experimental.pallas import tpu as pltpu


# ----------------------------- in-kernel helpers ----------------------------

def _ln(x, g, b, eps=1e-5):
    mu = jnp.mean(x, axis=-1, keepdims=True)
    var = jnp.mean((x - mu) ** 2, axis=-1, keepdims=True)
    return (x - mu) * lax.rsqrt(var + eps) * g + b


# ------------------------- kernel 1: stem + blocks ---------------------------

def _blocks_kernel(patches_ref, wconv_ref, add_ref, stemln_ref,
                   wqkv_ref, wo_ref, w1_ref, w2_ref, vec_ref, bqkv_ref, b1_ref,
                   feat_ref, attn_ref, x_sc,
                   *, num_heads, head_dim, s_real, n_layers):
    """One transformer block per grid step; the stem runs as the i==0 preamble.

    feat_ref : resident (n_layers, Sp, D) output; row i <- ln1_i(x), last row
               <- final residual x.
    attn_ref : resident (H, Sp, Sp) output accumulating the attention maps.
    x_sc     : carried residual stream.
    """
    i = pl.program_id(0)
    d = num_heads * head_dim

    @pl.when(i == 0)
    def _():
        # stem: patch-embed matmul + (class+pos) add + ln_pre, zero pad rows.
        xs = jnp.dot(patches_ref[...], wconv_ref[...],
                     preferred_element_type=jnp.float32) + add_ref[...]
        sl = stemln_ref[...]
        xs = _ln(xs, sl[0:1, :], sl[1:2, :])
        rows = lax.broadcasted_iota(jnp.int32, xs.shape, 0)
        x_sc[...] = jnp.where(rows < s_real, xs, 0.0)
        attn_ref[...] = jnp.zeros_like(attn_ref)

    vecs = vec_ref[...]                         # (6, D) packed per-layer vecs
    ln1_g, ln1_b = vecs[0:1, :], vecs[1:2, :]
    ln2_g, ln2_b = vecs[2:3, :], vecs[3:4, :]
    bo, b2 = vecs[4:5, :], vecs[5:6, :]

    x = x_sc[...]                               # (Sp, D)
    ln_x = _ln(x, ln1_g, ln1_b)
    feat_ref[pl.ds(i, 1), :, :] = ln_x[None]    # collected feature for layer i

    qkv = jnp.dot(ln_x, wqkv_ref[...],
                  preferred_element_type=jnp.float32) + bqkv_ref[...]
    # head split via lane slices + stack (kept for robust Mosaic lowering at
    # hd=8; the attention scale is already folded into the Q weight columns).
    q = jnp.stack([qkv[:, h * head_dim:(h + 1) * head_dim]
                   for h in range(num_heads)], axis=0)           # (H, Sp, hd)
    k = jnp.stack([qkv[:, d + h * head_dim:d + (h + 1) * head_dim]
                   for h in range(num_heads)], axis=0)
    v = jnp.stack([qkv[:, 2 * d + h * head_dim:2 * d + (h + 1) * head_dim]
                   for h in range(num_heads)], axis=0)

    logits = jnp.einsum('hsd,htd->hst', q, k,
                        preferred_element_type=jnp.float32)
    kcol = lax.broadcasted_iota(jnp.int32, logits.shape, 2)
    logits = jnp.where(kcol < s_real, logits, -1e30)             # mask pad keys
    logits = logits - jnp.max(logits, axis=-1, keepdims=True)
    p = jnp.exp(logits)
    p = p * pl.reciprocal(jnp.sum(p, axis=-1, keepdims=True), approx=True)

    qrow = lax.broadcasted_iota(jnp.int32, p.shape, 1)
    attn_ref[...] += jnp.where(qrow < s_real, p, 0.0)            # pad rows -> 0

    o = jnp.einsum('hst,htd->hsd', p, v,
                   preferred_element_type=jnp.float32)           # (H, Sp, hd)
    o = jnp.concatenate([o[h] for h in range(num_heads)], axis=1)
    x = x + jnp.dot(o, wo_ref[...],
                    preferred_element_type=jnp.float32) + bo

    ln2x = _ln(x, ln2_g, ln2_b)
    h1 = jnp.dot(ln2x, w1_ref[...],
                 preferred_element_type=jnp.float32) + b1_ref[...]
    h1 = h1 * jax.nn.sigmoid(1.702 * h1)                         # QuickGELU
    x = x + jnp.dot(h1, w2_ref[...],
                    preferred_element_type=jnp.float32) + b2

    x_sc[...] = x

    @pl.when(i == pl.num_programs(0) - 1)
    def _():
        # torch: img_features[-1] = x (the residual stream, not ln'd).
        feat_ref[pl.ds(n_layers - 1, 1), :, :] = x[None]


# ------------- kernel 2: fused-attn + ln_post/proj + classify + seg ----------

def _tail_kernel(feat_ref, attn_ref, vec_ref, wv_ref, wo_ref, proj_ref,
                 tnt_ref, imgf_ref, seg_ref, amap_ref,
                 *, num_heads, head_dim, s_real, n_layers, n_fg, logit_scale):
    sp = feat_ref.shape[1]
    d = num_heads * head_dim
    vecs = vec_ref[...]                         # (6, D)
    ln1_g, ln1_b = vecs[0:1, :], vecs[1:2, :]
    bv, bo = vecs[2:3, :], vecs[3:4, :]
    lnp_g, lnp_b = vecs[4:5, :], vecs[5:6, :]

    # ---- Sinkhorn-style mask evolution: independent of the features, so it
    # runs first as a short serial loop of pure VPU math (torch's in-place /=
    # carries only the two divisions across kth iterations; exact division).
    m = attn_ref[...]                           # (H, Sp, Sp)
    a_list = []
    for _ in range(n_layers):
        csum = jnp.sum(m, axis=-2, keepdims=True)
        m = m / jnp.where(csum == 0.0, 1.0, csum)
        rsum = jnp.sum(m, axis=-1, keepdims=True)
        m = m / jnp.where(rsum == 0.0, 1.0, rsum)
        mt = jnp.stack([m[h].T for h in range(num_heads)], axis=0)
        a = (m + mt) * 0.5
        a = a - jnp.sum(a, axis=-2, keepdims=True) * (1.0 / s_real)
        a = jnp.maximum(a, 0.0)
        ars = jnp.sum(a, axis=-1, keepdims=True)
        a = a * pl.reciprocal(jnp.where(ars == 0.0, 1.0, ars), approx=True)
        a_list.append(a)

    # ---- hoisted LN + V projection over all collected features:
    # one (L*Sp, D) @ (D, D) matmul instead of L tiny ones.
    lf = jnp.concatenate([feat_ref[l] for l in range(n_layers)], axis=0)
    lf = _ln(lf, ln1_g, ln1_b)
    vfull = jnp.dot(lf, wv_ref[...],
                    preferred_element_type=jnp.float32) + bv     # (L*Sp, D)
    vh = jnp.stack([vfull[:, h * head_dim:(h + 1) * head_dim]
                    for h in range(num_heads)], axis=0)          # (H, L*Sp, hd)

    # ---- per-kth masked attention (tiny), then one batched out-projection.
    o_rows = []
    for l in range(n_layers):
        vl = vh[:, l * sp:(l + 1) * sp, :]                       # (H, Sp, hd)
        ol = jnp.einsum('hst,htd->hsd', a_list[l], vl,
                        preferred_element_type=jnp.float32)
        o_rows.append(jnp.concatenate([ol[h] for h in range(num_heads)],
                                      axis=1))                   # (Sp, D)
    o2 = jnp.concatenate(o_rows, axis=0)                         # (L*Sp, D)
    out = jnp.dot(o2, wo_ref[...],
                  preferred_element_type=jnp.float32) + bo

    # ---- ln_post + proj + cosine-sim classify (text already normalised,
    # transposed in the wrapper).
    xp = jnp.dot(_ln(out, lnp_g, lnp_b), proj_ref[...],
                 preferred_element_type=jnp.float32)             # (L*Sp, E)
    imgf_ref[...] = xp
    fn = xp * lax.rsqrt(jnp.maximum(jnp.sum(xp * xp, axis=-1, keepdims=True),
                                    1e-12))
    logits = logit_scale * jnp.dot(fn, tnt_ref[...],
                                   preferred_element_type=jnp.float32)
    logits = logits - jnp.max(logits, axis=-1, keepdims=True)
    ex = jnp.exp(logits)
    soft = ex * pl.reciprocal(jnp.sum(ex, axis=-1, keepdims=True), approx=True)

    # ---- seg head: threshold last-layer seg, apply mean attn map, add the
    # mean of the earlier layers.
    seg_rows = [soft[l * sp + 1:l * sp + s_real, :n_fg]
                for l in range(n_layers)]                        # (S-1, n_fg)
    seg_last = seg_rows[-1]
    thr = jnp.max(seg_last, axis=0, keepdims=True) * 0.2
    seg_last = jnp.where(seg_last < thr, 0.0, seg_last)
    seg_prev = seg_rows[0]
    for l in range(1, n_layers - 1):
        seg_prev = seg_prev + seg_rows[l]
    seg_prev = seg_prev * (1.0 / (n_layers - 1))

    am = jnp.mean(a_list[-1], axis=0)                            # (Sp, Sp)
    amap = am[1:s_real, 1:s_real]
    amap_ref[...] = amap
    seg_ref[...] = (jnp.dot(amap, seg_last,
                            preferred_element_type=jnp.float32) + seg_prev)


# ------------------------------- call helpers --------------------------------

def _vmem_spec():
    return pl.BlockSpec(memory_space=pltpu.MemorySpace.VMEM)


def _run_blocks(stem, params, *, num_heads, head_dim, s_real, n_layers):
    sp, d = stem['add'].shape
    cpp = stem['patches'].shape[1]
    h = num_heads
    nl = n_layers - 1
    kern = functools.partial(_blocks_kernel, num_heads=num_heads,
                             head_dim=head_dim, s_real=s_real,
                             n_layers=n_layers)
    c2 = lambda i: (0, 0)
    c3 = lambda i: (0, 0, 0)
    l3 = lambda i: (i, 0, 0)
    in_specs = [
        pl.BlockSpec((sp, cpp), c2),                 # patches (stem)
        pl.BlockSpec((cpp, d), c2),                  # conv weight (stem)
        pl.BlockSpec((sp, d), c2),                   # class+pos add (stem)
        pl.BlockSpec((2, d), c2),                    # ln_pre g/b (stem)
        pl.BlockSpec((None, d, 3 * d), l3),          # wqkv
        pl.BlockSpec((None, d, d), l3),              # wo
        pl.BlockSpec((None, d, 4 * d), l3),          # w1
        pl.BlockSpec((None, 4 * d, d), l3),          # w2
        pl.BlockSpec((None, 6, d), l3),              # packed per-layer vectors
        pl.BlockSpec((None, 1, 3 * d), l3),          # bqkv
        pl.BlockSpec((None, 1, 4 * d), l3),          # b1
    ]
    out_specs = (
        pl.BlockSpec((n_layers, sp, d), c3),         # collected features
        pl.BlockSpec((h, sp, sp), c3),               # summed attention maps
    )
    out_shape = (
        jax.ShapeDtypeStruct((n_layers, sp, d), jnp.float32),
        jax.ShapeDtypeStruct((h, sp, sp), jnp.float32),
    )
    return pl.pallas_call(
        kern, grid=(nl,),
        in_specs=in_specs, out_specs=out_specs, out_shape=out_shape,
        scratch_shapes=[pltpu.VMEM((sp, d), jnp.float32)],
        compiler_params=pltpu.CompilerParams(
            dimension_semantics=("arbitrary",)),
    )(stem['patches'], stem['wconv'], stem['add'], stem['stem_ln'],
      params['wqkv'], params['wo'], params['w1'], params['w2'],
      params['vecs'], params['bqkv'], params['b1'])


def _run_tail(feats, attn_maps, lastp, tnt, *, num_heads, head_dim, s_real,
              n_layers, n_fg, logit_scale):
    n_l, sp, d = feats.shape
    e = lastp['proj'].shape[1]
    kern = functools.partial(_tail_kernel, num_heads=num_heads,
                             head_dim=head_dim, s_real=s_real,
                             n_layers=n_layers, n_fg=n_fg,
                             logit_scale=logit_scale)
    out_shape = (
        jax.ShapeDtypeStruct((n_l * sp, e), jnp.float32),           # img feats
        jax.ShapeDtypeStruct((s_real - 1, n_fg), jnp.float32),      # seg
        jax.ShapeDtypeStruct((s_real - 1, s_real - 1), jnp.float32),  # attn map
    )
    return pl.pallas_call(
        kern,
        in_specs=[_vmem_spec() for _ in range(7)],
        out_specs=tuple(_vmem_spec() for _ in range(3)),
        out_shape=out_shape,
    )(feats, attn_maps, lastp['vecs'], lastp['wv'], lastp['wo'],
      lastp['proj'], tnt)


# --------------------------------- the model ---------------------------------

class CLIPerBLIPPallas:
    """JAX/Pallas re-implementation of CLIPer_BLIP.forward
    (attn_type='fused-attn', fuse_feature=True).  Weights are synthesized
    deterministically."""

    def __init__(self, key, *, patch_size=4, size=16, width=32, layers=3,
                 heads=4, out_dim=16, in_chans=3, logit_scale=100.0):
        self.patch_size = patch_size
        self.size = size
        self.width = width
        self.layers = layers
        self.heads = heads
        self.out_dim = out_dim
        self.logit_scale = float(logit_scale)
        self.fuse_feature = True
        self.attn_type = 'fused-attn'
        grid = size // patch_size

        def nrm(k, shape, s=0.02):
            return (s * jax.random.normal(k, shape)).astype(jnp.float32)

        keys = jax.random.split(key, 8 + layers)
        self.conv_w = nrm(keys[0], (width, in_chans, patch_size, patch_size))
        self.class_emb = nrm(keys[1], (width,))
        self.pos_emb = nrm(keys[2], (1 + grid * grid, width))
        self.ln_pre_g = 1.0 + nrm(keys[3], (width,), 0.1)
        self.ln_pre_b = nrm(keys[4], (width,), 0.1)
        self.ln_post_g = 1.0 + nrm(keys[5], (width,), 0.1)
        self.ln_post_b = nrm(keys[6], (width,), 0.1)
        self.proj = nrm(keys[7], (width, out_dim))

        blocks = []
        for i in range(layers):
            bk = jax.random.split(keys[8 + i], 12)
            blocks.append(dict(
                ln1_g=1.0 + nrm(bk[0], (width,), 0.1),
                ln1_b=nrm(bk[1], (width,), 0.1),
                wqkv=nrm(bk[2], (width, 3 * width)),   # = in_proj_weight.T
                bqkv=nrm(bk[3], (3 * width,)),
                wo=nrm(bk[4], (width, width)),         # = out_proj.weight.T
                bo=nrm(bk[5], (width,)),
                ln2_g=1.0 + nrm(bk[6], (width,), 0.1),
                ln2_b=nrm(bk[7], (width,), 0.1),
                w1=nrm(bk[8], (width, 4 * width)),
                b1=nrm(bk[9], (4 * width,)),
                w2=nrm(bk[10], (4 * width, width)),
                b2=nrm(bk[11], (width,)),
            ))

        fb = blocks[:-1]
        scale = (width // heads) ** -0.5

        def stk(name):
            return jnp.stack([b[name] for b in fb], axis=0)

        # stacked per-layer weights; attention scale folded into Q columns.
        # NOTE(v7x scaling): at real CLIP sizes keep these in HBM
        # (memory_space=pl.ANY) and stream per layer with vmem_limit_bytes
        # set; fine resident at toy size.
        wqkv = stk('wqkv')
        bqkv = stk('bqkv')
        wqkv = jnp.concatenate([wqkv[:, :, :width] * scale,
                                wqkv[:, :, width:]], axis=-1)
        bqkv = jnp.concatenate([bqkv[:, :width] * scale,
                                bqkv[:, width:]], axis=-1)
        self.stacked = dict(
            wqkv=wqkv,
            wo=stk('wo'),
            w1=stk('w1'),
            w2=stk('w2'),
            vecs=jnp.stack([jnp.stack([b['ln1_g'], b['ln1_b'], b['ln2_g'],
                                       b['ln2_b'], b['bo'], b['b2']], axis=0)
                            for b in fb], axis=0),              # (nl, 6, D)
            bqkv=bqkv[:, None, :],                               # (nl, 1, 3D)
            b1=stk('b1')[:, None, :],                            # (nl, 1, 4D)
        )

        lb = blocks[-1]
        self.last = dict(
            vecs=jnp.stack([lb['ln1_g'], lb['ln1_b'],
                            lb['bqkv'][2 * width:3 * width], lb['bo'],
                            self.ln_post_g, self.ln_post_b], axis=0),  # (6, D)
            wv=lb['wqkv'][:, 2 * width:3 * width],    # only the V projection
            wo=lb['wo'],
            proj=self.proj,
        )
        self.img_h, self.img_w = None, None
        self._jit_forward = jax.jit(self._forward)

    # --- upsample_pos_emb (glue) ---
    def upsample_pos_emb(self, emb, new_size):
        first, rest = emb[:1], emb[1:]
        n, d = rest.shape
        side = int(np.sqrt(n))
        g = rest.reshape(side, side, d)
        # TODO(synk): torch F.interpolate(bilinear) and jax.image.resize
        # sample slightly differently when sizes differ; identity at equal
        # sizes as used here.  The torch .half() round-trip is omitted.
        g = jax.image.resize(g, (new_size[0], new_size[1], d),
                             method='bilinear')
        return jnp.concatenate([first, g.reshape(-1, d)], axis=0)

    # --- full forward (jitted) ---
    def _forward(self, img, fg_text_features, bg_text_features):
        ps = self.patch_size
        b, c, hh, ww = img.shape
        gh, gw = hh // ps, ww // ps
        s_real = 1 + gh * gw
        sp = -(-s_real // 8) * 8                  # pad S to a multiple of 8
        d = self.width
        h = self.heads
        hd = d // h
        n_layers = self.layers
        e = self.out_dim

        # ---- stem glue: patch extraction + padded additive (class+pos) ----
        pos = self.upsample_pos_emb(self.pos_emb, (gh, gw))       # (S, D)
        p = img.reshape(b, c, gh, ps, gw, ps)
        p = jnp.transpose(p, (0, 2, 4, 1, 3, 5)).reshape(gh * gw, c * ps * ps)
        patches_pad = jnp.zeros((sp, c * ps * ps),
                                jnp.float32).at[1:s_real].set(p)
        add = jnp.concatenate([(self.class_emb + pos[0])[None, :], pos[1:]], 0)
        add_pad = jnp.zeros((sp, d), jnp.float32).at[:s_real].set(add)
        wconv = self.conv_w.reshape(d, -1).T                      # (C*ps*ps, D)
        stem_ln = jnp.stack([self.ln_pre_g, self.ln_pre_b], axis=0)

        # ---- kernel 1: stem + first (layers-1) transformer blocks ----
        feats, attn_maps = _run_blocks(
            dict(patches=patches_pad, wconv=wconv, add=add_pad,
                 stem_ln=stem_ln),
            self.stacked, num_heads=h, head_dim=hd, s_real=s_real,
            n_layers=n_layers)

        # ---- text features: normalised + transposed outside the kernel ----
        text = jnp.concatenate(
            [fg_text_features, bg_text_features,
             fg_text_features.mean(0, keepdims=True)], axis=0)
        tnt = (text * lax.rsqrt(jnp.sum(text * text, axis=-1,
                                        keepdims=True))).T        # (E, n_cls)
        n_fg = fg_text_features.shape[0]

        # ---- kernel 2: fused-attn + head + seg ----
        imgf_flat, seg_out, attn_map = _run_tail(
            feats, attn_maps, self.last, tnt,
            num_heads=h, head_dim=hd, s_real=s_real, n_layers=n_layers,
            n_fg=n_fg, logit_scale=self.logit_scale)

        img_feature = imgf_flat.reshape(n_layers, sp, e)[:, :s_real, :]

        # TODO(synk): .classifier() (BLIP captioning + CLIP text encoder) and
        # PIL-based _resize preprocessing have no Pallas equivalent; text
        # features are passed in directly.
        return {'seg': seg_out,
                'img_part_features': img_feature,
                'mid_feature': None,
                'attn_map': attn_map}

    # --- CLIPer_BLIP.forward ---
    def __call__(self, img, fg_text_features, bg_text_features):
        ps = self.patch_size
        self.img_h, self.img_w = img.shape[2] // ps, img.shape[3] // ps
        return self._jit_forward(img, fg_text_features, bg_text_features)


if __name__ == "__main__":
    key = jax.random.PRNGKey(0)
    k_model, k_img, k_fg, k_bg = jax.random.split(key, 4)
    model = CLIPerBLIPPallas(k_model, patch_size=4, size=16, width=32,
                             layers=3, heads=4, out_dim=16)
    img = jax.random.normal(k_img, (1, 3, 16, 16), jnp.float32)
    fg_text = jax.random.normal(k_fg, (3, 16), jnp.float32)
    bg_text = jax.random.normal(k_bg, (2, 16), jnp.float32)
    out = model(img, fg_text, bg_text)
    jax.block_until_ready(out['seg'])
    jax.block_until_ready(out['img_part_features'])
    jax.block_until_ready(out['attn_map'])
    assert out['seg'].shape == (16, 3)
    assert out['img_part_features'].shape == (3, 17, 16)
    assert out['attn_map'].shape == (16, 16)
    print("KERNEL_OK")
</pallas_src>

<mosaic_0001>
module attributes {stable_mosaic.version = 11 : i64} {
  func.func @_blocks_kernel(%arg0: i32, %arg1: memref<24x48xf32, #tpu.memory_space<vmem>>, %arg2: memref<48x32xf32, #tpu.memory_space<vmem>>, %arg3: memref<24x32xf32, #tpu.memory_space<vmem>>, %arg4: memref<2x32xf32, #tpu.memory_space<vmem>>, %arg5: memref<1x32x96xf32, #tpu.memory_space<vmem>>, %arg6: memref<1x32x32xf32, #tpu.memory_space<vmem>>, %arg7: memref<1x32x128xf32, #tpu.memory_space<vmem>>, %arg8: memref<1x128x32xf32, #tpu.memory_space<vmem>>, %arg9: memref<1x6x32xf32, #tpu.memory_space<vmem>>, %arg10: memref<1x1x96xf32, #tpu.memory_space<vmem>>, %arg11: memref<1x1x128xf32, #tpu.memory_space<vmem>>, %arg12: memref<3x24x32xf32, #tpu.memory_space<vmem>>, %arg13: memref<4x24x24xf32, #tpu.memory_space<vmem>>, %arg14: memref<24x32xf32, #tpu.memory_space<vmem>>) attributes {dimension_semantics = [#tpu.dimension_semantics<arbitrary>], iteration_bounds = array<i64: 2>, scalar_prefetch = 0 : i64, scratch_operands = 1 : i64, tpu.core_type = #tpu.core_type<tc>, window_params = [{pipeline_mode = #tpu.pipeline_mode<synchronous>, transform_indices = @transform_0, window_bounds = array<i64: 24, 48>}, {pipeline_mode = #tpu.pipeline_mode<synchronous>, transform_indices = @transform_1, window_bounds = array<i64: 48, 32>}, {pipeline_mode = #tpu.pipeline_mode<synchronous>, transform_indices = @transform_2, window_bounds = array<i64: 24, 32>}, {pipeline_mode = #tpu.pipeline_mode<synchronous>, transform_indices = @transform_3, window_bounds = array<i64: 2, 32>}, {transform_indices = @transform_4, window_bounds = array<i64: 1, 32, 96>}, {transform_indices = @transform_5, window_bounds = array<i64: 1, 32, 32>}, {transform_indices = @transform_6, window_bounds = array<i64: 1, 32, 128>}, {transform_indices = @transform_7, window_bounds = array<i64: 1, 128, 32>}, {transform_indices = @transform_8, window_bounds = array<i64: 1, 6, 32>}, {transform_indices = @transform_9, window_bounds = array<i64: 1, 1, 96>}, {transform_indices = @transform_10, window_bounds = array<i64: 1, 1, 128>}, {pipeline_mode = #tpu.pipeline_mode<synchronous>, transform_indices = @transform_11, window_bounds = array<i64: 3, 24, 32>}, {pipeline_mode = #tpu.pipeline_mode<synchronous>, transform_indices = @transform_12, window_bounds = array<i64: 4, 24, 24>}]} {
    %c0_i32 = arith.constant 0 : i32
    %0 = arith.cmpi eq, %arg0, %c0_i32 : i32
    %1 = arith.extui %0 : i1 to i32
    %c0_i32_0 = arith.constant 0 : i32
    %2 = arith.cmpi ne, %1, %c0_i32_0 : i32
    scf.if %2 {
      %c0_56 = arith.constant 0 : index
      %c0_57 = arith.constant 0 : index
      %158 = vector.load %arg1[%c0_56, %c0_57] : memref<24x48xf32, #tpu.memory_space<vmem>>, vector<24x48xf32>
      %c0_58 = arith.constant 0 : index
      %c0_59 = arith.constant 0 : index
      %159 = vector.load %arg2[%c0_58, %c0_59] : memref<48x32xf32, #tpu.memory_space<vmem>>, vector<48x32xf32>
      %cst_60 = arith.constant dense<0.000000e+00> : vector<24x32xf32>
      %160 = tpu.matmul %158, %159, %cst_60 {dimension_numbers = #tpu.dot_dimension_numbers<[1], [0], [0], [1], [0, 0, 1, 1], [], []>} : vector<24x48xf32>, vector<48x32xf32>, vector<24x32xf32> -> vector<24x32xf32>
      %c0_61 = arith.constant 0 : index
      %c0_62 = arith.constant 0 : index
      %161 = vector.load %arg3[%c0_61, %c0_62] : memref<24x32xf32, #tpu.memory_space<vmem>>, vector<24x32xf32>
      %162 = arith.addf %160, %161 : vector<24x32xf32>
      %c0_63 = arith.constant 0 : index
      %c0_64 = arith.constant 0 : index
      %163 = vector.load %arg4[%c0_63, %c0_64] : memref<2x32xf32, #tpu.memory_space<vmem>>, vector<2x32xf32>
      %164 = vector.extract_strided_slice %163 {offsets = [0, 0], sizes = [1, 32], strides = [1, 1]} : vector<2x32xf32> to vector<1x32xf32>
      %165 = vector.extract_strided_slice %163 {offsets = [1, 0], sizes = [1, 32], strides = [1, 1]} : vector<2x32xf32> to vector<1x32xf32>
      %cst_65 = arith.constant dense<0.000000e+00> : vector<24xf32>
      %166 = vector.multi_reduction <add>, %162, %cst_65 [1] : vector<24x32xf32> to vector<24xf32>
      %167 = vector.shape_cast %166 : vector<24xf32> to vector<24x1xf32>
      %cst_66 = arith.constant 3.200000e+01 : f32
      %168 = vector.broadcast %cst_66 : f32 to vector<24x1xf32>
      %169 = arith.divf %167, %168 : vector<24x1xf32>
      %170 = vector.broadcast %169 : vector<24x1xf32> to vector<24x32xf32>
      %171 = arith.subf %162, %170 : vector<24x32xf32>
      %172 = arith.mulf %171, %171 : vector<24x32xf32>
      %cst_67 = arith.constant dense<0.000000e+00> : vector<24xf32>
      %173 = vector.multi_reduction <add>, %172, %cst_67 [1] : vector<24x32xf32> to vector<24xf32>
      %174 = vector.shape_cast %173 : vector<24xf32> to vector<24x1xf32>
      %cst_68 = arith.constant 3.200000e+01 : f32
      %175 = vector.broadcast %cst_68 : f32 to vector<24x1xf32>
      %176 = arith.divf %174, %175 : vector<24x1xf32>
      %177 = vector.broadcast %169 : vector<24x1xf32> to vector<24x32xf32>
      %178 = arith.subf %162, %177 : vector<24x32xf32>
      %cst_69 = arith.constant 9.99999974E-6 : f32
      %179 = vector.broadcast %cst_69 : f32 to vector<24x1xf32>
      %180 = arith.addf %176, %179 : vector<24x1xf32>
      %181 = math.rsqrt %180 : vector<24x1xf32>
      %182 = vector.broadcast %181 : vector<24x1xf32> to vector<24x32xf32>
      %183 = arith.mulf %178, %182 : vector<24x32xf32>
      %184 = vector.broadcast %164 : vector<1x32xf32> to vector<24x32xf32>
      %185 = arith.mulf %183, %184 : vector<24x32xf32>
      %186 = vector.broadcast %165 : vector<1x32xf32> to vector<24x32xf32>
      %187 = arith.addf %185, %186 : vector<24x32xf32>
      %188 = tpu.iota {dimensions = array<i32: 0>} : vector<24x32xi32>
      %c17_i32_70 = arith.constant 17 : i32
      %189 = vector.broadcast %c17_i32_70 : i32 to vector<24x32xi32>
      %190 = arith.cmpi slt, %188, %189 : vector<24x32xi32>
      %cst_71 = arith.constant 0.000000e+00 : f32
      %191 = vector.broadcast %cst_71 : f32 to vector<24x32xf32>
      %192 = arith.select %190, %187, %191 : vector<24x32xi1>, vector<24x32xf32>
      %c0_72 = arith.constant 0 : index
      %c0_73 = arith.constant 0 : index
      %193 = vector.load %arg14[%c0_72, %c0_73] : memref<24x32xf32, #tpu.memory_space<vmem>>, vector<24x32xf32>
      tpu.vector_store %arg14[%c0_72, %c0_73], %192 {strides = array<i32>} : memref<24x32xf32, #tpu.memory_space<vmem>>, vector<24x32xf32>,
      %cst_74 = arith.constant 0.000000e+00 : f32
      %194 = vector.broadcast %cst_74 : f32 to vector<4x24x24xf32>
      %c0_75 = arith.constant 0 : index
      %c0_76 = arith.constant 0 : index
      %c0_77 = arith.constant 0 : index
      %195 = vector.load %arg13[%c0_75, %c0_76, %c0_77] : memref<4x24x24xf32, #tpu.memory_space<vmem>>, vector<4x24x24xf32>
      tpu.vector_store %arg13[%c0_75, %c0_76, %c0_77], %194 {strides = array<i32>} : memref<4x24x24xf32, #tpu.memory_space<vmem>>, vector<4x24x24xf32>,
    } else {
    }
    %c0 = arith.constant 0 : index
    %c0_1 = arith.constant 0 : index
    %c0_2 = arith.constant 0 : index
    %3 = vector.load %arg9[%c0, %c0_1, %c0_2] : memref<1x6x32xf32, #tpu.memory_space<vmem>>, vector<1x6x32xf32>
    %4 = vector.shape_cast %3 : vector<1x6x32xf32> to vector<6x32xf32>
    %5 = vector.extract_strided_slice %4 {offsets = [0, 0], sizes = [1, 32], strides = [1, 1]} : vector<6x32xf32> to vector<1x32xf32>
    %6 = vector.extract_strided_slice %4 {offsets = [1, 0], sizes = [1, 32], strides = [1, 1]} : vector<6x32xf32> to vector<1x32xf32>
    %7 = vector.extract_strided_slice %4 {offsets = [2, 0], sizes = [1, 32], strides = [1, 1]} : vector<6x32xf32> to vector<1x32xf32>
    %8 = vector.extract_strided_slice %4 {offsets = [3, 0], sizes = [1, 32], strides = [1, 1]} : vector<6x32xf32> to vector<1x32xf32>
    %9 = vector.extract_strided_slice %4 {offsets = [4, 0], sizes = [1, 32], strides = [1, 1]} : vector<6x32xf32> to vector<1x32xf32>
    %10 = vector.extract_strided_slice %4 {offsets = [5, 0], sizes = [1, 32], strides = [1, 1]} : vector<6x32xf32> to vector<1x32xf32>
    %c0_3 = arith.constant 0 : index
    %c0_4 = arith.constant 0 : index
    %11 = vector.load %arg14[%c0_3, %c0_4] : memref<24x32xf32, #tpu.memory_space<vmem>>, vector<24x32xf32>
    %cst = arith.constant dense<0.000000e+00> : vector<24xf32>
    %12 = vector.multi_reduction <add>, %11, %cst [1] : vector<24x32xf32> to vector<24xf32>
    %13 = vector.shape_cast %12 : vector<24xf32> to vector<24x1xf32>
    %cst_5 = arith.constant 3.200000e+01 : f32
    %14 = vector.broadcast %cst_5 : f32 to vector<24x1xf32>
    %15 = arith.divf %13, %14 : vector<24x1xf32>
    %16 = vector.broadcast %15 : vector<24x1xf32> to vector<24x32xf32>
    %17 = arith.subf %11, %16 : vector<24x32xf32>
    %18 = arith.mulf %17, %17 : vector<24x32xf32>
    %cst_6 = arith.constant dense<0.000000e+00> : vector<24xf32>
    %19 = vector.multi_reduction <add>, %18, %cst_6 [1] : vector<24x32xf32> to vector<24xf32>
    %20 = vector.shape_cast %19 : vector<24xf32> to vector<24x1xf32>
    %cst_7 = arith.constant 3.200000e+01 : f32
    %21 = vector.broadcast %cst_7 : f32 to vector<24x1xf32>
    %22 = arith.divf %20, %21 : vector<24x1xf32>
    %23 = vector.broadcast %15 : vector<24x1xf32> to vector<24x32xf32>
    %24 = arith.subf %11, %23 : vector<24x32xf32>
    %cst_8 = arith.constant 9.99999974E-6 : f32
    %25 = vector.broadcast %cst_8 : f32 to vector<24x1xf32>
    %26 = arith.addf %22, %25 : vector<24x1xf32>
    %27 = math.rsqrt %26 : vector<24x1xf32>
    %28 = vector.broadcast %27 : vector<24x1xf32> to vector<24x32xf32>
    %29 = arith.mulf %24, %28 : vector<24x32xf32>
    %30 = vector.broadcast %5 : vector<1x32xf32> to vector<24x32xf32>
    %31 = arith.mulf %29, %30 : vector<24x32xf32>
    %32 = vector.broadcast %6 : vector<1x32xf32> to vector<24x32xf32>
    %33 = arith.addf %31, %32 : vector<24x32xf32>
    %34 = vector.shape_cast %33 : vector<24x32xf32> to vector<1x24x32xf32>
    %35 = arith.index_cast %arg0 : i32 to index
    %c0_9 = arith.constant 0 : index
    %c0_10 = arith.constant 0 : index
    %36 = vector.load %arg12[%35, %c0_9, %c0_10] : memref<3x24x32xf32, #tpu.memory_space<vmem>>, vector<1x24x32xf32>
    tpu.vector_store %arg12[%35, %c0_9, %c0_10], %34 {strides = array<i32>} : memref<3x24x32xf32, #tpu.memory_space<vmem>>, vector<1x24x32xf32>,
    %c0_11 = arith.constant 0 : index
    %c0_12 = arith.constant 0 : index
    %c0_13 = arith.constant 0 : index
    %37 = vector.load %arg5[%c0_11, %c0_12, %c0_13] : memref<1x32x96xf32, #tpu.memory_space<vmem>>, vector<1x32x96xf32>
    %38 = vector.shape_cast %37 : vector<1x32x96xf32> to vector<32x96xf32>
    %cst_14 = arith.constant dense<0.000000e+00> : vector<24x96xf32>
    %39 = tpu.matmul %33, %38, %cst_14 {dimension_numbers = #tpu.dot_dimension_numbers<[1], [0], [0], [1], [0, 0, 1, 1], [], []>} : vector<24x32xf32>, vector<32x96xf32>, vector<24x96xf32> -> vector<24x96xf32>
    %c0_15 = arith.constant 0 : index
    %c0_16 = arith.constant 0 : index
    %c0_17 = arith.constant 0 : index
    %40 = vector.load %arg10[%c0_15, %c0_16, %c0_17] : memref<1x1x96xf32, #tpu.memory_space<vmem>>, vector<1x1x96xf32>
    %41 = vector.shape_cast %40 : vector<1x1x96xf32> to vector<1x96xf32>
    %42 = vector.broadcast %41 : vector<1x96xf32> to vector<24x96xf32>
    %43 = arith.addf %39, %42 : vector<24x96xf32>
    %44 = vector.extract_strided_slice %43 {offsets = [0, 0], sizes = [24, 8], strides = [1, 1]} : vector<24x96xf32> to vector<24x8xf32>
    %45 = vector.extract_strided_slice %43 {offsets = [0, 8], sizes = [24, 8], strides = [1, 1]} : vector<24x96xf32> to vector<24x8xf32>
    %46 = vector.extract_strided_slice %43 {offsets = [0, 16], sizes = [24, 8], strides = [1, 1]} : vector<24x96xf32> to vector<24x8xf32>
    %47 = vector.extract_strided_slice %43 {offsets = [0, 24], sizes = [24, 8], strides = [1, 1]} : vector<24x96xf32> to vector<24x8xf32>
    %48 = vector.shape_cast %44 : vector<24x8xf32> to vector<1x24x8xf32>
    %49 = vector.shape_cast %45 : vector<24x8xf32> to vector<1x24x8xf32>
    %50 = vector.shape_cast %46 : vector<24x8xf32> to vector<1x24x8xf32>
    %51 = vector.shape_cast %47 : vector<24x8xf32> to vector<1x24x8xf32>
    %52 = tpu.concatenate %48, %49, %50, %51 in 0 : vector<1x24x8xf32>, vector<1x24x8xf32>, vector<1x24x8xf32>, vector<1x24x8xf32> -> vector<4x24x8xf32>
    %53 = vector.extract_strided_slice %43 {offsets = [0, 32], sizes = [24, 8], strides = [1, 1]} : vector<24x96xf32> to vector<24x8xf32>
    %54 = vector.extract_strided_slice %43 {offsets = [0, 40], sizes = [24, 8], strides = [1, 1]} : vector<24x96xf32> to vector<24x8xf32>
    %55 = vector.extract_strided_slice %43 {offsets = [0, 48], sizes = [24, 8], strides = [1, 1]} : vector<24x96xf32> to vector<24x8xf32>
    %56 = vector.extract_strided_slice %43 {offsets = [0, 56], sizes = [24, 8], strides = [1, 1]} : vector<24x96xf32> to vector<24x8xf32>
    %57 = vector.shape_cast %53 : vector<24x8xf32> to vector<1x24x8xf32>
    %58 = vector.shape_cast %54 : vector<24x8xf32> to vector<1x24x8xf32>
    %59 = vector.shape_cast %55 : vector<24x8xf32> to vector<1x24x8xf32>
    %60 = vector.shape_cast %56 : vector<24x8xf32> to vector<1x24x8xf32>
    %61 = tpu.concatenate %57, %58, %59, %60 in 0 : vector<1x24x8xf32>, vector<1x24x8xf32>, vector<1x24x8xf32>, vector<1x24x8xf32> -> vector<4x24x8xf32>
    %62 = vector.extract_strided_slice %43 {offsets = [0, 64], sizes = [24, 8], strides = [1, 1]} : vector<24x96xf32> to vector<24x8xf32>
    %63 = vector.extract_strided_slice %43 {offsets = [0, 72], sizes = [24, 8], strides = [1, 1]} : vector<24x96xf32> to vector<24x8xf32>
    %64 = vector.extract_strided_slice %43 {offsets = [0, 80], sizes = [24, 8], strides = [1, 1]} : vector<24x96xf32> to vector<24x8xf32>
    %65 = vector.extract_strided_slice %43 {offsets = [0, 88], sizes = [24, 8], strides = [1, 1]} : vector<24x96xf32> to vector<24x8xf32>
    %66 = vector.shape_cast %62 : vector<24x8xf32> to vector<1x24x8xf32>
    %67 = vector.shape_cast %63 : vector<24x8xf32> to vector<1x24x8xf32>
    %68 = vector.shape_cast %64 : vector<24x8xf32> to vector<1x24x8xf32>
    %69 = vector.shape_cast %65 : vector<24x8xf32> to vector<1x24x8xf32>
    %70 = tpu.concatenate %66, %67, %68, %69 in 0 : vector<1x24x8xf32>, vector<1x24x8xf32>, vector<1x24x8xf32>, vector<1x24x8xf32> -> vector<4x24x8xf32>
    "tpu.trace_start"() <{level = 10 : i32, message = "hsd,htd->hst"}> : () -> ()
    %cst_18 = arith.constant dense<0.000000e+00> : vector<4x24x24xf32>
    %71 = tpu.matmul %52, %61, %cst_18 {dimension_numbers = #tpu.dot_dimension_numbers<[2], [2], [1], [1], [0, 0, 0, 1, 1, 1], [0], [0]>} : vector<4x24x8xf32>, vector<4x24x8xf32>, vector<4x24x24xf32> -> vector<4x24x24xf32>
    "tpu.trace_stop"() : () -> ()
    %72 = tpu.iota {dimensions = array<i32: 2>} : vector<4x24x24xi32>
    %c17_i32 = arith.constant 17 : i32
    %73 = vector.broadcast %c17_i32 : i32 to vector<4x24x24xi32>
    %74 = arith.cmpi slt, %72, %73 : vector<4x24x24xi32>
    %cst_19 = arith.constant -1.000000e+30 : f32
    %75 = vector.broadcast %cst_19 : f32 to vector<4x24x24xf32>
    %76 = arith.select %74, %71, %75 : vector<4x24x24xi1>, vector<4x24x24xf32>
    %cst_20 = arith.constant dense<0xFF800000> : vector<4x24xf32>
    %77 = vector.multi_reduction <maximumf>, %76, %cst_20 [2] : vector<4x24x24xf32> to vector<4x24xf32>
    %78 = vector.shape_cast %77 : vector<4x24xf32> to vector<4x24x1xf32>
    %79 = vector.broadcast %78 : vector<4x24x1xf32> to vector<4x24x24xf32>
    %80 = arith.subf %76, %79 : vector<4x24x24xf32>
    %81 = math.exp %80 : vector<4x24x24xf32>
    %cst_21 = arith.constant dense<0.000000e+00> : vector<4x24xf32>
    %82 = vector.multi_reduction <add>, %81, %cst_21 [2] : vector<4x24x24xf32> to vector<4x24xf32>
    %83 = vector.shape_cast %82 : vector<4x24xf32> to vector<4x24x1xf32>
    %84 = tpu.reciprocal %83 {approx = true} : vector<4x24x1xf32> -> vector<4x24x1xf32>
    %85 = vector.broadcast %84 : vector<4x24x1xf32> to vector<4x24x24xf32>
    %86 = arith.mulf %81, %85 : vector<4x24x24xf32>
    %87 = tpu.iota {dimensions = array<i32: 1>} : vector<4x24x24xi32>
    %c0_22 = arith.constant 0 : index
    %c0_23 = arith.constant 0 : index
    %c0_24 = arith.constant 0 : index
    %88 = vector.load %arg13[%c0_22, %c0_23, %c0_24] : memref<4x24x24xf32, #tpu.memory_space<vmem>>, vector<4x24x24xf32>
    %c17_i32_25 = arith.constant 17 : i32
    %89 = vector.broadcast %c17_i32_25 : i32 to vector<4x24x24xi32>
    %90 = arith.cmpi slt, %87, %89 : vector<4x24x24xi32>
    %cst_26 = arith.constant 0.000000e+00 : f32
    %91 = vector.broadcast %cst_26 : f32 to vector<4x24x24xf32>
    %92 = arith.select %90, %86, %91 : vector<4x24x24xi1>, vector<4x24x24xf32>
    %93 = arith.addf %88, %92 : vector<4x24x24xf32>
    %c0_27 = arith.constant 0 : index
    %c0_28 = arith.constant 0 : index
    %c0_29 = arith.constant 0 : index
    %94 = vector.load %arg13[%c0_27, %c0_28, %c0_29] : memref<4x24x24xf32, #tpu.memory_space<vmem>>, vector<4x24x24xf32>
    tpu.vector_store %arg13[%c0_27, %c0_28, %c0_29], %93 {strides = array<i32>} : memref<4x24x24xf32, #tpu.memory_space<vmem>>, vector<4x24x24xf32>,
    "tpu.trace_start"() <{level = 10 : i32, message = "hst,htd->hsd"}> : () -> ()
    %cst_30 = arith.constant dense<0.000000e+00> : vector<4x24x8xf32>
    %95 = tpu.matmul %86, %70, %cst_30 {dimension_numbers = #tpu.dot_dimension_numbers<[2], [1], [1], [2], [0, 0, 0, 1, 1, 2], [0], [0]>} : vector<4x24x24xf32>, vector<4x24x8xf32>, vector<4x24x8xf32> -> vector<4x24x8xf32>
    "tpu.trace_stop"() : () -> ()
    %96 = vector.extract_strided_slice %95 {offsets = [0, 0, 0], sizes = [1, 24, 8], strides = [1, 1, 1]} : vector<4x24x8xf32> to vector<1x24x8xf32>
    %97 = vector.shape_cast %96 : vector<1x24x8xf32> to vector<24x8xf32>
    %98 = vector.extract_strided_slice %95 {offsets = [1, 0, 0], sizes = [1, 24, 8], strides = [1, 1, 1]} : vector<4x24x8xf32> to vector<1x24x8xf32>
    %99 = vector.shape_cast %98 : vector<1x24x8xf32> to vector<24x8xf32>
    %100 = vector.extract_strided_slice %95 {offsets = [2, 0, 0], sizes = [1, 24, 8], strides = [1, 1, 1]} : vector<4x24x8xf32> to vector<1x24x8xf32>
    %101 = vector.shape_cast %100 : vector<1x24x8xf32> to vector<24x8xf32>
    %102 = vector.extract_strided_slice %95 {offsets = [3, 0, 0], sizes = [1, 24, 8], strides = [1, 1, 1]} : vector<4x24x8xf32> to vector<1x24x8xf32>
    %103 = vector.shape_cast %102 : vector<1x24x8xf32> to vector<24x8xf32>
    %104 = tpu.concatenate %97, %99, %101, %103 in 1 : vector<24x8xf32>, vector<24x8xf32>, vector<24x8xf32>, vector<24x8xf32> -> vector<24x32xf32>
    %c0_31 = arith.constant 0 : index
    %c0_32 = arith.constant 0 : index
    %c0_33 = arith.constant 0 : index
    %105 = vector.load %arg6[%c0_31, %c0_32, %c0_33] : memref<1x32x32xf32, #tpu.memory_space<vmem>>, vector<1x32x32xf32>
    %106 = vector.shape_cast %105 : vector<1x32x32xf32> to vector<32x32xf32>
    %cst_34 = arith.constant dense<0.000000e+00> : vector<24x32xf32>
    %107 = tpu.matmul %104, %106, %cst_34 {dimension_numbers = #tpu.dot_dimension_numbers<[1], [0], [0], [1], [0, 0, 1, 1], [], []>} : vector<24x32xf32>, vector<32x32xf32>, vector<24x32xf32> -> vector<24x32xf32>
    %108 = arith.addf %11, %107 : vector<24x32xf32>
    %109 = vector.broadcast %9 : vector<1x32xf32> to vector<24x32xf32>
    %110 = arith.addf %108, %109 : vector<24x32xf32>
    %cst_35 = arith.constant dense<0.000000e+00> : vector<24xf32>
    %111 = vector.multi_reduction <add>, %110, %cst_35 [1] : vector<24x32xf32> to vector<24xf32>
    %112 = vector.shape_cast %111 : vector<24xf32> to vector<24x1xf32>
    %cst_36 = arith.constant 3.200000e+01 : f32
    %113 = vector.broadcast %cst_36 : f32 to vector<24x1xf32>
    %114 = arith.divf %112, %113 : vector<24x1xf32>
    %115 = vector.broadcast %114 : vector<24x1xf32> to vector<24x32xf32>
    %116 = arith.subf %110, %115 : vector<24x32xf32>
    %117 = arith.mulf %116, %116 : vector<24x32xf32>
    %cst_37 = arith.constant dense<0.000000e+00> : vector<24xf32>
    %118 = vector.multi_reduction <add>, %117, %cst_37 [1] : vector<24x32xf32> to vector<24xf32>
    %119 = vector.shape_cast %118 : vector<24xf32> to vector<24x1xf32>
    %cst_38 = arith.constant 3.200000e+01 : f32
    %120 = vector.broadcast %cst_38 : f32 to vector<24x1xf32>
    %121 = arith.divf %119, %120 : vector<24x1xf32>
    %122 = vector.broadcast %114 : vector<24x1xf32> to vector<24x32xf32>
    %123 = arith.subf %110, %122 : vector<24x32xf32>
    %cst_39 = arith.constant 9.99999974E-6 : f32
    %124 = vector.broadcast %cst_39 : f32 to vector<24x1xf32>
    %125 = arith.addf %121, %124 : vector<24x1xf32>
    %126 = math.rsqrt %125 : vector<24x1xf32>
    %127 = vector.broadcast %126 : vector<24x1xf32> to vector<24x32xf32>
    %128 = arith.mulf %123, %127 : vector<24x32xf32>
    %129 = vector.broadcast %7 : vector<1x32xf32> to vector<24x32xf32>
    %130 = arith.mulf %128, %129 : vector<24x32xf32>
    %131 = vector.broadcast %8 : vector<1x32xf32> to vector<24x32xf32>
    %132 = arith.addf %130, %131 : vector<24x32xf32>
    %c0_40 = arith.constant 0 : index
    %c0_41 = arith.constant 0 : index
    %c0_42 = arith.constant 0 : index
    %133 = vector.load %arg7[%c0_40, %c0_41, %c0_42] : memref<1x32x128xf32, #tpu.memory_space<vmem>>, vector<1x32x128xf32>
    %134 = vector.shape_cast %133 : vector<1x32x128xf32> to vector<32x128xf32>
    %cst_43 = arith.constant dense<0.000000e+00> : vector<24x128xf32>
    %135 = tpu.matmul %132, %134, %cst_43 {dimension_numbers = #tpu.dot_dimension_numbers<[1], [0], [0], [1], [0, 0, 1, 1], [], []>} : vector<24x32xf32>, vector<32x128xf32>, vector<24x128xf32> -> vector<24x128xf32>
    %c0_44 = arith.constant 0 : index
    %c0_45 = arith.constant 0 : index
    %c0_46 = arith.constant 0 : index
    %136 = vector.load %arg11[%c0_44, %c0_45, %c0_46] : memref<1x1x128xf32, #tpu.memory_space<vmem>>, vector<1x1x128xf32>
    %137 = vector.shape_cast %136 : vector<1x1x128xf32> to vector<1x128xf32>
    %138 = vector.broadcast %137 : vector<1x128xf32> to vector<24x128xf32>
    %139 = arith.addf %135, %138 : vector<24x128xf32>
    %cst_47 = arith.constant 1.702000e+00 : f32
    %140 = vector.broadcast %cst_47 : f32 to vector<24x128xf32>
    %141 = arith.mulf %140, %139 : vector<24x128xf32>
    %142 = arith.negf %141 : vector<24x128xf32>
    %143 = math.exp %142 : vector<24x128xf32>
    %cst_48 = arith.constant 1.000000e+00 : f32
    %144 = vector.broadcast %cst_48 : f32 to vector<24x128xf32>
    %145 = arith.addf %144, %143 : vector<24x128xf32>
    %146 = arith.divf %144, %145 : vector<24x128xf32>
    %147 = arith.mulf %139, %146 : vector<24x128xf32>
    %c0_49 = arith.constant 0 : index
    %c0_50 = arith.constant 0 : index
    %c0_51 = arith.constant 0 : index
    %148 = vector.load %arg8[%c0_49, %c0_50, %c0_51] : memref<1x128x32xf32, #tpu.memory_space<vmem>>, vector<1x128x32xf32>
    %149 = vector.shape_cast %148 : vector<1x128x32xf32> to vector<128x32xf32>
    %cst_52 = arith.constant dense<0.000000e+00> : vector<24x32xf32>
    %150 = tpu.matmul %147, %149, %cst_52 {dimension_numbers = #tpu.dot_dimension_numbers<[1], [0], [0], [1], [0, 0, 1, 1], [], []>} : vector<24x128xf32>, vector<128x32xf32>, vector<24x32xf32> -> vector<24x32xf32>
    %151 = arith.addf %110, %150 : vector<24x32xf32>
    %152 = vector.broadcast %10 : vector<1x32xf32> to vector<24x32xf32>
    %153 = arith.addf %151, %152 : vector<24x32xf32>
    %c0_53 = arith.constant 0 : index
    %c0_54 = arith.constant 0 : index
    %154 = vector.load %arg14[%c0_53, %c0_54] : memref<24x32xf32, #tpu.memory_space<vmem>>, vector<24x32xf32>
    tpu.vector_store %arg14[%c0_53, %c0_54], %153 {strides = array<i32>} : memref<24x32xf32, #tpu.memory_space<vmem>>, vector<24x32xf32>,
    %c1_i32 = arith.constant 1 : i32
    %155 = arith.cmpi eq, %arg0, %c1_i32 : i32
    %156 = arith.extui %155 : i1 to i32
    %c0_i32_55 = arith.constant 0 : i32
    %157 = arith.cmpi ne, %156, %c0_i32_55 : i32
    scf.if %157 {
      %158 = vector.shape_cast %153 : vector<24x32xf32> to vector<1x24x32xf32>
      %c2 = arith.constant 2 : index
      %c0_56 = arith.constant 0 : index
      %c0_57 = arith.constant 0 : index
      %159 = vector.load %arg12[%c2, %c0_56, %c0_57] : memref<3x24x32xf32, #tpu.memory_space<vmem>>, vector<1x24x32xf32>
      tpu.vector_store %arg12[%c2, %c0_56, %c0_57], %158 {strides = array<i32>} : memref<3x24x32xf32, #tpu.memory_space<vmem>>, vector<1x24x32xf32>,
    } else {
    }
    return
  }
  func.func @transform_0(%arg0: i32) -> (i32, i32) {
    %c0_i32 = arith.constant 0 : i32
    %c0_i32_0 = arith.constant 0 : i32
    %c0_i32_1 = arith.constant 0 : i32
    return %c0_i32, %c0_i32_0 : i32, i32
  }
  func.func @transform_1(%arg0: i32) -> (i32, i32) {
    %c0_i32 = arith.constant 0 : i32
    %c0_i32_0 = arith.constant 0 : i32
    %c0_i32_1 = arith.constant 0 : i32
    return %c0_i32, %c0_i32_0 : i32, i32
  }
  func.func @transform_2(%arg0: i32) -> (i32, i32) {
    %c0_i32 = arith.constant 0 : i32
    %c0_i32_0 = arith.constant 0 : i32
    %c0_i32_1 = arith.constant 0 : i32
    return %c0_i32, %c0_i32_0 : i32, i32
  }
  func.func @transform_3(%arg0: i32) -> (i32, i32) {
    %c0_i32 = arith.constant 0 : i32
    %c0_i32_0 = arith.constant 0 : i32
    %c0_i32_1 = arith.constant 0 : i32
    return %c0_i32, %c0_i32_0 : i32, i32
  }
  func.func @transform_4(%arg0: i32) -> (i32, i32, i32) {
    %c0_i32 = arith.constant 0 : i32
    %c0_i32_0 = arith.constant 0 : i32
    %c0_i32_1 = arith.constant 0 : i32
    return %arg0, %c0_i32, %c0_i32_0 : i32, i32, i32
  }
  func.func @transform_5(%arg0: i32) -> (i32, i32, i32) {
    %c0_i32 = arith.constant 0 : i32
    %c0_i32_0 = arith.constant 0 : i32
    %c0_i32_1 = arith.constant 0 : i32
    return %arg0, %c0_i32, %c0_i32_0 : i32, i32, i32
  }
  func.func @transform_6(%arg0: i32) -> (i32, i32, i32) {
    %c0_i32 = arith.constant 0 : i32
    %c0_i32_0 = arith.constant 0 : i32
    %c0_i32_1 = arith.constant 0 : i32
    return %arg0, %c0_i32, %c0_i32_0 : i32, i32, i32
  }
  func.func @transform_7(%arg0: i32) -> (i32, i32, i32) {
    %c0_i32 = arith.constant 0 : i32
    %c0_i32_0 = arith.constant 0 : i32
    %c0_i32_1 = arith.constant 0 : i32
    return %arg0, %c0_i32, %c0_i32_0 : i32, i32, i32
  }
  func.func @transform_8(%arg0: i32) -> (i32, i32, i32) {
    %c0_i32 = arith.constant 0 : i32
    %c0_i32_0 = arith.constant 0 : i32
    %c0_i32_1 = arith.constant 0 : i32
    return %arg0, %c0_i32, %c0_i32_0 : i32, i32, i32
  }
  func.func @transform_9(%arg0: i32) -> (i32, i32, i32) {
    %c0_i32 = arith.constant 0 : i32
    %c0_i32_0 = arith.constant 0 : i32
    %c0_i32_1 = arith.constant 0 : i32
    return %arg0, %c0_i32, %c0_i32_0 : i32, i32, i32
  }
  func.func @transform_10(%arg0: i32) -> (i32, i32, i32) {
    %c0_i32 = arith.constant 0 : i32
    %c0_i32_0 = arith.constant 0 : i32
    %c0_i32_1 = arith.constant 0 : i32
    return %arg0, %c0_i32, %c0_i32_0 : i32, i32, i32
  }
  func.func @transform_11(%arg0: i32) -> (i32, i32, i32) {
    %c0_i32 = arith.constant 0 : i32
    %c0_i32_0 = arith.constant 0 : i32
    %c0_i32_1 = arith.constant 0 : i32
    %c0_i32_2 = arith.constant 0 : i32
    return %c0_i32, %c0_i32_0, %c0_i32_1 : i32, i32, i32
  }
  func.func @transform_12(%arg0: i32) -> (i32, i32, i32) {
    %c0_i32 = arith.constant 0 : i32
    %c0_i32_0 = arith.constant 0 : i32
    %c0_i32_1 = arith.constant 0 : i32
    %c0_i32_2 = arith.constant 0 : i32
    return %c0_i32, %c0_i32_0, %c0_i32_1 : i32, i32, i32
  }
}

module attributes {stable_mosaic.version = 11 : i64} {
  func.func @_tail_kernel(%arg0: memref<3x24x32xf32, #tpu.memory_space<vmem>>, %arg1: memref<4x24x24xf32, #tpu.memory_space<vmem>>, %arg2: memref<6x32xf32, #tpu.memory_space<vmem>>, %arg3: memref<32x32xf32, #tpu.memory_space<vmem>>, %arg4: memref<32x32xf32, #tpu.memory_space<vmem>>, %arg5: memref<32x16xf32, #tpu.memory_space<vmem>>, %arg6: memref<16x6xf32, #tpu.memory_space<vmem>>, %arg7: memref<72x16xf32, #tpu.memory_space<vmem>>, %arg8: memref<16x3xf32, #tpu.memory_space<vmem>>, %arg9: memref<16x16xf32, #tpu.memory_space<vmem>>) attributes {dimension_semantics = [], scalar_prefetch = 0 : i64, scratch_operands = 0 : i64, tpu.core_type = #tpu.core_type<tc>} {
    %c0 = arith.constant 0 : index
    %c0_0 = arith.constant 0 : index
    %0 = vector.load %arg2[%c0, %c0_0] : memref<6x32xf32, #tpu.memory_space<vmem>>, vector<6x32xf32>
    %1 = vector.extract_strided_slice %0 {offsets = [0, 0], sizes = [1, 32], strides = [1, 1]} : vector<6x32xf32> to vector<1x32xf32>
    %2 = vector.extract_strided_slice %0 {offsets = [1, 0], sizes = [1, 32], strides = [1, 1]} : vector<6x32xf32> to vector<1x32xf32>
    %3 = vector.extract_strided_slice %0 {offsets = [2, 0], sizes = [1, 32], strides = [1, 1]} : vector<6x32xf32> to vector<1x32xf32>
    %4 = vector.extract_strided_slice %0 {offsets = [3, 0], sizes = [1, 32], strides = [1, 1]} : vector<6x32xf32> to vector<1x32xf32>
    %5 = vector.extract_strided_slice %0 {offsets = [4, 0], sizes = [1, 32], strides = [1, 1]} : vector<6x32xf32> to vector<1x32xf32>
    %6 = vector.extract_strided_slice %0 {offsets = [5, 0], sizes = [1, 32], strides = [1, 1]} : vector<6x32xf32> to vector<1x32xf32>
    %c0_1 = arith.constant 0 : index
    %c0_2 = arith.constant 0 : index
    %c0_3 = arith.constant 0 : index
    %7 = vector.load %arg1[%c0_1, %c0_2, %c0_3] : memref<4x24x24xf32, #tpu.memory_space<vmem>>, vector<4x24x24xf32>
    %cst = arith.constant dense<0.000000e+00> : vector<4x24xf32>
    %8 = vector.multi_reduction <add>, %7, %cst [1] : vector<4x24x24xf32> to vector<4x24xf32>
    %9 = vector.shape_cast %8 : vector<4x24xf32> to vector<4x1x24xf32>
    %cst_4 = arith.constant 0.000000e+00 : f32
    %10 = vector.broadcast %cst_4 : f32 to vector<4x1x24xf32>
    %11 = arith.cmpf oeq, %9, %10 : vector<4x1x24xf32>
    %cst_5 = arith.constant 1.000000e+00 : f32
    %12 = vector.broadcast %cst_5 : f32 to vector<4x1x24xf32>
    %13 = arith.select %11, %12, %9 : vector<4x1x24xi1>, vector<4x1x24xf32>
    %14 = vector.broadcast %13 : vector<4x1x24xf32> to vector<4x24x24xf32>
    %15 = arith.divf %7, %14 : vector<4x24x24xf32>
    %cst_6 = arith.constant dense<0.000000e+00> : vector<4x24xf32>
    %16 = vector.multi_reduction <add>, %15, %cst_6 [2] : vector<4x24x24xf32> to vector<4x24xf32>
    %17 = vector.shape_cast %16 : vector<4x24xf32> to vector<4x24x1xf32>
    %cst_7 = arith.constant 0.000000e+00 : f32
    %18 = vector.broadcast %cst_7 : f32 to vector<4x24x1xf32>
    %19 = arith.cmpf oeq, %17, %18 : vector<4x24x1xf32>
    %cst_8 = arith.constant 1.000000e+00 : f32
    %20 = vector.broadcast %cst_8 : f32 to vector<4x24x1xf32>
    %21 = arith.select %19, %20, %17 : vector<4x24x1xi1>, vector<4x24x1xf32>
    %22 = vector.broadcast %21 : vector<4x24x1xf32> to vector<4x24x24xf32>
    %23 = arith.divf %15, %22 : vector<4x24x24xf32>
    %24 = vector.extract_strided_slice %23 {offsets = [0, 0, 0], sizes = [1, 24, 24], strides = [1, 1, 1]} : vector<4x24x24xf32> to vector<1x24x24xf32>
    %25 = vector.shape_cast %24 : vector<1x24x24xf32> to vector<24x24xf32>
    %26 = tpu.transpose %25, [1, 0] : vector<24x24xf32> -> vector<24x24xf32>
    %27 = vector.extract_strided_slice %23 {offsets = [1, 0, 0], sizes = [1, 24, 24], strides = [1, 1, 1]} : vector<4x24x24xf32> to vector<1x24x24xf32>
    %28 = vector.shape_cast %27 : vector<1x24x24xf32> to vector<24x24xf32>
    %29 = tpu.transpose %28, [1, 0] : vector<24x24xf32> -> vector<24x24xf32>
    %30 = vector.extract_strided_slice %23 {offsets = [2, 0, 0], sizes = [1, 24, 24], strides = [1, 1, 1]} : vector<4x24x24xf32> to vector<1x24x24xf32>
    %31 = vector.shape_cast %30 : vector<1x24x24xf32> to vector<24x24xf32>
    %32 = tpu.transpose %31, [1, 0] : vector<24x24xf32> -> vector<24x24xf32>
    %33 = vector.extract_strided_slice %23 {offsets = [3, 0, 0], sizes = [1, 24, 24], strides = [1, 1, 1]} : vector<4x24x24xf32> to vector<1x24x24xf32>
    %34 = vector.shape_cast %33 : vector<1x24x24xf32> to vector<24x24xf32>
    %35 = tpu.transpose %34, [1, 0] : vector<24x24xf32> -> vector<24x24xf32>
    %36 = vector.shape_cast %26 : vector<24x24xf32> to vector<1x24x24xf32>
    %37 = vector.shape_cast %29 : vector<24x24xf32> to vector<1x24x24xf32>
    %38 = vector.shape_cast %32 : vector<24x24xf32> to vector<1x24x24xf32>
    %39 = vector.shape_cast %35 : vector<24x24xf32> to vector<1x24x24xf32>
    %40 = tpu.concatenate %36, %37, %38, %39 in 0 : vector<1x24x24xf32>, vector<1x24x24xf32>, vector<1x24x24xf32>, vector<1x24x24xf32> -> vector<4x24x24xf32>
    %41 = arith.addf %23, %40 : vector<4x24x24xf32>
    %cst_9 = arith.constant 5.000000e-01 : f32
    %42 = vector.broadcast %cst_9 : f32 to vector<4x24x24xf32>
    %43 = arith.mulf %41, %42 : vector<4x24x24xf32>
    %cst_10 = arith.constant dense<0.000000e+00> : vector<4x24xf32>
    %44 = vector.multi_reduction <add>, %43, %cst_10 [1] : vector<4x24x24xf32> to vector<4x24xf32>
    %45 = vector.shape_cast %44 : vector<4x24xf32> to vector<4x1x24xf32>
    %cst_11 = arith.constant 0.0588235296 : f32
    %46 = vector.broadcast %cst_11 : f32 to vector<4x1x24xf32>
    %47 = arith.mulf %45, %46 : vector<4x1x24xf32>
    %48 = vector.broadcast %47 : vector<4x1x24xf32> to vector<4x24x24xf32>
    %49 = arith.subf %43, %48 : vector<4x24x24xf32>
    %cst_12 = arith.constant 0.000000e+00 : f32
    %50 = vector.broadcast %cst_12 : f32 to vector<4x24x24xf32>
    %51 = arith.maximumf %49, %50 : vector<4x24x24xf32>
    %cst_13 = arith.constant dense<0.000000e+00> : vector<4x24xf32>
    %52 = vector.multi_reduction <add>, %51, %cst_13 [2] : vector<4x24x24xf32> to vector<4x24xf32>
    %53 = vector.shape_cast %52 : vector<4x24xf32> to vector<4x24x1xf32>
    %cst_14 = arith.constant 0.000000e+00 : f32
    %54 = vector.broadcast %cst_14 : f32 to vector<4x24x1xf32>
    %55 = arith.cmpf oeq, %53, %54 : vector<4x24x1xf32>
    %cst_15 = arith.constant 1.000000e+00 : f32
    %56 = vector.broadcast %cst_15 : f32 to vector<4x24x1xf32>
    %57 = arith.select %55, %56, %53 : vector<4x24x1xi1>, vector<4x24x1xf32>
    %58 = tpu.reciprocal %57 {approx = true} : vector<4x24x1xf32> -> vector<4x24x1xf32>
    %59 = vector.broadcast %58 : vector<4x24x1xf32> to vector<4x24x24xf32>
    %60 = arith.mulf %51, %59 : vector<4x24x24xf32>
    %cst_16 = arith.constant dense<0.000000e+00> : vector<4x24xf32>
    %61 = vector.multi_reduction <add>, %23, %cst_16 [1] : vector<4x24x24xf32> to vector<4x24xf32>
    %62 = vector.shape_cast %61 : vector<4x24xf32> to vector<4x1x24xf32>
    %cst_17 = arith.constant 0.000000e+00 : f32
    %63 = vector.broadcast %cst_17 : f32 to vector<4x1x24xf32>
    %64 = arith.cmpf oeq, %62, %63 : vector<4x1x24xf32>
    %cst_18 = arith.constant 1.000000e+00 : f32
    %65 = vector.broadcast %cst_18 : f32 to vector<4x1x24xf32>
    %66 = arith.select %64, %65, %62 : vector<4x1x24xi1>, vector<4x1x24xf32>
    %67 = vector.broadcast %66 : vector<4x1x24xf32> to vector<4x24x24xf32>
    %68 = arith.divf %23, %67 : vector<4x24x24xf32>
    %cst_19 = arith.constant dense<0.000000e+00> : vector<4x24xf32>
    %69 = vector.multi_reduction <add>, %68, %cst_19 [2] : vector<4x24x24xf32> to vector<4x24xf32>
    %70 = vector.shape_cast %69 : vector<4x24xf32> to vector<4x24x1xf32>
    %cst_20 = arith.constant 0.000000e+00 : f32
    %71 = vector.broadcast %cst_20 : f32 to vector<4x24x1xf32>
    %72 = arith.cmpf oeq, %70, %71 : vector<4x24x1xf32>
    %cst_21 = arith.constant 1.000000e+00 : f32
    %73 = vector.broadcast %cst_21 : f32 to vector<4x24x1xf32>
    %74 = arith.select %72, %73, %70 : vector<4x24x1xi1>, vector<4x24x1xf32>
    %75 = vector.broadcast %74 : vector<4x24x1xf32> to vector<4x24x24xf32>
    %76 = arith.divf %68, %75 : vector<4x24x24xf32>
    %77 = vector.extract_strided_slice %76 {offsets = [0, 0, 0], sizes = [1, 24, 24], strides = [1, 1, 1]} : vector<4x24x24xf32> to vector<1x24x24xf32>
    %78 = vector.shape_cast %77 : vector<1x24x24xf32> to vector<24x24xf32>
    %79 = tpu.transpose %78, [1, 0] : vector<24x24xf32> -> vector<24x24xf32>
    %80 = vector.extract_strided_slice %76 {offsets = [1, 0, 0], sizes = [1, 24, 24], strides = [1, 1, 1]} : vector<4x24x24xf32> to vector<1x24x24xf32>
    %81 = vector.shape_cast %80 : vector<1x24x24xf32> to vector<24x24xf32>
    %82 = tpu.transpose %81, [1, 0] : vector<24x24xf32> -> vector<24x24xf32>
    %83 = vector.extract_strided_slice %76 {offsets = [2, 0, 0], sizes = [1, 24, 24], strides = [1, 1, 1]} : vector<4x24x24xf32> to vector<1x24x24xf32>
    %84 = vector.shape_cast %83 : vector<1x24x24xf32> to vector<24x24xf32>
    %85 = tpu.transpose %84, [1, 0] : vector<24x24xf32> -> vector<24x24xf32>
    %86 = vector.extract_strided_slice %76 {offsets = [3, 0, 0], sizes = [1, 24, 24], strides = [1, 1, 1]} : vector<4x24x24xf32> to vector<1x24x24xf32>
    %87 = vector.shape_cast %86 : vector<1x24x24xf32> to vector<24x24xf32>
    %88 = tpu.transpose %87, [1, 0] : vector<24x24xf32> -> vector<24x24xf32>
    %89 = vector.shape_cast %79 : vector<24x24xf32> to vector<1x24x24xf32>
    %90 = vector.shape_cast %82 : vector<24x24xf32> to vector<1x24x24xf32>
    %91 = vector.shape_cast %85 : vector<24x24xf32> to vector<1x24x24xf32>
    %92 = vector.shape_cast %88 : vector<24x24xf32> to vector<1x24x24xf32>
    %93 = tpu.concatenate %89, %90, %91, %92 in 0 : vector<1x24x24xf32>, vector<1x24x24xf32>, vector<1x24x24xf32>, vector<1x24x24xf32> -> vector<4x24x24xf32>
    %94 = arith.addf %76, %93 : vector<4x24x24xf32>
    %cst_22 = arith.constant 5.000000e-01 : f32
    %95 = vector.broadcast %cst_22 : f32 to vector<4x24x24xf32>
    %96 = arith.mulf %94, %95 : vector<4x24x24xf32>
    %cst_23 = arith.constant dense<0.000000e+00> : vector<4x24xf32>
    %97 = vector.multi_reduction <add>, %96, %cst_23 [1] : vector<4x24x24xf32> to vector<4x24xf32>
    %98 = vector.shape_cast %97 : vector<4x24xf32> to vector<4x1x24xf32>
    %cst_24 = arith.constant 0.0588235296 : f32
    %99 = vector.broadcast %cst_24 : f32 to vector<4x1x24xf32>
    %100 = arith.mulf %98, %99 : vector<4x1x24xf32>
    %101 = vector.broadcast %100 : vector<4x1x24xf32> to vector<4x24x24xf32>
    %102 = arith.subf %96, %101 : vector<4x24x24xf32>
    %cst_25 = arith.constant 0.000000e+00 : f32
    %103 = vector.broadcast %cst_25 : f32 to vector<4x24x24xf32>
    %104 = arith.maximumf %102, %103 : vector<4x24x24xf32>
    %cst_26 = arith.constant dense<0.000000e+00> : vector<4x24xf32>
    %105 = vector.multi_reduction <add>, %104, %cst_26 [2] : vector<4x24x24xf32> to vector<4x24xf32>
    %106 = vector.shape_cast %105 : vector<4x24xf32> to vector<4x24x1xf32>
    %cst_27 = arith.constant 0.000000e+00 : f32
    %107 = vector.broadcast %cst_27 : f32 to vector<4x24x1xf32>
    %108 = arith.cmpf oeq, %106, %107 : vector<4x24x1xf32>
    %cst_28 = arith.constant 1.000000e+00 : f32
    %109 = vector.broadcast %cst_28 : f32 to vector<4x24x1xf32>
    %110 = arith.select %108, %109, %106 : vector<4x24x1xi1>, vector<4x24x1xf32>
    %111 = tpu.reciprocal %110 {approx = true} : vector<4x24x1xf32> -> vector<4x24x1xf32>
    %112 = vector.broadcast %111 : vector<4x24x1xf32> to vector<4x24x24xf32>
    %113 = arith.mulf %104, %112 : vector<4x24x24xf32>
    %cst_29 = arith.constant dense<0.000000e+00> : vector<4x24xf32>
    %114 = vector.multi_reduction <add>, %76, %cst_29 [1] : vector<4x24x24xf32> to vector<4x24xf32>
    %115 = vector.shape_cast %114 : vector<4x24xf32> to vector<4x1x24xf32>
    %cst_30 = arith.constant 0.000000e+00 : f32
    %116 = vector.broadcast %cst_30 : f32 to vector<4x1x24xf32>
    %117 = arith.cmpf oeq, %115, %116 : vector<4x1x24xf32>
    %cst_31 = arith.constant 1.000000e+00 : f32
    %118 = vector.broadcast %cst_31 : f32 to vector<4x1x24xf32>
    %119 = arith.select %117, %118, %115 : vector<4x1x24xi1>, vector<4x1x24xf32>
    %120 = vector.broadcast %119 : vector<4x1x24xf32> to vector<4x24x24xf32>
    %121 = arith.divf %76, %120 : vector<4x24x24xf32>
    %cst_32 = arith.constant dense<0.000000e+00> : vector<4x24xf32>
    %122 = vector.multi_reduction <add>, %121, %cst_32 [2] : vector<4x24x24xf32> to vector<4x24xf32>
    %123 = vector.shape_cast %122 : vector<4x24xf32> to vector<4x24x1xf32>
    %cst_33 = arith.constant 0.000000e+00 : f32
    %124 = vector.broadcast %cst_33 : f32 to vector<4x24x1xf32>
    %125 = arith.cmpf oeq, %123, %124 : vector<4x24x1xf32>
    %cst_34 = arith.constant 1.000000e+00 : f32
    %126 = vector.broadcast %cst_34 : f32 to vector<4x24x1xf32>
    %127 = arith.select %125, %126, %123 : vector<4x24x1xi1>, vector<4x24x1xf32>
    %128 = vector.broadcast %127 : vector<4x24x1xf32> to vector<4x24x24xf32>
    %129 = arith.divf %121, %128 : vector<4x24x24xf32>
    %130 = vector.extract_strided_slice %129 {offsets = [0, 0, 0], sizes = [1, 24, 24], strides = [1, 1, 1]} : vector<4x24x24xf32> to vector<1x24x24xf32>
    %131 = vector.shape_cast %130 : vector<1x24x24xf32> to vector<24x24xf32>
    %132 = tpu.transpose %131, [1, 0] : vector<24x24xf32> -> vector<24x24xf32>
    %133 = vector.extract_strided_slice %129 {offsets = [1, 0, 0], sizes = [1, 24, 24], strides = [1, 1, 1]} : vector<4x24x24xf32> to vector<1x24x24xf32>
    %134 = vector.shape_cast %133 : vector<1x24x24xf32> to vector<24x24xf32>
    %135 = tpu.transpose %134, [1, 0] : vector<24x24xf32> -> vector<24x24xf32>
    %136 = vector.extract_strided_slice %129 {offsets = [2, 0, 0], sizes = [1, 24, 24], strides = [1, 1, 1]} : vector<4x24x24xf32> to vector<1x24x24xf32>
    %137 = vector.shape_cast %136 : vector<1x24x24xf32> to vector<24x24xf32>
    %138 = tpu.transpose %137, [1, 0] : vector<24x24xf32> -> vector<24x24xf32>
    %139 = vector.extract_strided_slice %129 {offsets = [3, 0, 0], sizes = [1, 24, 24], strides = [1, 1, 1]} : vector<4x24x24xf32> to vector<1x24x24xf32>
    %140 = vector.shape_cast %139 : vector<1x24x24xf32> to vector<24x24xf32>
    %141 = tpu.transpose %140, [1, 0] : vector<24x24xf32> -> vector<24x24xf32>
    %142 = vector.shape_cast %132 : vector<24x24xf32> to vector<1x24x24xf32>
    %143 = vector.shape_cast %135 : vector<24x24xf32> to vector<1x24x24xf32>
    %144 = vector.shape_cast %138 : vector<24x24xf32> to vector<1x24x24xf32>
    %145 = vector.shape_cast %141 : vector<24x24xf32> to vector<1x24x24xf32>
    %146 = tpu.concatenate %142, %143, %144, %145 in 0 : vector<1x24x24xf32>, vector<1x24x24xf32>, vector<1x24x24xf32>, vector<1x24x24xf32> -> vector<4x24x24xf32>
    %147 = arith.addf %129, %146 : vector<4x24x24xf32>
    %cst_35 = arith.constant 5.000000e-01 : f32
    %148 = vector.broadcast %cst_35 : f32 to vector<4x24x24xf32>
    %149 = arith.mulf %147, %148 : vector<4x24x24xf32>
    %cst_36 = arith.constant dense<0.000000e+00> : vector<4x24xf32>
    %150 = vector.multi_reduction <add>, %149, %cst_36 [1] : vector<4x24x24xf32> to vector<4x24xf32>
    %151 = vector.shape_cast %150 : vector<4x24xf32> to vector<4x1x24xf32>
    %cst_37 = arith.constant 0.0588235296 : f32
    %152 = vector.broadcast %cst_37 : f32 to vector<4x1x24xf32>
    %153 = arith.mulf %151, %152 : vector<4x1x24xf32>
    %154 = vector.broadcast %153 : vector<4x1x24xf32> to vector<4x24x24xf32>
    %155 = arith.subf %149, %154 : vector<4x24x24xf32>
    %cst_38 = arith.constant 0.000000e+00 : f32
    %156 = vector.broadcast %cst_38 : f32 to vector<4x24x24xf32>
    %157 = arith.maximumf %155, %156 : vector<4x24x24xf32>
    %cst_39 = arith.constant dense<0.000000e+00> : vector<4x24xf32>
    %158 = vector.multi_reduction <add>, %157, %cst_39 [2] : vector<4x24x24xf32> to vector<4x24xf32>
    %159 = vector.shape_cast %158 : vector<4x24xf32> to vector<4x24x1xf32>
    %cst_40 = arith.constant 0.000000e+00 : f32
    %160 = vector.broadcast %cst_40 : f32 to vector<4x24x1xf32>
    %161 = arith.cmpf oeq, %159, %160 : vector<4x24x1xf32>
    %cst_41 = arith.constant 1.000000e+00 : f32
    %162 = vector.broadcast %cst_41 : f32 to vector<4x24x1xf32>
    %163 = arith.select %161, %162, %159 : vector<4x24x1xi1>, vector<4x24x1xf32>
    %164 = tpu.reciprocal %163 {approx = true} : vector<4x24x1xf32> -> vector<4x24x1xf32>
    %165 = vector.broadcast %164 : vector<4x24x1xf32> to vector<4x24x24xf32>
    %166 = arith.mulf %157, %165 : vector<4x24x24xf32>
    %c0_42 = arith.constant 0 : index
    %c0_43 = arith.constant 0 : index
    %c0_44 = arith.constant 0 : index
    %167 = vector.load %arg0[%c0_42, %c0_43, %c0_44] : memref<3x24x32xf32, #tpu.memory_space<vmem>>, vector<1x24x32xf32>
    %168 = vector.shape_cast %167 : vector<1x24x32xf32> to vector<24x32xf32>
    %c1 = arith.constant 1 : index
    %c0_45 = arith.constant 0 : index
    %c0_46 = arith.constant 0 : index
    %169 = vector.load %arg0[%c1, %c0_45, %c0_46] : memref<3x24x32xf32, #tpu.memory_space<vmem>>, vector<1x24x32xf32>
    %170 = vector.shape_cast %169 : vector<1x24x32xf32> to vector<24x32xf32>
    %c2 = arith.constant 2 : index
    %c0_47 = arith.constant 0 : index
    %c0_48 = arith.constant 0 : index
    %171 = vector.load %arg0[%c2, %c0_47, %c0_48] : memref<3x24x32xf32, #tpu.memory_space<vmem>>, vector<1x24x32xf32>
    %172 = vector.shape_cast %171 : vector<1x24x32xf32> to vector<24x32xf32>
    %173 = tpu.concatenate %168, %170, %172 in 0 : vector<24x32xf32>, vector<24x32xf32>, vector<24x32xf32> -> vector<72x32xf32>
    %cst_49 = arith.constant dense<0.000000e+00> : vector<72xf32>
    %174 = vector.multi_reduction <add>, %173, %cst_49 [1] : vector<72x32xf32> to vector<72xf32>
    %175 = vector.shape_cast %174 : vector<72xf32> to vector<72x1xf32>
    %cst_50 = arith.constant 3.200000e+01 : f32
    %176 = vector.broadcast %cst_50 : f32 to vector<72x1xf32>
    %177 = arith.divf %175, %176 : vector<72x1xf32>
    %178 = vector.broadcast %177 : vector<72x1xf32> to vector<72x32xf32>
    %179 = arith.subf %173, %178 : vector<72x32xf32>
    %180 = arith.mulf %179, %179 : vector<72x32xf32>
    %cst_51 = arith.constant dense<0.000000e+00> : vector<72xf32>
    %181 = vector.multi_reduction <add>, %180, %cst_51 [1] : vector<72x32xf32> to vector<72xf32>
    %182 = vector.shape_cast %181 : vector<72xf32> to vector<72x1xf32>
    %cst_52 = arith.constant 3.200000e+01 : f32
    %183 = vector.broadcast %cst_52 : f32 to vector<72x1xf32>
    %184 = arith.divf %182, %183 : vector<72x1xf32>
    %185 = vector.broadcast %177 : vector<72x1xf32> to vector<72x32xf32>
    %186 = arith.subf %173, %185 : vector<72x32xf32>
    %cst_53 = arith.constant 9.99999974E-6 : f32
    %187 = vector.broadcast %cst_53 : f32 to vector<72x1xf32>
    %188 = arith.addf %184, %187 : vector<72x1xf32>
    %189 = math.rsqrt %188 : vector<72x1xf32>
    %190 = vector.broadcast %189 : vector<72x1xf32> to vector<72x32xf32>
    %191 = arith.mulf %186, %190 : vector<72x32xf32>
    %192 = vector.broadcast %1 : vector<1x32xf32> to vector<72x32xf32>
    %193 = arith.mulf %191, %192 : vector<72x32xf32>
    %194 = vector.broadcast %2 : vector<1x32xf32> to vector<72x32xf32>
    %195 = arith.addf %193, %194 : vector<72x32xf32>
    %c0_54 = arith.constant 0 : index
    %c0_55 = arith.constant 0 : index
    %196 = vector.load %arg3[%c0_54, %c0_55] : memref<32x32xf32, #tpu.memory_space<vmem>>, vector<32x32xf32>
    %cst_56 = arith.constant dense<0.000000e+00> : vector<72x32xf32>
    %197 = tpu.matmul %195, %196, %cst_56 {dimension_numbers = #tpu.dot_dimension_numbers<[1], [0], [0], [1], [0, 0, 1, 1], [], []>} : vector<72x32xf32>, vector<32x32xf32>, vector<72x32xf32> -> vector<72x32xf32>
    %198 = vector.broadcast %3 : vector<1x32xf32> to vector<72x32xf32>
    %199 = arith.addf %197, %198 : vector<72x32xf32>
    %200 = vector.extract_strided_slice %199 {offsets = [0, 0], sizes = [72, 8], strides = [1, 1]} : vector<72x32xf32> to vector<72x8xf32>
    %201 = vector.extract_strided_slice %199 {offsets = [0, 8], sizes = [72, 8], strides = [1, 1]} : vector<72x32xf32> to vector<72x8xf32>
    %202 = vector.extract_strided_slice %199 {offsets = [0, 16], sizes = [72, 8], strides = [1, 1]} : vector<72x32xf32> to vector<72x8xf32>
    %203 = vector.extract_strided_slice %199 {offsets = [0, 24], sizes = [72, 8], strides = [1, 1]} : vector<72x32xf32> to vector<72x8xf32>
    %204 = vector.shape_cast %200 : vector<72x8xf32> to vector<1x72x8xf32>
    %205 = vector.shape_cast %201 : vector<72x8xf32> to vector<1x72x8xf32>
    %206 = vector.shape_cast %202 : vector<72x8xf32> to vector<1x72x8xf32>
    %207 = vector.shape_cast %203 : vector<72x8xf32> to vector<1x72x8xf32>
    %208 = tpu.concatenate %204, %205, %206, %207 in 0 : vector<1x72x8xf32>, vector<1x72x8xf32>, vector<1x72x8xf32>, vector<1x72x8xf32> -> vector<4x72x8xf32>
    %209 = vector.extract_strided_slice %208 {offsets = [0, 0, 0], sizes = [4, 24, 8], strides = [1, 1, 1]} : vector<4x72x8xf32> to vector<4x24x8xf32>
    "tpu.trace_start"() <{level = 10 : i32, message = "hst,htd->hsd"}> : () -> ()
    %cst_57 = arith.constant dense<0.000000e+00> : vector<4x24x8xf32>
    %210 = tpu.matmul %60, %209, %cst_57 {dimension_numbers = #tpu.dot_dimension_numbers<[2], [1], [1], [2], [0, 0, 0, 1, 1, 2], [0], [0]>} : vector<4x24x24xf32>, vector<4x24x8xf32>, vector<4x24x8xf32> -> vector<4x24x8xf32>
    "tpu.trace_stop"() : () -> ()
    %211 = vector.extract_strided_slice %210 {offsets = [0, 0, 0], sizes = [1, 24, 8], strides = [1, 1, 1]} : vector<4x24x8xf32> to vector<1x24x8xf32>
    %212 = vector.shape_cast %211 : vector<1x24x8xf32> to vector<24x8xf32>
    %213 = vector.extract_strided_slice %210 {offsets = [1, 0, 0], sizes = [1, 24, 8], strides = [1, 1, 1]} : vector<4x24x8xf32> to vector<1x24x8xf32>
    %214 = vector.shape_cast %213 : vector<1x24x8xf32> to vector<24x8xf32>
    %215 = vector.extract_strided_slice %210 {offsets = [2, 0, 0], sizes = [1, 24, 8], strides = [1, 1, 1]} : vector<4x24x8xf32> to vector<1x24x8xf32>
    %216 = vector.shape_cast %215 : vector<1x24x8xf32> to vector<24x8xf32>
    %217 = vector.extract_strided_slice %210 {offsets = [3, 0, 0], sizes = [1, 24, 8], strides = [1, 1, 1]} : vector<4x24x8xf32> to vector<1x24x8xf32>
    %218 = vector.shape_cast %217 : vector<1x24x8xf32> to vector<24x8xf32>
    %219 = tpu.concatenate %212, %214, %216, %218 in 1 : vector<24x8xf32>, vector<24x8xf32>, vector<24x8xf32>, vector<24x8xf32> -> vector<24x32xf32>
    %220 = vector.extract_strided_slice %208 {offsets = [0, 24, 0], sizes = [4, 24, 8], strides = [1, 1, 1]} : vector<4x72x8xf32> to vector<4x24x8xf32>
    "tpu.trace_start"() <{level = 10 : i32, message = "hst,htd->hsd"}> : () -> ()
    %cst_58 = arith.constant dense<0.000000e+00> : vector<4x24x8xf32>
    %221 = tpu.matmul %113, %220, %cst_58 {dimension_numbers = #tpu.dot_dimension_numbers<[2], [1], [1], [2], [0, 0, 0, 1, 1, 2], [0], [0]>} : vector<4x24x24xf32>, vector<4x24x8xf32>, vector<4x24x8xf32> -> vector<4x24x8xf32>
    "tpu.trace_stop"() : () -> ()
    %222 = vector.extract_strided_slice %221 {offsets = [0, 0, 0], sizes = [1, 24, 8], strides = [1, 1, 1]} : vector<4x24x8xf32> to vector<1x24x8xf32>
    %223 = vector.shape_cast %222 : vector<1x24x8xf32> to vector<24x8xf32>
    %224 = vector.extract_strided_slice %221 {offsets = [1, 0, 0], sizes = [1, 24, 8], strides = [1, 1, 1]} : vector<4x24x8xf32> to vector<1x24x8xf32>
    %225 = vector.shape_cast %224 : vector<1x24x8xf32> to vector<24x8xf32>
    %226 = vector.extract_strided_slice %221 {offsets = [2, 0, 0], sizes = [1, 24, 8], strides = [1, 1, 1]} : vector<4x24x8xf32> to vector<1x24x8xf32>
    %227 = vector.shape_cast %226 : vector<1x24x8xf32> to vector<24x8xf32>
    %228 = vector.extract_strided_slice %221 {offsets = [3, 0, 0], sizes = [1, 24, 8], strides = [1, 1, 1]} : vector<4x24x8xf32> to vector<1x24x8xf32>
    %229 = vector.shape_cast %228 : vector<1x24x8xf32> to vector<24x8xf32>
    %230 = tpu.concatenate %223, %225, %227, %229 in 1 : vector<24x8xf32>, vector<24x8xf32>, vector<24x8xf32>, vector<24x8xf32> -> vector<24x32xf32>
    %231 = vector.extract_strided_slice %208 {offsets = [0, 48, 0], sizes = [4, 24, 8], strides = [1, 1, 1]} : vector<4x72x8xf32> to vector<4x24x8xf32>
    "tpu.trace_start"() <{level = 10 : i32, message = "hst,htd->hsd"}> : () -> ()
    %cst_59 = arith.constant dense<0.000000e+00> : vector<4x24x8xf32>
    %232 = tpu.matmul %166, %231, %cst_59 {dimension_numbers = #tpu.dot_dimension_numbers<[2], [1], [1], [2], [0, 0, 0, 1, 1, 2], [0], [0]>} : vector<4x24x24xf32>, vector<4x24x8xf32>, vector<4x24x8xf32> -> vector<4x24x8xf32>
    "tpu.trace_stop"() : () -> ()
    %233 = vector.extract_strided_slice %232 {offsets = [0, 0, 0], sizes = [1, 24, 8], strides = [1, 1, 1]} : vector<4x24x8xf32> to vector<1x24x8xf32>
    %234 = vector.shape_cast %233 : vector<1x24x8xf32> to vector<24x8xf32>
    %235 = vector.extract_strided_slice %232 {offsets = [1, 0, 0], sizes = [1, 24, 8], strides = [1, 1, 1]} : vector<4x24x8xf32> to vector<1x24x8xf32>
    %236 = vector.shape_cast %235 : vector<1x24x8xf32> to vector<24x8xf32>
    %237 = vector.extract_strided_slice %232 {offsets = [2, 0, 0], sizes = [1, 24, 8], strides = [1, 1, 1]} : vector<4x24x8xf32> to vector<1x24x8xf32>
    %238 = vector.shape_cast %237 : vector<1x24x8xf32> to vector<24x8xf32>
    %239 = vector.extract_strided_slice %232 {offsets = [3, 0, 0], sizes = [1, 24, 8], strides = [1, 1, 1]} : vector<4x24x8xf32> to vector<1x24x8xf32>
    %240 = vector.shape_cast %239 : vector<1x24x8xf32> to vector<24x8xf32>
    %241 = tpu.concatenate %234, %236, %238, %240 in 1 : vector<24x8xf32>, vector<24x8xf32>, vector<24x8xf32>, vector<24x8xf32> -> vector<24x32xf32>
    %242 = tpu.concatenate %219, %230, %241 in 0 : vector<24x32xf32>, vector<24x32xf32>, vector<24x32xf32> -> vector<72x32xf32>
    %c0_60 = arith.constant 0 : index
    %c0_61 = arith.constant 0 : index
    %243 = vector.load %arg4[%c0_60, %c0_61] : memref<32x32xf32, #tpu.memory_space<vmem>>, vector<32x32xf32>
    %cst_62 = arith.constant dense<0.000000e+00> : vector<72x32xf32>
    %244 = tpu.matmul %242, %243, %cst_62 {dimension_numbers = #tpu.dot_dimension_numbers<[1], [0], [0], [1], [0, 0, 1, 1], [], []>} : vector<72x32xf32>, vector<32x32xf32>, vector<72x32xf32> -> vector<72x32xf32>
    %245 = vector.broadcast %4 : vector<1x32xf32> to vector<72x32xf32>
    %246 = arith.addf %244, %245 : vector<72x32xf32>
    %cst_63 = arith.constant dense<0.000000e+00> : vector<72xf32>
    %247 = vector.multi_reduction <add>, %246, %cst_63 [1] : vector<72x32xf32> to vector<72xf32>
    %248 = vector.shape_cast %247 : vector<72xf32> to vector<72x1xf32>
    %cst_64 = arith.constant 3.200000e+01 : f32
    %249 = vector.broadcast %cst_64 : f32 to vector<72x1xf32>
    %250 = arith.divf %248, %249 : vector<72x1xf32>
    %251 = vector.broadcast %250 : vector<72x1xf32> to vector<72x32xf32>
    %252 = arith.subf %246, %251 : vector<72x32xf32>
    %253 = arith.mulf %252, %252 : vector<72x32xf32>
    %cst_65 = arith.constant dense<0.000000e+00> : vector<72xf32>
    %254 = vector.multi_reduction <add>, %253, %cst_65 [1] : vector<72x32xf32> to vector<72xf32>
    %255 = vector.shape_cast %254 : vector<72xf32> to vector<72x1xf32>
    %cst_66 = arith.constant 3.200000e+01 : f32
    %256 = vector.broadcast %cst_66 : f32 to vector<72x1xf32>
    %257 = arith.divf %255, %256 : vector<72x1xf32>
    %258 = vector.broadcast %250 : vector<72x1xf32> to vector<72x32xf32>
    %259 = arith.subf %246, %258 : vector<72x32xf32>
    %cst_67 = arith.constant 9.99999974E-6 : f32
    %260 = vector.broadcast %cst_67 : f32 to vector<72x1xf32>
    %261 = arith.addf %257, %260 : vector<72x1xf32>
    %262 = math.rsqrt %261 : vector<72x1xf32>
    %263 = vector.broadcast %262 : vector<72x1xf32> to vector<72x32xf32>
    %264 = arith.mulf %259, %263 : vector<72x32xf32>
    %265 = vector.broadcast %5 : vector<1x32xf32> to vector<72x32xf32>
    %266 = arith.mulf %264, %265 : vector<72x32xf32>
    %267 = vector.broadcast %6 : vector<1x32xf32> to vector<72x32xf32>
    %268 = arith.addf %266, %267 : vector<72x32xf32>
    %c0_68 = arith.constant 0 : index
    %c0_69 = arith.constant 0 : index
    %269 = vector.load %arg5[%c0_68, %c0_69] : memref<32x16xf32, #tpu.memory_space<vmem>>, vector<32x16xf32>
    %cst_70 = arith.constant dense<0.000000e+00> : vector<72x16xf32>
    %270 = tpu.matmul %268, %269, %cst_70 {dimension_numbers = #tpu.dot_dimension_numbers<[1], [0], [0], [1], [0, 0, 1, 1], [], []>} : vector<72x32xf32>, vector<32x16xf32>, vector<72x16xf32> -> vector<72x16xf32>
    %c0_71 = arith.constant 0 : index
    %c0_72 = arith.constant 0 : index
    %271 = vector.load %arg7[%c0_71, %c0_72] : memref<72x16xf32, #tpu.memory_space<vmem>>, vector<72x16xf32>
    tpu.vector_store %arg7[%c0_71, %c0_72], %270 {strides = array<i32>} : memref<72x16xf32, #tpu.memory_space<vmem>>, vector<72x16xf32>,
    %272 = arith.mulf %270, %270 : vector<72x16xf32>
    %cst_73 = arith.constant dense<0.000000e+00> : vector<72xf32>
    %273 = vector.multi_reduction <add>, %272, %cst_73 [1] : vector<72x16xf32> to vector<72xf32>
    %274 = vector.shape_cast %273 : vector<72xf32> to vector<72x1xf32>
    %cst_74 = arith.constant 9.99999996E-13 : f32
    %275 = vector.broadcast %cst_74 : f32 to vector<72x1xf32>
    %276 = arith.maximumf %274, %275 : vector<72x1xf32>
    %277 = math.rsqrt %276 : vector<72x1xf32>
    %278 = vector.broadcast %277 : vector<72x1xf32> to vector<72x16xf32>
    %279 = arith.mulf %270, %278 : vector<72x16xf32>
    %c0_75 = arith.constant 0 : index
    %c0_76 = arith.constant 0 : index
    %280 = vector.load %arg6[%c0_75, %c0_76] : memref<16x6xf32, #tpu.memory_space<vmem>>, vector<16x6xf32>
    %cst_77 = arith.constant dense<0.000000e+00> : vector<72x6xf32>
    %281 = tpu.matmul %279, %280, %cst_77 {dimension_numbers = #tpu.dot_dimension_numbers<[1], [0], [0], [1], [0, 0, 1, 1], [], []>} : vector<72x16xf32>, vector<16x6xf32>, vector<72x6xf32> -> vector<72x6xf32>
    %cst_78 = arith.constant 1.000000e+02 : f32
    %282 = vector.broadcast %cst_78 : f32 to vector<72x6xf32>
    %283 = arith.mulf %282, %281 : vector<72x6xf32>
    %cst_79 = arith.constant dense<0xFF800000> : vector<72xf32>
    %284 = vector.multi_reduction <maximumf>, %283, %cst_79 [1] : vector<72x6xf32> to vector<72xf32>
    %285 = vector.shape_cast %284 : vector<72xf32> to vector<72x1xf32>
    %286 = vector.broadcast %285 : vector<72x1xf32> to vector<72x6xf32>
    %287 = arith.subf %283, %286 : vector<72x6xf32>
    %288 = math.exp %287 : vector<72x6xf32>
    %cst_80 = arith.constant dense<0.000000e+00> : vector<72xf32>
    %289 = vector.multi_reduction <add>, %288, %cst_80 [1] : vector<72x6xf32> to vector<72xf32>
    %290 = vector.shape_cast %289 : vector<72xf32> to vector<72x1xf32>
    %291 = tpu.reciprocal %290 {approx = true} : vector<72x1xf32> -> vector<72x1xf32>
    %292 = vector.broadcast %291 : vector<72x1xf32> to vector<72x6xf32>
    %293 = arith.mulf %288, %292 : vector<72x6xf32>
    %294 = vector.extract_strided_slice %293 {offsets = [1, 0], sizes = [16, 3], strides = [1, 1]} : vector<72x6xf32> to vector<16x3xf32>
    %295 = vector.extract_strided_slice %293 {offsets = [25, 0], sizes = [16, 3], strides = [1, 1]} : vector<72x6xf32> to vector<16x3xf32>
    %296 = vector.extract_strided_slice %293 {offsets = [49, 0], sizes = [16, 3], strides = [1, 1]} : vector<72x6xf32> to vector<16x3xf32>
    %cst_81 = arith.constant dense<0xFF800000> : vector<3xf32>
    %297 = vector.multi_reduction <maximumf>, %296, %cst_81 [0] : vector<16x3xf32> to vector<3xf32>
    %298 = vector.shape_cast %297 : vector<3xf32> to vector<1x3xf32>
    %cst_82 = arith.constant 2.000000e-01 : f32
    %299 = vector.broadcast %cst_82 : f32 to vector<1x3xf32>
    %300 = arith.mulf %298, %299 : vector<1x3xf32>
    %301 = vector.broadcast %300 : vector<1x3xf32> to vector<16x3xf32>
    %302 = arith.cmpf olt, %296, %301 : vector<16x3xf32>
    %cst_83 = arith.constant 0.000000e+00 : f32
    %303 = vector.broadcast %cst_83 : f32 to vector<16x3xf32>
    %304 = arith.select %302, %303, %296 : vector<16x3xi1>, vector<16x3xf32>
    %305 = arith.addf %294, %295 : vector<16x3xf32>
    %cst_84 = arith.constant 5.000000e-01 : f32
    %306 = vector.broadcast %cst_84 : f32 to vector<16x3xf32>
    %307 = arith.mulf %305, %306 : vector<16x3xf32>
    %cst_85 = arith.constant dense<0.000000e+00> : vector<24x24xf32>
    %308 = vector.multi_reduction <add>, %166, %cst_85 [0] : vector<4x24x24xf32> to vector<24x24xf32>
    %cst_86 = arith.constant 4.000000e+00 : f32
    %309 = vector.broadcast %cst_86 : f32 to vector<24x24xf32>
    %310 = arith.divf %308, %309 : vector<24x24xf32>
    %311 = vector.extract_strided_slice %310 {offsets = [1, 1], sizes = [16, 16], strides = [1, 1]} : vector<24x24xf32> to vector<16x16xf32>
    %c0_87 = arith.constant 0 : index
    %c0_88 = arith.constant 0 : index
    %312 = vector.load %arg9[%c0_87, %c0_88] : memref<16x16xf32, #tpu.memory_space<vmem>>, vector<16x16xf32>
    tpu.vector_store %arg9[%c0_87, %c0_88], %311 {strides = array<i32>} : memref<16x16xf32, #tpu.memory_space<vmem>>, vector<16x16xf32>,
    %cst_89 = arith.constant dense<0.000000e+00> : vector<16x3xf32>
    %313 = tpu.matmul %311, %304, %cst_89 {dimension_numbers = #tpu.dot_dimension_numbers<[1], [0], [0], [1], [0, 0, 1, 1], [], []>} : vector<16x16xf32>, vector<16x3xf32>, vector<16x3xf32> -> vector<16x3xf32>
    %314 = arith.addf %313, %307 : vector<16x3xf32>
    %c0_90 = arith.constant 0 : index
    %c0_91 = arith.constant 0 : index
    %315 = vector.load %arg8[%c0_90, %c0_91] : memref<16x3xf32, #tpu.memory_space<vmem>>, vector<16x3xf32>
    tpu.vector_store %arg8[%c0_90, %c0_91], %314 {strides = array<i32>} : memref<16x3xf32, #tpu.memory_space<vmem>>, vector<16x3xf32>,
    return
  }
}

</mosaic_0001>

<llo_original>
// kernel: _forward.2
$region0: #{_forward.2}
  #allocation0 [shape = 'u32[]', space=smem, size = 0x4, offset = 0x4, fixed_abs, tag = 'smem constant byte address 0x4 - core index']
  #allocation1 [shape = 'u32[144,128]{1,0:T(1,128)}', space=vmem, size = 0x12000, scoped, tag = 'internal scratch']
  #allocation2 [shape = 'f32[24,32]{1,0:T(8,128)}', space=vmem, size = 0x3000, scoped, tag = 'scratch operand']
  %s0 = inlined_call_operand.vmem [shape: f32[24,48], index: 0, kind: input, shape index: {}]
  %s1 = inlined_call_operand.vmem [shape: f32[48,32], index: 1, kind: input, shape index: {}]
  %s2 = inlined_call_operand.vmem [shape: f32[24,32], index: 2, kind: input, shape index: {}]
  %s3 = inlined_call_operand.vmem [shape: f32[2,32], index: 3, kind: input, shape index: {}]
  %s4 = inlined_call_operand.vmem [shape: f32[2,32,96], index: 4, kind: input, shape index: {}]
  %s5 = inlined_call_operand.vmem [shape: f32[2,32,32], index: 5, kind: input, shape index: {}]
  %s6 = inlined_call_operand.vmem [shape: f32[2,32,128], index: 6, kind: input, shape index: {}]
  %s7 = inlined_call_operand.vmem [shape: f32[2,128,32], index: 7, kind: input, shape index: {}]
  %s8 = inlined_call_operand.vmem [shape: f32[2,6,32], index: 8, kind: input, shape index: {}]
  %s9 = inlined_call_operand.vmem [shape: f32[2,1,96], index: 9, kind: input, shape index: {}]
  %s10 = inlined_call_operand.vmem [shape: f32[2,1,128], index: 10, kind: input, shape index: {}]
  %s11 = inlined_call_operand.vmem [shape: f32[3,24,32], index: 11, kind: output, shape index: {0}]
  %s12 = inlined_call_operand.vmem [shape: f32[4,24,24], index: 12, kind: output, shape index: {1}]
  %13 = xla_tuple %s11, %s12
  %s14 = sld [smem:[#allocation0]]
  $region93: #{_forward.2} parent=0
    _
  %s16 = ssub.s32 1, %s14
  %s17 = scalar_select 0, %s16, %s14
  loop: start=0, step=1, limit=4
  $region2: #{_forward.2} parent=0 // loop_pre_header
    _
  $region3: #{_forward.2} parent=0 // loop_header
    %s19 = sphi 0, %s23
    %p20 = scmp.ge.s32.totalorder %s19, 4
    %s27 = sphi 0, %s27
    %s29 = sphi 0, %s27
    %s30 = sphi 0, %s29
    %s44 = sphi 0, %s30
    %s48 = sphi 0, %s48
    %s50 = sphi 0, %s48
    %s51 = sphi 0, %s50
    %s65 = sphi 0, %s51
    %s69 = sphi 0, %s69
    %s71 = sphi 0, %s69
    %s72 = sphi 0, %s71
    %s86 = sphi 0, %s72
    %s90 = sphi 0, %s90
    %s92 = sphi 0, %s90
    %s93 = sphi 0, %s92
    %s107 = sphi 0, %s93
    %s113 = sphi 0, %s115
    %s116 = sphi 0, %s113
    %s117 = sphi 0, %s116
    %s133 = sphi 0, %s117
    %s139 = sphi 0, %s141
    %s142 = sphi 0, %s139
    %s143 = sphi 0, %s142
    %s159 = sphi 0, %s143
    %s165 = sphi 0, %s167
    %s168 = sphi 0, %s165
    %s169 = sphi 0, %s168
    %s185 = sphi 0, %s169
    %s191 = sphi 0, %s193
    %s194 = sphi 0, %s191
    %s195 = sphi 0, %s194
    %s211 = sphi 0, %s195
    %s217 = sphi 0, %s219
    %s220 = sphi 0, %s217
    %s221 = sphi 0, %s220
    %s237 = sphi 0, %s221
    %s243 = sphi 0, %s245
    %s246 = sphi 0, %s243
    %s247 = sphi 0, %s246
    %s263 = sphi 0, %s247
    %s269 = sphi 0, %s271
    %s272 = sphi 0, %s269
    %s273 = sphi 0, %s272
    %s289 = sphi 0, %s273
    %s293 = sphi 0, %s293
    %s295 = sphi 0, %s293
    %s296 = sphi 0, %s295
    %s310 = sphi 0, %s296
    %s314 = sphi 0, %s314
    %s316 = sphi 0, %s314
    %s317 = sphi 0, %s316
    %s331 = sphi 0, %s317
  $region4: #{_forward.2} parent=0 // loop_header_branch
    %22 = sbr.rel (%p20) target = $region8
  $region5: #{_forward.2} parent=0 // loop_body
    %s24 = ssub.s32 %s19, 1
    %s25 = ssub.s32 %s19, 2
    %s26 = sadd.s32 %s19, 1
    %s28 = sadd.s32 %s27, 1
    %p31 = scmp.eq.s32.totalorder %s19, 1
    %p32 = scmp.ne.s32.totalorder %s27, %s29
    %p33 = scmp.eq.s32.totalorder %s19, 0
    %p34 = por %p32, %p33
    %p35 = scmp.ne.s32.totalorder %s27, %s29
    %p36 = scmp.eq.s32.totalorder %s24, 1
    %p37 = por %p35, %p36
    %p38 = scmp.ne.s32.totalorder %s29, %s30
    %p39 = scmp.eq.s32.totalorder %s24, 0
    %p40 = por %p38, %p39
    %p41 = scmp.ne.s32.totalorder %s29, %s30
    %p42 = scmp.eq.s32.totalorder %s25, 1
    %p43 = por %p41, %p42
    %p45 = scmp.ne.s32.totalorder %s30, %s44
    %p46 = scmp.eq.s32.totalorder %s25, 0
    %p47 = por %p45, %p46
    %s49 = sadd.s32 %s48, 1
    %p52 = scmp.eq.s32.totalorder %s19, 1
    %p53 = scmp.ne.s32.totalorder %s48, %s50
    %p54 = scmp.eq.s32.totalorder %s19, 0
    %p55 = por %p53, %p54
    %p56 = scmp.ne.s32.totalorder %s48, %s50
    %p57 = scmp.eq.s32.totalorder %s24, 1
    %p58 = por %p56, %p57
    %p59 = scmp.ne.s32.totalorder %s50, %s51
    %p60 = scmp.eq.s32.totalorder %s24, 0
    %p61 = por %p59, %p60
    %p62 = scmp.ne.s32.totalorder %s50, %s51
    %p63 = scmp.eq.s32.totalorder %s25, 1
    %p64 = por %p62, %p63
    %p66 = scmp.ne.s32.totalorder %s51, %s65
    %p67 = scmp.eq.s32.totalorder %s25, 0
    %p68 = por %p66, %p67
    %s70 = sadd.s32 %s69, 1
    %p73 = scmp.eq.s32.totalorder %s19, 1
    %p74 = scmp.ne.s32.totalorder %s69, %s71
    %p75 = scmp.eq.s32.totalorder %s19, 0
    %p76 = por %p74, %p75
    %p77 = scmp.ne.s32.totalorder %s69, %s71
    %p78 = scmp.eq.s32.totalorder %s24, 1
    %p79 = por %p77, %p78
    %p80 = scmp.ne.s32.totalorder %s71, %s72
    %p81 = scmp.eq.s32.totalorder %s24, 0
    %p82 = por %p80, %p81
    %p83 = scmp.ne.s32.totalorder %s71, %s72
    %p84 = scmp.eq.s32.totalorder %s25, 1
    %p85 = por %p83, %p84
    %p87 = scmp.ne.s32.totalorder %s72, %s86
    %p88 = scmp.eq.s32.totalorder %s25, 0
    %p89 = por %p87, %p88
    %s91 = sadd.s32 %s90, 1
    %p94 = scmp.eq.s32.totalorder %s19, 1
    %p95 = scmp.ne.s32.totalorder %s90, %s92
    %p96 = scmp.eq.s32.totalorder %s19, 0
    %p97 = por %p95, %p96
    %p98 = scmp.ne.s32.totalorder %s90, %s92
    %p99 = scmp.eq.s32.totalorder %s24, 1
    %p100 = por %p98, %p99
    %p101 = scmp.ne.s32.totalorder %s92, %s93
    %p102 = scmp.eq.s32.totalorder %s24, 0
    %p103 = por %p101, %p102
    %p104 = scmp.ne.s32.totalorder %s92, %s93
    %p105 = scmp.eq.s32.totalorder %s25, 1
    %p106 = por %p104, %p105
    %p108 = scmp.ne.s32.totalorder %s93, %s107
    %p109 = scmp.eq.s32.totalorder %s25, 0
    %p110 = por %p108, %p109
    %s111 = ssub.s32 %s19, %s26
    %p112 = scmp.eq.s32.totalorder %s111, 0
    %s114 = sadd.s32 %s113, 1
    %s115 = scalar_select %p112, %s113, %s114
    %p118 = pneg %p112
    %p119 = scmp.eq.s32.totalorder %s19, 1
    %p120 = por %p118, %p119
    %p121 = scmp.ne.s32.totalorder %s113, %s116
    %p122 = scmp.eq.s32.totalorder %s19, 0
    %p123 = por %p121, %p122
    %p124 = scmp.ne.s32.totalorder %s113, %s116
    %p125 = scmp.eq.s32.totalorder %s24, 1
    %p126 = por %p124, %p125
    %p127 = scmp.ne.s32.totalorder %s116, %s117
    %p128 = scmp.eq.s32.totalorder %s24, 0
    %p129 = por %p127, %p128
    %p130 = scmp.ne.s32.totalorder %s116, %s117
    %p131 = scmp.eq.s32.totalorder %s25, 1
    %p132 = por %p130, %p131
    %p134 = scmp.ne.s32.totalorder %s117, %s133
    %p135 = scmp.eq.s32.totalorder %s25, 0
    %p136 = por %p134, %p135
    %s137 = ssub.s32 %s19, %s26
    %p138 = scmp.eq.s32.totalorder %s137, 0
    %s140 = sadd.s32 %s139, 1
    %s141 = scalar_select %p138, %s139, %s140
    %p144 = pneg %p138
    %p145 = scmp.eq.s32.totalorder %s19, 1
    %p146 = por %p144, %p145
    %p147 = scmp.ne.s32.totalorder %s139, %s142
    %p148 = scmp.eq.s32.totalorder %s19, 0
    %p149 = por %p147, %p148
    %p150 = scmp.ne.s32.totalorder %s139, %s142
    %p151 = scmp.eq.s32.totalorder %s24, 1
    %p152 = por %p150, %p151
    %p153 = scmp.ne.s32.totalorder %s142, %s143
    %p154 = scmp.eq.s32.totalorder %s24, 0
    %p155 = por %p153, %p154
    %p156 = scmp.ne.s32.totalorder %s142, %s143
    %p157 = scmp.eq.s32.totalorder %s25, 1
    %p158 = por %p156, %p157
    %p160 = scmp.ne.s32.totalorder %s143, %s159
    %p161 = scmp.eq.s32.totalorder %s25, 0
    %p162 = por %p160, %p161
    %s163 = ssub.s32 %s19, %s26
    %p164 = scmp.eq.s32.totalorder %s163, 0
    %s166 = sadd.s32 %s165, 1
    %s167 = scalar_select %p164, %s165, %s166
    %p170 = pneg %p164
    %p171 = scmp.eq.s32.totalorder %s19, 1
    %p172 = por %p170, %p171
    %p173 = scmp.ne.s32.totalorder %s165, %s168
    %p174 = scmp.eq.s32.totalorder %s19, 0
    %p175 = por %p173, %p174
    %p176 = scmp.ne.s32.totalorder %s165, %s168
    %p177 = scmp.eq.s32.totalorder %s24, 1
    %p178 = por %p176, %p177
    %p179 = scmp.ne.s32.totalorder %s168, %s169
    %p180 = scmp.eq.s32.totalorder %s24, 0
    %p181 = por %p179, %p180
    %p182 = scmp.ne.s32.totalorder %s168, %s169
    %p183 = scmp.eq.s32.totalorder %s25, 1
    %p184 = por %p182, %p183
    %p186 = scmp.ne.s32.totalorder %s169, %s185
    %p187 = scmp.eq.s32.totalorder %s25, 0
    %p188 = por %p186, %p187
    %s189 = ssub.s32 %s19, %s26
    %p190 = scmp.eq.s32.totalorder %s189, 0
    %s192 = sadd.s32 %s191, 1
    %s193 = scalar_select %p190, %s191, %s192
    %p196 = pneg %p190
    %p197 = scmp.eq.s32.totalorder %s19, 1
    %p198 = por %p196, %p197
    %p199 = scmp.ne.s32.totalorder %s191, %s194
    %p200 = scmp.eq.s32.totalorder %s19, 0
    %p201 = por %p199, %p200
    %p202 = scmp.ne.s32.totalorder %s191, %s194
    %p203 = scmp.eq.s32.totalorder %s24, 1
    %p204 = por %p202, %p203
    %p205 = scmp.ne.s32.totalorder %s194, %s195
    %p206 = scmp.eq.s32.totalorder %s24, 0
    %p207 = por %p205, %p206
    %p208 = scmp.ne.s32.totalorder %s194, %s195
    %p209 = scmp.eq.s32.totalorder %s25, 1
    %p210 = por %p208, %p209
    %p212 = scmp.ne.s32.totalorder %s195, %s211
    %p213 = scmp.eq.s32.totalorder %s25, 0
    %p214 = por %p212, %p213
    %s215 = ssub.s32 %s19, %s26
    %p216 = scmp.eq.s32.totalorder %s215, 0
    %s218 = sadd.s32 %s217, 1
    %s219 = scalar_select %p216, %s217, %s218
    %p222 = pneg %p216
    %p223 = scmp.eq.s32.totalorder %s19, 1
    %p224 = por %p222, %p223
    %p225 = scmp.ne.s32.totalorder %s217, %s220
    %p226 = scmp.eq.s32.totalorder %s19, 0
    %p227 = por %p225, %p226
    %p228 = scmp.ne.s32.totalorder %s217, %s220
    %p229 = scmp.eq.s32.totalorder %s24, 1
    %p230 = por %p228, %p229
    %p231 = scmp.ne.s32.totalorder %s220, %s221
    %p232 = scmp.eq.s32.totalorder %s24, 0
    %p233 = por %p231, %p232
    %p234 = scmp.ne.s32.totalorder %s220, %s221
    %p235 = scmp.eq.s32.totalorder %s25, 1
    %p236 = por %p234, %p235
    %p238 = scmp.ne.s32.totalorder %s221, %s237
    %p239 = scmp.eq.s32.totalorder %s25, 0
    %p240 = por %p238, %p239
    %s241 = ssub.s32 %s19, %s26
    %p242 = scmp.eq.s32.totalorder %s241, 0
    %s244 = sadd.s32 %s243, 1
    %s245 = scalar_select %p242, %s243, %s244
    %p248 = pneg %p242
    %p249 = scmp.eq.s32.totalorder %s19, 1
    %p250 = por %p248, %p249
    %p251 = scmp.ne.s32.totalorder %s243, %s246
    %p252 = scmp.eq.s32.totalorder %s19, 0
    %p253 = por %p251, %p252
    %p254 = scmp.ne.s32.totalorder %s243, %s246
    %p255 = scmp.eq.s32.totalorder %s24, 1
    %p256 = por %p254, %p255
    %p257 = scmp.ne.s32.totalorder %s246, %s247
    %p258 = scmp.eq.s32.totalorder %s24, 0
    %p259 = por %p257, %p258
    %p260 = scmp.ne.s32.totalorder %s246, %s247
    %p261 = scmp.eq.s32.totalorder %s25, 1
    %p262 = por %p260, %p261
    %p264 = scmp.ne.s32.totalorder %s247, %s263
    %p265 = scmp.eq.s32.totalorder %s25, 0
    %p266 = por %p264, %p265
    %s267 = ssub.s32 %s19, %s26
    %p268 = scmp.eq.s32.totalorder %s267, 0
    %s270 = sadd.s32 %s269, 1
    %s271 = scalar_select %p268, %s269, %s270
    %p274 = pneg %p268
    %p275 = scmp.eq.s32.totalorder %s19, 1
    %p276 = por %p274, %p275
    %p277 = scmp.ne.s32.totalorder %s269, %s272
    %p278 = scmp.eq.s32.totalorder %s19, 0
    %p279 = por %p277, %p278
    %p280 = scmp.ne.s32.totalorder %s269, %s272
    %p281 = scmp.eq.s32.totalorder %s24, 1
    %p282 = por %p280, %p281
    %p283 = scmp.ne.s32.totalorder %s272, %s273
    %p284 = scmp.eq.s32.totalorder %s24, 0
    %p285 = por %p283, %p284
    %p286 = scmp.ne.s32.totalorder %s272, %s273
    %p287 = scmp.eq.s32.totalorder %s25, 1
    %p288 = por %p286, %p287
    %p290 = scmp.ne.s32.totalorder %s273, %s289
    %p291 = scmp.eq.s32.totalorder %s25, 0
    %p292 = por %p290, %p291
    %s294 = sadd.s32 %s293, 1
    %p297 = scmp.eq.s32.totalorder %s19, 1
    %p298 = scmp.ne.s32.totalorder %s293, %s295
    %p299 = scmp.eq.s32.totalorder %s19, 0
    %p300 = por %p298, %p299
    %p301 = scmp.ne.s32.totalorder %s293, %s295
    %p302 = scmp.eq.s32.totalorder %s24, 1
    %p303 = por %p301, %p302
    %p304 = scmp.ne.s32.totalorder %s295, %s296
    %p305 = scmp.eq.s32.totalorder %s24, 0
    %p306 = por %p304, %p305
    %p307 = scmp.ne.s32.totalorder %s295, %s296
    %p308 = scmp.eq.s32.totalorder %s25, 1
    %p309 = por %p307, %p308
    %p311 = scmp.ne.s32.totalorder %s296, %s310
    %p312 = scmp.eq.s32.totalorder %s25, 0
    %p313 = por %p311, %p312
    %s315 = sadd.s32 %s314, 1
    %p318 = scmp.eq.s32.totalorder %s19, 1
    %p319 = scmp.ne.s32.totalorder %s314, %s316
    %p320 = scmp.eq.s32.totalorder %s19, 0
    %p321 = por %p319, %p320
    %p322 = scmp.ne.s32.totalorder %s314, %s316
    %p323 = scmp.eq.s32.totalorder %s24, 1
    %p324 = por %p322, %p323
    %p325 = scmp.ne.s32.totalorder %s316, %s317
    %p326 = scmp.eq.s32.totalorder %s24, 0
    %p327 = por %p325, %p326
    %p328 = scmp.ne.s32.totalorder %s316, %s317
    %p329 = scmp.eq.s32.totalorder %s25, 1
    %p330 = por %p328, %p329
    %p332 = scmp.ne.s32.totalorder %s317, %s331
    %p333 = scmp.eq.s32.totalorder %s25, 0
    %p334 = por %p332, %p333
    %p335 = scmp.le.s32.totalorder 1, %s19
    %p336 = scmp.lt.s32.totalorder %s19, 3
    %p337 = pnand %p335, %p336
    %p338 = pneg %p337
    // Predicated region
    $region9: #{_forward.2} parent=5 // pred_check
      _
    $region10: #{_forward.2} parent=5 // pred_check_branch
      %340 = sbr.rel (%p337) target = $region12
    $region11: #{_forward.2} parent=5 // pred_region
      %s341 = ssub.s32 %s19, 1
      // Predicated region
      $region13: #{_forward.2} parent=11 // pred_check
        %p342 = pneg %p40
      $region14: #{_forward.2} parent=11 // pred_check_branch
        %344 = sbr.rel (%p342) target = $region16
      $region15: #{_forward.2} parent=11 // pred_region
        _
      $region16: #{_forward.2} parent=11 // pred_fallthru
        _
      // Predicated region
      $region17: #{_forward.2} parent=11 // pred_check
        %p345 = pneg %p61
      $region18: #{_forward.2} parent=11 // pred_check_branch
        %347 = sbr.rel (%p345) target = $region20
      $region19: #{_forward.2} parent=11 // pred_region
        _
      $region20: #{_forward.2} parent=11 // pred_fallthru
        _
      // Predicated region
      $region21: #{_forward.2} parent=11 // pred_check
        %p348 = pneg %p82
      $region22: #{_forward.2} parent=11 // pred_check_branch
        %350 = sbr.rel (%p348) target = $region24
      $region23: #{_forward.2} parent=11 // pred_region
        _
      $region24: #{_forward.2} parent=11 // pred_fallthru
        _
      // Predicated region
      $region25: #{_forward.2} parent=11 // pred_check
        %p351 = pneg %p103
      $region26: #{_forward.2} parent=11 // pred_check_branch
        %353 = sbr.rel (%p351) target = $region28
      $region27: #{_forward.2} parent=11 // pred_region
        _
      $region28: #{_forward.2} parent=11 // pred_fallthru
        _
    $region12: #{_forward.2} parent=5 // pred_fallthru
      _
    %p354 = scmp.lt.s32.totalorder %s19, 2
    // Predicated region
    $region29: #{_forward.2} parent=5 // pred_check
      %p355 = pneg %p354
    $region30: #{_forward.2} parent=5 // pred_check_branch
      %357 = sbr.rel (%p355) target = $region32
    $region31: #{_forward.2} parent=5 // pred_region
      // Predicated region
      $region33: #{_forward.2} parent=31 // pred_check
        %p358 = pneg %p123
      $region34: #{_forward.2} parent=31 // pred_check_branch
        %360 = sbr.rel (%p358) target = $region36
      $region35: #{_forward.2} parent=31 // pred_region
        %p361 = scmp.lt.s32.totalorder %s19, 1
        %s362 = scalar_select %p361, %s19, 1
        %s363 = smul.addr %s362, 4
        %s364 = smul.addr %s363, 8
        %s365 = scalar_lea.vmem %s4, %s364
      $region36: #{_forward.2} parent=31 // pred_fallthru
        _
      // Predicated region
      $region37: #{_forward.2} parent=31 // pred_check
        %p366 = pneg %p149
      $region38: #{_forward.2} parent=31 // pred_check_branch
        %368 = sbr.rel (%p366) target = $region40
      $region39: #{_forward.2} parent=31 // pred_region
        %p369 = scmp.lt.s32.totalorder %s19, 1
        %s370 = scalar_select %p369, %s19, 1
        %s371 = smul.addr %s370, 4
        %s372 = smul.addr %s371, 8
        %s373 = scalar_lea.vmem %s5, %s372
      $region40: #{_forward.2} parent=31 // pred_fallthru
        _
      // Predicated region
      $region41: #{_forward.2} parent=31 // pred_check
        %p374 = pneg %p175
      $region42: #{_forward.2} parent=31 // pred_check_branch
        %376 = sbr.rel (%p374) target = $region44
      $region43: #{_forward.2} parent=31 // pred_region
        %p377 = scmp.lt.s32.totalorder %s19, 1
        %s378 = scalar_select %p377, %s19, 1
        %s379 = smul.addr %s378, 4
        %s380 = smul.addr %s379, 8
        %s381 = scalar_lea.vmem %s6, %s380
      $region44: #{_forward.2} parent=31 // pred_fallthru
        _
      // Predicated region
      $region45: #{_forward.2} parent=31 // pred_check
        %p382 = pneg %p201
      $region46: #{_forward.2} parent=31 // pred_check_branch
        %384 = sbr.rel (%p382) target = $region48
      $region47: #{_forward.2} parent=31 // pred_region
        %p385 = scmp.lt.s32.totalorder %s19, 1
        %s386 = scalar_select %p385, %s19, 1
        %s387 = smul.addr %s386, 16
        %s388 = smul.addr %s387, 8
        %s389 = scalar_lea.vmem %s7, %s388
      $region48: #{_forward.2} parent=31 // pred_fallthru
        _
      // Predicated region
      $region49: #{_forward.2} parent=31 // pred_check
        %p390 = pneg %p227
      $region50: #{_forward.2} parent=31 // pred_check_branch
        %392 = sbr.rel (%p390) target = $region52
      $region51: #{_forward.2} parent=31 // pred_region
        %p393 = scmp.lt.s32.totalorder %s19, 1
        %s394 = scalar_select %p393, %s19, 1
        %s395 = smul.addr %s394, 8
        %s396 = scalar_lea.vmem %s8, %s395
      $region52: #{_forward.2} parent=31 // pred_fallthru
        _
      // Predicated region
      $region53: #{_forward.2} parent=31 // pred_check
        %p397 = pneg %p253
      $region54: #{_forward.2} parent=31 // pred_check_branch
        %399 = sbr.rel (%p397) target = $region56
      $region55: #{_forward.2} parent=31 // pred_region
        %p400 = scmp.lt.s32.totalorder %s19, 1
        %s401 = scalar_select %p400, %s19, 1
        %s402 = scalar_lea.vmem %s9, %s401
      $region56: #{_forward.2} parent=31 // pred_fallthru
        _
      // Predicated region
      $region57: #{_forward.2} parent=31 // pred_check
        %p403 = pneg %p279
      $region58: #{_forward.2} parent=31 // pred_check_branch
        %405 = sbr.rel (%p403) target = $region60
      $region59: #{_forward.2} parent=31 // pred_region
        %p406 = scmp.lt.s32.totalorder %s19, 1
        %s407 = scalar_select %p406, %s19, 1
        %s408 = scalar_lea.vmem %s10, %s407
      $region60: #{_forward.2} parent=31 // pred_fallthru
        _
    $region32: #{_forward.2} parent=5 // pred_fallthru
      _
    %p409 = scmp.le.s32.totalorder 1, %s19
    %p410 = scmp.lt.s32.totalorder %s19, 3
    %p411 = pnand %p409, %p410
    %p412 = pneg %p411
    // Predicated region
    $region61: #{_forward.2} parent=5 // pred_check
      _
    $region62: #{_forward.2} parent=5 // pred_check_branch
      %414 = sbr.rel (%p411) target = $region64
    $region63: #{_forward.2} parent=5 // pred_region
      %s415 = ssub.s32 %s19, 1
      %p416 = pneg %p40
      %p417 = pneg %p37
      %p418 = pneg %p61
      %p419 = pneg %p58
      %p420 = pneg %p82
      %p421 = pneg %p79
      %p422 = pneg %p103
      %p423 = pneg %p100
      %p424 = scmp.lt.s32.totalorder %s24, 1
      %s425 = scalar_select %p424, %s24, 1
      %s426 = smul.addr %s425, 4
      %s427 = smul.addr %s426, 8
      %s428 = scalar_lea.vmem %s4, %s427
      %p429 = pneg %p129
      %p430 = pneg %p126
      %p431 = scmp.lt.s32.totalorder %s24, 1
      %s432 = scalar_select %p431, %s24, 1
      %s433 = smul.addr %s432, 4
      %s434 = smul.addr %s433, 8
      %s435 = scalar_lea.vmem %s5, %s434
      %p436 = pneg %p155
      %p437 = pneg %p152
      %p438 = scmp.lt.s32.totalorder %s24, 1
      %s439 = scalar_select %p438, %s24, 1
      %s440 = smul.addr %s439, 4
      %s441 = smul.addr %s440, 8
      %s442 = scalar_lea.vmem %s6, %s441
      %p443 = pneg %p181
      %p444 = pneg %p178
      %p445 = scmp.lt.s32.totalorder %s24, 1
      %s446 = scalar_select %p445, %s24, 1
      %s447 = smul.addr %s446, 16
      %s448 = smul.addr %s447, 8
      %s449 = scalar_lea.vmem %s7, %s448
      %p450 = pneg %p207
      %p451 = pneg %p204
      %p452 = scmp.lt.s32.totalorder %s24, 1
      %s453 = scalar_select %p452, %s24, 1
      %s454 = smul.addr %s453, 8
      %s455 = scalar_lea.vmem %s8, %s454
      %p456 = pneg %p233
      %p457 = pneg %p230
      %p458 = scmp.lt.s32.totalorder %s24, 1
      %s459 = scalar_select %p458, %s24, 1
      %s460 = scalar_lea.vmem %s9, %s459
      %p461 = pneg %p259
      %p462 = pneg %p256
      %p463 = scmp.lt.s32.totalorder %s24, 1
      %s464 = scalar_select %p463, %s24, 1
      %s465 = scalar_lea.vmem %s10, %s464
      %p466 = pneg %p285
      %p467 = pneg %p282
      %p468 = pneg %p306
      %p469 = pneg %p303
      %p470 = pneg %p327
      %p471 = pneg %p324
      %p472 = scmp.lt.s32.totalorder %s24, 1
      %s473 = scalar_select %p472, %s24, 1
      %s474 = smul.addr %s473, 4
      %s475 = smul.addr %s474, 8
      %s476 = scalar_lea.vmem %s4, %s475
      %p477 = scmp.lt.s32.totalorder %s24, 1
      %s478 = scalar_select %p477, %s24, 1
      %s479 = smul.addr %s478, 4
      %s480 = smul.addr %s479, 8
      %s481 = scalar_lea.vmem %s5, %s480
      %p482 = scmp.lt.s32.totalorder %s24, 1
      %s483 = scalar_select %p482, %s24, 1
      %s484 = smul.addr %s483, 4
      %s485 = smul.addr %s484, 8
      %s486 = scalar_lea.vmem %s6, %s485
      %p487 = scmp.lt.s32.totalorder %s24, 1
      %s488 = scalar_select %p487, %s24, 1
      %s489 = smul.addr %s488, 16
      %s490 = smul.addr %s489, 8
      %s491 = scalar_lea.vmem %s7, %s490
      %p492 = scmp.lt.s32.totalorder %s24, 1
      %s493 = scalar_select %p492, %s24, 1
      %s494 = smul.addr %s493, 8
      %s495 = scalar_lea.vmem %s8, %s494
      %p496 = scmp.lt.s32.totalorder %s24, 1
      %s497 = scalar_select %p496, %s24, 1
      %s498 = scalar_lea.vmem %s9, %s497
      %p499 = scmp.lt.s32.totalorder %s24, 1
      %s500 = scalar_select %p499, %s24, 1
      %s501 = scalar_lea.vmem %s10, %s500
      %p502 = scmp.eq.s32.totalorder %s24, 0
      // Predicated region
      $region65: #{_forward.2} parent=63 // pred_check
        %p503 = pneg %p502
      $region66: #{_forward.2} parent=63 // pred_check_branch
        %505 = sbr.rel (%p503) target = $region68
      $region67: #{_forward.2} parent=63 // pred_region
        %v506 = vld [vmem:[%s0] sm:$0xff]
        %v507 = vld [vmem:[%s0 + $0x8] sm:$0xff]
        %v508 = vld [vmem:[%s0 + $0x10] sm:$0xff]
        %v509 = vld [vmem:[%s1] sm:$0xff]
        %v510 = vld [vmem:[%s1 + $0x8] sm:$0xff]
        %v511 = vld [vmem:[%s1 + $0x10] sm:$0xff]
        %v512 = vld [vmem:[%s1 + $0x18] sm:$0xff]
        %v513 = vld [vmem:[%s1 + $0x20] sm:$0xff]
        %v514 = vld [vmem:[%s1 + $0x28] sm:$0xff]
        %v515 = vld [vmem:[%s2] sm:$0xff]
        %v516 = vld [vmem:[%s2 + $0x8] sm:$0xff]
        %v517 = vld [vmem:[%s2 + $0x10] sm:$0xff]
        %vm518 = vcmask 392192
        %v520 = vsel %vm518, %v506, 0
        %v523 = vsel %vm518, %v507, 0
        %v526 = vsel %vm518, %v508, 0
        %528 = vmatprep.subr.mxu0 0.0
        %529 = vmatpush1.msra.mxu0 0.0
        %530 = vmatprep.subr.mxu0 0.0
        %531 = vmatpush1.msra.mxu0 0.0
        %532 = vmatprep.subr.mxu0 0.0
        %533 = vmatpush1.msra.mxu0 0.0
        %534 = vmatprep.subr.mxu0 0.0
        %535 = vmatpush1.msra.mxu0 0.0
        %536 = vmatprep.subr.mxu0 0.0
        %537 = vmatpush1.msra.mxu0 0.0
        %538 = vmatprep.subr.mxu0 0.0
        %539 = vmatpush1.msra.mxu0 0.0
        %540 = vmatprep.subr.mxu0 0.0
        %541 = vmatpush1.msra.mxu0 0.0
        %542 = vmatprep.subr.mxu0 0.0
        %543 = vmatpush1.msra.mxu0 0.0
        %544 = vmatprep.subr.mxu0 0.0
        %545 = vmatpush1.msra.mxu0 0.0
        %546 = vmatprep.subr.mxu0 0.0
        %547 = vmatpush1.msra.mxu0 0.0
        %548 = vmatprep.subr.mxu0 0.0
        %549 = vmatpush1.msra.mxu0 %v514
        %550 = vmatprep.subr.mxu0 0.0
        %551 = vmatpush1.msra.mxu0 %v513
        %552 = vmatprep.subr.mxu0 0.0
        %553 = vmatpush1.msra.mxu0 %v512
        %554 = vmatprep.subr.mxu0 0.0
        %555 = vmatpush1.msra.mxu0 %v511
        %556 = vmatprep.subr.mxu0 0.0
        %557 = vmatpush1.msra.mxu0 %v510
        %558 = vmatprep.subr.mxu0 0.0
        %559 = vmatpush1.msra.mxu0 %v509
        %560 = vmatprep.subr.mxu0 0.0
        %561 = vmatpush2.msra.mxu0 0.0
        %562 = vmatprep.subr.mxu0 0.0
        %563 = vmatpush2.msra.mxu0 0.0
        %564 = vmatprep.subr.mxu0 0.0
        %565 = vmatpush2.msra.mxu0 0.0
        %566 = vmatprep.subr.mxu0 0.0
        %567 = vmatpush2.msra.mxu0 0.0
        %568 = vmatprep.subr.mxu0 0.0
        %569 = vmatpush2.msra.mxu0 0.0
        %570 = vmatprep.subr.mxu0 0.0
        %571 = vmatpush2.msra.mxu0 0.0
        %572 = vmatprep.subr.mxu0 0.0
        %573 = vmatpush2.msra.mxu0 0.0
        %574 = vmatprep.subr.mxu0 0.0
        %575 = vmatpush2.msra.mxu0 0.0
        %576 = vmatprep.subr.mxu0 0.0
        %577 = vmatpush2.msra.mxu0 0.0
        %578 = vmatprep.subr.mxu0 0.0
        %579 = vmatpush2.msra.mxu0 0.0
        %580 = vmatprep.subr.mxu0 0.0
        %581 = vmatpush2.msra.mxu0 0.0
        %582 = vmatprep.subr.mxu0 0.0
        %583 = vmatpush2.msra.mxu0 0.0
        %584 = vmatprep.subr.mxu0 0.0
        %585 = vmatpush2.msra.mxu0 0.0
        %586 = vmatprep.subr.mxu0 0.0
        %587 = vmatpush2.msra.mxu0 0.0
        %588 = vmatprep.subr.mxu0 0.0
        %589 = vmatpush2.msra.mxu0 0.0
        %590 = vmatprep.subr.mxu0 0.0
        %591 = vmatpush2.msra.mxu0 0.0
        %592 = vmatprep.mubr.f32.mxu0 0.0
        %593 = vmatmul.mubr.f32.gmra.mxu0 %v520
        %v594 = vpop.f32.mrf.mxu0
        %v595 = vadd.f32 %v515, %v594
        %v596 = vpop.f32.mrf.mxu0
        %597 = vmatprep.mubr.f32.mxu0 0.0
        %598 = vmatmul.mubr.f32.gmra.mxu0 %v523
        %v599 = vpop.f32.mrf.mxu0
        %v600 = vadd.f32 %v516, %v599
        %v601 = vpop.f32.mrf.mxu0
        %602 = vmatprep.mubr.f32.mxu0 0.0
        %603 = vmatmul.mubr.f32.gmra.mxu0 %v526
        %v604 = vpop.f32.mrf.mxu0
        %v605 = vadd.f32 %v517, %v604
        %v606 = vpop.f32.mrf.mxu0
        %607 = vdwg.mxu0
        %v608 = vld [vmem:[%s3] sm:$0x3]
        %vm609 = vcmask 261120
        %v610 = vsel %vm609, %v595, 0.0
        %611 = vadd.xlane.f32.xlu0 %v610
        %v612 = vpop.xlane.xlu0 %611
        %v613 = vsel %vm609, %v600, 0.0
        %614 = vadd.xlane.f32.xlu0 %v613
        %v615 = vpop.xlane.xlu0 %614
        %v616 = vsel %vm609, %v605, 0.0
        %617 = vadd.xlane.f32.xlu0 %v616
        %v618 = vpop.xlane.xlu0 %617
        %v619 = vrcp.pop 32.0
        %v620 = vmul.f32 %v612, %v619
        %v621 = vmul.f32 %v615, %v619
        %v622 = vmul.f32 %v618, %v619
        %v623 = vsub.f32 %v595, %v620
        %v624 = vsub.f32 %v600, %v621
        %v625 = vsub.f32 %v605, %v622
        %v626 = vmul.f32 %v623, %v623
        %v627 = vmul.f32 %v624, %v624
        %v628 = vmul.f32 %v625, %v625
        %v629 = vsel %vm609, %v626, 0.0
        %630 = vadd.xlane.f32.xlu0 %v629
        %v631 = vpop.xlane.xlu0 %630
        %v632 = vsel %vm609, %v627, 0.0
        %633 = vadd.xlane.f32.xlu0 %v632
        %v634 = vpop.xlane.xlu0 %633
        %v635 = vsel %vm609, %v628, 0.0
        %636 = vadd.xlane.f32.xlu0 %v635
        %v637 = vpop.xlane.xlu0 %636
        %v638 = vmul.f32 %v631, %v619
        %v639 = vmul.f32 %v634, %v619
        %v640 = vmul.f32 %v637, %v619
        %v641 = vadd.f32 %v638, 1e-05
        %v642 = vadd.f32 %v639, 1e-05
        %v643 = vadd.f32 %v640, 1e-05
        %v644 = vrsqrt.pop %v641
        %v645 = vrsqrt.pop %v642
        %v646 = vrsqrt.pop %v643
        %v647 = vmul.f32 %v623, %v644
        %v648 = vmul.f32 %v624, %v645
        %v649 = vmul.f32 %v625, %v646
        %v650 = vlaneseq
        %v651 = vshrl.u32 %v650, 7
        %v652 = vsub.s32 0, %v651
        %v653 = vrot.slane %v608, %v652
        %v654 = vmul.f32 %v647, %v653
        %v655 = vmul.f32 %v648, %v653
        %v656 = vmul.f32 %v649, %v653
        %v657 = vlaneseq
        %v658 = vshrl.u32 %v657, 7
        %v659 = vsub.s32 1, %v658
        %v660 = vrot.slane %v608, %v659
        %v661 = vadd.f32 %v654, %v660
        %v662 = vadd.f32 %v655, %v660
        %v663 = vadd.f32 %v656, %v660
        %v664 = vlaneseq
        %v665 = vshrl.u32 %v664, 7
        %v666 = vadd.s32 %v665, 8
        %v667 = vadd.s32 %v665, 16
        %vm668 = vcmp.lt.s32.totalorder %v665, 17
        %vm669 = vcmp.lt.s32.totalorder %v666, 17
        %vm670 = vcmp.lt.s32.totalorder %v667, 17
        %v671 = vsel %vm668, %v661, 0.0
        %v672 = vsel %vm669, %v662, 0.0
        %v673 = vsel %vm670, %v663, 0.0
        %674 = vst.msk [vmem:[#allocation2] sm:$0xff] %vm609, %v671
        %675 = vst.msk [vmem:[#allocation2 + $0x8] sm:$0xff] %vm609, %v672
        %676 = vst.msk [vmem:[#allocation2 + $0x10] sm:$0xff] %vm609, %v673
        %vm677 = vcmask 195584
        %678 = vst.msk [vmem:[%s12] sm:$0xff] %vm677, 0.0
        %679 = vst.msk [vmem:[%s12 + $0x8] sm:$0xff] %vm677, 0.0
        %680 = vst.msk [vmem:[%s12 + $0x10] sm:$0xff] %vm677, 0.0
        %681 = vst.msk [vmem:[%s12 + $0x18] sm:$0xff] %vm677, 0.0
        %682 = vst.msk [vmem:[%s12 + $0x20] sm:$0xff] %vm677, 0.0
        %683 = vst.msk [vmem:[%s12 + $0x28] sm:$0xff] %vm677, 0.0
        %684 = vst.msk [vmem:[%s12 + $0x30] sm:$0xff] %vm677, 0.0
        %685 = vst.msk [vmem:[%s12 + $0x38] sm:$0xff] %vm677, 0.0
        %686 = vst.msk [vmem:[%s12 + $0x40] sm:$0xff] %vm677, 0.0
        %687 = vst.msk [vmem:[%s12 + $0x48] sm:$0xff] %vm677, 0.0
        %688 = vst.msk [vmem:[%s12 + $0x50] sm:$0xff] %vm677, 0.0
        %689 = vst.msk [vmem:[%s12 + $0x58] sm:$0xff] %vm677, 0.0
      $region68: #{_forward.2} parent=63 // pred_fallthru
        _
      %v690 = vld [vmem:[%s495] sm:$0x3f]
      %v691 = vld [vmem:[#allocation2] sm:$0xff]
      %v692 = vld [vmem:[#allocation2 + $0x8] sm:$0xff]
      %v693 = vld [vmem:[#allocation2 + $0x10] sm:$0xff]
      %vm694 = vcmask 261120
      %v695 = vsel %vm694, %v691, 0.0
      %696 = vadd.xlane.f32.xlu0 %v695
      %v697 = vpop.xlane.xlu0 %696
      %v698 = vsel %vm694, %v692, 0.0
      %699 = vadd.xlane.f32.xlu0 %v698
      %v700 = vpop.xlane.xlu0 %699
      %v701 = vsel %vm694, %v693, 0.0
      %702 = vadd.xlane.f32.xlu0 %v701
      %v703 = vpop.xlane.xlu0 %702
      %v704 = vrcp.pop 32.0
      %v705 = vmul.f32 %v697, %v704
      %v706 = vmul.f32 %v700, %v704
      %v707 = vmul.f32 %v703, %v704
      %v708 = vsub.f32 %v691, %v705
      %v709 = vsub.f32 %v692, %v706
      %v710 = vsub.f32 %v693, %v707
      %v711 = vmul.f32 %v708, %v708
      %v712 = vmul.f32 %v709, %v709
      %v713 = vmul.f32 %v710, %v710
      %v714 = vsel %vm694, %v711, 0.0
      %715 = vadd.xlane.f32.xlu0 %v714
      %v716 = vpop.xlane.xlu0 %715
      %v717 = vsel %vm694, %v712, 0.0
      %718 = vadd.xlane.f32.xlu0 %v717
      %v719 = vpop.xlane.xlu0 %718
      %v720 = vsel %vm694, %v713, 0.0
      %721 = vadd.xlane.f32.xlu0 %v720
      %v722 = vpop.xlane.xlu0 %721
      %v723 = vmul.f32 %v716, %v704
      %v724 = vmul.f32 %v719, %v704
      %v725 = vmul.f32 %v722, %v704
      %v726 = vadd.f32 %v723, 1e-05
      %v727 = vadd.f32 %v724, 1e-05
      %v728 = vadd.f32 %v725, 1e-05
      %v729 = vrsqrt.pop %v726
      %v730 = vrsqrt.pop %v727
      %v731 = vrsqrt.pop %v728
      %v732 = vmul.f32 %v708, %v729
      %v733 = vmul.f32 %v709, %v730
      %v734 = vmul.f32 %v710, %v731
      %v735 = vlaneseq
      %v736 = vshrl.u32 %v735, 7
      %v737 = vsub.s32 0, %v736
      %v738 = vrot.slane %v690, %v737
      %v739 = vmul.f32 %v732, %v738
      %v740 = vmul.f32 %v733, %v738
      %v741 = vmul.f32 %v734, %v738
      %v742 = vlaneseq
      %v743 = vshrl.u32 %v742, 7
      %v744 = vsub.s32 1, %v743
      %v745 = vrot.slane %v690, %v744
      %v746 = vadd.f32 %v739, %v745
      %v747 = vadd.f32 %v740, %v745
      %v748 = vadd.f32 %v741, %v745
      %s749 = smul.u32 %s24, 24
      %s750 = scalar_lea.vmem %s11, %s749
      %751 = vst.msk [vmem:[%s750] sm:$0xff] %vm694, %v746
      %752 = vst.msk [vmem:[%s750 + $0x8] sm:$0xff] %vm694, %v747
      %753 = vst.msk [vmem:[%s750 + $0x10] sm:$0xff] %vm694, %v748
      %v754 = vld [vmem:[%s476] sm:$0xff]
      %v755 = vld [vmem:[%s476 + $0x8] sm:$0xff]
      %v756 = vld [vmem:[%s476 + $0x10] sm:$0xff]
      %v757 = vld [vmem:[%s476 + $0x18] sm:$0xff]
      %v758 = vld [vmem:[%s498] sm:$0x1]
      %v760 = vlaneseq
      %v761 = vshrl.u32 %v760, 7
      %v762 = vsub.s32 0, %v761
      %v763 = vrot.slane %v758, %v762
      %v766 = vsel %vm694, %v746, 0
      %v769 = vsel %vm694, %v747, 0
      %v772 = vsel %vm694, %v748, 0
      %774 = vmatprep.subr.mxu0 0.0
      %775 = vmatpush1.msra.mxu0 0.0
      %776 = vmatprep.subr.mxu0 0.0
      %777 = vmatpush1.msra.mxu0 0.0
      %778 = vmatprep.subr.mxu0 0.0
      %779 = vmatpush1.msra.mxu0 0.0
      %780 = vmatprep.subr.mxu0 0.0
      %781 = vmatpush1.msra.mxu0 0.0
      %782 = vmatprep.subr.mxu0 0.0
      %783 = vmatpush1.msra.mxu0 0.0
      %784 = vmatprep.subr.mxu0 0.0
      %785 = vmatpush1.msra.mxu0 0.0
      %786 = vmatprep.subr.mxu0 0.0
      %787 = vmatpush1.msra.mxu0 0.0
      %788 = vmatprep.subr.mxu0 0.0
      %789 = vmatpush1.msra.mxu0 0.0
      %790 = vmatprep.subr.mxu0 0.0
      %791 = vmatpush1.msra.mxu0 0.0
      %792 = vmatprep.subr.mxu0 0.0
      %793 = vmatpush1.msra.mxu0 0.0
      %794 = vmatprep.subr.mxu0 0.0
      %795 = vmatpush1.msra.mxu0 0.0
      %796 = vmatprep.subr.mxu0 0.0
      %797 = vmatpush1.msra.mxu0 0.0
      %798 = vmatprep.subr.mxu0 0.0
      %799 = vmatpush1.msra.mxu0 %v757
      %800 = vmatprep.subr.mxu0 0.0
      %801 = vmatpush1.msra.mxu0 %v756
      %802 = vmatprep.subr.mxu0 0.0
      %803 = vmatpush1.msra.mxu0 %v755
      %804 = vmatprep.subr.mxu0 0.0
      %805 = vmatpush1.msra.mxu0 %v754
      %806 = vmatprep.subr.mxu0 0.0
      %807 = vmatpush2.msra.mxu0 0.0
      %808 = vmatprep.subr.mxu0 0.0
      %809 = vmatpush2.msra.mxu0 0.0
      %810 = vmatprep.subr.mxu0 0.0
      %811 = vmatpush2.msra.mxu0 0.0
      %812 = vmatprep.subr.mxu0 0.0
      %813 = vmatpush2.msra.mxu0 0.0
      %814 = vmatprep.subr.mxu0 0.0
      %815 = vmatpush2.msra.mxu0 0.0
      %816 = vmatprep.subr.mxu0 0.0
      %817 = vmatpush2.msra.mxu0 0.0
      %818 = vmatprep.subr.mxu0 0.0
      %819 = vmatpush2.msra.mxu0 0.0
      %820 = vmatprep.subr.mxu0 0.0
      %821 = vmatpush2.msra.mxu0 0.0
      %822 = vmatprep.subr.mxu0 0.0
      %823 = vmatpush2.msra.mxu0 0.0
      %824 = vmatprep.subr.mxu0 0.0
      %825 = vmatpush2.msra.mxu0 0.0
      %826 = vmatprep.subr.mxu0 0.0
      %827 = vmatpush2.msra.mxu0 0.0
      %828 = vmatprep.subr.mxu0 0.0
      %829 = vmatpush2.msra.mxu0 0.0
      %830 = vmatprep.subr.mxu0 0.0
      %831 = vmatpush2.msra.mxu0 0.0
      %832 = vmatprep.subr.mxu0 0.0
      %833 = vmatpush2.msra.mxu0 0.0
      %834 = vmatprep.subr.mxu0 0.0
      %835 = vmatpush2.msra.mxu0 0.0
      %836 = vmatprep.subr.mxu0 0.0
      %837 = vmatpush2.msra.mxu0 0.0
      %838 = vmatprep.mubr.f32.mxu0 0.0
      %839 = vmatmul.mubr.f32.gmra.mxu0 %v766
      %v840 = vpop.f32.mrf.mxu0
      %v841 = vadd.f32 %v763, %v840
      %v842 = vpop.f32.mrf.mxu0
      %843 = vmatprep.mubr.f32.mxu0 0.0
      %844 = vmatmul.mubr.f32.gmra.mxu0 %v769
      %v845 = vpop.f32.mrf.mxu0
      %v846 = vadd.f32 %v763, %v845
      %v847 = vpop.f32.mrf.mxu0
      %848 = vmatprep.mubr.f32.mxu0 0.0
      %849 = vmatmul.mubr.f32.gmra.mxu0 %v772
      %v850 = vpop.f32.mrf.mxu0
      %v851 = vadd.f32 %v763, %v850
      %v852 = vpop.f32.mrf.mxu0
      %853 = vdwg.mxu0
      %857 = vrot.lane.b32.xlu0 %v841, 120
      %v858 = vpop.permute.xlu0 %857
      %859 = vrot.lane.b32.xlu0 %v846, 120
      %v860 = vpop.permute.xlu0 %859
      %861 = vrot.lane.b32.xlu0 %v851, 120
      %v862 = vpop.permute.xlu0 %861
      %863 = vrot.lane.b32.xlu0 %v841, 112
      %v864 = vpop.permute.xlu0 %863
      %865 = vrot.lane.b32.xlu0 %v846, 112
      %v866 = vpop.permute.xlu0 %865
      %867 = vrot.lane.b32.xlu0 %v851, 112
      %v868 = vpop.permute.xlu0 %867
      %869 = vrot.lane.b32.xlu0 %v841, 104
      %v870 = vpop.permute.xlu0 %869
      %871 = vrot.lane.b32.xlu0 %v846, 104
      %v872 = vpop.permute.xlu0 %871
      %873 = vrot.lane.b32.xlu0 %v851, 104
      %v874 = vpop.permute.xlu0 %873
      %875 = vrot.lane.b32.xlu0 %v841, 96
      %v876 = vpop.permute.xlu0 %875
      %877 = vrot.lane.b32.xlu0 %v846, 96
      %v878 = vpop.permute.xlu0 %877
      %879 = vrot.lane.b32.xlu0 %v851, 96
      %v880 = vpop.permute.xlu0 %879
      %vm881 = vcmask 64512
      %v882 = vsel %vm881, %v841, 0
      %v884 = vsel %vm881, %v846, 0
      %v886 = vsel %vm881, %v851, 0
      %v888 = vsel %vm881, %v876, 0
      %v890 = vsel %vm881, %v878, 0
      %v892 = vsel %vm881, %v880, 0
      %894 = vmatprep.subr.mxu0 0.0
      %895 = vmatpush1.xpose.msra.mxu0 0.0
      %896 = vmatprep.subr.mxu0 0.0
      %897 = vmatpush1.xpose.msra.mxu0 0.0
      %898 = vmatprep.subr.mxu0 0.0
      %899 = vmatpush1.xpose.msra.mxu0 0.0
      %900 = vmatprep.subr.mxu0 0.0
      %901 = vmatpush1.xpose.msra.mxu0 0.0
      %902 = vmatprep.subr.mxu0 0.0
      %903 = vmatpush1.xpose.msra.mxu0 0.0
      %904 = vmatprep.subr.mxu0 0.0
      %905 = vmatpush1.xpose.msra.mxu0 0.0
      %906 = vmatprep.subr.mxu0 0.0
      %907 = vmatpush1.xpose.msra.mxu0 0.0
      %908 = vmatprep.subr.mxu0 0.0
      %909 = vmatpush1.xpose.msra.mxu0 0.0
      %910 = vmatprep.subr.mxu0 0.0
      %911 = vmatpush1.xpose.msra.mxu0 0.0
      %912 = vmatprep.subr.mxu0 0.0
      %913 = vmatpush1.xpose.msra.mxu0 0.0
      %914 = vmatprep.subr.mxu0 0.0
      %915 = vmatpush1.xpose.msra.mxu0 0.0
      %916 = vmatprep.subr.mxu0 0.0
      %917 = vmatpush1.xpose.msra.mxu0 0.0
      %918 = vmatprep.subr.mxu0 0.0
      %919 = vmatpush1.xpose.msra.mxu0 0.0
      %920 = vmatprep.subr.mxu0 0.0
      %921 = vmatpush1.xpose.msra.mxu0 %v892
      %922 = vmatprep.subr.mxu0 0.0
      %923 = vmatpush1.xpose.msra.mxu0 %v890
      %924 = vmatprep.subr.mxu0 0.0
      %925 = vmatpush1.xpose.msra.mxu0 %v888
      %926 = vmatprep.subr.mxu0 0.0
      %927 = vmatpush2.xpose.msra.mxu0 0.0
      %928 = vmatprep.subr.mxu0 0.0
      %929 = vmatpush2.xpose.msra.mxu0 0.0
      %930 = vmatprep.subr.mxu0 0.0
      %931 = vmatpush2.xpose.msra.mxu0 0.0
      %932 = vmatprep.subr.mxu0 0.0
      %933 = vmatpush2.xpose.msra.mxu0 0.0
      %934 = vmatprep.subr.mxu0 0.0
      %935 = vmatpush2.xpose.msra.mxu0 0.0
      %936 = vmatprep.subr.mxu0 0.0
      %937 = vmatpush2.xpose.msra.mxu0 0.0
      %938 = vmatprep.subr.mxu0 0.0
      %939 = vmatpush2.xpose.msra.mxu0 0.0
      %940 = vmatprep.subr.mxu0 0.0
      %941 = vmatpush2.xpose.msra.mxu0 0.0
      %942 = vmatprep.subr.mxu0 0.0
      %943 = vmatpush2.xpose.msra.mxu0 0.0
      %944 = vmatprep.subr.mxu0 0.0
      %945 = vmatpush2.xpose.msra.mxu0 0.0
      %946 = vmatprep.subr.mxu0 0.0
      %947 = vmatpush2.xpose.msra.mxu0 0.0
      %948 = vmatprep.subr.mxu0 0.0
      %949 = vmatpush2.xpose.msra.mxu0 0.0
      %950 = vmatprep.subr.mxu0 0.0
      %951 = vmatpush2.xpose.msra.mxu0 0.0
      %952 = vmatprep.subr.mxu0 0.0
      %953 = vmatpush2.xpose.msra.mxu0 0.0
      %954 = vmatprep.subr.mxu0 0.0
      %955 = vmatpush2.xpose.msra.mxu0 0.0
      %956 = vmatprep.subr.mxu0 0.0
      %957 = vmatpush2.xpose.msra.mxu0 0.0
      %958 = vmatprep.mubr.f32.mxu0 0.0
      %959 = vmatmul.mubr.f32.gmra.mxu0 %v882
      %v960 = vpop.f32.mrf.mxu0
      %v961 = vadd.f32 0.0, %v960
      %v962 = vpop.f32.mrf.mxu0
      %963 = vmatprep.mubr.f32.mxu0 0.0
      %964 = vmatmul.mubr.f32.gmra.mxu0 %v884
      %v965 = vpop.f32.mrf.mxu0
      %v966 = vadd.f32 0.0, %v965
      %v967 = vpop.f32.mrf.mxu0
      %968 = vmatprep.mubr.f32.mxu0 0.0
      %969 = vmatmul.mubr.f32.gmra.mxu0 %v886
      %v970 = vpop.f32.mrf.mxu0
      %v971 = vadd.f32 0.0, %v970
      %v972 = vpop.f32.mrf.mxu0
      %973 = vdwg.mxu0
      %974 = vrot.lane.b32.xlu0 %v858, 96
      %v975 = vpop.permute.xlu0 %974
      %976 = vrot.lane.b32.xlu0 %v860, 96
      %v977 = vpop.permute.xlu0 %976
      %978 = vrot.lane.b32.xlu0 %v862, 96
      %v979 = vpop.permute.xlu0 %978
      %v980 = vsel %vm881, %v858, 0
      %v982 = vsel %vm881, %v860, 0
      %v984 = vsel %vm881, %v862, 0
      %v986 = vsel %vm881, %v975, 0
      %v988 = vsel %vm881, %v977, 0
      %v990 = vsel %vm881, %v979, 0
      %992 = vmatprep.subr.mxu0 0.0
      %993 = vmatpush1.xpose.msra.mxu0 0.0
      %994 = vmatprep.subr.mxu0 0.0
      %995 = vmatpush1.xpose.msra.mxu0 0.0
      %996 = vmatprep.subr.mxu0 0.0
      %997 = vmatpush1.xpose.msra.mxu0 0.0
      %998 = vmatprep.subr.mxu0 0.0
      %999 = vmatpush1.xpose.msra.mxu0 0.0
      %1000 = vmatprep.subr.mxu0 0.0
      %1001 = vmatpush1.xpose.msra.mxu0 0.0
      %1002 = vmatprep.subr.mxu0 0.0
      %1003 = vmatpush1.xpose.msra.mxu0 0.0
      %1004 = vmatprep.subr.mxu0 0.0
      %1005 = vmatpush1.xpose.msra.mxu0 0.0
      %1006 = vmatprep.subr.mxu0 0.0
      %1007 = vmatpush1.xpose.msra.mxu0 0.0
      %1008 = vmatprep.subr.mxu0 0.0
      %1009 = vmatpush1.xpose.msra.mxu0 0.0
      %1010 = vmatprep.subr.mxu0 0.0
      %1011 = vmatpush1.xpose.msra.mxu0 0.0
      %1012 = vmatprep.subr.mxu0 0.0
      %1013 = vmatpush1.xpose.msra.mxu0 0.0
      %1014 = vmatprep.subr.mxu0 0.0
      %1015 = vmatpush1.xpose.msra.mxu0 0.0
      %1016 = vmatprep.subr.mxu0 0.0
      %1017 = vmatpush1.xpose.msra.mxu0 0.0
      %1018 = vmatprep.subr.mxu0 0.0
      %1019 = vmatpush1.xpose.msra.mxu0 %v990
      %1020 = vmatprep.subr.mxu0 0.0
      %1021 = vmatpush1.xpose.msra.mxu0 %v988
      %1022 = vmatprep.subr.mxu0 0.0
      %1023 = vmatpush1.xpose.msra.mxu0 %v986
      %1024 = vmatprep.subr.mxu0 0.0
      %1025 = vmatpush2.xpose.msra.mxu0 0.0
      %1026 = vmatprep.subr.mxu0 0.0
      %1027 = vmatpush2.xpose.msra.mxu0 0.0
      %1028 = vmatprep.subr.mxu0 0.0
      %1029 = vmatpush2.xpose.msra.mxu0 0.0
      %1030 = vmatprep.subr.mxu0 0.0
      %1031 = vmatpush2.xpose.msra.mxu0 0.0
      %1032 = vmatprep.subr.mxu0 0.0
      %1033 = vmatpush2.xpose.msra.mxu0 0.0
      %1034 = vmatprep.subr.mxu0 0.0
      %1035 = vmatpush2.xpose.msra.mxu0 0.0
      %1036 = vmatprep.subr.mxu0 0.0
      %1037 = vmatpush2.xpose.msra.mxu0 0.0
      %1038 = vmatprep.subr.mxu0 0.0
      %1039 = vmatpush2.xpose.msra.mxu0 0.0
      %1040 = vmatprep.subr.mxu0 0.0
      %1041 = vmatpush2.xpose.msra.mxu0 0.0
      %1042 = vmatprep.subr.mxu0 0.0
      %1043 = vmatpush2.xpose.msra.mxu0 0.0
      %1044 = vmatprep.subr.mxu0 0.0
      %1045 = vmatpush2.xpose.msra.mxu0 0.0
      %1046 = vmatprep.subr.mxu0 0.0
      %1047 = vmatpush2.xpose.msra.mxu0 0.0
      %1048 = vmatprep.subr.mxu0 0.0
      %1049 = vmatpush2.xpose.msra.mxu0 0.0
      %1050 = vmatprep.subr.mxu0 0.0
      %1051 = vmatpush2.xpose.msra.mxu0 0.0
      %1052 = vmatprep.subr.mxu0 0.0
      %1053 = vmatpush2.xpose.msra.mxu0 0.0
      %1054 = vmatprep.subr.mxu0 0.0
      %1055 = vmatpush2.xpose.msra.mxu0 0.0
      %1056 = vmatprep.mubr.f32.mxu0 0.0
      %1057 = vmatmul.mubr.f32.gmra.mxu0 %v980
      %v1058 = vpop.f32.mrf.mxu0
      %v1059 = vadd.f32 0.0, %v1058
      %v1060 = vpop.f32.mrf.mxu0
      %1061 = vmatprep.mubr.f32.mxu0 0.0
      %1062 = vmatmul.mubr.f32.gmra.mxu0 %v982
      %v1063 = vpop.f32.mrf.mxu0
      %v1064 = vadd.f32 0.0, %v1063
      %v1065 = vpop.f32.mrf.mxu0
      %1066 = vmatprep.mubr.f32.mxu0 0.0
      %1067 = vmatmul.mubr.f32.gmra.mxu0 %v984
      %v1068 = vpop.f32.mrf.mxu0
      %v1069 = vadd.f32 0.0, %v1068
      %v1070 = vpop.f32.mrf.mxu0
      %1071 = vdwg.mxu0
      %1072 = vrot.lane.b32.xlu0 %v864, 96
      %v1073 = vpop.permute.xlu0 %1072
      %1074 = vrot.lane.b32.xlu0 %v866, 96
      %v1075 = vpop.permute.xlu0 %1074
      %1076 = vrot.lane.b32.xlu0 %v868, 96
      %v1077 = vpop.permute.xlu0 %1076
      %v1078 = vsel %vm881, %v864, 0
      %v1080 = vsel %vm881, %v866, 0
      %v1082 = vsel %vm881, %v868, 0
      %v1084 = vsel %vm881, %v1073, 0
      %v1086 = vsel %vm881, %v1075, 0
      %v1088 = vsel %vm881, %v1077, 0
      %1090 = vmatprep.subr.mxu0 0.0
      %1091 = vmatpush1.xpose.msra.mxu0 0.0
      %1092 = vmatprep.subr.mxu0 0.0
      %1093 = vmatpush1.xpose.msra.mxu0 0.0
      %1094 = vmatprep.subr.mxu0 0.0
      %1095 = vmatpush1.xpose.msra.mxu0 0.0
      %1096 = vmatprep.subr.mxu0 0.0
      %1097 = vmatpush1.xpose.msra.mxu0 0.0
      %1098 = vmatprep.subr.mxu0 0.0
      %1099 = vmatpush1.xpose.msra.mxu0 0.0
      %1100 = vmatprep.subr.mxu0 0.0
      %1101 = vmatpush1.xpose.msra.mxu0 0.0
      %1102 = vmatprep.subr.mxu0 0.0
      %1103 = vmatpush1.xpose.msra.mxu0 0.0
      %1104 = vmatprep.subr.mxu0 0.0
      %1105 = vmatpush1.xpose.msra.mxu0 0.0
      %1106 = vmatprep.subr.mxu0 0.0
      %1107 = vmatpush1.xpose.msra.mxu0 0.0
      %1108 = vmatprep.subr.mxu0 0.0
      %1109 = vmatpush1.xpose.msra.mxu0 0.0
      %1110 = vmatprep.subr.mxu0 0.0
      %1111 = vmatpush1.xpose.msra.mxu0 0.0
      %1112 = vmatprep.subr.mxu0 0.0
      %1113 = vmatpush1.xpose.msra.mxu0 0.0
      %1114 = vmatprep.subr.mxu0 0.0
      %1115 = vmatpush1.xpose.msra.mxu0 0.0
      %1116 = vmatprep.subr.mxu0 0.0
      %1117 = vmatpush1.xpose.msra.mxu0 %v1088
      %1118 = vmatprep.subr.mxu0 0.0
      %1119 = vmatpush1.xpose.msra.mxu0 %v1086
      %1120 = vmatprep.subr.mxu0 0.0
      %1121 = vmatpush1.xpose.msra.mxu0 %v1084
      %1122 = vmatprep.subr.mxu0 0.0
      %1123 = vmatpush2.xpose.msra.mxu0 0.0
      %1124 = vmatprep.subr.mxu0 0.0
      %1125 = vmatpush2.xpose.msra.mxu0 0.0
      %1126 = vmatprep.subr.mxu0 0.0
      %1127 = vmatpush2.xpose.msra.mxu0 0.0
      %1128 = vmatprep.subr.mxu0 0.0
      %1129 = vmatpush2.xpose.msra.mxu0 0.0
      %1130 = vmatprep.subr.mxu0 0.0
      %1131 = vmatpush2.xpose.msra.mxu0 0.0
      %1132 = vmatprep.subr.mxu0 0.0
      %1133 = vmatpush2.xpose.msra.mxu0 0.0
      %1134 = vmatprep.subr.mxu0 0.0
      %1135 = vmatpush2.xpose.msra.mxu0 0.0
      %1136 = vmatprep.subr.mxu0 0.0
      %1137 = vmatpush2.xpose.msra.mxu0 0.0
      %1138 = vmatprep.subr.mxu0 0.0
      %1139 = vmatpush2.xpose.msra.mxu0 0.0
      %1140 = vmatprep.subr.mxu0 0.0
      %1141 = vmatpush2.xpose.msra.mxu0 0.0
      %1142 = vmatprep.subr.mxu0 0.0
      %1143 = vmatpush2.xpose.msra.mxu0 0.0
      %1144 = vmatprep.subr.mxu0 0.0
      %1145 = vmatpush2.xpose.msra.mxu0 0.0
      %1146 = vmatprep.subr.mxu0 0.0
      %1147 = vmatpush2.xpose.msra.mxu0 0.0
      %1148 = vmatprep.subr.mxu0 0.0
      %1149 = vmatpush2.xpose.msra.mxu0 0.0
      %1150 = vmatprep.subr.mxu0 0.0
      %1151 = vmatpush2.xpose.msra.mxu0 0.0
      %1152 = vmatprep.subr.mxu0 0.0
      %1153 = vmatpush2.xpose.msra.mxu0 0.0
      %1154 = vmatprep.mubr.f32.mxu0 0.0
      %1155 = vmatmul.mubr.f32.gmra.mxu0 %v1078
      %v1156 = vpop.f32.mrf.mxu0
      %v1157 = vadd.f32 0.0, %v1156
      %v1158 = vpop.f32.mrf.mxu0
      %1159 = vmatprep.mubr.f32.mxu0 0.0
      %1160 = vmatmul.mubr.f32.gmra.mxu0 %v1080
      %v1161 = vpop.f32.mrf.mxu0
      %v1162 = vadd.f32 0.0, %v1161
      %v1163 = vpop.f32.mrf.mxu0
      %1164 = vmatprep.mubr.f32.mxu0 0.0
      %1165 = vmatmul.mubr.f32.gmra.mxu0 %v1082
      %v1166 = vpop.f32.mrf.mxu0
      %v1167 = vadd.f32 0.0, %v1166
      %v1168 = vpop.f32.mrf.mxu0
      %1169 = vdwg.mxu0
      %1170 = vrot.lane.b32.xlu0 %v870, 96
      %v1171 = vpop.permute.xlu0 %1170
      %1172 = vrot.lane.b32.xlu0 %v872, 96
      %v1173 = vpop.permute.xlu0 %1172
      %1174 = vrot.lane.b32.xlu0 %v874, 96
      %v1175 = vpop.permute.xlu0 %1174
      %v1176 = vsel %vm881, %v870, 0
      %v1178 = vsel %vm881, %v872, 0
      %v1180 = vsel %vm881, %v874, 0
      %v1182 = vsel %vm881, %v1171, 0
      %v1184 = vsel %vm881, %v1173, 0
      %v1186 = vsel %vm881, %v1175, 0
      %1188 = vmatprep.subr.mxu0 0.0
      %1189 = vmatpush1.xpose.msra.mxu0 0.0
      %1190 = vmatprep.subr.mxu0 0.0
      %1191 = vmatpush1.xpose.msra.mxu0 0.0
      %1192 = vmatprep.subr.mxu0 0.0
      %1193 = vmatpush1.xpose.msra.mxu0 0.0
      %1194 = vmatprep.subr.mxu0 0.0
      %1195 = vmatpush1.xpose.msra.mxu0 0.0
      %1196 = vmatprep.subr.mxu0 0.0
      %1197 = vmatpush1.xpose.msra.mxu0 0.0
      %1198 = vmatprep.subr.mxu0 0.0
      %1199 = vmatpush1.xpose.msra.mxu0 0.0
      %1200 = vmatprep.subr.mxu0 0.0
      %1201 = vmatpush1.xpose.msra.mxu0 0.0
      %1202 = vmatprep.subr.mxu0 0.0
      %1203 = vmatpush1.xpose.msra.mxu0 0.0
      %1204 = vmatprep.subr.mxu0 0.0
      %1205 = vmatpush1.xpose.msra.mxu0 0.0
      %1206 = vmatprep.subr.mxu0 0.0
      %1207 = vmatpush1.xpose.msra.mxu0 0.0
      %1208 = vmatprep.subr.mxu0 0.0
      %1209 = vmatpush1.xpose.msra.mxu0 0.0
      %1210 = vmatprep.subr.mxu0 0.0
      %1211 = vmatpush1.xpose.msra.mxu0 0.0
      %1212 = vmatprep.subr.mxu0 0.0
      %1213 = vmatpush1.xpose.msra.mxu0 0.0
      %1214 = vmatprep.subr.mxu0 0.0
      %1215 = vmatpush1.xpose.msra.mxu0 %v1186
      %1216 = vmatprep.subr.mxu0 0.0
      %1217 = vmatpush1.xpose.msra.mxu0 %v1184
      %1218 = vmatprep.subr.mxu0 0.0
      %1219 = vmatpush1.xpose.msra.mxu0 %v1182
      %1220 = vmatprep.subr.mxu0 0.0
      %1221 = vmatpush2.xpose.msra.mxu0 0.0
      %1222 = vmatprep.subr.mxu0 0.0
      %1223 = vmatpush2.xpose.msra.mxu0 0.0
      %1224 = vmatprep.subr.mxu0 0.0
      %1225 = vmatpush2.xpose.msra.mxu0 0.0
      %1226 = vmatprep.subr.mxu0 0.0
      %1227 = vmatpush2.xpose.msra.mxu0 0.0
      %1228 = vmatprep.subr.mxu0 0.0
      %1229 = vmatpush2.xpose.msra.mxu0 0.0
      %1230 = vmatprep.subr.mxu0 0.0
      %1231 = vmatpush2.xpose.msra.mxu0 0.0
      %1232 = vmatprep.subr.mxu0 0.0
      %1233 = vmatpush2.xpose.msra.mxu0 0.0
      %1234 = vmatprep.subr.mxu0 0.0
      %1235 = vmatpush2.xpose.msra.mxu0 0.0
      %1236 = vmatprep.subr.mxu0 0.0
      %1237 = vmatpush2.xpose.msra.mxu0 0.0
      %1238 = vmatprep.subr.mxu0 0.0
      %1239 = vmatpush2.xpose.msra.mxu0 0.0
      %1240 = vmatprep.subr.mxu0 0.0
      %1241 = vmatpush2.xpose.msra.mxu0 0.0
      %1242 = vmatprep.subr.mxu0 0.0
      %1243 = vmatpush2.xpose.msra.mxu0 0.0
      %1244 = vmatprep.subr.mxu0 0.0
      %1245 = vmatpush2.xpose.msra.mxu0 0.0
      %1246 = vmatprep.subr.mxu0 0.0
      %1247 = vmatpush2.xpose.msra.mxu0 0.0
      %1248 = vmatprep.subr.mxu0 0.0
      %1249 = vmatpush2.xpose.msra.mxu0 0.0
      %1250 = vmatprep.subr.mxu0 0.0
      %1251 = vmatpush2.xpose.msra.mxu0 0.0
      %1252 = vmatprep.mubr.f32.mxu0 0.0
      %1253 = vmatmul.mubr.f32.gmra.mxu0 %v1176
      %v1254 = vpop.f32.mrf.mxu0
      %v1255 = vadd.f32 0.0, %v1254
      %v1256 = vpop.f32.mrf.mxu0
      %1257 = vmatprep.mubr.f32.mxu0 0.0
      %1258 = vmatmul.mubr.f32.gmra.mxu0 %v1178
      %v1259 = vpop.f32.mrf.mxu0
      %v1260 = vadd.f32 0.0, %v1259
      %v1261 = vpop.f32.mrf.mxu0
      %1262 = vmatprep.mubr.f32.mxu0 0.0
      %1263 = vmatmul.mubr.f32.gmra.mxu0 %v1180
      %v1264 = vpop.f32.mrf.mxu0
      %v1265 = vadd.f32 0.0, %v1264
      %v1266 = vpop.f32.mrf.mxu0
      %1267 = vdwg.mxu0
      %v1268 = vlaneseq
      %v1269 = vand.u32 %v1268, 127
      %vm1270 = vcmp.lt.s32.totalorder %v1269, 17
      %v1271 = vsel %vm1270, %v961, -1e+30
      %v1272 = vsel %vm1270, %v966, -1e+30
      %v1273 = vsel %vm1270, %v971, -1e+30
      %v1274 = vsel %vm1270, %v1059, -1e+30
      %v1275 = vsel %vm1270, %v1064, -1e+30
      %v1276 = vsel %vm1270, %v1069, -1e+30
      %v1277 = vsel %vm1270, %v1157, -1e+30
      %v1278 = vsel %vm1270, %v1162, -1e+30
      %v1279 = vsel %vm1270, %v1167, -1e+30
      %v1280 = vsel %vm1270, %v1255, -1e+30
      %v1281 = vsel %vm1270, %v1260, -1e+30
      %v1282 = vsel %vm1270, %v1265, -1e+30
      %vm1283 = vcmask 195584
      %v1284 = vsel %vm1283, %v1271, -inf
      %1285 = vmax.xlane.f32.xlu0 %v1284
      %v1286 = vpop.xlane.xlu0 %1285
      %v1287 = vsel %vm1283, %v1272, -inf
      %1288 = vmax.xlane.f32.xlu0 %v1287
      %v1289 = vpop.xlane.xlu0 %1288
      %v1290 = vsel %vm1283, %v1273, -inf
      %1291 = vmax.xlane.f32.xlu0 %v1290
      %v1292 = vpop.xlane.xlu0 %1291
      %v1293 = vsel %vm1283, %v1274, -inf
      %1294 = vmax.xlane.f32.xlu0 %v1293
      %v1295 = vpop.xlane.xlu0 %1294
      %v1296 = vsel %vm1283, %v1275, -inf
      %1297 = vmax.xlane.f32.xlu0 %v1296
      %v1298 = vpop.xlane.xlu0 %1297
      %v1299 = vsel %vm1283, %v1276, -inf
      %1300 = vmax.xlane.f32.xlu0 %v1299
      %v1301 = vpop.xlane.xlu0 %1300
      %v1302 = vsel %vm1283, %v1277, -inf
      %1303 = vmax.xlane.f32.xlu0 %v1302
      %v1304 = vpop.xlane.xlu0 %1303
      %v1305 = vsel %vm1283, %v1278, -inf
      %1306 = vmax.xlane.f32.xlu0 %v1305
      %v1307 = vpop.xlane.xlu0 %1306
      %v1308 = vsel %vm1283, %v1279, -inf
      %1309 = vmax.xlane.f32.xlu0 %v1308
      %v1310 = vpop.xlane.xlu0 %1309
      %v1311 = vsel %vm1283, %v1280, -inf
      %1312 = vmax.xlane.f32.xlu0 %v1311
      %v1313 = vpop.xlane.xlu0 %1312
      %v1314 = vsel %vm1283, %v1281, -inf
      %1315 = vmax.xlane.f32.xlu0 %v1314
      %v1316 = vpop.xlane.xlu0 %1315
      %v1317 = vsel %vm1283, %v1282, -inf
      %1318 = vmax.xlane.f32.xlu0 %v1317
      %v1319 = vpop.xlane.xlu0 %1318
      %v1320 = vsub.f32 %v1271, %v1286
      %v1321 = vsub.f32 %v1272, %v1289
      %v1322 = vsub.f32 %v1273, %v1292
      %v1323 = vsub.f32 %v1274, %v1295
      %v1324 = vsub.f32 %v1275, %v1298
      %v1325 = vsub.f32 %v1276, %v1301
      %v1326 = vsub.f32 %v1277, %v1304
      %v1327 = vsub.f32 %v1278, %v1307
      %v1328 = vsub.f32 %v1279, %v1310
      %v1329 = vsub.f32 %v1280, %v1313
      %v1330 = vsub.f32 %v1281, %v1316
      %v1331 = vsub.f32 %v1282, %v1319
      %v1332 = vmul.f32 %v1320, 1.442695
      %v1333 = vpow.pop %v1332
      %v1334 = vmul.f32 %v1321, 1.442695
      %v1335 = vpow.pop %v1334
      %v1336 = vmul.f32 %v1322, 1.442695
      %v1337 = vpow.pop %v1336
      %v1338 = vmul.f32 %v1323, 1.442695
      %v1339 = vpow.pop %v1338
      %v1340 = vmul.f32 %v1324, 1.442695
      %v1341 = vpow.pop %v1340
      %v1342 = vmul.f32 %v1325, 1.442695
      %v1343 = vpow.pop %v1342
      %v1344 = vmul.f32 %v1326, 1.442695
      %v1345 = vpow.pop %v1344
      %v1346 = vmul.f32 %v1327, 1.442695
      %v1347 = vpow.pop %v1346
      %v1348 = vmul.f32 %v1328, 1.442695
      %v1349 = vpow.pop %v1348
      %v1350 = vmul.f32 %v1329, 1.442695
      %v1351 = vpow.pop %v1350
      %v1352 = vmul.f32 %v1330, 1.442695
      %v1353 = vpow.pop %v1352
      %v1354 = vmul.f32 %v1331, 1.442695
      %v1355 = vpow.pop %v1354
      %v1356 = vsel %vm1283, %v1333, 0.0
      %1357 = vadd.xlane.f32.xlu0 %v1356
      %v1358 = vpop.xlane.xlu0 %1357
      %v1359 = vsel %vm1283, %v1335, 0.0
      %1360 = vadd.xlane.f32.xlu0 %v1359
      %v1361 = vpop.xlane.xlu0 %1360
      %v1362 = vsel %vm1283, %v1337, 0.0
      %1363 = vadd.xlane.f32.xlu0 %v1362
      %v1364 = vpop.xlane.xlu0 %1363
      %v1365 = vsel %vm1283, %v1339, 0.0
      %1366 = vadd.xlane.f32.xlu0 %v1365
      %v1367 = vpop.xlane.xlu0 %1366
      %v1368 = vsel %vm1283, %v1341, 0.0
      %1369 = vadd.xlane.f32.xlu0 %v1368
      %v1370 = vpop.xlane.xlu0 %1369
      %v1371 = vsel %vm1283, %v1343, 0.0
      %1372 = vadd.xlane.f32.xlu0 %v1371
      %v1373 = vpop.xlane.xlu0 %1372
      %v1374 = vsel %vm1283, %v1345, 0.0
      %1375 = vadd.xlane.f32.xlu0 %v1374
      %v1376 = vpop.xlane.xlu0 %1375
      %v1377 = vsel %vm1283, %v1347, 0.0
      %1378 = vadd.xlane.f32.xlu0 %v1377
      %v1379 = vpop.xlane.xlu0 %1378
      %v1380 = vsel %vm1283, %v1349, 0.0
      %1381 = vadd.xlane.f32.xlu0 %v1380
      %v1382 = vpop.xlane.xlu0 %1381
      %v1383 = vsel %vm1283, %v1351, 0.0
      %1384 = vadd.xlane.f32.xlu0 %v1383
      %v1385 = vpop.xlane.xlu0 %1384
      %v1386 = vsel %vm1283, %v1353, 0.0
      %1387 = vadd.xlane.f32.xlu0 %v1386
      %v1388 = vpop.xlane.xlu0 %1387
      %v1389 = vsel %vm1283, %v1355, 0.0
      %1390 = vadd.xlane.f32.xlu0 %v1389
      %v1391 = vpop.xlane.xlu0 %1390
      %v1392 = vrcp.pop %v1358
      %v1393 = vrcp.pop %v1361
      %v1394 = vrcp.pop %v1364
      %v1395 = vrcp.pop %v1367
      %v1396 = vrcp.pop %v1370
      %v1397 = vrcp.pop %v1373
      %v1398 = vrcp.pop %v1376
      %v1399 = vrcp.pop %v1379
      %v1400 = vrcp.pop %v1382
      %v1401 = vrcp.pop %v1385
      %v1402 = vrcp.pop %v1388
      %v1403 = vrcp.pop %v1391
      %v1404 = vmul.f32 %v1333, %v1392
      %v1405 = vmul.f32 %v1335, %v1393
      %v1406 = vmul.f32 %v1337, %v1394
      %v1407 = vmul.f32 %v1339, %v1395
      %v1408 = vmul.f32 %v1341, %v1396
      %v1409 = vmul.f32 %v1343, %v1397
      %v1410 = vmul.f32 %v1345, %v1398
      %v1411 = vmul.f32 %v1347, %v1399
      %v1412 = vmul.f32 %v1349, %v1400
      %v1413 = vmul.f32 %v1351, %v1401
      %v1414 = vmul.f32 %v1353, %v1402
      %v1415 = vmul.f32 %v1355, %v1403
      %v1416 = vlaneseq
      %v1417 = vshrl.u32 %v1416, 7
      %v1418 = vadd.s32 %v1417, 8
      %v1419 = vadd.s32 %v1417, 16
      %v1420 = vld [vmem:[%s12] sm:$0xff]
      %v1421 = vld [vmem:[%s12 + $0x8] sm:$0xff]
      %v1422 = vld [vmem:[%s12 + $0x10] sm:$0xff]
      %v1423 = vld [vmem:[%s12 + $0x18] sm:$0xff]
      %v1424 = vld [vmem:[%s12 + $0x20] sm:$0xff]
      %v1425 = vld [vmem:[%s12 + $0x28] sm:$0xff]
      %v1426 = vld [vmem:[%s12 + $0x30] sm:$0xff]
      %v1427 = vld [vmem:[%s12 + $0x38] sm:$0xff]
      %v1428 = vld [vmem:[%s12 + $0x40] sm:$0xff]
      %v1429 = vld [vmem:[%s12 + $0x48] sm:$0xff]
      %v1430 = vld [vmem:[%s12 + $0x50] sm:$0xff]
      %v1431 = vld [vmem:[%s12 + $0x58] sm:$0xff]
      %vm1432 = vcmp.lt.s32.totalorder %v1417, 17
      %vm1433 = vcmp.lt.s32.totalorder %v1418, 17
      %vm1434 = vcmp.lt.s32.totalorder %v1419, 17
      %v1435 = vsel %vm1432, %v1404, 0.0
      %v1436 = vsel %vm1433, %v1405, 0.0
      %v1437 = vsel %vm1434, %v1406, 0.0
      %v1438 = vsel %vm1432, %v1407, 0.0
      %v1439 = vsel %vm1433, %v1408, 0.0
      %v1440 = vsel %vm1434, %v1409, 0.0
      %v1441 = vsel %vm1432, %v1410, 0.0
      %v1442 = vsel %vm1433, %v1411, 0.0
      %v1443 = vsel %vm1434, %v1412, 0.0
      %v1444 = vsel %vm1432, %v1413, 0.0
      %v1445 = vsel %vm1433, %v1414, 0.0
      %v1446 = vsel %vm1434, %v1415, 0.0
      %v1447 = vadd.f32 %v1420, %v1435
      %v1448 = vadd.f32 %v1421, %v1436
      %v1449 = vadd.f32 %v1422, %v1437
      %v1450 = vadd.f32 %v1423, %v1438
      %v1451 = vadd.f32 %v1424, %v1439
      %v1452 = vadd.f32 %v1425, %v1440
      %v1453 = vadd.f32 %v1426, %v1441
      %v1454 = vadd.f32 %v1427, %v1442
      %v1455 = vadd.f32 %v1428, %v1443
      %v1456 = vadd.f32 %v1429, %v1444
      %v1457 = vadd.f32 %v1430, %v1445
      %v1458 = vadd.f32 %v1431, %v1446
      %1459 = vst.msk [vmem:[%s12] sm:$0xff] %vm1283, %v1447
      %1460 = vst.msk [vmem:[%s12 + $0x8] sm:$0xff] %vm1283, %v1448
      %1461 = vst.msk [vmem:[%s12 + $0x10] sm:$0xff] %vm1283, %v1449
      %1462 = vst.msk [vmem:[%s12 + $0x18] sm:$0xff] %vm1283, %v1450
      %1463 = vst.msk [vmem:[%s12 + $0x20] sm:$0xff] %vm1283, %v1451
      %1464 = vst.msk [vmem:[%s12 + $0x28] sm:$0xff] %vm1283, %v1452
      %1465 = vst.msk [vmem:[%s12 + $0x30] sm:$0xff] %vm1283, %v1453
      %1466 = vst.msk [vmem:[%s12 + $0x38] sm:$0xff] %vm1283, %v1454
      %1467 = vst.msk [vmem:[%s12 + $0x40] sm:$0xff] %vm1283, %v1455
      %1468 = vst.msk [vmem:[%s12 + $0x48] sm:$0xff] %vm1283, %v1456
      %1469 = vst.msk [vmem:[%s12 + $0x50] sm:$0xff] %vm1283, %v1457
      %1470 = vst.msk [vmem:[%s12 + $0x58] sm:$0xff] %vm1283, %v1458
      %1471 = vrot.lane.b32.xlu0 %v841, 64
      %v1472 = vpop.permute.xlu0 %1471
      %1473 = vrot.lane.b32.xlu0 %v846, 64
      %v1474 = vpop.permute.xlu0 %1473
      %1475 = vrot.lane.b32.xlu0 %v851, 64
      %v1476 = vpop.permute.xlu0 %1475
      %v1481 = vsel %vm1283, %v1404, 0
      %v1484 = vsel %vm1283, %v1405, 0
      %v1487 = vsel %vm1283, %v1406, 0
      %1489 = vmatprep.subr.mxu0 0.0
      %1490 = vmatpush1.msra.mxu0 0.0
      %1491 = vmatprep.subr.mxu0 0.0
      %1492 = vmatpush1.msra.mxu0 0.0
      %1493 = vmatprep.subr.mxu0 0.0
      %1494 = vmatpush1.msra.mxu0 0.0
      %1495 = vmatprep.subr.mxu0 0.0
      %1496 = vmatpush1.msra.mxu0 0.0
      %1497 = vmatprep.subr.mxu0 0.0
      %1498 = vmatpush1.msra.mxu0 0.0
      %1499 = vmatprep.subr.mxu0 0.0
      %1500 = vmatpush1.msra.mxu0 0.0
      %1501 = vmatprep.subr.mxu0 0.0
      %1502 = vmatpush1.msra.mxu0 0.0
      %1503 = vmatprep.subr.mxu0 0.0
      %1504 = vmatpush1.msra.mxu0 0.0
      %1505 = vmatprep.subr.mxu0 0.0
      %1506 = vmatpush1.msra.mxu0 0.0
      %1507 = vmatprep.subr.mxu0 0.0
      %1508 = vmatpush1.msra.mxu0 0.0
      %1509 = vmatprep.subr.mxu0 0.0
      %1510 = vmatpush1.msra.mxu0 0.0
      %1511 = vmatprep.subr.mxu0 0.0
      %1512 = vmatpush1.msra.mxu0 0.0
      %1513 = vmatprep.subr.mxu0 0.0
      %1514 = vmatpush1.msra.mxu0 0.0
      %1515 = vmatprep.subr.mxu0 0.0
      %1516 = vmatpush1.msra.mxu0 %v1476
      %1517 = vmatprep.subr.mxu0 0.0
      %1518 = vmatpush1.msra.mxu0 %v1474
      %1519 = vmatprep.subr.mxu0 0.0
      %1520 = vmatpush1.msra.mxu0 %v1472
      %1521 = vmatprep.subr.mxu0 0.0
      %1522 = vmatpush2.msra.mxu0 0.0
      %1523 = vmatprep.subr.mxu0 0.0
      %1524 = vmatpush2.msra.mxu0 0.0
      %1525 = vmatprep.subr.mxu0 0.0
      %1526 = vmatpush2.msra.mxu0 0.0
      %1527 = vmatprep.subr.mxu0 0.0
      %1528 = vmatpush2.msra.mxu0 0.0
      %1529 = vmatprep.subr.mxu0 0.0
      %1530 = vmatpush2.msra.mxu0 0.0
      %1531 = vmatprep.subr.mxu0 0.0
      %1532 = vmatpush2.msra.mxu0 0.0
      %1533 = vmatprep.subr.mxu0 0.0
      %1534 = vmatpush2.msra.mxu0 0.0
      %1535 = vmatprep.subr.mxu0 0.0
      %1536 = vmatpush2.msra.mxu0 0.0
      %1537 = vmatprep.subr.mxu0 0.0
      %1538 = vmatpush2.msra.mxu0 0.0
      %1539 = vmatprep.subr.mxu0 0.0
      %1540 = vmatpush2.msra.mxu0 0.0
      %1541 = vmatprep.subr.mxu0 0.0
      %1542 = vmatpush2.msra.mxu0 0.0
      %1543 = vmatprep.subr.mxu0 0.0
      %1544 = vmatpush2.msra.mxu0 0.0
      %1545 = vmatprep.subr.mxu0 0.0
      %1546 = vmatpush2.msra.mxu0 0.0
      %1547 = vmatprep.subr.mxu0 0.0
      %1548 = vmatpush2.msra.mxu0 0.0
      %1549 = vmatprep.subr.mxu0 0.0
      %1550 = vmatpush2.msra.mxu0 0.0
      %1551 = vmatprep.subr.mxu0 0.0
      %1552 = vmatpush2.msra.mxu0 0.0
      %1553 = vmatprep.mubr.f32.mxu0 0.0
      %1554 = vmatmul.mubr.f32.gmra.mxu0 %v1481
      %v1555 = vpop.f32.mrf.mxu0
      %v1556 = vadd.f32 0.0, %v1555
      %v1557 = vpop.f32.mrf.mxu0
      %1558 = vmatprep.mubr.f32.mxu0 0.0
      %1559 = vmatmul.mubr.f32.gmra.mxu0 %v1484
      %v1560 = vpop.f32.mrf.mxu0
      %v1561 = vadd.f32 0.0, %v1560
      %v1562 = vpop.f32.mrf.mxu0
      %1563 = vmatprep.mubr.f32.mxu0 0.0
      %1564 = vmatmul.mubr.f32.gmra.mxu0 %v1487
      %v1565 = vpop.f32.mrf.mxu0
      %v1566 = vadd.f32 0.0, %v1565
      %v1567 = vpop.f32.mrf.mxu0
      %1568 = vdwg.mxu0
      %1569 = vrot.lane.b32.xlu0 %v858, 64
      %v1570 = vpop.permute.xlu0 %1569
      %1571 = vrot.lane.b32.xlu0 %v860, 64
      %v1572 = vpop.permute.xlu0 %1571
      %1573 = vrot.lane.b32.xlu0 %v862, 64
      %v1574 = vpop.permute.xlu0 %1573
      %v1579 = vsel %vm1283, %v1407, 0
      %v1582 = vsel %vm1283, %v1408, 0
      %v1585 = vsel %vm1283, %v1409, 0
      %1587 = vmatprep.subr.mxu0 0.0
      %1588 = vmatpush1.msra.mxu0 0.0
      %1589 = vmatprep.subr.mxu0 0.0
      %1590 = vmatpush1.msra.mxu0 0.0
      %1591 = vmatprep.subr.mxu0 0.0
      %1592 = vmatpush1.msra.mxu0 0.0
      %1593 = vmatprep.subr.mxu0 0.0
      %1594 = vmatpush1.msra.mxu0 0.0
      %1595 = vmatprep.subr.mxu0 0.0
      %1596 = vmatpush1.msra.mxu0 0.0
      %1597 = vmatprep.subr.mxu0 0.0
      %1598 = vmatpush1.msra.mxu0 0.0
      %1599 = vmatprep.subr.mxu0 0.0
      %1600 = vmatpush1.msra.mxu0 0.0
      %1601 = vmatprep.subr.mxu0 0.0
      %1602 = vmatpush1.msra.mxu0 0.0
      %1603 = vmatprep.subr.mxu0 0.0
      %1604 = vmatpush1.msra.mxu0 0.0
      %1605 = vmatprep.subr.mxu0 0.0
      %1606 = vmatpush1.msra.mxu0 0.0
      %1607 = vmatprep.subr.mxu0 0.0
      %1608 = vmatpush1.msra.mxu0 0.0
      %1609 = vmatprep.subr.mxu0 0.0
      %1610 = vmatpush1.msra.mxu0 0.0
      %1611 = vmatprep.subr.mxu0 0.0
      %1612 = vmatpush1.msra.mxu0 0.0
      %1613 = vmatprep.subr.mxu0 0.0
      %1614 = vmatpush1.msra.mxu0 %v1574
      %1615 = vmatprep.subr.mxu0 0.0
      %1616 = vmatpush1.msra.mxu0 %v1572
      %1617 = vmatprep.subr.mxu0 0.0
      %1618 = vmatpush1.msra.mxu0 %v1570
      %1619 = vmatprep.subr.mxu0 0.0
      %1620 = vmatpush2.msra.mxu0 0.0
      %1621 = vmatprep.subr.mxu0 0.0
      %1622 = vmatpush2.msra.mxu0 0.0
      %1623 = vmatprep.subr.mxu0 0.0
      %1624 = vmatpush2.msra.mxu0 0.0
      %1625 = vmatprep.subr.mxu0 0.0
      %1626 = vmatpush2.msra.mxu0 0.0
      %1627 = vmatprep.subr.mxu0 0.0
      %1628 = vmatpush2.msra.mxu0 0.0
      %1629 = vmatprep.subr.mxu0 0.0
      %1630 = vmatpush2.msra.mxu0 0.0
      %1631 = vmatprep.subr.mxu0 0.0
      %1632 = vmatpush2.msra.mxu0 0.0
      %1633 = vmatprep.subr.mxu0 0.0
      %1634 = vmatpush2.msra.mxu0 0.0
      %1635 = vmatprep.subr.mxu0 0.0
      %1636 = vmatpush2.msra.mxu0 0.0
      %1637 = vmatprep.subr.mxu0 0.0
      %1638 = vmatpush2.msra.mxu0 0.0
      %1639 = vmatprep.subr.mxu0 0.0
      %1640 = vmatpush2.msra.mxu0 0.0
      %1641 = vmatprep.subr.mxu0 0.0
      %1642 = vmatpush2.msra.mxu0 0.0
      %1643 = vmatprep.subr.mxu0 0.0
      %1644 = vmatpush2.msra.mxu0 0.0
      %1645 = vmatprep.subr.mxu0 0.0
      %1646 = vmatpush2.msra.mxu0 0.0
      %1647 = vmatprep.subr.mxu0 0.0
      %1648 = vmatpush2.msra.mxu0 0.0
      %1649 = vmatprep.subr.mxu0 0.0
      %1650 = vmatpush2.msra.mxu0 0.0
      %1651 = vmatprep.mubr.f32.mxu0 0.0
      %1652 = vmatmul.mubr.f32.gmra.mxu0 %v1579
      %v1653 = vpop.f32.mrf.mxu0
      %v1654 = vadd.f32 0.0, %v1653
      %v1655 = vpop.f32.mrf.mxu0
      %1656 = vmatprep.mubr.f32.mxu0 0.0
      %1657 = vmatmul.mubr.f32.gmra.mxu0 %v1582
      %v1658 = vpop.f32.mrf.mxu0
      %v1659 = vadd.f32 0.0, %v1658
      %v1660 = vpop.f32.mrf.mxu0
      %1661 = vmatprep.mubr.f32.mxu0 0.0
      %1662 = vmatmul.mubr.f32.gmra.mxu0 %v1585
      %v1663 = vpop.f32.mrf.mxu0
      %v1664 = vadd.f32 0.0, %v1663
      %v1665 = vpop.f32.mrf.mxu0
      %1666 = vdwg.mxu0
      %1667 = vrot.lane.b32.xlu0 %v864, 64
      %v1668 = vpop.permute.xlu0 %1667
      %1669 = vrot.lane.b32.xlu0 %v866, 64
      %v1670 = vpop.permute.xlu0 %1669
      %1671 = vrot.lane.b32.xlu0 %v868, 64
      %v1672 = vpop.permute.xlu0 %1671
      %v1677 = vsel %vm1283, %v1410, 0
      %v1680 = vsel %vm1283, %v1411, 0
      %v1683 = vsel %vm1283, %v1412, 0
      %1685 = vmatprep.subr.mxu0 0.0
      %1686 = vmatpush1.msra.mxu0 0.0
      %1687 = vmatprep.subr.mxu0 0.0
      %1688 = vmatpush1.msra.mxu0 0.0
      %1689 = vmatprep.subr.mxu0 0.0
      %1690 = vmatpush1.msra.mxu0 0.0
      %1691 = vmatprep.subr.mxu0 0.0
      %1692 = vmatpush1.msra.mxu0 0.0
      %1693 = vmatprep.subr.mxu0 0.0
      %1694 = vmatpush1.msra.mxu0 0.0
      %1695 = vmatprep.subr.mxu0 0.0
      %1696 = vmatpush1.msra.mxu0 0.0
      %1697 = vmatprep.subr.mxu0 0.0
      %1698 = vmatpush1.msra.mxu0 0.0
      %1699 = vmatprep.subr.mxu0 0.0
      %1700 = vmatpush1.msra.mxu0 0.0
      %1701 = vmatprep.subr.mxu0 0.0
      %1702 = vmatpush1.msra.mxu0 0.0
      %1703 = vmatprep.subr.mxu0 0.0
      %1704 = vmatpush1.msra.mxu0 0.0
      %1705 = vmatprep.subr.mxu0 0.0
      %1706 = vmatpush1.msra.mxu0 0.0
      %1707 = vmatprep.subr.mxu0 0.0
      %1708 = vmatpush1.msra.mxu0 0.0
      %1709 = vmatprep.subr.mxu0 0.0
      %1710 = vmatpush1.msra.mxu0 0.0
      %1711 = vmatprep.subr.mxu0 0.0
      %1712 = vmatpush1.msra.mxu0 %v1672
      %1713 = vmatprep.subr.mxu0 0.0
      %1714 = vmatpush1.msra.mxu0 %v1670
      %1715 = vmatprep.subr.mxu0 0.0
      %1716 = vmatpush1.msra.mxu0 %v1668
      %1717 = vmatprep.subr.mxu0 0.0
      %1718 = vmatpush2.msra.mxu0 0.0
      %1719 = vmatprep.subr.mxu0 0.0
      %1720 = vmatpush2.msra.mxu0 0.0
      %1721 = vmatprep.subr.mxu0 0.0
      %1722 = vmatpush2.msra.mxu0 0.0
      %1723 = vmatprep.subr.mxu0 0.0
      %1724 = vmatpush2.msra.mxu0 0.0
      %1725 = vmatprep.subr.mxu0 0.0
      %1726 = vmatpush2.msra.mxu0 0.0
      %1727 = vmatprep.subr.mxu0 0.0
      %1728 = vmatpush2.msra.mxu0 0.0
      %1729 = vmatprep.subr.mxu0 0.0
      %1730 = vmatpush2.msra.mxu0 0.0
      %1731 = vmatprep.subr.mxu0 0.0
      %1732 = vmatpush2.msra.mxu0 0.0
      %1733 = vmatprep.subr.mxu0 0.0
      %1734 = vmatpush2.msra.mxu0 0.0
      %1735 = vmatprep.subr.mxu0 0.0
      %1736 = vmatpush2.msra.mxu0 0.0
      %1737 = vmatprep.subr.mxu0 0.0
      %1738 = vmatpush2.msra.mxu0 0.0
      %1739 = vmatprep.subr.mxu0 0.0
      %1740 = vmatpush2.msra.mxu0 0.0
      %1741 = vmatprep.subr.mxu0 0.0
      %1742 = vmatpush2.msra.mxu0 0.0
      %1743 = vmatprep.subr.mxu0 0.0
      %1744 = vmatpush2.msra.mxu0 0.0
      %1745 = vmatprep.subr.mxu0 0.0
      %1746 = vmatpush2.msra.mxu0 0.0
      %1747 = vmatprep.subr.mxu0 0.0
      %1748 = vmatpush2.msra.mxu0 0.0
      %1749 = vmatprep.mubr.f32.mxu0 0.0
      %1750 = vmatmul.mubr.f32.gmra.mxu0 %v1677
      %v1751 = vpop.f32.mrf.mxu0
      %v1752 = vadd.f32 0.0, %v1751
      %v1753 = vpop.f32.mrf.mxu0
      %1754 = vmatprep.mubr.f32.mxu0 0.0
      %1755 = vmatmul.mubr.f32.gmra.mxu0 %v1680
      %v1756 = vpop.f32.mrf.mxu0
      %v1757 = vadd.f32 0.0, %v1756
      %v1758 = vpop.f32.mrf.mxu0
      %1759 = vmatprep.mubr.f32.mxu0 0.0
      %1760 = vmatmul.mubr.f32.gmra.mxu0 %v1683
      %v1761 = vpop.f32.mrf.mxu0
      %v1762 = vadd.f32 0.0, %v1761
      %v1763 = vpop.f32.mrf.mxu0
      %1764 = vdwg.mxu0
      %1765 = vrot.lane.b32.xlu0 %v870, 64
      %v1766 = vpop.permute.xlu0 %1765
      %1767 = vrot.lane.b32.xlu0 %v872, 64
      %v1768 = vpop.permute.xlu0 %1767
      %1769 = vrot.lane.b32.xlu0 %v874, 64
      %v1770 = vpop.permute.xlu0 %1769
      %v1775 = vsel %vm1283, %v1413, 0
      %v1778 = vsel %vm1283, %v1414, 0
      %v1781 = vsel %vm1283, %v1415, 0
      %1783 = vmatprep.subr.mxu0 0.0
      %1784 = vmatpush1.msra.mxu0 0.0
      %1785 = vmatprep.subr.mxu0 0.0
      %1786 = vmatpush1.msra.mxu0 0.0
      %1787 = vmatprep.subr.mxu0 0.0
      %1788 = vmatpush1.msra.mxu0 0.0
      %1789 = vmatprep.subr.mxu0 0.0
      %1790 = vmatpush1.msra.mxu0 0.0
      %1791 = vmatprep.subr.mxu0 0.0
      %1792 = vmatpush1.msra.mxu0 0.0
      %1793 = vmatprep.subr.mxu0 0.0
      %1794 = vmatpush1.msra.mxu0 0.0
      %1795 = vmatprep.subr.mxu0 0.0
      %1796 = vmatpush1.msra.mxu0 0.0
      %1797 = vmatprep.subr.mxu0 0.0
      %1798 = vmatpush1.msra.mxu0 0.0
      %1799 = vmatprep.subr.mxu0 0.0
      %1800 = vmatpush1.msra.mxu0 0.0
      %1801 = vmatprep.subr.mxu0 0.0
      %1802 = vmatpush1.msra.mxu0 0.0
      %1803 = vmatprep.subr.mxu0 0.0
      %1804 = vmatpush1.msra.mxu0 0.0
      %1805 = vmatprep.subr.mxu0 0.0
      %1806 = vmatpush1.msra.mxu0 0.0
      %1807 = vmatprep.subr.mxu0 0.0
      %1808 = vmatpush1.msra.mxu0 0.0
      %1809 = vmatprep.subr.mxu0 0.0
      %1810 = vmatpush1.msra.mxu0 %v1770
      %1811 = vmatprep.subr.mxu0 0.0
      %1812 = vmatpush1.msra.mxu0 %v1768
      %1813 = vmatprep.subr.mxu0 0.0
      %1814 = vmatpush1.msra.mxu0 %v1766
      %1815 = vmatprep.subr.mxu0 0.0
      %1816 = vmatpush2.msra.mxu0 0.0
      %1817 = vmatprep.subr.mxu0 0.0
      %1818 = vmatpush2.msra.mxu0 0.0
      %1819 = vmatprep.subr.mxu0 0.0
      %1820 = vmatpush2.msra.mxu0 0.0
      %1821 = vmatprep.subr.mxu0 0.0
      %1822 = vmatpush2.msra.mxu0 0.0
      %1823 = vmatprep.subr.mxu0 0.0
      %1824 = vmatpush2.msra.mxu0 0.0
      %1825 = vmatprep.subr.mxu0 0.0
      %1826 = vmatpush2.msra.mxu0 0.0
      %1827 = vmatprep.subr.mxu0 0.0
      %1828 = vmatpush2.msra.mxu0 0.0
      %1829 = vmatprep.subr.mxu0 0.0
      %1830 = vmatpush2.msra.mxu0 0.0
      %1831 = vmatprep.subr.mxu0 0.0
      %1832 = vmatpush2.msra.mxu0 0.0
      %1833 = vmatprep.subr.mxu0 0.0
      %1834 = vmatpush2.msra.mxu0 0.0
      %1835 = vmatprep.subr.mxu0 0.0
      %1836 = vmatpush2.msra.mxu0 0.0
      %1837 = vmatprep.subr.mxu0 0.0
      %1838 = vmatpush2.msra.mxu0 0.0
      %1839 = vmatprep.subr.mxu0 0.0
      %1840 = vmatpush2.msra.mxu0 0.0
      %1841 = vmatprep.subr.mxu0 0.0
      %1842 = vmatpush2.msra.mxu0 0.0
      %1843 = vmatprep.subr.mxu0 0.0
      %1844 = vmatpush2.msra.mxu0 0.0
      %1845 = vmatprep.subr.mxu0 0.0
      %1846 = vmatpush2.msra.mxu0 0.0
      %1847 = vmatprep.mubr.f32.mxu0 0.0
      %1848 = vmatmul.mubr.f32.gmra.mxu0 %v1775
      %v1849 = vpop.f32.mrf.mxu0
      %v1850 = vadd.f32 0.0, %v1849
      %v1851 = vpop.f32.mrf.mxu0
      %1852 = vmatprep.mubr.f32.mxu0 0.0
      %1853 = vmatmul.mubr.f32.gmra.mxu0 %v1778
      %v1854 = vpop.f32.mrf.mxu0
      %v1855 = vadd.f32 0.0, %v1854
      %v1856 = vpop.f32.mrf.mxu0
      %1857 = vmatprep.mubr.f32.mxu0 0.0
      %1858 = vmatmul.mubr.f32.gmra.mxu0 %v1781
      %v1859 = vpop.f32.mrf.mxu0
      %v1860 = vadd.f32 0.0, %v1859
      %v1861 = vpop.f32.mrf.mxu0
      %1862 = vdwg.mxu0
      %1866 = vrot.lane.b32.xlu0 %v1654, 8
      %v1867 = vpop.permute.xlu0 %1866
      %1868 = vrot.lane.b32.xlu0 %v1659, 8
      %v1869 = vpop.permute.xlu0 %1868
      %1870 = vrot.lane.b32.xlu0 %v1664, 8
      %v1871 = vpop.permute.xlu0 %1870
      %1878 = vrot.lane.b32.xlu0 %v1752, 16
      %v1879 = vpop.permute.xlu0 %1878
      %1880 = vrot.lane.b32.xlu0 %v1757, 16
      %v1881 = vpop.permute.xlu0 %1880
      %1882 = vrot.lane.b32.xlu0 %v1762, 16
      %v1883 = vpop.permute.xlu0 %1882
      %1890 = vrot.lane.b32.xlu0 %v1850, 24
      %v1891 = vpop.permute.xlu0 %1890
      %1892 = vrot.lane.b32.xlu0 %v1855, 24
      %v1893 = vpop.permute.xlu0 %1892
      %1894 = vrot.lane.b32.xlu0 %v1860, 24
      %v1895 = vpop.permute.xlu0 %1894
      %v1899 = vsel %vm881, %v1556, %v1867
      %v1900 = vsel %vm881, %v1561, %v1869
      %v1901 = vsel %vm881, %v1566, %v1871
      %vm1902 = vcmask 130048
      %v1903 = vsel %vm1902, %v1899, %v1879
      %v1904 = vsel %vm1902, %v1900, %v1881
      %v1905 = vsel %vm1902, %v1901, %v1883
      %v1906 = vsel %vm1283, %v1903, %v1891
      %v1907 = vsel %vm1283, %v1904, %v1893
      %v1908 = vsel %vm1283, %v1905, %v1895
      %v1909 = vld [vmem:[%s481] sm:$0xff]
      %v1910 = vld [vmem:[%s481 + $0x8] sm:$0xff]
      %v1911 = vld [vmem:[%s481 + $0x10] sm:$0xff]
      %v1912 = vld [vmem:[%s481 + $0x18] sm:$0xff]
      %v1914 = vsel %vm694, %v1906, 0
      %v1917 = vsel %vm694, %v1907, 0
      %v1920 = vsel %vm694, %v1908, 0
      %1922 = vmatprep.subr.mxu0 0.0
      %1923 = vmatpush1.msra.mxu0 0.0
      %1924 = vmatprep.subr.mxu0 0.0
      %1925 = vmatpush1.msra.mxu0 0.0
      %1926 = vmatprep.subr.mxu0 0.0
      %1927 = vmatpush1.msra.mxu0 0.0
      %1928 = vmatprep.subr.mxu0 0.0
      %1929 = vmatpush1.msra.mxu0 0.0
      %1930 = vmatprep.subr.mxu0 0.0
      %1931 = vmatpush1.msra.mxu0 0.0
      %1932 = vmatprep.subr.mxu0 0.0
      %1933 = vmatpush1.msra.mxu0 0.0
      %1934 = vmatprep.subr.mxu0 0.0
      %1935 = vmatpush1.msra.mxu0 0.0
      %1936 = vmatprep.subr.mxu0 0.0
      %1937 = vmatpush1.msra.mxu0 0.0
      %1938 = vmatprep.subr.mxu0 0.0
      %1939 = vmatpush1.msra.mxu0 0.0
      %1940 = vmatprep.subr.mxu0 0.0
      %1941 = vmatpush1.msra.mxu0 0.0
      %1942 = vmatprep.subr.mxu0 0.0
      %1943 = vmatpush1.msra.mxu0 0.0
      %1944 = vmatprep.subr.mxu0 0.0
      %1945 = vmatpush1.msra.mxu0 0.0
      %1946 = vmatprep.subr.mxu0 0.0
      %1947 = vmatpush1.msra.mxu0 %v1912
      %1948 = vmatprep.subr.mxu0 0.0
      %1949 = vmatpush1.msra.mxu0 %v1911
      %1950 = vmatprep.subr.mxu0 0.0
      %1951 = vmatpush1.msra.mxu0 %v1910
      %1952 = vmatprep.subr.mxu0 0.0
      %1953 = vmatpush1.msra.mxu0 %v1909
      %1954 = vmatprep.subr.mxu0 0.0
      %1955 = vmatpush2.msra.mxu0 0.0
      %1956 = vmatprep.subr.mxu0 0.0
      %1957 = vmatpush2.msra.mxu0 0.0
      %1958 = vmatprep.subr.mxu0 0.0
      %1959 = vmatpush2.msra.mxu0 0.0
      %1960 = vmatprep.subr.mxu0 0.0
      %1961 = vmatpush2.msra.mxu0 0.0
      %1962 = vmatprep.subr.mxu0 0.0
      %1963 = vmatpush2.msra.mxu0 0.0
      %1964 = vmatprep.subr.mxu0 0.0
      %1965 = vmatpush2.msra.mxu0 0.0
      %1966 = vmatprep.subr.mxu0 0.0
      %1967 = vmatpush2.msra.mxu0 0.0
      %1968 = vmatprep.subr.mxu0 0.0
      %1969 = vmatpush2.msra.mxu0 0.0
      %1970 = vmatprep.subr.mxu0 0.0
      %1971 = vmatpush2.msra.mxu0 0.0
      %1972 = vmatprep.subr.mxu0 0.0
      %1973 = vmatpush2.msra.mxu0 0.0
      %1974 = vmatprep.subr.mxu0 0.0
      %1975 = vmatpush2.msra.mxu0 0.0
      %1976 = vmatprep.subr.mxu0 0.0
      %1977 = vmatpush2.msra.mxu0 0.0
      %1978 = vmatprep.subr.mxu0 0.0
      %1979 = vmatpush2.msra.mxu0 0.0
      %1980 = vmatprep.subr.mxu0 0.0
      %1981 = vmatpush2.msra.mxu0 0.0
      %1982 = vmatprep.subr.mxu0 0.0
      %1983 = vmatpush2.msra.mxu0 0.0
      %1984 = vmatprep.subr.mxu0 0.0
      %1985 = vmatpush2.msra.mxu0 0.0
      %1986 = vmatprep.mubr.f32.mxu0 0.0
      %1987 = vmatmul.mubr.f32.gmra.mxu0 %v1914
      %v1988 = vpop.f32.mrf.mxu0
      %v1989 = vadd.f32 0.0, %v1988
      %v1990 = vpop.f32.mrf.mxu0
      %1991 = vmatprep.mubr.f32.mxu0 0.0
      %1992 = vmatmul.mubr.f32.gmra.mxu0 %v1917
      %v1993 = vpop.f32.mrf.mxu0
      %v1994 = vadd.f32 0.0, %v1993
      %v1995 = vpop.f32.mrf.mxu0
      %1996 = vmatprep.mubr.f32.mxu0 0.0
      %1997 = vmatmul.mubr.f32.gmra.mxu0 %v1920
      %v1998 = vpop.f32.mrf.mxu0
      %v1999 = vadd.f32 0.0, %v1998
      %v2000 = vpop.f32.mrf.mxu0
      %2001 = vdwg.mxu0
      %v2002 = vadd.f32 %v691, %v1989
      %v2003 = vadd.f32 %v692, %v1994
      %v2004 = vadd.f32 %v693, %v1999
      %v2005 = vlaneseq
      %v2006 = vshrl.u32 %v2005, 7
      %v2007 = vsub.s32 4, %v2006
      %v2008 = vrot.slane %v690, %v2007
      %v2009 = vadd.f32 %v2002, %v2008
      %v2010 = vadd.f32 %v2003, %v2008
      %v2011 = vadd.f32 %v2004, %v2008
      %v2012 = vsel %vm694, %v2009, 0.0
      %2013 = vadd.xlane.f32.xlu0 %v2012
      %v2014 = vpop.xlane.xlu0 %2013
      %v2015 = vsel %vm694, %v2010, 0.0
      %2016 = vadd.xlane.f32.xlu0 %v2015
      %v2017 = vpop.xlane.xlu0 %2016
      %v2018 = vsel %vm694, %v2011, 0.0
      %2019 = vadd.xlane.f32.xlu0 %v2018
      %v2020 = vpop.xlane.xlu0 %2019
      %v2021 = vmul.f32 %v2014, %v704
      %v2022 = vmul.f32 %v2017, %v704
      %v2023 = vmul.f32 %v2020, %v704
      %v2024 = vsub.f32 %v2009, %v2021
      %v2025 = vsub.f32 %v2010, %v2022
      %v2026 = vsub.f32 %v2011, %v2023
      %v2027 = vmul.f32 %v2024, %v2024
      %v2028 = vmul.f32 %v2025, %v2025
      %v2029 = vmul.f32 %v2026, %v2026
      %v2030 = vsel %vm694, %v2027, 0.0
      %2031 = vadd.xlane.f32.xlu0 %v2030
      %v2032 = vpop.xlane.xlu0 %2031
      %v2033 = vsel %vm694, %v2028, 0.0
      %2034 = vadd.xlane.f32.xlu0 %v2033
      %v2035 = vpop.xlane.xlu0 %2034
      %v2036 = vsel %vm694, %v2029, 0.0
      %2037 = vadd.xlane.f32.xlu0 %v2036
      %v2038 = vpop.xlane.xlu0 %2037
      %v2039 = vmul.f32 %v2032, %v704
      %v2040 = vmul.f32 %v2035, %v704
      %v2041 = vmul.f32 %v2038, %v704
      %v2042 = vadd.f32 %v2039, 1e-05
      %v2043 = vadd.f32 %v2040, 1e-05
      %v2044 = vadd.f32 %v2041, 1e-05
      %v2045 = vrsqrt.pop %v2042
      %v2046 = vrsqrt.pop %v2043
      %v2047 = vrsqrt.pop %v2044
      %v2048 = vmul.f32 %v2024, %v2045
      %v2049 = vmul.f32 %v2025, %v2046
      %v2050 = vmul.f32 %v2026, %v2047
      %v2051 = vlaneseq
      %v2052 = vshrl.u32 %v2051, 7
      %v2053 = vsub.s32 2, %v2052
      %v2054 = vrot.slane %v690, %v2053
      %v2055 = vmul.f32 %v2048, %v2054
      %v2056 = vmul.f32 %v2049, %v2054
      %v2057 = vmul.f32 %v2050, %v2054
      %v2058 = vlaneseq
      %v2059 = vshrl.u32 %v2058, 7
      %v2060 = vsub.s32 3, %v2059
      %v2061 = vrot.slane %v690, %v2060
      %v2062 = vadd.f32 %v2055, %v2061
      %v2063 = vadd.f32 %v2056, %v2061
      %v2064 = vadd.f32 %v2057, %v2061
      %v2065 = vld [vmem:[%s486] sm:$0xff]
      %v2066 = vld [vmem:[%s486 + $0x8] sm:$0xff]
      %v2067 = vld [vmem:[%s486 + $0x10] sm:$0xff]
      %v2068 = vld [vmem:[%s486 + $0x18] sm:$0xff]
      %v2069 = vld [vmem:[%s501] sm:$0x1]
      %v2071 = vlaneseq
      %v2072 = vshrl.u32 %v2071, 7
      %v2073 = vsub.s32 0, %v2072
      %v2074 = vrot.slane %v2069, %v2073
      %v2077 = vsel %vm694, %v2062, 0
      %v2080 = vsel %vm694, %v2063, 0
      %v2083 = vsel %vm694, %v2064, 0
      %2085 = vmatprep.subr.mxu0 0.0
      %2086 = vmatpush1.msra.mxu0 0.0
      %2087 = vmatprep.subr.mxu0 0.0
      %2088 = vmatpush1.msra.mxu0 0.0
      %2089 = vmatprep.subr.mxu0 0.0
      %2090 = vmatpush1.msra.mxu0 0.0
      %2091 = vmatprep.subr.mxu0 0.0
      %2092 = vmatpush1.msra.mxu0 0.0
      %2093 = vmatprep.subr.mxu0 0.0
      %2094 = vmatpush1.msra.mxu0 0.0
      %2095 = vmatprep.subr.mxu0 0.0
      %2096 = vmatpush1.msra.mxu0 0.0
      %2097 = vmatprep.subr.mxu0 0.0
      %2098 = vmatpush1.msra.mxu0 0.0
      %2099 = vmatprep.subr.mxu0 0.0
      %2100 = vmatpush1.msra.mxu0 0.0
      %2101 = vmatprep.subr.mxu0 0.0
      %2102 = vmatpush1.msra.mxu0 0.0
      %2103 = vmatprep.subr.mxu0 0.0
      %2104 = vmatpush1.msra.mxu0 0.0
      %2105 = vmatprep.subr.mxu0 0.0
      %2106 = vmatpush1.msra.mxu0 0.0
      %2107 = vmatprep.subr.mxu0 0.0
      %2108 = vmatpush1.msra.mxu0 0.0
      %2109 = vmatprep.subr.mxu0 0.0
      %2110 = vmatpush1.msra.mxu0 %v2068
      %2111 = vmatprep.subr.mxu0 0.0
      %2112 = vmatpush1.msra.mxu0 %v2067
      %2113 = vmatprep.subr.mxu0 0.0
      %2114 = vmatpush1.msra.mxu0 %v2066
      %2115 = vmatprep.subr.mxu0 0.0
      %2116 = vmatpush1.msra.mxu0 %v2065
      %2117 = vmatprep.subr.mxu0 0.0
      %2118 = vmatpush2.msra.mxu0 0.0
      %2119 = vmatprep.subr.mxu0 0.0
      %2120 = vmatpush2.msra.mxu0 0.0
      %2121 = vmatprep.subr.mxu0 0.0
      %2122 = vmatpush2.msra.mxu0 0.0
      %2123 = vmatprep.subr.mxu0 0.0
      %2124 = vmatpush2.msra.mxu0 0.0
      %2125 = vmatprep.subr.mxu0 0.0
      %2126 = vmatpush2.msra.mxu0 0.0
      %2127 = vmatprep.subr.mxu0 0.0
      %2128 = vmatpush2.msra.mxu0 0.0
      %2129 = vmatprep.subr.mxu0 0.0
      %2130 = vmatpush2.msra.mxu0 0.0
      %2131 = vmatprep.subr.mxu0 0.0
      %2132 = vmatpush2.msra.mxu0 0.0
      %2133 = vmatprep.subr.mxu0 0.0
      %2134 = vmatpush2.msra.mxu0 0.0
      %2135 = vmatprep.subr.mxu0 0.0
      %2136 = vmatpush2.msra.mxu0 0.0
      %2137 = vmatprep.subr.mxu0 0.0
      %2138 = vmatpush2.msra.mxu0 0.0
      %2139 = vmatprep.subr.mxu0 0.0
      %2140 = vmatpush2.msra.mxu0 0.0
      %2141 = vmatprep.subr.mxu0 0.0
      %2142 = vmatpush2.msra.mxu0 0.0
      %2143 = vmatprep.subr.mxu0 0.0
      %2144 = vmatpush2.msra.mxu0 0.0
      %2145 = vmatprep.subr.mxu0 0.0
      %2146 = vmatpush2.msra.mxu0 0.0
      %2147 = vmatprep.subr.mxu0 0.0
      %2148 = vmatpush2.msra.mxu0 0.0
      %2149 = vmatprep.mubr.f32.mxu0 0.0
      %2150 = vmatmul.mubr.f32.gmra.mxu0 %v2077
      %v2151 = vpop.f32.mrf.mxu0
      %v2152 = vadd.f32 %v2074, %v2151
      %v2153 = vpop.f32.mrf.mxu0
      %2154 = vmatprep.mubr.f32.mxu0 0.0
      %2155 = vmatmul.mubr.f32.gmra.mxu0 %v2080
      %v2156 = vpop.f32.mrf.mxu0
      %v2157 = vadd.f32 %v2074, %v2156
      %v2158 = vpop.f32.mrf.mxu0
      %2159 = vmatprep.mubr.f32.mxu0 0.0
      %2160 = vmatmul.mubr.f32.gmra.mxu0 %v2083
      %v2161 = vpop.f32.mrf.mxu0
      %v2162 = vadd.f32 %v2074, %v2161
      %v2163 = vpop.f32.mrf.mxu0
      %2164 = vdwg.mxu0
      %v2165 = vmul.f32 %v2152, 1.702
      %v2166 = vmul.f32 %v2157, 1.702
      %v2167 = vmul.f32 %v2162, 1.702
      %v2168 = vxor.u32 %v2165, 2147483648
      %v2169 = vxor.u32 %v2166, 2147483648
      %v2170 = vxor.u32 %v2167, 2147483648
      %v2171 = vmul.f32 %v2168, 1.442695
      %v2172 = vpow.pop %v2171
      %v2173 = vmul.f32 %v2169, 1.442695
      %v2174 = vpow.pop %v2173
      %v2175 = vmul.f32 %v2170, 1.442695
      %v2176 = vpow.pop %v2175
      %v2177 = vadd.f32 %v2172, 1.0
      %v2178 = vadd.f32 %v2174, 1.0
      %v2179 = vadd.f32 %v2176, 1.0
      %v2180 = vrcp.pop %v2177
      %v2181 = vmul.f32 1.0, %v2180
      %v2182 = vrcp.pop %v2178
      %v2183 = vmul.f32 1.0, %v2182
      %v2184 = vrcp.pop %v2179
      %v2185 = vmul.f32 1.0, %v2184
      %v2186 = vmul.f32 %v2152, %v2181
      %v2187 = vmul.f32 %v2157, %v2183
      %v2188 = vmul.f32 %v2162, %v2185
      %v2189 = vld [vmem:[%s491] sm:$0xff]
      %v2190 = vld [vmem:[%s491 + $0x8] sm:$0xff]
      %v2191 = vld [vmem:[%s491 + $0x10] sm:$0xff]
      %v2192 = vld [vmem:[%s491 + $0x18] sm:$0xff]
      %v2193 = vld [vmem:[%s491 + $0x20] sm:$0xff]
      %v2194 = vld [vmem:[%s491 + $0x28] sm:$0xff]
      %v2195 = vld [vmem:[%s491 + $0x30] sm:$0xff]
      %v2196 = vld [vmem:[%s491 + $0x38] sm:$0xff]
      %v2197 = vld [vmem:[%s491 + $0x40] sm:$0xff]
      %v2198 = vld [vmem:[%s491 + $0x48] sm:$0xff]
      %v2199 = vld [vmem:[%s491 + $0x50] sm:$0xff]
      %v2200 = vld [vmem:[%s491 + $0x58] sm:$0xff]
      %v2201 = vld [vmem:[%s491 + $0x60] sm:$0xff]
      %v2202 = vld [vmem:[%s491 + $0x68] sm:$0xff]
      %v2203 = vld [vmem:[%s491 + $0x70] sm:$0xff]
      %v2204 = vld [vmem:[%s491 + $0x78] sm:$0xff]
      %2205 = vmatprep.subr.mxu0 0.0
      %2206 = vmatpush1.msra.mxu0 %v2204
      %2207 = vmatprep.subr.mxu0 0.0
      %2208 = vmatpush1.msra.mxu0 %v2203
      %2209 = vmatprep.subr.mxu0 0.0
      %2210 = vmatpush1.msra.mxu0 %v2202
      %2211 = vmatprep.subr.mxu0 0.0
      %2212 = vmatpush1.msra.mxu0 %v2201
      %2213 = vmatprep.subr.mxu0 0.0
      %2214 = vmatpush1.msra.mxu0 %v2200
      %2215 = vmatprep.subr.mxu0 0.0
      %2216 = vmatpush1.msra.mxu0 %v2199
      %2217 = vmatprep.subr.mxu0 0.0
      %2218 = vmatpush1.msra.mxu0 %v2198
      %2219 = vmatprep.subr.mxu0 0.0
      %2220 = vmatpush1.msra.mxu0 %v2197
      %2221 = vmatprep.subr.mxu0 0.0
      %2222 = vmatpush1.msra.mxu0 %v2196
      %2223 = vmatprep.subr.mxu0 0.0
      %2224 = vmatpush1.msra.mxu0 %v2195
      %2225 = vmatprep.subr.mxu0 0.0
      %2226 = vmatpush1.msra.mxu0 %v2194
      %2227 = vmatprep.subr.mxu0 0.0
      %2228 = vmatpush1.msra.mxu0 %v2193
      %2229 = vmatprep.subr.mxu0 0.0
      %2230 = vmatpush1.msra.mxu0 %v2192
      %2231 = vmatprep.subr.mxu0 0.0
      %2232 = vmatpush1.msra.mxu0 %v2191
      %2233 = vmatprep.subr.mxu0 0.0
      %2234 = vmatpush1.msra.mxu0 %v2190
      %2235 = vmatprep.subr.mxu0 0.0
      %2236 = vmatpush1.msra.mxu0 %v2189
      %2237 = vmatprep.subr.mxu0 0.0
      %2238 = vmatpush2.msra.mxu0 0.0
      %2239 = vmatprep.subr.mxu0 0.0
      %2240 = vmatpush2.msra.mxu0 0.0
      %2241 = vmatprep.subr.mxu0 0.0
      %2242 = vmatpush2.msra.mxu0 0.0
      %2243 = vmatprep.subr.mxu0 0.0
      %2244 = vmatpush2.msra.mxu0 0.0
      %2245 = vmatprep.subr.mxu0 0.0
      %2246 = vmatpush2.msra.mxu0 0.0
      %2247 = vmatprep.subr.mxu0 0.0
      %2248 = vmatpush2.msra.mxu0 0.0
      %2249 = vmatprep.subr.mxu0 0.0
      %2250 = vmatpush2.msra.mxu0 0.0
      %2251 = vmatprep.subr.mxu0 0.0
      %2252 = vmatpush2.msra.mxu0 0.0
      %2253 = vmatprep.subr.mxu0 0.0
      %2254 = vmatpush2.msra.mxu0 0.0
      %2255 = vmatprep.subr.mxu0 0.0
      %2256 = vmatpush2.msra.mxu0 0.0
      %2257 = vmatprep.subr.mxu0 0.0
      %2258 = vmatpush2.msra.mxu0 0.0
      %2259 = vmatprep.subr.mxu0 0.0
      %2260 = vmatpush2.msra.mxu0 0.0
      %2261 = vmatprep.subr.mxu0 0.0
      %2262 = vmatpush2.msra.mxu0 0.0
      %2263 = vmatprep.subr.mxu0 0.0
      %2264 = vmatpush2.msra.mxu0 0.0
      %2265 = vmatprep.subr.mxu0 0.0
      %2266 = vmatpush2.msra.mxu0 0.0
      %2267 = vmatprep.subr.mxu0 0.0
      %2268 = vmatpush2.msra.mxu0 0.0
      %2269 = vmatprep.mubr.f32.mxu0 0.0
      %2270 = vmatmul.mubr.f32.gmra.mxu0 %v2186
      %v2271 = vpop.f32.mrf.mxu0
      %v2272 = vadd.f32 0.0, %v2271
      %v2273 = vpop.f32.mrf.mxu0
      %2274 = vmatprep.mubr.f32.mxu0 0.0
      %2275 = vmatmul.mubr.f32.gmra.mxu0 %v2187
      %v2276 = vpop.f32.mrf.mxu0
      %v2277 = vadd.f32 0.0, %v2276
      %v2278 = vpop.f32.mrf.mxu0
      %2279 = vmatprep.mubr.f32.mxu0 0.0
      %2280 = vmatmul.mubr.f32.gmra.mxu0 %v2188
      %v2281 = vpop.f32.mrf.mxu0
      %v2282 = vadd.f32 0.0, %v2281
      %v2283 = vpop.f32.mrf.mxu0
      %2284 = vdwg.mxu0
      %v2285 = vadd.f32 %v2009, %v2272
      %v2286 = vadd.f32 %v2010, %v2277
      %v2287 = vadd.f32 %v2011, %v2282
      %v2288 = vlaneseq
      %v2289 = vshrl.u32 %v2288, 7
      %v2290 = vsub.s32 5, %v2289
      %v2291 = vrot.slane %v690, %v2290
      %v2292 = vadd.f32 %v2285, %v2291
      %v2293 = vadd.f32 %v2286, %v2291
      %v2294 = vadd.f32 %v2287, %v2291
      %2295 = vst.msk [vmem:[#allocation2] sm:$0xff] %vm694, %v2292
      %2296 = vst.msk [vmem:[#allocation2 + $0x8] sm:$0xff] %vm694, %v2293
      %2297 = vst.msk [vmem:[#allocation2 + $0x10] sm:$0xff] %vm694, %v2294
      %p2298 = scmp.eq.s32.totalorder %s24, 1
      // Predicated region
      $region69: #{_forward.2} parent=63 // pred_check
        %p2299 = pneg %p2298
      $region70: #{_forward.2} parent=63 // pred_check_branch
        %2301 = sbr.rel (%p2299) target = $region72
      $region71: #{_forward.2} parent=63 // pred_region
        %s2302 = scalar_lea.vmem %s11, 48
        %2303 = vst.msk [vmem:[%s2302] sm:$0xff] %vm694, %v2292
        %2304 = vst.msk [vmem:[%s2302 + $0x8] sm:$0xff] %vm694, %v2293
        %2305 = vst.msk [vmem:[%s2302 + $0x10] sm:$0xff] %vm694, %v2294
      $region72: #{_forward.2} parent=63 // pred_fallthru
        _
      // Predicated region
      $region73: #{_forward.2} parent=63 // pred_check
        %p2306 = pneg %p303
      $region74: #{_forward.2} parent=63 // pred_check_branch
        %2308 = sbr.rel (%p2306) target = $region76
      $region75: #{_forward.2} parent=63 // pred_region
        _
      $region76: #{_forward.2} parent=63 // pred_fallthru
        _
      // Predicated region
      $region77: #{_forward.2} parent=63 // pred_check
        %p2309 = pneg %p324
      $region78: #{_forward.2} parent=63 // pred_check_branch
        %2311 = sbr.rel (%p2309) target = $region80
      $region79: #{_forward.2} parent=63 // pred_region
        _
      $region80: #{_forward.2} parent=63 // pred_fallthru
        _
      // Predicated region
      $region81: #{_forward.2} parent=63 // pred_check
        %p2312 = pneg %p303
      $region82: #{_forward.2} parent=63 // pred_check_branch
        %2314 = sbr.rel (%p2312) target = $region84
      $region83: #{_forward.2} parent=63 // pred_region
        _
      $region84: #{_forward.2} parent=63 // pred_fallthru
        _
      // Predicated region
      $region85: #{_forward.2} parent=63 // pred_check
        %p2315 = pneg %p324
      $region86: #{_forward.2} parent=63 // pred_check_branch
        %2317 = sbr.rel (%p2315) target = $region88
      $region87: #{_forward.2} parent=63 // pred_region
        _
      $region88: #{_forward.2} parent=63 // pred_fallthru
        _
    $region64: #{_forward.2} parent=5 // pred_fallthru
      _
    %p2318 = scmp.le.s32.totalorder 2, %s19
    // Predicated region
    $region89: #{_forward.2} parent=5 // pred_check
      %p2319 = pneg %p2318
    $region90: #{_forward.2} parent=5 // pred_check_branch
      %2321 = sbr.rel (%p2319) target = $region92
    $region91: #{_forward.2} parent=5 // pred_region
      %s2322 = ssub.s32 %s19, 2
    $region92: #{_forward.2} parent=5 // pred_fallthru
      _
  $region6: #{_forward.2} parent=0 // loop_footer
    %s23 = sadd.s32 1, %s19
  $region7: #{_forward.2} parent=0 // loop_footer_branch
    %18 = sbr.rel target = $region3
  $region8: #{_forward.2} parent=0 // loop_exit
    _

// kernel: _forward.3
$region0: #{_forward.3}
  #allocation0 [shape = 'u32[]', space=smem, size = 0x4, offset = 0x4, fixed_abs, tag = 'smem constant byte address 0x4 - core index']
  #allocation1 [shape = 'u32[144,128]{1,0:T(1,128)}', space=vmem, size = 0x12000, scoped, tag = 'internal scratch']
  %s0 = inlined_call_operand.vmem [shape: f32[3,24,32], index: 0, kind: input, shape index: {}]
  %s1 = inlined_call_operand.vmem [shape: f32[4,24,24], index: 1, kind: input, shape index: {}]
  %s2 = inlined_call_operand.vmem [shape: f32[6,32], index: 2, kind: input, shape index: {}]
  %s3 = inlined_call_operand.vmem [shape: f32[32,32], index: 3, kind: input, shape index: {}]
  %s4 = inlined_call_operand.vmem [shape: f32[32,32], index: 4, kind: input, shape index: {}]
  %s5 = inlined_call_operand.vmem [shape: f32[32,16], index: 5, kind: input, shape index: {}]
  %s6 = inlined_call_operand.vmem [shape: f32[16,6], index: 6, kind: input, shape index: {}]
  %s7 = inlined_call_operand.vmem [shape: f32[72,16], index: 7, kind: output, shape index: {0}]
  %s8 = inlined_call_operand.vmem [shape: f32[16,3], index: 8, kind: output, shape index: {1}]
  %s9 = inlined_call_operand.hbm [shape: f32[16,16], index: 9, kind: output, shape index: {2}]
  %10 = xla_tuple %s7, %s8, %s9
  %s11 = sld [smem:[#allocation0]]
  $region54: #{_forward.3} parent=0
    _
  %s13 = ssub.s32 1, %s11
  %s14 = scalar_select 0, %s13, %s11
  $region1: #{_forward.3} parent=0
    #allocation2 [shape = 'u8[8192]{0}', space=vmem, size = 0x2000, scoped, tag = 'output window, operand 2, single buffered']
    #allocation3 [shape = 's32[1]{0}', space=sflag, size = 0x4, scoped, tag = 'scoped memory for _forward.3']
    %15 = vsyncpa [#allocation3], 0
    // Predicated region
    $region2: #{_forward.3} parent=1 // pred_check
      _
    $region3: #{_forward.3} parent=1 // pred_check_branch
      %17 = sbr.rel (0) target = $region5
    $region4: #{_forward.3} parent=1 // pred_region
      _
    $region5: #{_forward.3} parent=1 // pred_fallthru
      _
    // Predicated region
    $region6: #{_forward.3} parent=1 // pred_check
      _
    $region7: #{_forward.3} parent=1 // pred_check_branch
      %19 = sbr.rel (0) target = $region9
    $region8: #{_forward.3} parent=1 // pred_region
      _
    $region9: #{_forward.3} parent=1 // pred_fallthru
      _
    // Predicated region
    $region10: #{_forward.3} parent=1 // pred_check
      _
    $region11: #{_forward.3} parent=1 // pred_check_branch
      %21 = sbr.rel (0) target = $region13
    $region12: #{_forward.3} parent=1 // pred_region
      _
    $region13: #{_forward.3} parent=1 // pred_fallthru
      _
    // Predicated region
    $region14: #{_forward.3} parent=1 // pred_check
      _
    $region15: #{_forward.3} parent=1 // pred_check_branch
      %23 = sbr.rel (0) target = $region17
    $region16: #{_forward.3} parent=1 // pred_region
      _
    $region17: #{_forward.3} parent=1 // pred_fallthru
      _
    // Predicated region
    $region18: #{_forward.3} parent=1 // pred_check
      _
    $region19: #{_forward.3} parent=1 // pred_check_branch
      %25 = sbr.rel (0) target = $region21
    $region20: #{_forward.3} parent=1 // pred_region
      _
    $region21: #{_forward.3} parent=1 // pred_fallthru
      _
    // Predicated region
    $region22: #{_forward.3} parent=1 // pred_check
      _
    $region23: #{_forward.3} parent=1 // pred_check_branch
      %27 = sbr.rel (0) target = $region25
    $region24: #{_forward.3} parent=1 // pred_region
      _
    $region25: #{_forward.3} parent=1 // pred_fallthru
      _
    // Predicated region
    $region26: #{_forward.3} parent=1 // pred_check
      _
    $region27: #{_forward.3} parent=1 // pred_check_branch
      %29 = sbr.rel (0) target = $region29
    $region28: #{_forward.3} parent=1 // pred_region
      _
    $region29: #{_forward.3} parent=1 // pred_fallthru
      _
    %v30 = vld [vmem:[%s2] sm:$0x3f]
    %v31 = vld [vmem:[%s1] sm:$0xff]
    %v32 = vld [vmem:[%s1 + $0x8] sm:$0xff]
    %v33 = vld [vmem:[%s1 + $0x10] sm:$0xff]
    %v34 = vld [vmem:[%s1 + $0x18] sm:$0xff]
    %v35 = vld [vmem:[%s1 + $0x20] sm:$0xff]
    %v36 = vld [vmem:[%s1 + $0x28] sm:$0xff]
    %v37 = vld [vmem:[%s1 + $0x30] sm:$0xff]
    %v38 = vld [vmem:[%s1 + $0x38] sm:$0xff]
    %v39 = vld [vmem:[%s1 + $0x40] sm:$0xff]
    %v40 = vld [vmem:[%s1 + $0x48] sm:$0xff]
    %v41 = vld [vmem:[%s1 + $0x50] sm:$0xff]
    %v42 = vld [vmem:[%s1 + $0x58] sm:$0xff]
    %vm43 = vcmask 195584
    %v44 = vsel %vm43, %v31, 0.0
    %v45 = vsel %vm43, %v32, 0.0
    %v46 = vadd.f32 %v44, %v45
    %v47 = vsel %vm43, %v33, 0.0
    %v48 = vadd.f32 %v46, %v47
    %v49 = vrot.slane %v48, 4
    %v50 = vadd.f32 %v48, %v49
    %v51 = vrot.slane %v50, 2
    %v52 = vadd.f32 %v50, %v51
    %v53 = vrot.slane %v52, 1
    %v54 = vadd.f32 %v52, %v53
    %v55 = vsel %vm43, %v34, 0.0
    %v56 = vsel %vm43, %v35, 0.0
    %v57 = vadd.f32 %v55, %v56
    %v58 = vsel %vm43, %v36, 0.0
    %v59 = vadd.f32 %v57, %v58
    %v60 = vrot.slane %v59, 4
    %v61 = vadd.f32 %v59, %v60
    %v62 = vrot.slane %v61, 2
    %v63 = vadd.f32 %v61, %v62
    %v64 = vrot.slane %v63, 1
    %v65 = vadd.f32 %v63, %v64
    %v66 = vsel %vm43, %v37, 0.0
    %v67 = vsel %vm43, %v38, 0.0
    %v68 = vadd.f32 %v66, %v67
    %v69 = vsel %vm43, %v39, 0.0
    %v70 = vadd.f32 %v68, %v69
    %v71 = vrot.slane %v70, 4
    %v72 = vadd.f32 %v70, %v71
    %v73 = vrot.slane %v72, 2
    %v74 = vadd.f32 %v72, %v73
    %v75 = vrot.slane %v74, 1
    %v76 = vadd.f32 %v74, %v75
    %v77 = vsel %vm43, %v40, 0.0
    %v78 = vsel %vm43, %v41, 0.0
    %v79 = vadd.f32 %v77, %v78
    %v80 = vsel %vm43, %v42, 0.0
    %v81 = vadd.f32 %v79, %v80
    %v82 = vrot.slane %v81, 4
    %v83 = vadd.f32 %v81, %v82
    %v84 = vrot.slane %v83, 2
    %v85 = vadd.f32 %v83, %v84
    %v86 = vrot.slane %v85, 1
    %v87 = vadd.f32 %v85, %v86
    %vm88 = vcmp.eq.f32.partialorder %v54, 0.0
    %vm89 = vcmp.eq.f32.partialorder %v65, 0.0
    %vm90 = vcmp.eq.f32.partialorder %v76, 0.0
    %vm91 = vcmp.eq.f32.partialorder %v87, 0.0
    %v92 = vsel %vm88, 1.0, %v54
    %v93 = vsel %vm89, 1.0, %v65
    %v94 = vsel %vm90, 1.0, %v76
    %v95 = vsel %vm91, 1.0, %v87
    %v96 = vrcp.pop %v92
    %v97 = vmul.f32 %v31, %v96
    %v98 = vmul.f32 %v32, %v96
    %v99 = vmul.f32 %v33, %v96
    %v100 = vrcp.pop %v93
    %v101 = vmul.f32 %v34, %v100
    %v102 = vmul.f32 %v35, %v100
    %v103 = vmul.f32 %v36, %v100
    %v104 = vrcp.pop %v94
    %v105 = vmul.f32 %v37, %v104
    %v106 = vmul.f32 %v38, %v104
    %v107 = vmul.f32 %v39, %v104
    %v108 = vrcp.pop %v95
    %v109 = vmul.f32 %v40, %v108
    %v110 = vmul.f32 %v41, %v108
    %v111 = vmul.f32 %v42, %v108
    %v112 = vsel %vm43, %v97, 0.0
    %113 = vadd.xlane.f32.xlu0 %v112
    %v114 = vpop.xlane.xlu0 %113
    %v115 = vsel %vm43, %v98, 0.0
    %116 = vadd.xlane.f32.xlu0 %v115
    %v117 = vpop.xlane.xlu0 %116
    %v118 = vsel %vm43, %v99, 0.0
    %119 = vadd.xlane.f32.xlu0 %v118
    %v120 = vpop.xlane.xlu0 %119
    %v121 = vsel %vm43, %v101, 0.0
    %122 = vadd.xlane.f32.xlu0 %v121
    %v123 = vpop.xlane.xlu0 %122
    %v124 = vsel %vm43, %v102, 0.0
    %125 = vadd.xlane.f32.xlu0 %v124
    %v126 = vpop.xlane.xlu0 %125
    %v127 = vsel %vm43, %v103, 0.0
    %128 = vadd.xlane.f32.xlu0 %v127
    %v129 = vpop.xlane.xlu0 %128
    %v130 = vsel %vm43, %v105, 0.0
    %131 = vadd.xlane.f32.xlu0 %v130
    %v132 = vpop.xlane.xlu0 %131
    %v133 = vsel %vm43, %v106, 0.0
    %134 = vadd.xlane.f32.xlu0 %v133
    %v135 = vpop.xlane.xlu0 %134
    %v136 = vsel %vm43, %v107, 0.0
    %137 = vadd.xlane.f32.xlu0 %v136
    %v138 = vpop.xlane.xlu0 %137
    %v139 = vsel %vm43, %v109, 0.0
    %140 = vadd.xlane.f32.xlu0 %v139
    %v141 = vpop.xlane.xlu0 %140
    %v142 = vsel %vm43, %v110, 0.0
    %143 = vadd.xlane.f32.xlu0 %v142
    %v144 = vpop.xlane.xlu0 %143
    %v145 = vsel %vm43, %v111, 0.0
    %146 = vadd.xlane.f32.xlu0 %v145
    %v147 = vpop.xlane.xlu0 %146
    %vm148 = vcmp.eq.f32.partialorder %v114, 0.0
    %vm149 = vcmp.eq.f32.partialorder %v117, 0.0
    %vm150 = vcmp.eq.f32.partialorder %v120, 0.0
    %vm151 = vcmp.eq.f32.partialorder %v123, 0.0
    %vm152 = vcmp.eq.f32.partialorder %v126, 0.0
    %vm153 = vcmp.eq.f32.partialorder %v129, 0.0
    %vm154 = vcmp.eq.f32.partialorder %v132, 0.0
    %vm155 = vcmp.eq.f32.partialorder %v135, 0.0
    %vm156 = vcmp.eq.f32.partialorder %v138, 0.0
    %vm157 = vcmp.eq.f32.partialorder %v141, 0.0
    %vm158 = vcmp.eq.f32.partialorder %v144, 0.0
    %vm159 = vcmp.eq.f32.partialorder %v147, 0.0
    %v160 = vsel %vm148, 1.0, %v114
    %v161 = vsel %vm149, 1.0, %v117
    %v162 = vsel %vm150, 1.0, %v120
    %v163 = vsel %vm151, 1.0, %v123
    %v164 = vsel %vm152, 1.0, %v126
    %v165 = vsel %vm153, 1.0, %v129
    %v166 = vsel %vm154, 1.0, %v132
    %v167 = vsel %vm155, 1.0, %v135
    %v168 = vsel %vm156, 1.0, %v138
    %v169 = vsel %vm157, 1.0, %v141
    %v170 = vsel %vm158, 1.0, %v144
    %v171 = vsel %vm159, 1.0, %v147
    %v172 = vrcp.pop %v160
    %v173 = vmul.f32 %v97, %v172
    %v174 = vrcp.pop %v161
    %v175 = vmul.f32 %v98, %v174
    %v176 = vrcp.pop %v162
    %v177 = vmul.f32 %v99, %v176
    %v178 = vrcp.pop %v163
    %v179 = vmul.f32 %v101, %v178
    %v180 = vrcp.pop %v164
    %v181 = vmul.f32 %v102, %v180
    %v182 = vrcp.pop %v165
    %v183 = vmul.f32 %v103, %v182
    %v184 = vrcp.pop %v166
    %v185 = vmul.f32 %v105, %v184
    %v186 = vrcp.pop %v167
    %v187 = vmul.f32 %v106, %v186
    %v188 = vrcp.pop %v168
    %v189 = vmul.f32 %v107, %v188
    %v190 = vrcp.pop %v169
    %v191 = vmul.f32 %v109, %v190
    %v192 = vrcp.pop %v170
    %v193 = vmul.f32 %v110, %v192
    %v194 = vrcp.pop %v171
    %v195 = vmul.f32 %v111, %v194
    %196 = vxpose.xlu0.b32.start [1/16] %v173, 128
    %197 = vxpose.xlu0.b32.cont [2/16] %v175, 128
    %198 = vxpose.xlu0.b32.cont [3/16] %v177, 128
    %199 = vxpose.xlu0.b32.cont [4/16] 0.0, 128
    %200 = vxpose.xlu0.b32.cont [5/16] 0.0, 128
    %201 = vxpose.xlu0.b32.cont [6/16] 0.0, 128
    %202 = vxpose.xlu0.b32.cont [7/16] 0.0, 128
    %203 = vxpose.xlu0.b32.cont [8/16] 0.0, 128
    %204 = vxpose.xlu0.b32.cont [9/16] 0.0, 128
    %205 = vxpose.xlu0.b32.cont [10/16] 0.0, 128
    %206 = vxpose.xlu0.b32.cont [11/16] 0.0, 128
    %207 = vxpose.xlu0.b32.cont [12/16] 0.0, 128
    %208 = vxpose.xlu0.b32.cont [13/16] 0.0, 128
    %209 = vxpose.xlu0.b32.cont [14/16] 0.0, 128
    %210 = vxpose.xlu0.b32.cont [15/16] 0.0, 128
    %211 = vxpose.xlu0.b32.end [16/16] 0.0, 128
    %v212 = vpop.trf.xlu0
    %v213 = vpop.trf.xlu0
    %v214 = vpop.trf.xlu0
    %v215 = vpop.trf.xlu0
    %v216 = vpop.trf.xlu0
    %v217 = vpop.trf.xlu0
    %v218 = vpop.trf.xlu0
    %v219 = vpop.trf.xlu0
    %v220 = vpop.trf.xlu0
    %v221 = vpop.trf.xlu0
    %v222 = vpop.trf.xlu0
    %v223 = vpop.trf.xlu0
    %v224 = vpop.trf.xlu0
    %v225 = vpop.trf.xlu0
    %v226 = vpop.trf.xlu0
    %v227 = vpop.trf.xlu0
    %228 = vxpose.xlu0.b32.start [1/16] %v179, 128
    %229 = vxpose.xlu0.b32.cont [2/16] %v181, 128
    %230 = vxpose.xlu0.b32.cont [3/16] %v183, 128
    %231 = vxpose.xlu0.b32.cont [4/16] 0.0, 128
    %232 = vxpose.xlu0.b32.cont [5/16] 0.0, 128
    %233 = vxpose.xlu0.b32.cont [6/16] 0.0, 128
    %234 = vxpose.xlu0.b32.cont [7/16] 0.0, 128
    %235 = vxpose.xlu0.b32.cont [8/16] 0.0, 128
    %236 = vxpose.xlu0.b32.cont [9/16] 0.0, 128
    %237 = vxpose.xlu0.b32.cont [10/16] 0.0, 128
    %238 = vxpose.xlu0.b32.cont [11/16] 0.0, 128
    %239 = vxpose.xlu0.b32.cont [12/16] 0.0, 128
    %240 = vxpose.xlu0.b32.cont [13/16] 0.0, 128
    %241 = vxpose.xlu0.b32.cont [14/16] 0.0, 128
    %242 = vxpose.xlu0.b32.cont [15/16] 0.0, 128
    %243 = vxpose.xlu0.b32.end [16/16] 0.0, 128
    %v244 = vpop.trf.xlu0
    %v245 = vpop.trf.xlu0
    %v246 = vpop.trf.xlu0
    %v247 = vpop.trf.xlu0
    %v248 = vpop.trf.xlu0
    %v249 = vpop.trf.xlu0
    %v250 = vpop.trf.xlu0
    %v251 = vpop.trf.xlu0
    %v252 = vpop.trf.xlu0
    %v253 = vpop.trf.xlu0
    %v254 = vpop.trf.xlu0
    %v255 = vpop.trf.xlu0
    %v256 = vpop.trf.xlu0
    %v257 = vpop.trf.xlu0
    %v258 = vpop.trf.xlu0
    %v259 = vpop.trf.xlu0
    %260 = vxpose.xlu0.b32.start [1/16] %v185, 128
    %261 = vxpose.xlu0.b32.cont [2/16] %v187, 128
    %262 = vxpose.xlu0.b32.cont [3/16] %v189, 128
    %263 = vxpose.xlu0.b32.cont [4/16] 0.0, 128
    %264 = vxpose.xlu0.b32.cont [5/16] 0.0, 128
    %265 = vxpose.xlu0.b32.cont [6/16] 0.0, 128
    %266 = vxpose.xlu0.b32.cont [7/16] 0.0, 128
    %267 = vxpose.xlu0.b32.cont [8/16] 0.0, 128
    %268 = vxpose.xlu0.b32.cont [9/16] 0.0, 128
    %269 = vxpose.xlu0.b32.cont [10/16] 0.0, 128
    %270 = vxpose.xlu0.b32.cont [11/16] 0.0, 128
    %271 = vxpose.xlu0.b32.cont [12/16] 0.0, 128
    %272 = vxpose.xlu0.b32.cont [13/16] 0.0, 128
    %273 = vxpose.xlu0.b32.cont [14/16] 0.0, 128
    %274 = vxpose.xlu0.b32.cont [15/16] 0.0, 128
    %275 = vxpose.xlu0.b32.end [16/16] 0.0, 128
    %v276 = vpop.trf.xlu0
    %v277 = vpop.trf.xlu0
    %v278 = vpop.trf.xlu0
    %v279 = vpop.trf.xlu0
    %v280 = vpop.trf.xlu0
    %v281 = vpop.trf.xlu0
    %v282 = vpop.trf.xlu0
    %v283 = vpop.trf.xlu0
    %v284 = vpop.trf.xlu0
    %v285 = vpop.trf.xlu0
    %v286 = vpop.trf.xlu0
    %v287 = vpop.trf.xlu0
    %v288 = vpop.trf.xlu0
    %v289 = vpop.trf.xlu0
    %v290 = vpop.trf.xlu0
    %v291 = vpop.trf.xlu0
    %292 = vxpose.xlu0.b32.start [1/16] %v191, 128
    %293 = vxpose.xlu0.b32.cont [2/16] %v193, 128
    %294 = vxpose.xlu0.b32.cont [3/16] %v195, 128
    %295 = vxpose.xlu0.b32.cont [4/16] 0.0, 128
    %296 = vxpose.xlu0.b32.cont [5/16] 0.0, 128
    %297 = vxpose.xlu0.b32.cont [6/16] 0.0, 128
    %298 = vxpose.xlu0.b32.cont [7/16] 0.0, 128
    %299 = vxpose.xlu0.b32.cont [8/16] 0.0, 128
    %300 = vxpose.xlu0.b32.cont [9/16] 0.0, 128
    %301 = vxpose.xlu0.b32.cont [10/16] 0.0, 128
    %302 = vxpose.xlu0.b32.cont [11/16] 0.0, 128
    %303 = vxpose.xlu0.b32.cont [12/16] 0.0, 128
    %304 = vxpose.xlu0.b32.cont [13/16] 0.0, 128
    %305 = vxpose.xlu0.b32.cont [14/16] 0.0, 128
    %306 = vxpose.xlu0.b32.cont [15/16] 0.0, 128
    %307 = vxpose.xlu0.b32.end [16/16] 0.0, 128
    %v308 = vpop.trf.xlu0
    %v309 = vpop.trf.xlu0
    %v310 = vpop.trf.xlu0
    %v311 = vpop.trf.xlu0
    %v312 = vpop.trf.xlu0
    %v313 = vpop.trf.xlu0
    %v314 = vpop.trf.xlu0
    %v315 = vpop.trf.xlu0
    %v316 = vpop.trf.xlu0
    %v317 = vpop.trf.xlu0
    %v318 = vpop.trf.xlu0
    %v319 = vpop.trf.xlu0
    %v320 = vpop.trf.xlu0
    %v321 = vpop.trf.xlu0
    %v322 = vpop.trf.xlu0
    %v323 = vpop.trf.xlu0
    %v324 = vadd.f32 %v173, %v212
    %v325 = vadd.f32 %v175, %v213
    %v326 = vadd.f32 %v177, %v214
    %v327 = vadd.f32 %v179, %v244
    %v328 = vadd.f32 %v181, %v245
    %v329 = vadd.f32 %v183, %v246
    %v330 = vadd.f32 %v185, %v276
    %v331 = vadd.f32 %v187, %v277
    %v332 = vadd.f32 %v189, %v278
    %v333 = vadd.f32 %v191, %v308
    %v334 = vadd.f32 %v193, %v309
    %v335 = vadd.f32 %v195, %v310
    %v336 = vmul.f32 %v324, 0.5
    %v337 = vmul.f32 %v325, 0.5
    %v338 = vmul.f32 %v326, 0.5
    %v339 = vmul.f32 %v327, 0.5
    %v340 = vmul.f32 %v328, 0.5
    %v341 = vmul.f32 %v329, 0.5
    %v342 = vmul.f32 %v330, 0.5
    %v343 = vmul.f32 %v331, 0.5
    %v344 = vmul.f32 %v332, 0.5
    %v345 = vmul.f32 %v333, 0.5
    %v346 = vmul.f32 %v334, 0.5
    %v347 = vmul.f32 %v335, 0.5
    %v348 = vsel %vm43, %v336, 0.0
    %v349 = vsel %vm43, %v337, 0.0
    %v350 = vadd.f32 %v348, %v349
    %v351 = vsel %vm43, %v338, 0.0
    %v352 = vadd.f32 %v350, %v351
    %v353 = vrot.slane %v352, 4
    %v354 = vadd.f32 %v352, %v353
    %v355 = vrot.slane %v354, 2
    %v356 = vadd.f32 %v354, %v355
    %v357 = vrot.slane %v356, 1
    %v358 = vadd.f32 %v356, %v357
    %v359 = vsel %vm43, %v339, 0.0
    %v360 = vsel %vm43, %v340, 0.0
    %v361 = vadd.f32 %v359, %v360
    %v362 = vsel %vm43, %v341, 0.0
    %v363 = vadd.f32 %v361, %v362
    %v364 = vrot.slane %v363, 4
    %v365 = vadd.f32 %v363, %v364
    %v366 = vrot.slane %v365, 2
    %v367 = vadd.f32 %v365, %v366
    %v368 = vrot.slane %v367, 1
    %v369 = vadd.f32 %v367, %v368
    %v370 = vsel %vm43, %v342, 0.0
    %v371 = vsel %vm43, %v343, 0.0
    %v372 = vadd.f32 %v370, %v371
    %v373 = vsel %vm43, %v344, 0.0
    %v374 = vadd.f32 %v372, %v373
    %v375 = vrot.slane %v374, 4
    %v376 = vadd.f32 %v374, %v375
    %v377 = vrot.slane %v376, 2
    %v378 = vadd.f32 %v376, %v377
    %v379 = vrot.slane %v378, 1
    %v380 = vadd.f32 %v378, %v379
    %v381 = vsel %vm43, %v345, 0.0
    %v382 = vsel %vm43, %v346, 0.0
    %v383 = vadd.f32 %v381, %v382
    %v384 = vsel %vm43, %v347, 0.0
    %v385 = vadd.f32 %v383, %v384
    %v386 = vrot.slane %v385, 4
    %v387 = vadd.f32 %v385, %v386
    %v388 = vrot.slane %v387, 2
    %v389 = vadd.f32 %v387, %v388
    %v390 = vrot.slane %v389, 1
    %v391 = vadd.f32 %v389, %v390
    %v392 = vmul.f32 %v358, 0.05882353
    %v393 = vmul.f32 %v369, 0.05882353
    %v394 = vmul.f32 %v380, 0.05882353
    %v395 = vmul.f32 %v391, 0.05882353
    %v396 = vsub.f32 %v336, %v392
    %v397 = vsub.f32 %v337, %v392
    %v398 = vsub.f32 %v338, %v392
    %v399 = vsub.f32 %v339, %v393
    %v400 = vsub.f32 %v340, %v393
    %v401 = vsub.f32 %v341, %v393
    %v402 = vsub.f32 %v342, %v394
    %v403 = vsub.f32 %v343, %v394
    %v404 = vsub.f32 %v344, %v394
    %v405 = vsub.f32 %v345, %v395
    %v406 = vsub.f32 %v346, %v395
    %v407 = vsub.f32 %v347, %v395
    %v408 = vmax.f32 %v396, 0.0
    %v409 = vmax.f32 %v397, 0.0
    %v410 = vmax.f32 %v398, 0.0
    %v411 = vmax.f32 %v399, 0.0
    %v412 = vmax.f32 %v400, 0.0
    %v413 = vmax.f32 %v401, 0.0
    %v414 = vmax.f32 %v402, 0.0
    %v415 = vmax.f32 %v403, 0.0
    %v416 = vmax.f32 %v404, 0.0
    %v417 = vmax.f32 %v405, 0.0
    %v418 = vmax.f32 %v406, 0.0
    %v419 = vmax.f32 %v407, 0.0
    %v420 = vsel %vm43, %v408, 0.0
    %421 = vadd.xlane.f32.xlu0 %v420
    %v422 = vpop.xlane.xlu0 %421
    %v423 = vsel %vm43, %v409, 0.0
    %424 = vadd.xlane.f32.xlu0 %v423
    %v425 = vpop.xlane.xlu0 %424
    %v426 = vsel %vm43, %v410, 0.0
    %427 = vadd.xlane.f32.xlu0 %v426
    %v428 = vpop.xlane.xlu0 %427
    %v429 = vsel %vm43, %v411, 0.0
    %430 = vadd.xlane.f32.xlu0 %v429
    %v431 = vpop.xlane.xlu0 %430
    %v432 = vsel %vm43, %v412, 0.0
    %433 = vadd.xlane.f32.xlu0 %v432
    %v434 = vpop.xlane.xlu0 %433
    %v435 = vsel %vm43, %v413, 0.0
    %436 = vadd.xlane.f32.xlu0 %v435
    %v437 = vpop.xlane.xlu0 %436
    %v438 = vsel %vm43, %v414, 0.0
    %439 = vadd.xlane.f32.xlu0 %v438
    %v440 = vpop.xlane.xlu0 %439
    %v441 = vsel %vm43, %v415, 0.0
    %442 = vadd.xlane.f32.xlu0 %v441
    %v443 = vpop.xlane.xlu0 %442
    %v444 = vsel %vm43, %v416, 0.0
    %445 = vadd.xlane.f32.xlu0 %v444
    %v446 = vpop.xlane.xlu0 %445
    %v447 = vsel %vm43, %v417, 0.0
    %448 = vadd.xlane.f32.xlu0 %v447
    %v449 = vpop.xlane.xlu0 %448
    %v450 = vsel %vm43, %v418, 0.0
    %451 = vadd.xlane.f32.xlu0 %v450
    %v452 = vpop.xlane.xlu0 %451
    %v453 = vsel %vm43, %v419, 0.0
    %454 = vadd.xlane.f32.xlu0 %v453
    %v455 = vpop.xlane.xlu0 %454
    %vm456 = vcmp.eq.f32.partialorder %v422, 0.0
    %vm457 = vcmp.eq.f32.partialorder %v425, 0.0
    %vm458 = vcmp.eq.f32.partialorder %v428, 0.0
    %vm459 = vcmp.eq.f32.partialorder %v431, 0.0
    %vm460 = vcmp.eq.f32.partialorder %v434, 0.0
    %vm461 = vcmp.eq.f32.partialorder %v437, 0.0
    %vm462 = vcmp.eq.f32.partialorder %v440, 0.0
    %vm463 = vcmp.eq.f32.partialorder %v443, 0.0
    %vm464 = vcmp.eq.f32.partialorder %v446, 0.0
    %vm465 = vcmp.eq.f32.partialorder %v449, 0.0
    %vm466 = vcmp.eq.f32.partialorder %v452, 0.0
    %vm467 = vcmp.eq.f32.partialorder %v455, 0.0
    %v468 = vsel %vm456, 1.0, %v422
    %v469 = vsel %vm457, 1.0, %v425
    %v470 = vsel %vm458, 1.0, %v428
    %v471 = vsel %vm459, 1.0, %v431
    %v472 = vsel %vm460, 1.0, %v434
    %v473 = vsel %vm461, 1.0, %v437
    %v474 = vsel %vm462, 1.0, %v440
    %v475 = vsel %vm463, 1.0, %v443
    %v476 = vsel %vm464, 1.0, %v446
    %v477 = vsel %vm465, 1.0, %v449
    %v478 = vsel %vm466, 1.0, %v452
    %v479 = vsel %vm467, 1.0, %v455
    %v480 = vrcp.pop %v468
    %v481 = vrcp.pop %v469
    %v482 = vrcp.pop %v470
    %v483 = vrcp.pop %v471
    %v484 = vrcp.pop %v472
    %v485 = vrcp.pop %v473
    %v486 = vrcp.pop %v474
    %v487 = vrcp.pop %v475
    %v488 = vrcp.pop %v476
    %v489 = vrcp.pop %v477
    %v490 = vrcp.pop %v478
    %v491 = vrcp.pop %v479
    %v492 = vmul.f32 %v408, %v480
    %v493 = vmul.f32 %v409, %v481
    %v494 = vmul.f32 %v410, %v482
    %v495 = vmul.f32 %v411, %v483
    %v496 = vmul.f32 %v412, %v484
    %v497 = vmul.f32 %v413, %v485
    %v498 = vmul.f32 %v414, %v486
    %v499 = vmul.f32 %v415, %v487
    %v500 = vmul.f32 %v416, %v488
    %v501 = vmul.f32 %v417, %v489
    %v502 = vmul.f32 %v418, %v490
    %v503 = vmul.f32 %v419, %v491
    %v504 = vsel %vm43, %v173, 0.0
    %v505 = vsel %vm43, %v175, 0.0
    %v506 = vadd.f32 %v504, %v505
    %v507 = vsel %vm43, %v177, 0.0
    %v508 = vadd.f32 %v506, %v507
    %v509 = vrot.slane %v508, 4
    %v510 = vadd.f32 %v508, %v509
    %v511 = vrot.slane %v510, 2
    %v512 = vadd.f32 %v510, %v511
    %v513 = vrot.slane %v512, 1
    %v514 = vadd.f32 %v512, %v513
    %v515 = vsel %vm43, %v179, 0.0
    %v516 = vsel %vm43, %v181, 0.0
    %v517 = vadd.f32 %v515, %v516
    %v518 = vsel %vm43, %v183, 0.0
    %v519 = vadd.f32 %v517, %v518
    %v520 = vrot.slane %v519, 4
    %v521 = vadd.f32 %v519, %v520
    %v522 = vrot.slane %v521, 2
    %v523 = vadd.f32 %v521, %v522
    %v524 = vrot.slane %v523, 1
    %v525 = vadd.f32 %v523, %v524
    %v526 = vsel %vm43, %v185, 0.0
    %v527 = vsel %vm43, %v187, 0.0
    %v528 = vadd.f32 %v526, %v527
    %v529 = vsel %vm43, %v189, 0.0
    %v530 = vadd.f32 %v528, %v529
    %v531 = vrot.slane %v530, 4
    %v532 = vadd.f32 %v530, %v531
    %v533 = vrot.slane %v532, 2
    %v534 = vadd.f32 %v532, %v533
    %v535 = vrot.slane %v534, 1
    %v536 = vadd.f32 %v534, %v535
    %v537 = vsel %vm43, %v191, 0.0
    %v538 = vsel %vm43, %v193, 0.0
    %v539 = vadd.f32 %v537, %v538
    %v540 = vsel %vm43, %v195, 0.0
    %v541 = vadd.f32 %v539, %v540
    %v542 = vrot.slane %v541, 4
    %v543 = vadd.f32 %v541, %v542
    %v544 = vrot.slane %v543, 2
    %v545 = vadd.f32 %v543, %v544
    %v546 = vrot.slane %v545, 1
    %v547 = vadd.f32 %v545, %v546
    %vm548 = vcmp.eq.f32.partialorder %v514, 0.0
    %vm549 = vcmp.eq.f32.partialorder %v525, 0.0
    %vm550 = vcmp.eq.f32.partialorder %v536, 0.0
    %vm551 = vcmp.eq.f32.partialorder %v547, 0.0
    %v552 = vsel %vm548, 1.0, %v514
    %v553 = vsel %vm549, 1.0, %v525
    %v554 = vsel %vm550, 1.0, %v536
    %v555 = vsel %vm551, 1.0, %v547
    %v556 = vrcp.pop %v552
    %v557 = vmul.f32 %v173, %v556
    %v558 = vmul.f32 %v175, %v556
    %v559 = vmul.f32 %v177, %v556
    %v560 = vrcp.pop %v553
    %v561 = vmul.f32 %v179, %v560
    %v562 = vmul.f32 %v181, %v560
    %v563 = vmul.f32 %v183, %v560
    %v564 = vrcp.pop %v554
    %v565 = vmul.f32 %v185, %v564
    %v566 = vmul.f32 %v187, %v564
    %v567 = vmul.f32 %v189, %v564
    %v568 = vrcp.pop %v555
    %v569 = vmul.f32 %v191, %v568
    %v570 = vmul.f32 %v193, %v568
    %v571 = vmul.f32 %v195, %v568
    %v572 = vsel %vm43, %v557, 0.0
    %573 = vadd.xlane.f32.xlu0 %v572
    %v574 = vpop.xlane.xlu0 %573
    %v575 = vsel %vm43, %v558, 0.0
    %576 = vadd.xlane.f32.xlu0 %v575
    %v577 = vpop.xlane.xlu0 %576
    %v578 = vsel %vm43, %v559, 0.0
    %579 = vadd.xlane.f32.xlu0 %v578
    %v580 = vpop.xlane.xlu0 %579
    %v581 = vsel %vm43, %v561, 0.0
    %582 = vadd.xlane.f32.xlu0 %v581
    %v583 = vpop.xlane.xlu0 %582
    %v584 = vsel %vm43, %v562, 0.0
    %585 = vadd.xlane.f32.xlu0 %v584
    %v586 = vpop.xlane.xlu0 %585
    %v587 = vsel %vm43, %v563, 0.0
    %588 = vadd.xlane.f32.xlu0 %v587
    %v589 = vpop.xlane.xlu0 %588
    %v590 = vsel %vm43, %v565, 0.0
    %591 = vadd.xlane.f32.xlu0 %v590
    %v592 = vpop.xlane.xlu0 %591
    %v593 = vsel %vm43, %v566, 0.0
    %594 = vadd.xlane.f32.xlu0 %v593
    %v595 = vpop.xlane.xlu0 %594
    %v596 = vsel %vm43, %v567, 0.0
    %597 = vadd.xlane.f32.xlu0 %v596
    %v598 = vpop.xlane.xlu0 %597
    %v599 = vsel %vm43, %v569, 0.0
    %600 = vadd.xlane.f32.xlu0 %v599
    %v601 = vpop.xlane.xlu0 %600
    %v602 = vsel %vm43, %v570, 0.0
    %603 = vadd.xlane.f32.xlu0 %v602
    %v604 = vpop.xlane.xlu0 %603
    %v605 = vsel %vm43, %v571, 0.0
    %606 = vadd.xlane.f32.xlu0 %v605
    %v607 = vpop.xlane.xlu0 %606
    %vm608 = vcmp.eq.f32.partialorder %v574, 0.0
    %vm609 = vcmp.eq.f32.partialorder %v577, 0.0
    %vm610 = vcmp.eq.f32.partialorder %v580, 0.0
    %vm611 = vcmp.eq.f32.partialorder %v583, 0.0
    %vm612 = vcmp.eq.f32.partialorder %v586, 0.0
    %vm613 = vcmp.eq.f32.partialorder %v589, 0.0
    %vm614 = vcmp.eq.f32.partialorder %v592, 0.0
    %vm615 = vcmp.eq.f32.partialorder %v595, 0.0
    %vm616 = vcmp.eq.f32.partialorder %v598, 0.0
    %vm617 = vcmp.eq.f32.partialorder %v601, 0.0
    %vm618 = vcmp.eq.f32.partialorder %v604, 0.0
    %vm619 = vcmp.eq.f32.partialorder %v607, 0.0
    %v620 = vsel %vm608, 1.0, %v574
    %v621 = vsel %vm609, 1.0, %v577
    %v622 = vsel %vm610, 1.0, %v580
    %v623 = vsel %vm611, 1.0, %v583
    %v624 = vsel %vm612, 1.0, %v586
    %v625 = vsel %vm613, 1.0, %v589
    %v626 = vsel %vm614, 1.0, %v592
    %v627 = vsel %vm615, 1.0, %v595
    %v628 = vsel %vm616, 1.0, %v598
    %v629 = vsel %vm617, 1.0, %v601
    %v630 = vsel %vm618, 1.0, %v604
    %v631 = vsel %vm619, 1.0, %v607
    %v632 = vrcp.pop %v620
    %v633 = vmul.f32 %v557, %v632
    %v634 = vrcp.pop %v621
    %v635 = vmul.f32 %v558, %v634
    %v636 = vrcp.pop %v622
    %v637 = vmul.f32 %v559, %v636
    %v638 = vrcp.pop %v623
    %v639 = vmul.f32 %v561, %v638
    %v640 = vrcp.pop %v624
    %v641 = vmul.f32 %v562, %v640
    %v642 = vrcp.pop %v625
    %v643 = vmul.f32 %v563, %v642
    %v644 = vrcp.pop %v626
    %v645 = vmul.f32 %v565, %v644
    %v646 = vrcp.pop %v627
    %v647 = vmul.f32 %v566, %v646
    %v648 = vrcp.pop %v628
    %v649 = vmul.f32 %v567, %v648
    %v650 = vrcp.pop %v629
    %v651 = vmul.f32 %v569, %v650
    %v652 = vrcp.pop %v630
    %v653 = vmul.f32 %v570, %v652
    %v654 = vrcp.pop %v631
    %v655 = vmul.f32 %v571, %v654
    %656 = vxpose.xlu0.b32.start [1/16] %v633, 128
    %657 = vxpose.xlu0.b32.cont [2/16] %v635, 128
    %658 = vxpose.xlu0.b32.cont [3/16] %v637, 128
    %659 = vxpose.xlu0.b32.cont [4/16] 0.0, 128
    %660 = vxpose.xlu0.b32.cont [5/16] 0.0, 128
    %661 = vxpose.xlu0.b32.cont [6/16] 0.0, 128
    %662 = vxpose.xlu0.b32.cont [7/16] 0.0, 128
    %663 = vxpose.xlu0.b32.cont [8/16] 0.0, 128
    %664 = vxpose.xlu0.b32.cont [9/16] 0.0, 128
    %665 = vxpose.xlu0.b32.cont [10/16] 0.0, 128
    %666 = vxpose.xlu0.b32.cont [11/16] 0.0, 128
    %667 = vxpose.xlu0.b32.cont [12/16] 0.0, 128
    %668 = vxpose.xlu0.b32.cont [13/16] 0.0, 128
    %669 = vxpose.xlu0.b32.cont [14/16] 0.0, 128
    %670 = vxpose.xlu0.b32.cont [15/16] 0.0, 128
    %671 = vxpose.xlu0.b32.end [16/16] 0.0, 128
    %v672 = vpop.trf.xlu0
    %v673 = vpop.trf.xlu0
    %v674 = vpop.trf.xlu0
    %v675 = vpop.trf.xlu0
    %v676 = vpop.trf.xlu0
    %v677 = vpop.trf.xlu0
    %v678 = vpop.trf.xlu0
    %v679 = vpop.trf.xlu0
    %v680 = vpop.trf.xlu0
    %v681 = vpop.trf.xlu0
    %v682 = vpop.trf.xlu0
    %v683 = vpop.trf.xlu0
    %v684 = vpop.trf.xlu0
    %v685 = vpop.trf.xlu0
    %v686 = vpop.trf.xlu0
    %v687 = vpop.trf.xlu0
    %688 = vxpose.xlu0.b32.start [1/16] %v639, 128
    %689 = vxpose.xlu0.b32.cont [2/16] %v641, 128
    %690 = vxpose.xlu0.b32.cont [3/16] %v643, 128
    %691 = vxpose.xlu0.b32.cont [4/16] 0.0, 128
    %692 = vxpose.xlu0.b32.cont [5/16] 0.0, 128
    %693 = vxpose.xlu0.b32.cont [6/16] 0.0, 128
    %694 = vxpose.xlu0.b32.cont [7/16] 0.0, 128
    %695 = vxpose.xlu0.b32.cont [8/16] 0.0, 128
    %696 = vxpose.xlu0.b32.cont [9/16] 0.0, 128
    %697 = vxpose.xlu0.b32.cont [10/16] 0.0, 128
    %698 = vxpose.xlu0.b32.cont [11/16] 0.0, 128
    %699 = vxpose.xlu0.b32.cont [12/16] 0.0, 128
    %700 = vxpose.xlu0.b32.cont [13/16] 0.0, 128
    %701 = vxpose.xlu0.b32.cont [14/16] 0.0, 128
    %702 = vxpose.xlu0.b32.cont [15/16] 0.0, 128
    %703 = vxpose.xlu0.b32.end [16/16] 0.0, 128
    %v704 = vpop.trf.xlu0
    %v705 = vpop.trf.xlu0
    %v706 = vpop.trf.xlu0
    %v707 = vpop.trf.xlu0
    %v708 = vpop.trf.xlu0
    %v709 = vpop.trf.xlu0
    %v710 = vpop.trf.xlu0
    %v711 = vpop.trf.xlu0
    %v712 = vpop.trf.xlu0
    %v713 = vpop.trf.xlu0
    %v714 = vpop.trf.xlu0
    %v715 = vpop.trf.xlu0
    %v716 = vpop.trf.xlu0
    %v717 = vpop.trf.xlu0
    %v718 = vpop.trf.xlu0
    %v719 = vpop.trf.xlu0
    %720 = vxpose.xlu0.b32.start [1/16] %v645, 128
    %721 = vxpose.xlu0.b32.cont [2/16] %v647, 128
    %722 = vxpose.xlu0.b32.cont [3/16] %v649, 128
    %723 = vxpose.xlu0.b32.cont [4/16] 0.0, 128
    %724 = vxpose.xlu0.b32.cont [5/16] 0.0, 128
    %725 = vxpose.xlu0.b32.cont [6/16] 0.0, 128
    %726 = vxpose.xlu0.b32.cont [7/16] 0.0, 128
    %727 = vxpose.xlu0.b32.cont [8/16] 0.0, 128
    %728 = vxpose.xlu0.b32.cont [9/16] 0.0, 128
    %729 = vxpose.xlu0.b32.cont [10/16] 0.0, 128
    %730 = vxpose.xlu0.b32.cont [11/16] 0.0, 128
    %731 = vxpose.xlu0.b32.cont [12/16] 0.0, 128
    %732 = vxpose.xlu0.b32.cont [13/16] 0.0, 128
    %733 = vxpose.xlu0.b32.cont [14/16] 0.0, 128
    %734 = vxpose.xlu0.b32.cont [15/16] 0.0, 128
    %735 = vxpose.xlu0.b32.end [16/16] 0.0, 128
    %v736 = vpop.trf.xlu0
    %v737 = vpop.trf.xlu0
    %v738 = vpop.trf.xlu0
    %v739 = vpop.trf.xlu0
    %v740 = vpop.trf.xlu0
    %v741 = vpop.trf.xlu0
    %v742 = vpop.trf.xlu0
    %v743 = vpop.trf.xlu0
    %v744 = vpop.trf.xlu0
    %v745 = vpop.trf.xlu0
    %v746 = vpop.trf.xlu0
    %v747 = vpop.trf.xlu0
    %v748 = vpop.trf.xlu0
    %v749 = vpop.trf.xlu0
    %v750 = vpop.trf.xlu0
    %v751 = vpop.trf.xlu0
    %752 = vxpose.xlu0.b32.start [1/16] %v651, 128
    %753 = vxpose.xlu0.b32.cont [2/16] %v653, 128
    %754 = vxpose.xlu0.b32.cont [3/16] %v655, 128
    %755 = vxpose.xlu0.b32.cont [4/16] 0.0, 128
    %756 = vxpose.xlu0.b32.cont [5/16] 0.0, 128
    %757 = vxpose.xlu0.b32.cont [6/16] 0.0, 128
    %758 = vxpose.xlu0.b32.cont [7/16] 0.0, 128
    %759 = vxpose.xlu0.b32.cont [8/16] 0.0, 128
    %760 = vxpose.xlu0.b32.cont [9/16] 0.0, 128
    %761 = vxpose.xlu0.b32.cont [10/16] 0.0, 128
    %762 = vxpose.xlu0.b32.cont [11/16] 0.0, 128
    %763 = vxpose.xlu0.b32.cont [12/16] 0.0, 128
    %764 = vxpose.xlu0.b32.cont [13/16] 0.0, 128
    %765 = vxpose.xlu0.b32.cont [14/16] 0.0, 128
    %766 = vxpose.xlu0.b32.cont [15/16] 0.0, 128
    %767 = vxpose.xlu0.b32.end [16/16] 0.0, 128
    %v768 = vpop.trf.xlu0
    %v769 = vpop.trf.xlu0
    %v770 = vpop.trf.xlu0
    %v771 = vpop.trf.xlu0
    %v772 = vpop.trf.xlu0
    %v773 = vpop.trf.xlu0
    %v774 = vpop.trf.xlu0
    %v775 = vpop.trf.xlu0
    %v776 = vpop.trf.xlu0
    %v777 = vpop.trf.xlu0
    %v778 = vpop.trf.xlu0
    %v779 = vpop.trf.xlu0
    %v780 = vpop.trf.xlu0
    %v781 = vpop.trf.xlu0
    %v782 = vpop.trf.xlu0
    %v783 = vpop.trf.xlu0
    %v784 = vadd.f32 %v633, %v672
    %v785 = vadd.f32 %v635, %v673
    %v786 = vadd.f32 %v637, %v674
    %v787 = vadd.f32 %v639, %v704
    %v788 = vadd.f32 %v641, %v705
    %v789 = vadd.f32 %v643, %v706
    %v790 = vadd.f32 %v645, %v736
    %v791 = vadd.f32 %v647, %v737
    %v792 = vadd.f32 %v649, %v738
    %v793 = vadd.f32 %v651, %v768
    %v794 = vadd.f32 %v653, %v769
    %v795 = vadd.f32 %v655, %v770
    %v796 = vmul.f32 %v784, 0.5
    %v797 = vmul.f32 %v785, 0.5
    %v798 = vmul.f32 %v786, 0.5
    %v799 = vmul.f32 %v787, 0.5
    %v800 = vmul.f32 %v788, 0.5
    %v801 = vmul.f32 %v789, 0.5
    %v802 = vmul.f32 %v790, 0.5
    %v803 = vmul.f32 %v791, 0.5
    %v804 = vmul.f32 %v792, 0.5
    %v805 = vmul.f32 %v793, 0.5
    %v806 = vmul.f32 %v794, 0.5
    %v807 = vmul.f32 %v795, 0.5
    %v808 = vsel %vm43, %v796, 0.0
    %v809 = vsel %vm43, %v797, 0.0
    %v810 = vadd.f32 %v808, %v809
    %v811 = vsel %vm43, %v798, 0.0
    %v812 = vadd.f32 %v810, %v811
    %v813 = vrot.slane %v812, 4
    %v814 = vadd.f32 %v812, %v813
    %v815 = vrot.slane %v814, 2
    %v816 = vadd.f32 %v814, %v815
    %v817 = vrot.slane %v816, 1
    %v818 = vadd.f32 %v816, %v817
    %v819 = vsel %vm43, %v799, 0.0
    %v820 = vsel %vm43, %v800, 0.0
    %v821 = vadd.f32 %v819, %v820
    %v822 = vsel %vm43, %v801, 0.0
    %v823 = vadd.f32 %v821, %v822
    %v824 = vrot.slane %v823, 4
    %v825 = vadd.f32 %v823, %v824
    %v826 = vrot.slane %v825, 2
    %v827 = vadd.f32 %v825, %v826
    %v828 = vrot.slane %v827, 1
    %v829 = vadd.f32 %v827, %v828
    %v830 = vsel %vm43, %v802, 0.0
    %v831 = vsel %vm43, %v803, 0.0
    %v832 = vadd.f32 %v830, %v831
    %v833 = vsel %vm43, %v804, 0.0
    %v834 = vadd.f32 %v832, %v833
    %v835 = vrot.slane %v834, 4
    %v836 = vadd.f32 %v834, %v835
    %v837 = vrot.slane %v836, 2
    %v838 = vadd.f32 %v836, %v837
    %v839 = vrot.slane %v838, 1
    %v840 = vadd.f32 %v838, %v839
    %v841 = vsel %vm43, %v805, 0.0
    %v842 = vsel %vm43, %v806, 0.0
    %v843 = vadd.f32 %v841, %v842
    %v844 = vsel %vm43, %v807, 0.0
    %v845 = vadd.f32 %v843, %v844
    %v846 = vrot.slane %v845, 4
    %v847 = vadd.f32 %v845, %v846
    %v848 = vrot.slane %v847, 2
    %v849 = vadd.f32 %v847, %v848
    %v850 = vrot.slane %v849, 1
    %v851 = vadd.f32 %v849, %v850
    %v852 = vmul.f32 %v818, 0.05882353
    %v853 = vmul.f32 %v829, 0.05882353
    %v854 = vmul.f32 %v840, 0.05882353
    %v855 = vmul.f32 %v851, 0.05882353
    %v856 = vsub.f32 %v796, %v852
    %v857 = vsub.f32 %v797, %v852
    %v858 = vsub.f32 %v798, %v852
    %v859 = vsub.f32 %v799, %v853
    %v860 = vsub.f32 %v800, %v853
    %v861 = vsub.f32 %v801, %v853
    %v862 = vsub.f32 %v802, %v854
    %v863 = vsub.f32 %v803, %v854
    %v864 = vsub.f32 %v804, %v854
    %v865 = vsub.f32 %v805, %v855
    %v866 = vsub.f32 %v806, %v855
    %v867 = vsub.f32 %v807, %v855
    %v868 = vmax.f32 %v856, 0.0
    %v869 = vmax.f32 %v857, 0.0
    %v870 = vmax.f32 %v858, 0.0
    %v871 = vmax.f32 %v859, 0.0
    %v872 = vmax.f32 %v860, 0.0
    %v873 = vmax.f32 %v861, 0.0
    %v874 = vmax.f32 %v862, 0.0
    %v875 = vmax.f32 %v863, 0.0
    %v876 = vmax.f32 %v864, 0.0
    %v877 = vmax.f32 %v865, 0.0
    %v878 = vmax.f32 %v866, 0.0
    %v879 = vmax.f32 %v867, 0.0
    %v880 = vsel %vm43, %v868, 0.0
    %881 = vadd.xlane.f32.xlu0 %v880
    %v882 = vpop.xlane.xlu0 %881
    %v883 = vsel %vm43, %v869, 0.0
    %884 = vadd.xlane.f32.xlu0 %v883
    %v885 = vpop.xlane.xlu0 %884
    %v886 = vsel %vm43, %v870, 0.0
    %887 = vadd.xlane.f32.xlu0 %v886
    %v888 = vpop.xlane.xlu0 %887
    %v889 = vsel %vm43, %v871, 0.0
    %890 = vadd.xlane.f32.xlu0 %v889
    %v891 = vpop.xlane.xlu0 %890
    %v892 = vsel %vm43, %v872, 0.0
    %893 = vadd.xlane.f32.xlu0 %v892
    %v894 = vpop.xlane.xlu0 %893
    %v895 = vsel %vm43, %v873, 0.0
    %896 = vadd.xlane.f32.xlu0 %v895
    %v897 = vpop.xlane.xlu0 %896
    %v898 = vsel %vm43, %v874, 0.0
    %899 = vadd.xlane.f32.xlu0 %v898
    %v900 = vpop.xlane.xlu0 %899
    %v901 = vsel %vm43, %v875, 0.0
    %902 = vadd.xlane.f32.xlu0 %v901
    %v903 = vpop.xlane.xlu0 %902
    %v904 = vsel %vm43, %v876, 0.0
    %905 = vadd.xlane.f32.xlu0 %v904
    %v906 = vpop.xlane.xlu0 %905
    %v907 = vsel %vm43, %v877, 0.0
    %908 = vadd.xlane.f32.xlu0 %v907
    %v909 = vpop.xlane.xlu0 %908
    %v910 = vsel %vm43, %v878, 0.0
    %911 = vadd.xlane.f32.xlu0 %v910
    %v912 = vpop.xlane.xlu0 %911
    %v913 = vsel %vm43, %v879, 0.0
    %914 = vadd.xlane.f32.xlu0 %v913
    %v915 = vpop.xlane.xlu0 %914
    %vm916 = vcmp.eq.f32.partialorder %v882, 0.0
    %vm917 = vcmp.eq.f32.partialorder %v885, 0.0
    %vm918 = vcmp.eq.f32.partialorder %v888, 0.0
    %vm919 = vcmp.eq.f32.partialorder %v891, 0.0
    %vm920 = vcmp.eq.f32.partialorder %v894, 0.0
    %vm921 = vcmp.eq.f32.partialorder %v897, 0.0
    %vm922 = vcmp.eq.f32.partialorder %v900, 0.0
    %vm923 = vcmp.eq.f32.partialorder %v903, 0.0
    %vm924 = vcmp.eq.f32.partialorder %v906, 0.0
    %vm925 = vcmp.eq.f32.partialorder %v909, 0.0
    %vm926 = vcmp.eq.f32.partialorder %v912, 0.0
    %vm927 = vcmp.eq.f32.partialorder %v915, 0.0
    %v928 = vsel %vm916, 1.0, %v882
    %v929 = vsel %vm917, 1.0, %v885
    %v930 = vsel %vm918, 1.0, %v888
    %v931 = vsel %vm919, 1.0, %v891
    %v932 = vsel %vm920, 1.0, %v894
    %v933 = vsel %vm921, 1.0, %v897
    %v934 = vsel %vm922, 1.0, %v900
    %v935 = vsel %vm923, 1.0, %v903
    %v936 = vsel %vm924, 1.0, %v906
    %v937 = vsel %vm925, 1.0, %v909
    %v938 = vsel %vm926, 1.0, %v912
    %v939 = vsel %vm927, 1.0, %v915
    %v940 = vrcp.pop %v928
    %v941 = vrcp.pop %v929
    %v942 = vrcp.pop %v930
    %v943 = vrcp.pop %v931
    %v944 = vrcp.pop %v932
    %v945 = vrcp.pop %v933
    %v946 = vrcp.pop %v934
    %v947 = vrcp.pop %v935
    %v948 = vrcp.pop %v936
    %v949 = vrcp.pop %v937
    %v950 = vrcp.pop %v938
    %v951 = vrcp.pop %v939
    %v952 = vmul.f32 %v868, %v940
    %v953 = vmul.f32 %v869, %v941
    %v954 = vmul.f32 %v870, %v942
    %v955 = vmul.f32 %v871, %v943
    %v956 = vmul.f32 %v872, %v944
    %v957 = vmul.f32 %v873, %v945
    %v958 = vmul.f32 %v874, %v946
    %v959 = vmul.f32 %v875, %v947
    %v960 = vmul.f32 %v876, %v948
    %v961 = vmul.f32 %v877, %v949
    %v962 = vmul.f32 %v878, %v950
    %v963 = vmul.f32 %v879, %v951
    %v964 = vsel %vm43, %v633, 0.0
    %v965 = vsel %vm43, %v635, 0.0
    %v966 = vadd.f32 %v964, %v965
    %v967 = vsel %vm43, %v637, 0.0
    %v968 = vadd.f32 %v966, %v967
    %v969 = vrot.slane %v968, 4
    %v970 = vadd.f32 %v968, %v969
    %v971 = vrot.slane %v970, 2
    %v972 = vadd.f32 %v970, %v971
    %v973 = vrot.slane %v972, 1
    %v974 = vadd.f32 %v972, %v973
    %v975 = vsel %vm43, %v639, 0.0
    %v976 = vsel %vm43, %v641, 0.0
    %v977 = vadd.f32 %v975, %v976
    %v978 = vsel %vm43, %v643, 0.0
    %v979 = vadd.f32 %v977, %v978
    %v980 = vrot.slane %v979, 4
    %v981 = vadd.f32 %v979, %v980
    %v982 = vrot.slane %v981, 2
    %v983 = vadd.f32 %v981, %v982
    %v984 = vrot.slane %v983, 1
    %v985 = vadd.f32 %v983, %v984
    %v986 = vsel %vm43, %v645, 0.0
    %v987 = vsel %vm43, %v647, 0.0
    %v988 = vadd.f32 %v986, %v987
    %v989 = vsel %vm43, %v649, 0.0
    %v990 = vadd.f32 %v988, %v989
    %v991 = vrot.slane %v990, 4
    %v992 = vadd.f32 %v990, %v991
    %v993 = vrot.slane %v992, 2
    %v994 = vadd.f32 %v992, %v993
    %v995 = vrot.slane %v994, 1
    %v996 = vadd.f32 %v994, %v995
    %v997 = vsel %vm43, %v651, 0.0
    %v998 = vsel %vm43, %v653, 0.0
    %v999 = vadd.f32 %v997, %v998
    %v1000 = vsel %vm43, %v655, 0.0
    %v1001 = vadd.f32 %v999, %v1000
    %v1002 = vrot.slane %v1001, 4
    %v1003 = vadd.f32 %v1001, %v1002
    %v1004 = vrot.slane %v1003, 2
    %v1005 = vadd.f32 %v1003, %v1004
    %v1006 = vrot.slane %v1005, 1
    %v1007 = vadd.f32 %v1005, %v1006
    %vm1008 = vcmp.eq.f32.partialorder %v974, 0.0
    %vm1009 = vcmp.eq.f32.partialorder %v985, 0.0
    %vm1010 = vcmp.eq.f32.partialorder %v996, 0.0
    %vm1011 = vcmp.eq.f32.partialorder %v1007, 0.0
    %v1012 = vsel %vm1008, 1.0, %v974
    %v1013 = vsel %vm1009, 1.0, %v985
    %v1014 = vsel %vm1010, 1.0, %v996
    %v1015 = vsel %vm1011, 1.0, %v1007
    %v1016 = vrcp.pop %v1012
    %v1017 = vmul.f32 %v633, %v1016
    %v1018 = vmul.f32 %v635, %v1016
    %v1019 = vmul.f32 %v637, %v1016
    %v1020 = vrcp.pop %v1013
    %v1021 = vmul.f32 %v639, %v1020
    %v1022 = vmul.f32 %v641, %v1020
    %v1023 = vmul.f32 %v643, %v1020
    %v1024 = vrcp.pop %v1014
    %v1025 = vmul.f32 %v645, %v1024
    %v1026 = vmul.f32 %v647, %v1024
    %v1027 = vmul.f32 %v649, %v1024
    %v1028 = vrcp.pop %v1015
    %v1029 = vmul.f32 %v651, %v1028
    %v1030 = vmul.f32 %v653, %v1028
    %v1031 = vmul.f32 %v655, %v1028
    %v1032 = vsel %vm43, %v1017, 0.0
    %1033 = vadd.xlane.f32.xlu0 %v1032
    %v1034 = vpop.xlane.xlu0 %1033
    %v1035 = vsel %vm43, %v1018, 0.0
    %1036 = vadd.xlane.f32.xlu0 %v1035
    %v1037 = vpop.xlane.xlu0 %1036
    %v1038 = vsel %vm43, %v1019, 0.0
    %1039 = vadd.xlane.f32.xlu0 %v1038
    %v1040 = vpop.xlane.xlu0 %1039
    %v1041 = vsel %vm43, %v1021, 0.0
    %1042 = vadd.xlane.f32.xlu0 %v1041
    %v1043 = vpop.xlane.xlu0 %1042
    %v1044 = vsel %vm43, %v1022, 0.0
    %1045 = vadd.xlane.f32.xlu0 %v1044
    %v1046 = vpop.xlane.xlu0 %1045
    %v1047 = vsel %vm43, %v1023, 0.0
    %1048 = vadd.xlane.f32.xlu0 %v1047
    %v1049 = vpop.xlane.xlu0 %1048
    %v1050 = vsel %vm43, %v1025, 0.0
    %1051 = vadd.xlane.f32.xlu0 %v1050
    %v1052 = vpop.xlane.xlu0 %1051
    %v1053 = vsel %vm43, %v1026, 0.0
    %1054 = vadd.xlane.f32.xlu0 %v1053
    %v1055 = vpop.xlane.xlu0 %1054
    %v1056 = vsel %vm43, %v1027, 0.0
    %1057 = vadd.xlane.f32.xlu0 %v1056
    %v1058 = vpop.xlane.xlu0 %1057
    %v1059 = vsel %vm43, %v1029, 0.0
    %1060 = vadd.xlane.f32.xlu0 %v1059
    %v1061 = vpop.xlane.xlu0 %1060
    %v1062 = vsel %vm43, %v1030, 0.0
    %1063 = vadd.xlane.f32.xlu0 %v1062
    %v1064 = vpop.xlane.xlu0 %1063
    %v1065 = vsel %vm43, %v1031, 0.0
    %1066 = vadd.xlane.f32.xlu0 %v1065
    %v1067 = vpop.xlane.xlu0 %1066
    %vm1068 = vcmp.eq.f32.partialorder %v1034, 0.0
    %vm1069 = vcmp.eq.f32.partialorder %v1037, 0.0
    %vm1070 = vcmp.eq.f32.partialorder %v1040, 0.0
    %vm1071 = vcmp.eq.f32.partialorder %v1043, 0.0
    %vm1072 = vcmp.eq.f32.partialorder %v1046, 0.0
    %vm1073 = vcmp.eq.f32.partialorder %v1049, 0.0
    %vm1074 = vcmp.eq.f32.partialorder %v1052, 0.0
    %vm1075 = vcmp.eq.f32.partialorder %v1055, 0.0
    %vm1076 = vcmp.eq.f32.partialorder %v1058, 0.0
    %vm1077 = vcmp.eq.f32.partialorder %v1061, 0.0
    %vm1078 = vcmp.eq.f32.partialorder %v1064, 0.0
    %vm1079 = vcmp.eq.f32.partialorder %v1067, 0.0
    %v1080 = vsel %vm1068, 1.0, %v1034
    %v1081 = vsel %vm1069, 1.0, %v1037
    %v1082 = vsel %vm1070, 1.0, %v1040
    %v1083 = vsel %vm1071, 1.0, %v1043
    %v1084 = vsel %vm1072, 1.0, %v1046
    %v1085 = vsel %vm1073, 1.0, %v1049
    %v1086 = vsel %vm1074, 1.0, %v1052
    %v1087 = vsel %vm1075, 1.0, %v1055
    %v1088 = vsel %vm1076, 1.0, %v1058
    %v1089 = vsel %vm1077, 1.0, %v1061
    %v1090 = vsel %vm1078, 1.0, %v1064
    %v1091 = vsel %vm1079, 1.0, %v1067
    %v1092 = vrcp.pop %v1080
    %v1093 = vmul.f32 %v1017, %v1092
    %v1094 = vrcp.pop %v1081
    %v1095 = vmul.f32 %v1018, %v1094
    %v1096 = vrcp.pop %v1082
    %v1097 = vmul.f32 %v1019, %v1096
    %v1098 = vrcp.pop %v1083
    %v1099 = vmul.f32 %v1021, %v1098
    %v1100 = vrcp.pop %v1084
    %v1101 = vmul.f32 %v1022, %v1100
    %v1102 = vrcp.pop %v1085
    %v1103 = vmul.f32 %v1023, %v1102
    %v1104 = vrcp.pop %v1086
    %v1105 = vmul.f32 %v1025, %v1104
    %v1106 = vrcp.pop %v1087
    %v1107 = vmul.f32 %v1026, %v1106
    %v1108 = vrcp.pop %v1088
    %v1109 = vmul.f32 %v1027, %v1108
    %v1110 = vrcp.pop %v1089
    %v1111 = vmul.f32 %v1029, %v1110
    %v1112 = vrcp.pop %v1090
    %v1113 = vmul.f32 %v1030, %v1112
    %v1114 = vrcp.pop %v1091
    %v1115 = vmul.f32 %v1031, %v1114
    %1116 = vxpose.xlu0.b32.start [1/16] %v1093, 128
    %1117 = vxpose.xlu0.b32.cont [2/16] %v1095, 128
    %1118 = vxpose.xlu0.b32.cont [3/16] %v1097, 128
    %1119 = vxpose.xlu0.b32.cont [4/16] 0.0, 128
    %1120 = vxpose.xlu0.b32.cont [5/16] 0.0, 128
    %1121 = vxpose.xlu0.b32.cont [6/16] 0.0, 128
    %1122 = vxpose.xlu0.b32.cont [7/16] 0.0, 128
    %1123 = vxpose.xlu0.b32.cont [8/16] 0.0, 128
    %1124 = vxpose.xlu0.b32.cont [9/16] 0.0, 128
    %1125 = vxpose.xlu0.b32.cont [10/16] 0.0, 128
    %1126 = vxpose.xlu0.b32.cont [11/16] 0.0, 128
    %1127 = vxpose.xlu0.b32.cont [12/16] 0.0, 128
    %1128 = vxpose.xlu0.b32.cont [13/16] 0.0, 128
    %1129 = vxpose.xlu0.b32.cont [14/16] 0.0, 128
    %1130 = vxpose.xlu0.b32.cont [15/16] 0.0, 128
    %1131 = vxpose.xlu0.b32.end [16/16] 0.0, 128
    %v1132 = vpop.trf.xlu0
    %v1133 = vpop.trf.xlu0
    %v1134 = vpop.trf.xlu0
    %v1135 = vpop.trf.xlu0
    %v1136 = vpop.trf.xlu0
    %v1137 = vpop.trf.xlu0
    %v1138 = vpop.trf.xlu0
    %v1139 = vpop.trf.xlu0
    %v1140 = vpop.trf.xlu0
    %v1141 = vpop.trf.xlu0
    %v1142 = vpop.trf.xlu0
    %v1143 = vpop.trf.xlu0
    %v1144 = vpop.trf.xlu0
    %v1145 = vpop.trf.xlu0
    %v1146 = vpop.trf.xlu0
    %v1147 = vpop.trf.xlu0
    %1148 = vxpose.xlu0.b32.start [1/16] %v1099, 128
    %1149 = vxpose.xlu0.b32.cont [2/16] %v1101, 128
    %1150 = vxpose.xlu0.b32.cont [3/16] %v1103, 128
    %1151 = vxpose.xlu0.b32.cont [4/16] 0.0, 128
    %1152 = vxpose.xlu0.b32.cont [5/16] 0.0, 128
    %1153 = vxpose.xlu0.b32.cont [6/16] 0.0, 128
    %1154 = vxpose.xlu0.b32.cont [7/16] 0.0, 128
    %1155 = vxpose.xlu0.b32.cont [8/16] 0.0, 128
    %1156 = vxpose.xlu0.b32.cont [9/16] 0.0, 128
    %1157 = vxpose.xlu0.b32.cont [10/16] 0.0, 128
    %1158 = vxpose.xlu0.b32.cont [11/16] 0.0, 128
    %1159 = vxpose.xlu0.b32.cont [12/16] 0.0, 128
    %1160 = vxpose.xlu0.b32.cont [13/16] 0.0, 128
    %1161 = vxpose.xlu0.b32.cont [14/16] 0.0, 128
    %1162 = vxpose.xlu0.b32.cont [15/16] 0.0, 128
    %1163 = vxpose.xlu0.b32.end [16/16] 0.0, 128
    %v1164 = vpop.trf.xlu0
    %v1165 = vpop.trf.xlu0
    %v1166 = vpop.trf.xlu0
    %v1167 = vpop.trf.xlu0
    %v1168 = vpop.trf.xlu0
    %v1169 = vpop.trf.xlu0
    %v1170 = vpop.trf.xlu0
    %v1171 = vpop.trf.xlu0
    %v1172 = vpop.trf.xlu0
    %v1173 = vpop.trf.xlu0
    %v1174 = vpop.trf.xlu0
    %v1175 = vpop.trf.xlu0
    %v1176 = vpop.trf.xlu0
    %v1177 = vpop.trf.xlu0
    %v1178 = vpop.trf.xlu0
    %v1179 = vpop.trf.xlu0
    %1180 = vxpose.xlu0.b32.start [1/16] %v1105, 128
    %1181 = vxpose.xlu0.b32.cont [2/16] %v1107, 128
    %1182 = vxpose.xlu0.b32.cont [3/16] %v1109, 128
    %1183 = vxpose.xlu0.b32.cont [4/16] 0.0, 128
    %1184 = vxpose.xlu0.b32.cont [5/16] 0.0, 128
    %1185 = vxpose.xlu0.b32.cont [6/16] 0.0, 128
    %1186 = vxpose.xlu0.b32.cont [7/16] 0.0, 128
    %1187 = vxpose.xlu0.b32.cont [8/16] 0.0, 128
    %1188 = vxpose.xlu0.b32.cont [9/16] 0.0, 128
    %1189 = vxpose.xlu0.b32.cont [10/16] 0.0, 128
    %1190 = vxpose.xlu0.b32.cont [11/16] 0.0, 128
    %1191 = vxpose.xlu0.b32.cont [12/16] 0.0, 128
    %1192 = vxpose.xlu0.b32.cont [13/16] 0.0, 128
    %1193 = vxpose.xlu0.b32.cont [14/16] 0.0, 128
    %1194 = vxpose.xlu0.b32.cont [15/16] 0.0, 128
    %1195 = vxpose.xlu0.b32.end [16/16] 0.0, 128
    %v1196 = vpop.trf.xlu0
    %v1197 = vpop.trf.xlu0
    %v1198 = vpop.trf.xlu0
    %v1199 = vpop.trf.xlu0
    %v1200 = vpop.trf.xlu0
    %v1201 = vpop.trf.xlu0
    %v1202 = vpop.trf.xlu0
    %v1203 = vpop.trf.xlu0
    %v1204 = vpop.trf.xlu0
    %v1205 = vpop.trf.xlu0
    %v1206 = vpop.trf.xlu0
    %v1207 = vpop.trf.xlu0
    %v1208 = vpop.trf.xlu0
    %v1209 = vpop.trf.xlu0
    %v1210 = vpop.trf.xlu0
    %v1211 = vpop.trf.xlu0
    %1212 = vxpose.xlu0.b32.start [1/16] %v1111, 128
    %1213 = vxpose.xlu0.b32.cont [2/16] %v1113, 128
    %1214 = vxpose.xlu0.b32.cont [3/16] %v1115, 128
    %1215 = vxpose.xlu0.b32.cont [4/16] 0.0, 128
    %1216 = vxpose.xlu0.b32.cont [5/16] 0.0, 128
    %1217 = vxpose.xlu0.b32.cont [6/16] 0.0, 128
    %1218 = vxpose.xlu0.b32.cont [7/16] 0.0, 128
    %1219 = vxpose.xlu0.b32.cont [8/16] 0.0, 128
    %1220 = vxpose.xlu0.b32.cont [9/16] 0.0, 128
    %1221 = vxpose.xlu0.b32.cont [10/16] 0.0, 128
    %1222 = vxpose.xlu0.b32.cont [11/16] 0.0, 128
    %1223 = vxpose.xlu0.b32.cont [12/16] 0.0, 128
    %1224 = vxpose.xlu0.b32.cont [13/16] 0.0, 128
    %1225 = vxpose.xlu0.b32.cont [14/16] 0.0, 128
    %1226 = vxpose.xlu0.b32.cont [15/16] 0.0, 128
    %1227 = vxpose.xlu0.b32.end [16/16] 0.0, 128
    %v1228 = vpop.trf.xlu0
    %v1229 = vpop.trf.xlu0
    %v1230 = vpop.trf.xlu0
    %v1231 = vpop.trf.xlu0
    %v1232 = vpop.trf.xlu0
    %v1233 = vpop.trf.xlu0
    %v1234 = vpop.trf.xlu0
    %v1235 = vpop.trf.xlu0
    %v1236 = vpop.trf.xlu0
    %v1237 = vpop.trf.xlu0
    %v1238 = vpop.trf.xlu0
    %v1239 = vpop.trf.xlu0
    %v1240 = vpop.trf.xlu0
    %v1241 = vpop.trf.xlu0
    %v1242 = vpop.trf.xlu0
    %v1243 = vpop.trf.xlu0
    %v1244 = vadd.f32 %v1093, %v1132
    %v1245 = vadd.f32 %v1095, %v1133
    %v1246 = vadd.f32 %v1097, %v1134
    %v1247 = vadd.f32 %v1099, %v1164
    %v1248 = vadd.f32 %v1101, %v1165
    %v1249 = vadd.f32 %v1103, %v1166
    %v1250 = vadd.f32 %v1105, %v1196
    %v1251 = vadd.f32 %v1107, %v1197
    %v1252 = vadd.f32 %v1109, %v1198
    %v1253 = vadd.f32 %v1111, %v1228
    %v1254 = vadd.f32 %v1113, %v1229
    %v1255 = vadd.f32 %v1115, %v1230
    %v1256 = vmul.f32 %v1244, 0.5
    %v1257 = vmul.f32 %v1245, 0.5
    %v1258 = vmul.f32 %v1246, 0.5
    %v1259 = vmul.f32 %v1247, 0.5
    %v1260 = vmul.f32 %v1248, 0.5
    %v1261 = vmul.f32 %v1249, 0.5
    %v1262 = vmul.f32 %v1250, 0.5
    %v1263 = vmul.f32 %v1251, 0.5
    %v1264 = vmul.f32 %v1252, 0.5
    %v1265 = vmul.f32 %v1253, 0.5
    %v1266 = vmul.f32 %v1254, 0.5
    %v1267 = vmul.f32 %v1255, 0.5
    %v1268 = vsel %vm43, %v1256, 0.0
    %v1269 = vsel %vm43, %v1257, 0.0
    %v1270 = vadd.f32 %v1268, %v1269
    %v1271 = vsel %vm43, %v1258, 0.0
    %v1272 = vadd.f32 %v1270, %v1271
    %v1273 = vrot.slane %v1272, 4
    %v1274 = vadd.f32 %v1272, %v1273
    %v1275 = vrot.slane %v1274, 2
    %v1276 = vadd.f32 %v1274, %v1275
    %v1277 = vrot.slane %v1276, 1
    %v1278 = vadd.f32 %v1276, %v1277
    %v1279 = vsel %vm43, %v1259, 0.0
    %v1280 = vsel %vm43, %v1260, 0.0
    %v1281 = vadd.f32 %v1279, %v1280
    %v1282 = vsel %vm43, %v1261, 0.0
    %v1283 = vadd.f32 %v1281, %v1282
    %v1284 = vrot.slane %v1283, 4
    %v1285 = vadd.f32 %v1283, %v1284
    %v1286 = vrot.slane %v1285, 2
    %v1287 = vadd.f32 %v1285, %v1286
    %v1288 = vrot.slane %v1287, 1
    %v1289 = vadd.f32 %v1287, %v1288
    %v1290 = vsel %vm43, %v1262, 0.0
    %v1291 = vsel %vm43, %v1263, 0.0
    %v1292 = vadd.f32 %v1290, %v1291
    %v1293 = vsel %vm43, %v1264, 0.0
    %v1294 = vadd.f32 %v1292, %v1293
    %v1295 = vrot.slane %v1294, 4
    %v1296 = vadd.f32 %v1294, %v1295
    %v1297 = vrot.slane %v1296, 2
    %v1298 = vadd.f32 %v1296, %v1297
    %v1299 = vrot.slane %v1298, 1
    %v1300 = vadd.f32 %v1298, %v1299
    %v1301 = vsel %vm43, %v1265, 0.0
    %v1302 = vsel %vm43, %v1266, 0.0
    %v1303 = vadd.f32 %v1301, %v1302
    %v1304 = vsel %vm43, %v1267, 0.0
    %v1305 = vadd.f32 %v1303, %v1304
    %v1306 = vrot.slane %v1305, 4
    %v1307 = vadd.f32 %v1305, %v1306
    %v1308 = vrot.slane %v1307, 2
    %v1309 = vadd.f32 %v1307, %v1308
    %v1310 = vrot.slane %v1309, 1
    %v1311 = vadd.f32 %v1309, %v1310
    %v1312 = vmul.f32 %v1278, 0.05882353
    %v1313 = vmul.f32 %v1289, 0.05882353
    %v1314 = vmul.f32 %v1300, 0.05882353
    %v1315 = vmul.f32 %v1311, 0.05882353
    %v1316 = vsub.f32 %v1256, %v1312
    %v1317 = vsub.f32 %v1257, %v1312
    %v1318 = vsub.f32 %v1258, %v1312
    %v1319 = vsub.f32 %v1259, %v1313
    %v1320 = vsub.f32 %v1260, %v1313
    %v1321 = vsub.f32 %v1261, %v1313
    %v1322 = vsub.f32 %v1262, %v1314
    %v1323 = vsub.f32 %v1263, %v1314
    %v1324 = vsub.f32 %v1264, %v1314
    %v1325 = vsub.f32 %v1265, %v1315
    %v1326 = vsub.f32 %v1266, %v1315
    %v1327 = vsub.f32 %v1267, %v1315
    %v1328 = vmax.f32 %v1316, 0.0
    %v1329 = vmax.f32 %v1317, 0.0
    %v1330 = vmax.f32 %v1318, 0.0
    %v1331 = vmax.f32 %v1319, 0.0
    %v1332 = vmax.f32 %v1320, 0.0
    %v1333 = vmax.f32 %v1321, 0.0
    %v1334 = vmax.f32 %v1322, 0.0
    %v1335 = vmax.f32 %v1323, 0.0
    %v1336 = vmax.f32 %v1324, 0.0
    %v1337 = vmax.f32 %v1325, 0.0
    %v1338 = vmax.f32 %v1326, 0.0
    %v1339 = vmax.f32 %v1327, 0.0
    %v1340 = vsel %vm43, %v1328, 0.0
    %1341 = vadd.xlane.f32.xlu0 %v1340
    %v1342 = vpop.xlane.xlu0 %1341
    %v1343 = vsel %vm43, %v1329, 0.0
    %1344 = vadd.xlane.f32.xlu0 %v1343
    %v1345 = vpop.xlane.xlu0 %1344
    %v1346 = vsel %vm43, %v1330, 0.0
    %1347 = vadd.xlane.f32.xlu0 %v1346
    %v1348 = vpop.xlane.xlu0 %1347
    %v1349 = vsel %vm43, %v1331, 0.0
    %1350 = vadd.xlane.f32.xlu0 %v1349
    %v1351 = vpop.xlane.xlu0 %1350
    %v1352 = vsel %vm43, %v1332, 0.0
    %1353 = vadd.xlane.f32.xlu0 %v1352
    %v1354 = vpop.xlane.xlu0 %1353
    %v1355 = vsel %vm43, %v1333, 0.0
    %1356 = vadd.xlane.f32.xlu0 %v1355
    %v1357 = vpop.xlane.xlu0 %1356
    %v1358 = vsel %vm43, %v1334, 0.0
    %1359 = vadd.xlane.f32.xlu0 %v1358
    %v1360 = vpop.xlane.xlu0 %1359
    %v1361 = vsel %vm43, %v1335, 0.0
    %1362 = vadd.xlane.f32.xlu0 %v1361
    %v1363 = vpop.xlane.xlu0 %1362
    %v1364 = vsel %vm43, %v1336, 0.0
    %1365 = vadd.xlane.f32.xlu0 %v1364
    %v1366 = vpop.xlane.xlu0 %1365
    %v1367 = vsel %vm43, %v1337, 0.0
    %1368 = vadd.xlane.f32.xlu0 %v1367
    %v1369 = vpop.xlane.xlu0 %1368
    %v1370 = vsel %vm43, %v1338, 0.0
    %1371 = vadd.xlane.f32.xlu0 %v1370
    %v1372 = vpop.xlane.xlu0 %1371
    %v1373 = vsel %vm43, %v1339, 0.0
    %1374 = vadd.xlane.f32.xlu0 %v1373
    %v1375 = vpop.xlane.xlu0 %1374
    %vm1376 = vcmp.eq.f32.partialorder %v1342, 0.0
    %vm1377 = vcmp.eq.f32.partialorder %v1345, 0.0
    %vm1378 = vcmp.eq.f32.partialorder %v1348, 0.0
    %vm1379 = vcmp.eq.f32.partialorder %v1351, 0.0
    %vm1380 = vcmp.eq.f32.partialorder %v1354, 0.0
    %vm1381 = vcmp.eq.f32.partialorder %v1357, 0.0
    %vm1382 = vcmp.eq.f32.partialorder %v1360, 0.0
    %vm1383 = vcmp.eq.f32.partialorder %v1363, 0.0
    %vm1384 = vcmp.eq.f32.partialorder %v1366, 0.0
    %vm1385 = vcmp.eq.f32.partialorder %v1369, 0.0
    %vm1386 = vcmp.eq.f32.partialorder %v1372, 0.0
    %vm1387 = vcmp.eq.f32.partialorder %v1375, 0.0
    %v1388 = vsel %vm1376, 1.0, %v1342
    %v1389 = vsel %vm1377, 1.0, %v1345
    %v1390 = vsel %vm1378, 1.0, %v1348
    %v1391 = vsel %vm1379, 1.0, %v1351
    %v1392 = vsel %vm1380, 1.0, %v1354
    %v1393 = vsel %vm1381, 1.0, %v1357
    %v1394 = vsel %vm1382, 1.0, %v1360
    %v1395 = vsel %vm1383, 1.0, %v1363
    %v1396 = vsel %vm1384, 1.0, %v1366
    %v1397 = vsel %vm1385, 1.0, %v1369
    %v1398 = vsel %vm1386, 1.0, %v1372
    %v1399 = vsel %vm1387, 1.0, %v1375
    %v1400 = vrcp.pop %v1388
    %v1401 = vrcp.pop %v1389
    %v1402 = vrcp.pop %v1390
    %v1403 = vrcp.pop %v1391
    %v1404 = vrcp.pop %v1392
    %v1405 = vrcp.pop %v1393
    %v1406 = vrcp.pop %v1394
    %v1407 = vrcp.pop %v1395
    %v1408 = vrcp.pop %v1396
    %v1409 = vrcp.pop %v1397
    %v1410 = vrcp.pop %v1398
    %v1411 = vrcp.pop %v1399
    %v1412 = vmul.f32 %v1328, %v1400
    %v1413 = vmul.f32 %v1329, %v1401
    %v1414 = vmul.f32 %v1330, %v1402
    %v1415 = vmul.f32 %v1331, %v1403
    %v1416 = vmul.f32 %v1332, %v1404
    %v1417 = vmul.f32 %v1333, %v1405
    %v1418 = vmul.f32 %v1334, %v1406
    %v1419 = vmul.f32 %v1335, %v1407
    %v1420 = vmul.f32 %v1336, %v1408
    %v1421 = vmul.f32 %v1337, %v1409
    %v1422 = vmul.f32 %v1338, %v1410
    %v1423 = vmul.f32 %v1339, %v1411
    %v1424 = vld [vmem:[%s0] sm:$0xff]
    %v1425 = vld [vmem:[%s0 + $0x8] sm:$0xff]
    %v1426 = vld [vmem:[%s0 + $0x10] sm:$0xff]
    %s1427 = scalar_lea.vmem %s0, 24
    %v1428 = vld [vmem:[%s1427] sm:$0xff]
    %v1429 = vld [vmem:[%s1427 + $0x8] sm:$0xff]
    %v1430 = vld [vmem:[%s1427 + $0x10] sm:$0xff]
    %s1431 = scalar_lea.vmem %s0, 48
    %v1432 = vld [vmem:[%s1431] sm:$0xff]
    %v1433 = vld [vmem:[%s1431 + $0x8] sm:$0xff]
    %v1434 = vld [vmem:[%s1431 + $0x10] sm:$0xff]
    %vm1435 = vcmask 261120
    %v1436 = vsel %vm1435, %v1424, 0.0
    %1437 = vadd.xlane.f32.xlu0 %v1436
    %v1438 = vpop.xlane.xlu0 %1437
    %v1439 = vsel %vm1435, %v1425, 0.0
    %1440 = vadd.xlane.f32.xlu0 %v1439
    %v1441 = vpop.xlane.xlu0 %1440
    %v1442 = vsel %vm1435, %v1426, 0.0
    %1443 = vadd.xlane.f32.xlu0 %v1442
    %v1444 = vpop.xlane.xlu0 %1443
    %v1445 = vsel %vm1435, %v1428, 0.0
    %1446 = vadd.xlane.f32.xlu0 %v1445
    %v1447 = vpop.xlane.xlu0 %1446
    %v1448 = vsel %vm1435, %v1429, 0.0
    %1449 = vadd.xlane.f32.xlu0 %v1448
    %v1450 = vpop.xlane.xlu0 %1449
    %v1451 = vsel %vm1435, %v1430, 0.0
    %1452 = vadd.xlane.f32.xlu0 %v1451
    %v1453 = vpop.xlane.xlu0 %1452
    %v1454 = vsel %vm1435, %v1432, 0.0
    %1455 = vadd.xlane.f32.xlu0 %v1454
    %v1456 = vpop.xlane.xlu0 %1455
    %v1457 = vsel %vm1435, %v1433, 0.0
    %1458 = vadd.xlane.f32.xlu0 %v1457
    %v1459 = vpop.xlane.xlu0 %1458
    %v1460 = vsel %vm1435, %v1434, 0.0
    %1461 = vadd.xlane.f32.xlu0 %v1460
    %v1462 = vpop.xlane.xlu0 %1461
    %v1463 = vrcp.pop 32.0
    %v1464 = vmul.f32 %v1438, %v1463
    %v1465 = vmul.f32 %v1441, %v1463
    %v1466 = vmul.f32 %v1444, %v1463
    %v1467 = vmul.f32 %v1447, %v1463
    %v1468 = vmul.f32 %v1450, %v1463
    %v1469 = vmul.f32 %v1453, %v1463
    %v1470 = vmul.f32 %v1456, %v1463
    %v1471 = vmul.f32 %v1459, %v1463
    %v1472 = vmul.f32 %v1462, %v1463
    %v1473 = vsub.f32 %v1424, %v1464
    %v1474 = vsub.f32 %v1425, %v1465
    %v1475 = vsub.f32 %v1426, %v1466
    %v1476 = vsub.f32 %v1428, %v1467
    %v1477 = vsub.f32 %v1429, %v1468
    %v1478 = vsub.f32 %v1430, %v1469
    %v1479 = vsub.f32 %v1432, %v1470
    %v1480 = vsub.f32 %v1433, %v1471
    %v1481 = vsub.f32 %v1434, %v1472
    %v1482 = vmul.f32 %v1473, %v1473
    %v1483 = vmul.f32 %v1474, %v1474
    %v1484 = vmul.f32 %v1475, %v1475
    %v1485 = vmul.f32 %v1476, %v1476
    %v1486 = vmul.f32 %v1477, %v1477
    %v1487 = vmul.f32 %v1478, %v1478
    %v1488 = vmul.f32 %v1479, %v1479
    %v1489 = vmul.f32 %v1480, %v1480
    %v1490 = vmul.f32 %v1481, %v1481
    %v1491 = vsel %vm1435, %v1482, 0.0
    %1492 = vadd.xlane.f32.xlu0 %v1491
    %v1493 = vpop.xlane.xlu0 %1492
    %v1494 = vsel %vm1435, %v1483, 0.0
    %1495 = vadd.xlane.f32.xlu0 %v1494
    %v1496 = vpop.xlane.xlu0 %1495
    %v1497 = vsel %vm1435, %v1484, 0.0
    %1498 = vadd.xlane.f32.xlu0 %v1497
    %v1499 = vpop.xlane.xlu0 %1498
    %v1500 = vsel %vm1435, %v1485, 0.0
    %1501 = vadd.xlane.f32.xlu0 %v1500
    %v1502 = vpop.xlane.xlu0 %1501
    %v1503 = vsel %vm1435, %v1486, 0.0
    %1504 = vadd.xlane.f32.xlu0 %v1503
    %v1505 = vpop.xlane.xlu0 %1504
    %v1506 = vsel %vm1435, %v1487, 0.0
    %1507 = vadd.xlane.f32.xlu0 %v1506
    %v1508 = vpop.xlane.xlu0 %1507
    %v1509 = vsel %vm1435, %v1488, 0.0
    %1510 = vadd.xlane.f32.xlu0 %v1509
    %v1511 = vpop.xlane.xlu0 %1510
    %v1512 = vsel %vm1435, %v1489, 0.0
    %1513 = vadd.xlane.f32.xlu0 %v1512
    %v1514 = vpop.xlane.xlu0 %1513
    %v1515 = vsel %vm1435, %v1490, 0.0
    %1516 = vadd.xlane.f32.xlu0 %v1515
    %v1517 = vpop.xlane.xlu0 %1516
    %v1518 = vmul.f32 %v1493, %v1463
    %v1519 = vmul.f32 %v1496, %v1463
    %v1520 = vmul.f32 %v1499, %v1463
    %v1521 = vmul.f32 %v1502, %v1463
    %v1522 = vmul.f32 %v1505, %v1463
    %v1523 = vmul.f32 %v1508, %v1463
    %v1524 = vmul.f32 %v1511, %v1463
    %v1525 = vmul.f32 %v1514, %v1463
    %v1526 = vmul.f32 %v1517, %v1463
    %v1527 = vadd.f32 %v1518, 1e-05
    %v1528 = vadd.f32 %v1519, 1e-05
    %v1529 = vadd.f32 %v1520, 1e-05
    %v1530 = vadd.f32 %v1521, 1e-05
    %v1531 = vadd.f32 %v1522, 1e-05
    %v1532 = vadd.f32 %v1523, 1e-05
    %v1533 = vadd.f32 %v1524, 1e-05
    %v1534 = vadd.f32 %v1525, 1e-05
    %v1535 = vadd.f32 %v1526, 1e-05
    %v1536 = vrsqrt.pop %v1527
    %v1537 = vrsqrt.pop %v1528
    %v1538 = vrsqrt.pop %v1529
    %v1539 = vrsqrt.pop %v1530
    %v1540 = vrsqrt.pop %v1531
    %v1541 = vrsqrt.pop %v1532
    %v1542 = vrsqrt.pop %v1533
    %v1543 = vrsqrt.pop %v1534
    %v1544 = vrsqrt.pop %v1535
    %v1545 = vmul.f32 %v1473, %v1536
    %v1546 = vmul.f32 %v1474, %v1537
    %v1547 = vmul.f32 %v1475, %v1538
    %v1548 = vmul.f32 %v1476, %v1539
    %v1549 = vmul.f32 %v1477, %v1540
    %v1550 = vmul.f32 %v1478, %v1541
    %v1551 = vmul.f32 %v1479, %v1542
    %v1552 = vmul.f32 %v1480, %v1543
    %v1553 = vmul.f32 %v1481, %v1544
    %v1554 = vlaneseq
    %v1555 = vshrl.u32 %v1554, 7
    %v1556 = vsub.s32 0, %v1555
    %v1557 = vrot.slane %v30, %v1556
    %v1558 = vmul.f32 %v1545, %v1557
    %v1559 = vmul.f32 %v1546, %v1557
    %v1560 = vmul.f32 %v1547, %v1557
    %v1561 = vmul.f32 %v1548, %v1557
    %v1562 = vmul.f32 %v1549, %v1557
    %v1563 = vmul.f32 %v1550, %v1557
    %v1564 = vmul.f32 %v1551, %v1557
    %v1565 = vmul.f32 %v1552, %v1557
    %v1566 = vmul.f32 %v1553, %v1557
    %v1567 = vlaneseq
    %v1568 = vshrl.u32 %v1567, 7
    %v1569 = vsub.s32 1, %v1568
    %v1570 = vrot.slane %v30, %v1569
    %v1571 = vadd.f32 %v1558, %v1570
    %v1572 = vadd.f32 %v1559, %v1570
    %v1573 = vadd.f32 %v1560, %v1570
    %v1574 = vadd.f32 %v1561, %v1570
    %v1575 = vadd.f32 %v1562, %v1570
    %v1576 = vadd.f32 %v1563, %v1570
    %v1577 = vadd.f32 %v1564, %v1570
    %v1578 = vadd.f32 %v1565, %v1570
    %v1579 = vadd.f32 %v1566, %v1570
    %v1580 = vld [vmem:[%s3] sm:$0xff]
    %v1581 = vld [vmem:[%s3 + $0x8] sm:$0xff]
    %v1582 = vld [vmem:[%s3 + $0x10] sm:$0xff]
    %v1583 = vld [vmem:[%s3 + $0x18] sm:$0xff]
    %v1584 = vlaneseq
    %v1585 = vshrl.u32 %v1584, 7
    %v1586 = vsub.s32 2, %v1585
    %v1587 = vrot.slane %v30, %v1586
    %v1589 = vsel %vm1435, %v1571, 0
    %v1592 = vsel %vm1435, %v1572, 0
    %v1595 = vsel %vm1435, %v1573, 0
    %v1598 = vsel %vm1435, %v1574, 0
    %v1601 = vsel %vm1435, %v1575, 0
    %v1604 = vsel %vm1435, %v1576, 0
    %v1607 = vsel %vm1435, %v1577, 0
    %v1610 = vsel %vm1435, %v1578, 0
    %v1613 = vsel %vm1435, %v1579, 0
    %1615 = vmatprep.subr.mxu0 0.0
    %1616 = vmatpush1.msra.mxu0 0.0
    %1617 = vmatprep.subr.mxu0 0.0
    %1618 = vmatpush1.msra.mxu0 0.0
    %1619 = vmatprep.subr.mxu0 0.0
    %1620 = vmatpush1.msra.mxu0 0.0
    %1621 = vmatprep.subr.mxu0 0.0
    %1622 = vmatpush1.msra.mxu0 0.0
    %1623 = vmatprep.subr.mxu0 0.0
    %1624 = vmatpush1.msra.mxu0 0.0
    %1625 = vmatprep.subr.mxu0 0.0
    %1626 = vmatpush1.msra.mxu0 0.0
    %1627 = vmatprep.subr.mxu0 0.0
    %1628 = vmatpush1.msra.mxu0 0.0
    %1629 = vmatprep.subr.mxu0 0.0
    %1630 = vmatpush1.msra.mxu0 0.0
    %1631 = vmatprep.subr.mxu0 0.0
    %1632 = vmatpush1.msra.mxu0 0.0
    %1633 = vmatprep.subr.mxu0 0.0
    %1634 = vmatpush1.msra.mxu0 0.0
    %1635 = vmatprep.subr.mxu0 0.0
    %1636 = vmatpush1.msra.mxu0 0.0
    %1637 = vmatprep.subr.mxu0 0.0
    %1638 = vmatpush1.msra.mxu0 0.0
    %1639 = vmatprep.subr.mxu0 0.0
    %1640 = vmatpush1.msra.mxu0 %v1583
    %1641 = vmatprep.subr.mxu0 0.0
    %1642 = vmatpush1.msra.mxu0 %v1582
    %1643 = vmatprep.subr.mxu0 0.0
    %1644 = vmatpush1.msra.mxu0 %v1581
    %1645 = vmatprep.subr.mxu0 0.0
    %1646 = vmatpush1.msra.mxu0 %v1580
    %1647 = vmatprep.subr.mxu0 0.0
    %1648 = vmatpush2.msra.mxu0 0.0
    %1649 = vmatprep.subr.mxu0 0.0
    %1650 = vmatpush2.msra.mxu0 0.0
    %1651 = vmatprep.subr.mxu0 0.0
    %1652 = vmatpush2.msra.mxu0 0.0
    %1653 = vmatprep.subr.mxu0 0.0
    %1654 = vmatpush2.msra.mxu0 0.0
    %1655 = vmatprep.subr.mxu0 0.0
    %1656 = vmatpush2.msra.mxu0 0.0
    %1657 = vmatprep.subr.mxu0 0.0
    %1658 = vmatpush2.msra.mxu0 0.0
    %1659 = vmatprep.subr.mxu0 0.0
    %1660 = vmatpush2.msra.mxu0 0.0
    %1661 = vmatprep.subr.mxu0 0.0
    %1662 = vmatpush2.msra.mxu0 0.0
    %1663 = vmatprep.subr.mxu0 0.0
    %1664 = vmatpush2.msra.mxu0 0.0
    %1665 = vmatprep.subr.mxu0 0.0
    %1666 = vmatpush2.msra.mxu0 0.0
    %1667 = vmatprep.subr.mxu0 0.0
    %1668 = vmatpush2.msra.mxu0 0.0
    %1669 = vmatprep.subr.mxu0 0.0
    %1670 = vmatpush2.msra.mxu0 0.0
    %1671 = vmatprep.subr.mxu0 0.0
    %1672 = vmatpush2.msra.mxu0 0.0
    %1673 = vmatprep.subr.mxu0 0.0
    %1674 = vmatpush2.msra.mxu0 0.0
    %1675 = vmatprep.subr.mxu0 0.0
    %1676 = vmatpush2.msra.mxu0 0.0
    %1677 = vmatprep.subr.mxu0 0.0
    %1678 = vmatpush2.msra.mxu0 0.0
    %1679 = vmatprep.mubr.f32.mxu0 0.0
    %1680 = vmatmul.mubr.f32.gmra.mxu0 %v1589
    %v1681 = vpop.f32.mrf.mxu0
    %v1682 = vadd.f32 %v1587, %v1681
    %v1683 = vpop.f32.mrf.mxu0
    %1684 = vmatprep.mubr.f32.mxu0 0.0
    %1685 = vmatmul.mubr.f32.gmra.mxu0 %v1592
    %v1686 = vpop.f32.mrf.mxu0
    %v1687 = vadd.f32 %v1587, %v1686
    %v1688 = vpop.f32.mrf.mxu0
    %1689 = vmatprep.mubr.f32.mxu0 0.0
    %1690 = vmatmul.mubr.f32.gmra.mxu0 %v1595
    %v1691 = vpop.f32.mrf.mxu0
    %v1692 = vadd.f32 %v1587, %v1691
    %v1693 = vpop.f32.mrf.mxu0
    %1694 = vmatprep.mubr.f32.mxu0 0.0
    %1695 = vmatmul.mubr.f32.gmra.mxu0 %v1598
    %v1696 = vpop.f32.mrf.mxu0
    %v1697 = vadd.f32 %v1587, %v1696
    %v1698 = vpop.f32.mrf.mxu0
    %1699 = vmatprep.mubr.f32.mxu0 0.0
    %1700 = vmatmul.mubr.f32.gmra.mxu0 %v1601
    %v1701 = vpop.f32.mrf.mxu0
    %v1702 = vadd.f32 %v1587, %v1701
    %v1703 = vpop.f32.mrf.mxu0
    %1704 = vmatprep.mubr.f32.mxu0 0.0
    %1705 = vmatmul.mubr.f32.gmra.mxu0 %v1604
    %v1706 = vpop.f32.mrf.mxu0
    %v1707 = vadd.f32 %v1587, %v1706
    %v1708 = vpop.f32.mrf.mxu0
    %1709 = vmatprep.mubr.f32.mxu0 0.0
    %1710 = vmatmul.mubr.f32.gmra.mxu0 %v1607
    %v1711 = vpop.f32.mrf.mxu0
    %v1712 = vadd.f32 %v1587, %v1711
    %v1713 = vpop.f32.mrf.mxu0
    %1714 = vmatprep.mubr.f32.mxu0 0.0
    %1715 = vmatmul.mubr.f32.gmra.mxu0 %v1610
    %v1716 = vpop.f32.mrf.mxu0
    %v1717 = vadd.f32 %v1587, %v1716
    %v1718 = vpop.f32.mrf.mxu0
    %1719 = vmatprep.mubr.f32.mxu0 0.0
    %1720 = vmatmul.mubr.f32.gmra.mxu0 %v1613
    %v1721 = vpop.f32.mrf.mxu0
    %v1722 = vadd.f32 %v1587, %v1721
    %v1723 = vpop.f32.mrf.mxu0
    %1724 = vdwg.mxu0
    %1734 = vrot.lane.b32.xlu0 %v1682, 120
    %v1735 = vpop.permute.xlu0 %1734
    %1736 = vrot.lane.b32.xlu0 %v1687, 120
    %v1737 = vpop.permute.xlu0 %1736
    %1738 = vrot.lane.b32.xlu0 %v1692, 120
    %v1739 = vpop.permute.xlu0 %1738
    %1740 = vrot.lane.b32.xlu0 %v1697, 120
    %v1741 = vpop.permute.xlu0 %1740
    %1742 = vrot.lane.b32.xlu0 %v1702, 120
    %v1743 = vpop.permute.xlu0 %1742
    %1744 = vrot.lane.b32.xlu0 %v1707, 120
    %v1745 = vpop.permute.xlu0 %1744
    %1746 = vrot.lane.b32.xlu0 %v1712, 120
    %v1747 = vpop.permute.xlu0 %1746
    %1748 = vrot.lane.b32.xlu0 %v1717, 120
    %v1749 = vpop.permute.xlu0 %1748
    %1750 = vrot.lane.b32.xlu0 %v1722, 120
    %v1751 = vpop.permute.xlu0 %1750
    %1761 = vrot.lane.b32.xlu0 %v1682, 112
    %v1762 = vpop.permute.xlu0 %1761
    %1763 = vrot.lane.b32.xlu0 %v1687, 112
    %v1764 = vpop.permute.xlu0 %1763
    %1765 = vrot.lane.b32.xlu0 %v1692, 112
    %v1766 = vpop.permute.xlu0 %1765
    %1767 = vrot.lane.b32.xlu0 %v1697, 112
    %v1768 = vpop.permute.xlu0 %1767
    %1769 = vrot.lane.b32.xlu0 %v1702, 112
    %v1770 = vpop.permute.xlu0 %1769
    %1771 = vrot.lane.b32.xlu0 %v1707, 112
    %v1772 = vpop.permute.xlu0 %1771
    %1773 = vrot.lane.b32.xlu0 %v1712, 112
    %v1774 = vpop.permute.xlu0 %1773
    %1775 = vrot.lane.b32.xlu0 %v1717, 112
    %v1776 = vpop.permute.xlu0 %1775
    %1777 = vrot.lane.b32.xlu0 %v1722, 112
    %v1778 = vpop.permute.xlu0 %1777
    %1788 = vrot.lane.b32.xlu0 %v1682, 104
    %v1789 = vpop.permute.xlu0 %1788
    %1790 = vrot.lane.b32.xlu0 %v1687, 104
    %v1791 = vpop.permute.xlu0 %1790
    %1792 = vrot.lane.b32.xlu0 %v1692, 104
    %v1793 = vpop.permute.xlu0 %1792
    %1794 = vrot.lane.b32.xlu0 %v1697, 104
    %v1795 = vpop.permute.xlu0 %1794
    %1796 = vrot.lane.b32.xlu0 %v1702, 104
    %v1797 = vpop.permute.xlu0 %1796
    %1798 = vrot.lane.b32.xlu0 %v1707, 104
    %v1799 = vpop.permute.xlu0 %1798
    %1800 = vrot.lane.b32.xlu0 %v1712, 104
    %v1801 = vpop.permute.xlu0 %1800
    %1802 = vrot.lane.b32.xlu0 %v1717, 104
    %v1803 = vpop.permute.xlu0 %1802
    %1804 = vrot.lane.b32.xlu0 %v1722, 104
    %v1805 = vpop.permute.xlu0 %1804
    %v1816 = vsel %vm43, %v492, 0
    %v1819 = vsel %vm43, %v493, 0
    %v1822 = vsel %vm43, %v494, 0
    %1824 = vmatprep.subr.mxu0 0.0
    %1825 = vmatpush1.msra.mxu0 0.0
    %1826 = vmatprep.subr.mxu0 0.0
    %1827 = vmatpush1.msra.mxu0 0.0
    %1828 = vmatprep.subr.mxu0 0.0
    %1829 = vmatpush1.msra.mxu0 0.0
    %1830 = vmatprep.subr.mxu0 0.0
    %1831 = vmatpush1.msra.mxu0 0.0
    %1832 = vmatprep.subr.mxu0 0.0
    %1833 = vmatpush1.msra.mxu0 0.0
    %1834 = vmatprep.subr.mxu0 0.0
    %1835 = vmatpush1.msra.mxu0 0.0
    %1836 = vmatprep.subr.mxu0 0.0
    %1837 = vmatpush1.msra.mxu0 0.0
    %1838 = vmatprep.subr.mxu0 0.0
    %1839 = vmatpush1.msra.mxu0 0.0
    %1840 = vmatprep.subr.mxu0 0.0
    %1841 = vmatpush1.msra.mxu0 0.0
    %1842 = vmatprep.subr.mxu0 0.0
    %1843 = vmatpush1.msra.mxu0 0.0
    %1844 = vmatprep.subr.mxu0 0.0
    %1845 = vmatpush1.msra.mxu0 0.0
    %1846 = vmatprep.subr.mxu0 0.0
    %1847 = vmatpush1.msra.mxu0 0.0
    %1848 = vmatprep.subr.mxu0 0.0
    %1849 = vmatpush1.msra.mxu0 0.0
    %1850 = vmatprep.subr.mxu0 0.0
    %1851 = vmatpush1.msra.mxu0 %v1692
    %1852 = vmatprep.subr.mxu0 0.0
    %1853 = vmatpush1.msra.mxu0 %v1687
    %1854 = vmatprep.subr.mxu0 0.0
    %1855 = vmatpush1.msra.mxu0 %v1682
    %1856 = vmatprep.subr.mxu0 0.0
    %1857 = vmatpush2.msra.mxu0 0.0
    %1858 = vmatprep.subr.mxu0 0.0
    %1859 = vmatpush2.msra.mxu0 0.0
    %1860 = vmatprep.subr.mxu0 0.0
    %1861 = vmatpush2.msra.mxu0 0.0
    %1862 = vmatprep.subr.mxu0 0.0
    %1863 = vmatpush2.msra.mxu0 0.0
    %1864 = vmatprep.subr.mxu0 0.0
    %1865 = vmatpush2.msra.mxu0 0.0
    %1866 = vmatprep.subr.mxu0 0.0
    %1867 = vmatpush2.msra.mxu0 0.0
    %1868 = vmatprep.subr.mxu0 0.0
    %1869 = vmatpush2.msra.mxu0 0.0
    %1870 = vmatprep.subr.mxu0 0.0
    %1871 = vmatpush2.msra.mxu0 0.0
    %1872 = vmatprep.subr.mxu0 0.0
    %1873 = vmatpush2.msra.mxu0 0.0
    %1874 = vmatprep.subr.mxu0 0.0
    %1875 = vmatpush2.msra.mxu0 0.0
    %1876 = vmatprep.subr.mxu0 0.0
    %1877 = vmatpush2.msra.mxu0 0.0
    %1878 = vmatprep.subr.mxu0 0.0
    %1879 = vmatpush2.msra.mxu0 0.0
    %1880 = vmatprep.subr.mxu0 0.0
    %1881 = vmatpush2.msra.mxu0 0.0
    %1882 = vmatprep.subr.mxu0 0.0
    %1883 = vmatpush2.msra.mxu0 0.0
    %1884 = vmatprep.subr.mxu0 0.0
    %1885 = vmatpush2.msra.mxu0 0.0
    %1886 = vmatprep.subr.mxu0 0.0
    %1887 = vmatpush2.msra.mxu0 0.0
    %1888 = vmatprep.mubr.f32.mxu0 0.0
    %1889 = vmatmul.mubr.f32.gmra.mxu0 %v1816
    %v1890 = vpop.f32.mrf.mxu0
    %v1891 = vadd.f32 0.0, %v1890
    %v1892 = vpop.f32.mrf.mxu0
    %1893 = vmatprep.mubr.f32.mxu0 0.0
    %1894 = vmatmul.mubr.f32.gmra.mxu0 %v1819
    %v1895 = vpop.f32.mrf.mxu0
    %v1896 = vadd.f32 0.0, %v1895
    %v1897 = vpop.f32.mrf.mxu0
    %1898 = vmatprep.mubr.f32.mxu0 0.0
    %1899 = vmatmul.mubr.f32.gmra.mxu0 %v1822
    %v1900 = vpop.f32.mrf.mxu0
    %v1901 = vadd.f32 0.0, %v1900
    %v1902 = vpop.f32.mrf.mxu0
    %1903 = vdwg.mxu0
    %v1905 = vsel %vm43, %v495, 0
    %v1908 = vsel %vm43, %v496, 0
    %v1911 = vsel %vm43, %v497, 0
    %1913 = vmatprep.subr.mxu0 0.0
    %1914 = vmatpush1.msra.mxu0 0.0
    %1915 = vmatprep.subr.mxu0 0.0
    %1916 = vmatpush1.msra.mxu0 0.0
    %1917 = vmatprep.subr.mxu0 0.0
    %1918 = vmatpush1.msra.mxu0 0.0
    %1919 = vmatprep.subr.mxu0 0.0
    %1920 = vmatpush1.msra.mxu0 0.0
    %1921 = vmatprep.subr.mxu0 0.0
    %1922 = vmatpush1.msra.mxu0 0.0
    %1923 = vmatprep.subr.mxu0 0.0
    %1924 = vmatpush1.msra.mxu0 0.0
    %1925 = vmatprep.subr.mxu0 0.0
    %1926 = vmatpush1.msra.mxu0 0.0
    %1927 = vmatprep.subr.mxu0 0.0
    %1928 = vmatpush1.msra.mxu0 0.0
    %1929 = vmatprep.subr.mxu0 0.0
    %1930 = vmatpush1.msra.mxu0 0.0
    %1931 = vmatprep.subr.mxu0 0.0
    %1932 = vmatpush1.msra.mxu0 0.0
    %1933 = vmatprep.subr.mxu0 0.0
    %1934 = vmatpush1.msra.mxu0 0.0
    %1935 = vmatprep.subr.mxu0 0.0
    %1936 = vmatpush1.msra.mxu0 0.0
    %1937 = vmatprep.subr.mxu0 0.0
    %1938 = vmatpush1.msra.mxu0 0.0
    %1939 = vmatprep.subr.mxu0 0.0
    %1940 = vmatpush1.msra.mxu0 %v1739
    %1941 = vmatprep.subr.mxu0 0.0
    %1942 = vmatpush1.msra.mxu0 %v1737
    %1943 = vmatprep.subr.mxu0 0.0
    %1944 = vmatpush1.msra.mxu0 %v1735
    %1945 = vmatprep.subr.mxu0 0.0
    %1946 = vmatpush2.msra.mxu0 0.0
    %1947 = vmatprep.subr.mxu0 0.0
    %1948 = vmatpush2.msra.mxu0 0.0
    %1949 = vmatprep.subr.mxu0 0.0
    %1950 = vmatpush2.msra.mxu0 0.0
    %1951 = vmatprep.subr.mxu0 0.0
    %1952 = vmatpush2.msra.mxu0 0.0
    %1953 = vmatprep.subr.mxu0 0.0
    %1954 = vmatpush2.msra.mxu0 0.0
    %1955 = vmatprep.subr.mxu0 0.0
    %1956 = vmatpush2.msra.mxu0 0.0
    %1957 = vmatprep.subr.mxu0 0.0
    %1958 = vmatpush2.msra.mxu0 0.0
    %1959 = vmatprep.subr.mxu0 0.0
    %1960 = vmatpush2.msra.mxu0 0.0
    %1961 = vmatprep.subr.mxu0 0.0
    %1962 = vmatpush2.msra.mxu0 0.0
    %1963 = vmatprep.subr.mxu0 0.0
    %1964 = vmatpush2.msra.mxu0 0.0
    %1965 = vmatprep.subr.mxu0 0.0
    %1966 = vmatpush2.msra.mxu0 0.0
    %1967 = vmatprep.subr.mxu0 0.0
    %1968 = vmatpush2.msra.mxu0 0.0
    %1969 = vmatprep.subr.mxu0 0.0
    %1970 = vmatpush2.msra.mxu0 0.0
    %1971 = vmatprep.subr.mxu0 0.0
    %1972 = vmatpush2.msra.mxu0 0.0
    %1973 = vmatprep.subr.mxu0 0.0
    %1974 = vmatpush2.msra.mxu0 0.0
    %1975 = vmatprep.subr.mxu0 0.0
    %1976 = vmatpush2.msra.mxu0 0.0
    %1977 = vmatprep.mubr.f32.mxu0 0.0
    %1978 = vmatmul.mubr.f32.gmra.mxu0 %v1905
    %v1979 = vpop.f32.mrf.mxu0
    %v1980 = vadd.f32 0.0, %v1979
    %v1981 = vpop.f32.mrf.mxu0
    %1982 = vmatprep.mubr.f32.mxu0 0.0
    %1983 = vmatmul.mubr.f32.gmra.mxu0 %v1908
    %v1984 = vpop.f32.mrf.mxu0
    %v1985 = vadd.f32 0.0, %v1984
    %v1986 = vpop.f32.mrf.mxu0
    %1987 = vmatprep.mubr.f32.mxu0 0.0
    %1988 = vmatmul.mubr.f32.gmra.mxu0 %v1911
    %v1989 = vpop.f32.mrf.mxu0
    %v1990 = vadd.f32 0.0, %v1989
    %v1991 = vpop.f32.mrf.mxu0
    %1992 = vdwg.mxu0
    %v1994 = vsel %vm43, %v498, 0
    %v1997 = vsel %vm43, %v499, 0
    %v2000 = vsel %vm43, %v500, 0
    %2002 = vmatprep.subr.mxu0 0.0
    %2003 = vmatpush1.msra.mxu0 0.0
    %2004 = vmatprep.subr.mxu0 0.0
    %2005 = vmatpush1.msra.mxu0 0.0
    %2006 = vmatprep.subr.mxu0 0.0
    %2007 = vmatpush1.msra.mxu0 0.0
    %2008 = vmatprep.subr.mxu0 0.0
    %2009 = vmatpush1.msra.mxu0 0.0
    %2010 = vmatprep.subr.mxu0 0.0
    %2011 = vmatpush1.msra.mxu0 0.0
    %2012 = vmatprep.subr.mxu0 0.0
    %2013 = vmatpush1.msra.mxu0 0.0
    %2014 = vmatprep.subr.mxu0 0.0
    %2015 = vmatpush1.msra.mxu0 0.0
    %2016 = vmatprep.subr.mxu0 0.0
    %2017 = vmatpush1.msra.mxu0 0.0
    %2018 = vmatprep.subr.mxu0 0.0
    %2019 = vmatpush1.msra.mxu0 0.0
    %2020 = vmatprep.subr.mxu0 0.0
    %2021 = vmatpush1.msra.mxu0 0.0
    %2022 = vmatprep.subr.mxu0 0.0
    %2023 = vmatpush1.msra.mxu0 0.0
    %2024 = vmatprep.subr.mxu0 0.0
    %2025 = vmatpush1.msra.mxu0 0.0
    %2026 = vmatprep.subr.mxu0 0.0
    %2027 = vmatpush1.msra.mxu0 0.0
    %2028 = vmatprep.subr.mxu0 0.0
    %2029 = vmatpush1.msra.mxu0 %v1766
    %2030 = vmatprep.subr.mxu0 0.0
    %2031 = vmatpush1.msra.mxu0 %v1764
    %2032 = vmatprep.subr.mxu0 0.0
    %2033 = vmatpush1.msra.mxu0 %v1762
    %2034 = vmatprep.subr.mxu0 0.0
    %2035 = vmatpush2.msra.mxu0 0.0
    %2036 = vmatprep.subr.mxu0 0.0
    %2037 = vmatpush2.msra.mxu0 0.0
    %2038 = vmatprep.subr.mxu0 0.0
    %2039 = vmatpush2.msra.mxu0 0.0
    %2040 = vmatprep.subr.mxu0 0.0
    %2041 = vmatpush2.msra.mxu0 0.0
    %2042 = vmatprep.subr.mxu0 0.0
    %2043 = vmatpush2.msra.mxu0 0.0
    %2044 = vmatprep.subr.mxu0 0.0
    %2045 = vmatpush2.msra.mxu0 0.0
    %2046 = vmatprep.subr.mxu0 0.0
    %2047 = vmatpush2.msra.mxu0 0.0
    %2048 = vmatprep.subr.mxu0 0.0
    %2049 = vmatpush2.msra.mxu0 0.0
    %2050 = vmatprep.subr.mxu0 0.0
    %2051 = vmatpush2.msra.mxu0 0.0
    %2052 = vmatprep.subr.mxu0 0.0
    %2053 = vmatpush2.msra.mxu0 0.0
    %2054 = vmatprep.subr.mxu0 0.0
    %2055 = vmatpush2.msra.mxu0 0.0
    %2056 = vmatprep.subr.mxu0 0.0
    %2057 = vmatpush2.msra.mxu0 0.0
    %2058 = vmatprep.subr.mxu0 0.0
    %2059 = vmatpush2.msra.mxu0 0.0
    %2060 = vmatprep.subr.mxu0 0.0
    %2061 = vmatpush2.msra.mxu0 0.0
    %2062 = vmatprep.subr.mxu0 0.0
    %2063 = vmatpush2.msra.mxu0 0.0
    %2064 = vmatprep.subr.mxu0 0.0
    %2065 = vmatpush2.msra.mxu0 0.0
    %2066 = vmatprep.mubr.f32.mxu0 0.0
    %2067 = vmatmul.mubr.f32.gmra.mxu0 %v1994
    %v2068 = vpop.f32.mrf.mxu0
    %v2069 = vadd.f32 0.0, %v2068
    %v2070 = vpop.f32.mrf.mxu0
    %2071 = vmatprep.mubr.f32.mxu0 0.0
    %2072 = vmatmul.mubr.f32.gmra.mxu0 %v1997
    %v2073 = vpop.f32.mrf.mxu0
    %v2074 = vadd.f32 0.0, %v2073
    %v2075 = vpop.f32.mrf.mxu0
    %2076 = vmatprep.mubr.f32.mxu0 0.0
    %2077 = vmatmul.mubr.f32.gmra.mxu0 %v2000
    %v2078 = vpop.f32.mrf.mxu0
    %v2079 = vadd.f32 0.0, %v2078
    %v2080 = vpop.f32.mrf.mxu0
    %2081 = vdwg.mxu0
    %v2083 = vsel %vm43, %v501, 0
    %v2086 = vsel %vm43, %v502, 0
    %v2089 = vsel %vm43, %v503, 0
    %2091 = vmatprep.subr.mxu0 0.0
    %2092 = vmatpush1.msra.mxu0 0.0
    %2093 = vmatprep.subr.mxu0 0.0
    %2094 = vmatpush1.msra.mxu0 0.0
    %2095 = vmatprep.subr.mxu0 0.0
    %2096 = vmatpush1.msra.mxu0 0.0
    %2097 = vmatprep.subr.mxu0 0.0
    %2098 = vmatpush1.msra.mxu0 0.0
    %2099 = vmatprep.subr.mxu0 0.0
    %2100 = vmatpush1.msra.mxu0 0.0
    %2101 = vmatprep.subr.mxu0 0.0
    %2102 = vmatpush1.msra.mxu0 0.0
    %2103 = vmatprep.subr.mxu0 0.0
    %2104 = vmatpush1.msra.mxu0 0.0
    %2105 = vmatprep.subr.mxu0 0.0
    %2106 = vmatpush1.msra.mxu0 0.0
    %2107 = vmatprep.subr.mxu0 0.0
    %2108 = vmatpush1.msra.mxu0 0.0
    %2109 = vmatprep.subr.mxu0 0.0
    %2110 = vmatpush1.msra.mxu0 0.0
    %2111 = vmatprep.subr.mxu0 0.0
    %2112 = vmatpush1.msra.mxu0 0.0
    %2113 = vmatprep.subr.mxu0 0.0
    %2114 = vmatpush1.msra.mxu0 0.0
    %2115 = vmatprep.subr.mxu0 0.0
    %2116 = vmatpush1.msra.mxu0 0.0
    %2117 = vmatprep.subr.mxu0 0.0
    %2118 = vmatpush1.msra.mxu0 %v1793
    %2119 = vmatprep.subr.mxu0 0.0
    %2120 = vmatpush1.msra.mxu0 %v1791
    %2121 = vmatprep.subr.mxu0 0.0
    %2122 = vmatpush1.msra.mxu0 %v1789
    %2123 = vmatprep.subr.mxu0 0.0
    %2124 = vmatpush2.msra.mxu0 0.0
    %2125 = vmatprep.subr.mxu0 0.0
    %2126 = vmatpush2.msra.mxu0 0.0
    %2127 = vmatprep.subr.mxu0 0.0
    %2128 = vmatpush2.msra.mxu0 0.0
    %2129 = vmatprep.subr.mxu0 0.0
    %2130 = vmatpush2.msra.mxu0 0.0
    %2131 = vmatprep.subr.mxu0 0.0
    %2132 = vmatpush2.msra.mxu0 0.0
    %2133 = vmatprep.subr.mxu0 0.0
    %2134 = vmatpush2.msra.mxu0 0.0
    %2135 = vmatprep.subr.mxu0 0.0
    %2136 = vmatpush2.msra.mxu0 0.0
    %2137 = vmatprep.subr.mxu0 0.0
    %2138 = vmatpush2.msra.mxu0 0.0
    %2139 = vmatprep.subr.mxu0 0.0
    %2140 = vmatpush2.msra.mxu0 0.0
    %2141 = vmatprep.subr.mxu0 0.0
    %2142 = vmatpush2.msra.mxu0 0.0
    %2143 = vmatprep.subr.mxu0 0.0
    %2144 = vmatpush2.msra.mxu0 0.0
    %2145 = vmatprep.subr.mxu0 0.0
    %2146 = vmatpush2.msra.mxu0 0.0
    %2147 = vmatprep.subr.mxu0 0.0
    %2148 = vmatpush2.msra.mxu0 0.0
    %2149 = vmatprep.subr.mxu0 0.0
    %2150 = vmatpush2.msra.mxu0 0.0
    %2151 = vmatprep.subr.mxu0 0.0
    %2152 = vmatpush2.msra.mxu0 0.0
    %2153 = vmatprep.subr.mxu0 0.0
    %2154 = vmatpush2.msra.mxu0 0.0
    %2155 = vmatprep.mubr.f32.mxu0 0.0
    %2156 = vmatmul.mubr.f32.gmra.mxu0 %v2083
    %v2157 = vpop.f32.mrf.mxu0
    %v2158 = vadd.f32 0.0, %v2157
    %v2159 = vpop.f32.mrf.mxu0
    %2160 = vmatprep.mubr.f32.mxu0 0.0
    %2161 = vmatmul.mubr.f32.gmra.mxu0 %v2086
    %v2162 = vpop.f32.mrf.mxu0
    %v2163 = vadd.f32 0.0, %v2162
    %v2164 = vpop.f32.mrf.mxu0
    %2165 = vmatprep.mubr.f32.mxu0 0.0
    %2166 = vmatmul.mubr.f32.gmra.mxu0 %v2089
    %v2167 = vpop.f32.mrf.mxu0
    %v2168 = vadd.f32 0.0, %v2167
    %v2169 = vpop.f32.mrf.mxu0
    %2170 = vdwg.mxu0
    %2174 = vrot.lane.b32.xlu0 %v1980, 8
    %v2175 = vpop.permute.xlu0 %2174
    %2176 = vrot.lane.b32.xlu0 %v1985, 8
    %v2177 = vpop.permute.xlu0 %2176
    %2178 = vrot.lane.b32.xlu0 %v1990, 8
    %v2179 = vpop.permute.xlu0 %2178
    %2186 = vrot.lane.b32.xlu0 %v2069, 16
    %v2187 = vpop.permute.xlu0 %2186
    %2188 = vrot.lane.b32.xlu0 %v2074, 16
    %v2189 = vpop.permute.xlu0 %2188
    %2190 = vrot.lane.b32.xlu0 %v2079, 16
    %v2191 = vpop.permute.xlu0 %2190
    %2198 = vrot.lane.b32.xlu0 %v2158, 24
    %v2199 = vpop.permute.xlu0 %2198
    %2200 = vrot.lane.b32.xlu0 %v2163, 24
    %v2201 = vpop.permute.xlu0 %2200
    %2202 = vrot.lane.b32.xlu0 %v2168, 24
    %v2203 = vpop.permute.xlu0 %2202
    %vm2207 = vcmask 64512
    %v2208 = vsel %vm2207, %v1891, %v2175
    %v2209 = vsel %vm2207, %v1896, %v2177
    %v2210 = vsel %vm2207, %v1901, %v2179
    %vm2211 = vcmask 130048
    %v2212 = vsel %vm2211, %v2208, %v2187
    %v2213 = vsel %vm2211, %v2209, %v2189
    %v2214 = vsel %vm2211, %v2210, %v2191
    %v2215 = vsel %vm43, %v2212, %v2199
    %v2216 = vsel %vm43, %v2213, %v2201
    %v2217 = vsel %vm43, %v2214, %v2203
    %v2219 = vsel %vm43, %v952, 0
    %v2222 = vsel %vm43, %v953, 0
    %v2225 = vsel %vm43, %v954, 0
    %2227 = vmatprep.subr.mxu0 0.0
    %2228 = vmatpush1.msra.mxu0 0.0
    %2229 = vmatprep.subr.mxu0 0.0
    %2230 = vmatpush1.msra.mxu0 0.0
    %2231 = vmatprep.subr.mxu0 0.0
    %2232 = vmatpush1.msra.mxu0 0.0
    %2233 = vmatprep.subr.mxu0 0.0
    %2234 = vmatpush1.msra.mxu0 0.0
    %2235 = vmatprep.subr.mxu0 0.0
    %2236 = vmatpush1.msra.mxu0 0.0
    %2237 = vmatprep.subr.mxu0 0.0
    %2238 = vmatpush1.msra.mxu0 0.0
    %2239 = vmatprep.subr.mxu0 0.0
    %2240 = vmatpush1.msra.mxu0 0.0
    %2241 = vmatprep.subr.mxu0 0.0
    %2242 = vmatpush1.msra.mxu0 0.0
    %2243 = vmatprep.subr.mxu0 0.0
    %2244 = vmatpush1.msra.mxu0 0.0
    %2245 = vmatprep.subr.mxu0 0.0
    %2246 = vmatpush1.msra.mxu0 0.0
    %2247 = vmatprep.subr.mxu0 0.0
    %2248 = vmatpush1.msra.mxu0 0.0
    %2249 = vmatprep.subr.mxu0 0.0
    %2250 = vmatpush1.msra.mxu0 0.0
    %2251 = vmatprep.subr.mxu0 0.0
    %2252 = vmatpush1.msra.mxu0 0.0
    %2253 = vmatprep.subr.mxu0 0.0
    %2254 = vmatpush1.msra.mxu0 %v1707
    %2255 = vmatprep.subr.mxu0 0.0
    %2256 = vmatpush1.msra.mxu0 %v1702
    %2257 = vmatprep.subr.mxu0 0.0
    %2258 = vmatpush1.msra.mxu0 %v1697
    %2259 = vmatprep.subr.mxu0 0.0
    %2260 = vmatpush2.msra.mxu0 0.0
    %2261 = vmatprep.subr.mxu0 0.0
    %2262 = vmatpush2.msra.mxu0 0.0
    %2263 = vmatprep.subr.mxu0 0.0
    %2264 = vmatpush2.msra.mxu0 0.0
    %2265 = vmatprep.subr.mxu0 0.0
    %2266 = vmatpush2.msra.mxu0 0.0
    %2267 = vmatprep.subr.mxu0 0.0
    %2268 = vmatpush2.msra.mxu0 0.0
    %2269 = vmatprep.subr.mxu0 0.0
    %2270 = vmatpush2.msra.mxu0 0.0
    %2271 = vmatprep.subr.mxu0 0.0
    %2272 = vmatpush2.msra.mxu0 0.0
    %2273 = vmatprep.subr.mxu0 0.0
    %2274 = vmatpush2.msra.mxu0 0.0
    %2275 = vmatprep.subr.mxu0 0.0
    %2276 = vmatpush2.msra.mxu0 0.0
    %2277 = vmatprep.subr.mxu0 0.0
    %2278 = vmatpush2.msra.mxu0 0.0
    %2279 = vmatprep.subr.mxu0 0.0
    %2280 = vmatpush2.msra.mxu0 0.0
    %2281 = vmatprep.subr.mxu0 0.0
    %2282 = vmatpush2.msra.mxu0 0.0
    %2283 = vmatprep.subr.mxu0 0.0
    %2284 = vmatpush2.msra.mxu0 0.0
    %2285 = vmatprep.subr.mxu0 0.0
    %2286 = vmatpush2.msra.mxu0 0.0
    %2287 = vmatprep.subr.mxu0 0.0
    %2288 = vmatpush2.msra.mxu0 0.0
    %2289 = vmatprep.subr.mxu0 0.0
    %2290 = vmatpush2.msra.mxu0 0.0
    %2291 = vmatprep.mubr.f32.mxu0 0.0
    %2292 = vmatmul.mubr.f32.gmra.mxu0 %v2219
    %v2293 = vpop.f32.mrf.mxu0
    %v2294 = vadd.f32 0.0, %v2293
    %v2295 = vpop.f32.mrf.mxu0
    %2296 = vmatprep.mubr.f32.mxu0 0.0
    %2297 = vmatmul.mubr.f32.gmra.mxu0 %v2222
    %v2298 = vpop.f32.mrf.mxu0
    %v2299 = vadd.f32 0.0, %v2298
    %v2300 = vpop.f32.mrf.mxu0
    %2301 = vmatprep.mubr.f32.mxu0 0.0
    %2302 = vmatmul.mubr.f32.gmra.mxu0 %v2225
    %v2303 = vpop.f32.mrf.mxu0
    %v2304 = vadd.f32 0.0, %v2303
    %v2305 = vpop.f32.mrf.mxu0
    %2306 = vdwg.mxu0
    %v2308 = vsel %vm43, %v955, 0
    %v2311 = vsel %vm43, %v956, 0
    %v2314 = vsel %vm43, %v957, 0
    %2316 = vmatprep.subr.mxu0 0.0
    %2317 = vmatpush1.msra.mxu0 0.0
    %2318 = vmatprep.subr.mxu0 0.0
    %2319 = vmatpush1.msra.mxu0 0.0
    %2320 = vmatprep.subr.mxu0 0.0
    %2321 = vmatpush1.msra.mxu0 0.0
    %2322 = vmatprep.subr.mxu0 0.0
    %2323 = vmatpush1.msra.mxu0 0.0
    %2324 = vmatprep.subr.mxu0 0.0
    %2325 = vmatpush1.msra.mxu0 0.0
    %2326 = vmatprep.subr.mxu0 0.0
    %2327 = vmatpush1.msra.mxu0 0.0
    %2328 = vmatprep.subr.mxu0 0.0
    %2329 = vmatpush1.msra.mxu0 0.0
    %2330 = vmatprep.subr.mxu0 0.0
    %2331 = vmatpush1.msra.mxu0 0.0
    %2332 = vmatprep.subr.mxu0 0.0
    %2333 = vmatpush1.msra.mxu0 0.0
    %2334 = vmatprep.subr.mxu0 0.0
    %2335 = vmatpush1.msra.mxu0 0.0
    %2336 = vmatprep.subr.mxu0 0.0
    %2337 = vmatpush1.msra.mxu0 0.0
    %2338 = vmatprep.subr.mxu0 0.0
    %2339 = vmatpush1.msra.mxu0 0.0
    %2340 = vmatprep.subr.mxu0 0.0
    %2341 = vmatpush1.msra.mxu0 0.0
    %2342 = vmatprep.subr.mxu0 0.0
    %2343 = vmatpush1.msra.mxu0 %v1745
    %2344 = vmatprep.subr.mxu0 0.0
    %2345 = vmatpush1.msra.mxu0 %v1743
    %2346 = vmatprep.subr.mxu0 0.0
    %2347 = vmatpush1.msra.mxu0 %v1741
    %2348 = vmatprep.subr.mxu0 0.0
    %2349 = vmatpush2.msra.mxu0 0.0
    %2350 = vmatprep.subr.mxu0 0.0
    %2351 = vmatpush2.msra.mxu0 0.0
    %2352 = vmatprep.subr.mxu0 0.0
    %2353 = vmatpush2.msra.mxu0 0.0
    %2354 = vmatprep.subr.mxu0 0.0
    %2355 = vmatpush2.msra.mxu0 0.0
    %2356 = vmatprep.subr.mxu0 0.0
    %2357 = vmatpush2.msra.mxu0 0.0
    %2358 = vmatprep.subr.mxu0 0.0
    %2359 = vmatpush2.msra.mxu0 0.0
    %2360 = vmatprep.subr.mxu0 0.0
    %2361 = vmatpush2.msra.mxu0 0.0
    %2362 = vmatprep.subr.mxu0 0.0
    %2363 = vmatpush2.msra.mxu0 0.0
    %2364 = vmatprep.subr.mxu0 0.0
    %2365 = vmatpush2.msra.mxu0 0.0
    %2366 = vmatprep.subr.mxu0 0.0
    %2367 = vmatpush2.msra.mxu0 0.0
    %2368 = vmatprep.subr.mxu0 0.0
    %2369 = vmatpush2.msra.mxu0 0.0
    %2370 = vmatprep.subr.mxu0 0.0
    %2371 = vmatpush2.msra.mxu0 0.0
    %2372 = vmatprep.subr.mxu0 0.0
    %2373 = vmatpush2.msra.mxu0 0.0
    %2374 = vmatprep.subr.mxu0 0.0
    %2375 = vmatpush2.msra.mxu0 0.0
    %2376 = vmatprep.subr.mxu0 0.0
    %2377 = vmatpush2.msra.mxu0 0.0
    %2378 = vmatprep.subr.mxu0 0.0
    %2379 = vmatpush2.msra.mxu0 0.0
    %2380 = vmatprep.mubr.f32.mxu0 0.0
    %2381 = vmatmul.mubr.f32.gmra.mxu0 %v2308
    %v2382 = vpop.f32.mrf.mxu0
    %v2383 = vadd.f32 0.0, %v2382
    %v2384 = vpop.f32.mrf.mxu0
    %2385 = vmatprep.mubr.f32.mxu0 0.0
    %2386 = vmatmul.mubr.f32.gmra.mxu0 %v2311
    %v2387 = vpop.f32.mrf.mxu0
    %v2388 = vadd.f32 0.0, %v2387
    %v2389 = vpop.f32.mrf.mxu0
    %2390 = vmatprep.mubr.f32.mxu0 0.0
    %2391 = vmatmul.mubr.f32.gmra.mxu0 %v2314
    %v2392 = vpop.f32.mrf.mxu0
    %v2393 = vadd.f32 0.0, %v2392
    %v2394 = vpop.f32.mrf.mxu0
    %2395 = vdwg.mxu0
    %v2397 = vsel %vm43, %v958, 0
    %v2400 = vsel %vm43, %v959, 0
    %v2403 = vsel %vm43, %v960, 0
    %2405 = vmatprep.subr.mxu0 0.0
    %2406 = vmatpush1.msra.mxu0 0.0
    %2407 = vmatprep.subr.mxu0 0.0
    %2408 = vmatpush1.msra.mxu0 0.0
    %2409 = vmatprep.subr.mxu0 0.0
    %2410 = vmatpush1.msra.mxu0 0.0
    %2411 = vmatprep.subr.mxu0 0.0
    %2412 = vmatpush1.msra.mxu0 0.0
    %2413 = vmatprep.subr.mxu0 0.0
    %2414 = vmatpush1.msra.mxu0 0.0
    %2415 = vmatprep.subr.mxu0 0.0
    %2416 = vmatpush1.msra.mxu0 0.0
    %2417 = vmatprep.subr.mxu0 0.0
    %2418 = vmatpush1.msra.mxu0 0.0
    %2419 = vmatprep.subr.mxu0 0.0
    %2420 = vmatpush1.msra.mxu0 0.0
    %2421 = vmatprep.subr.mxu0 0.0
    %2422 = vmatpush1.msra.mxu0 0.0
    %2423 = vmatprep.subr.mxu0 0.0
    %2424 = vmatpush1.msra.mxu0 0.0
    %2425 = vmatprep.subr.mxu0 0.0
    %2426 = vmatpush1.msra.mxu0 0.0
    %2427 = vmatprep.subr.mxu0 0.0
    %2428 = vmatpush1.msra.mxu0 0.0
    %2429 = vmatprep.subr.mxu0 0.0
    %2430 = vmatpush1.msra.mxu0 0.0
    %2431 = vmatprep.subr.mxu0 0.0
    %2432 = vmatpush1.msra.mxu0 %v1772
    %2433 = vmatprep.subr.mxu0 0.0
    %2434 = vmatpush1.msra.mxu0 %v1770
    %2435 = vmatprep.subr.mxu0 0.0
    %2436 = vmatpush1.msra.mxu0 %v1768
    %2437 = vmatprep.subr.mxu0 0.0
    %2438 = vmatpush2.msra.mxu0 0.0
    %2439 = vmatprep.subr.mxu0 0.0
    %2440 = vmatpush2.msra.mxu0 0.0
    %2441 = vmatprep.subr.mxu0 0.0
    %2442 = vmatpush2.msra.mxu0 0.0
    %2443 = vmatprep.subr.mxu0 0.0
    %2444 = vmatpush2.msra.mxu0 0.0
    %2445 = vmatprep.subr.mxu0 0.0
    %2446 = vmatpush2.msra.mxu0 0.0
    %2447 = vmatprep.subr.mxu0 0.0
    %2448 = vmatpush2.msra.mxu0 0.0
    %2449 = vmatprep.subr.mxu0 0.0
    %2450 = vmatpush2.msra.mxu0 0.0
    %2451 = vmatprep.subr.mxu0 0.0
    %2452 = vmatpush2.msra.mxu0 0.0
    %2453 = vmatprep.subr.mxu0 0.0
    %2454 = vmatpush2.msra.mxu0 0.0
    %2455 = vmatprep.subr.mxu0 0.0
    %2456 = vmatpush2.msra.mxu0 0.0
    %2457 = vmatprep.subr.mxu0 0.0
    %2458 = vmatpush2.msra.mxu0 0.0
    %2459 = vmatprep.subr.mxu0 0.0
    %2460 = vmatpush2.msra.mxu0 0.0
    %2461 = vmatprep.subr.mxu0 0.0
    %2462 = vmatpush2.msra.mxu0 0.0
    %2463 = vmatprep.subr.mxu0 0.0
    %2464 = vmatpush2.msra.mxu0 0.0
    %2465 = vmatprep.subr.mxu0 0.0
    %2466 = vmatpush2.msra.mxu0 0.0
    %2467 = vmatprep.subr.mxu0 0.0
    %2468 = vmatpush2.msra.mxu0 0.0
    %2469 = vmatprep.mubr.f32.mxu0 0.0
    %2470 = vmatmul.mubr.f32.gmra.mxu0 %v2397
    %v2471 = vpop.f32.mrf.mxu0
    %v2472 = vadd.f32 0.0, %v2471
    %v2473 = vpop.f32.mrf.mxu0
    %2474 = vmatprep.mubr.f32.mxu0 0.0
    %2475 = vmatmul.mubr.f32.gmra.mxu0 %v2400
    %v2476 = vpop.f32.mrf.mxu0
    %v2477 = vadd.f32 0.0, %v2476
    %v2478 = vpop.f32.mrf.mxu0
    %2479 = vmatprep.mubr.f32.mxu0 0.0
    %2480 = vmatmul.mubr.f32.gmra.mxu0 %v2403
    %v2481 = vpop.f32.mrf.mxu0
    %v2482 = vadd.f32 0.0, %v2481
    %v2483 = vpop.f32.mrf.mxu0
    %2484 = vdwg.mxu0
    %v2486 = vsel %vm43, %v961, 0
    %v2489 = vsel %vm43, %v962, 0
    %v2492 = vsel %vm43, %v963, 0
    %2494 = vmatprep.subr.mxu0 0.0
    %2495 = vmatpush1.msra.mxu0 0.0
    %2496 = vmatprep.subr.mxu0 0.0
    %2497 = vmatpush1.msra.mxu0 0.0
    %2498 = vmatprep.subr.mxu0 0.0
    %2499 = vmatpush1.msra.mxu0 0.0
    %2500 = vmatprep.subr.mxu0 0.0
    %2501 = vmatpush1.msra.mxu0 0.0
    %2502 = vmatprep.subr.mxu0 0.0
    %2503 = vmatpush1.msra.mxu0 0.0
    %2504 = vmatprep.subr.mxu0 0.0
    %2505 = vmatpush1.msra.mxu0 0.0
    %2506 = vmatprep.subr.mxu0 0.0
    %2507 = vmatpush1.msra.mxu0 0.0
    %2508 = vmatprep.subr.mxu0 0.0
    %2509 = vmatpush1.msra.mxu0 0.0
    %2510 = vmatprep.subr.mxu0 0.0
    %2511 = vmatpush1.msra.mxu0 0.0
    %2512 = vmatprep.subr.mxu0 0.0
    %2513 = vmatpush1.msra.mxu0 0.0
    %2514 = vmatprep.subr.mxu0 0.0
    %2515 = vmatpush1.msra.mxu0 0.0
    %2516 = vmatprep.subr.mxu0 0.0
    %2517 = vmatpush1.msra.mxu0 0.0
    %2518 = vmatprep.subr.mxu0 0.0
    %2519 = vmatpush1.msra.mxu0 0.0
    %2520 = vmatprep.subr.mxu0 0.0
    %2521 = vmatpush1.msra.mxu0 %v1799
    %2522 = vmatprep.subr.mxu0 0.0
    %2523 = vmatpush1.msra.mxu0 %v1797
    %2524 = vmatprep.subr.mxu0 0.0
    %2525 = vmatpush1.msra.mxu0 %v1795
    %2526 = vmatprep.subr.mxu0 0.0
    %2527 = vmatpush2.msra.mxu0 0.0
    %2528 = vmatprep.subr.mxu0 0.0
    %2529 = vmatpush2.msra.mxu0 0.0
    %2530 = vmatprep.subr.mxu0 0.0
    %2531 = vmatpush2.msra.mxu0 0.0
    %2532 = vmatprep.subr.mxu0 0.0
    %2533 = vmatpush2.msra.mxu0 0.0
    %2534 = vmatprep.subr.mxu0 0.0
    %2535 = vmatpush2.msra.mxu0 0.0
    %2536 = vmatprep.subr.mxu0 0.0
    %2537 = vmatpush2.msra.mxu0 0.0
    %2538 = vmatprep.subr.mxu0 0.0
    %2539 = vmatpush2.msra.mxu0 0.0
    %2540 = vmatprep.subr.mxu0 0.0
    %2541 = vmatpush2.msra.mxu0 0.0
    %2542 = vmatprep.subr.mxu0 0.0
    %2543 = vmatpush2.msra.mxu0 0.0
    %2544 = vmatprep.subr.mxu0 0.0
    %2545 = vmatpush2.msra.mxu0 0.0
    %2546 = vmatprep.subr.mxu0 0.0
    %2547 = vmatpush2.msra.mxu0 0.0
    %2548 = vmatprep.subr.mxu0 0.0
    %2549 = vmatpush2.msra.mxu0 0.0
    %2550 = vmatprep.subr.mxu0 0.0
    %2551 = vmatpush2.msra.mxu0 0.0
    %2552 = vmatprep.subr.mxu0 0.0
    %2553 = vmatpush2.msra.mxu0 0.0
    %2554 = vmatprep.subr.mxu0 0.0
    %2555 = vmatpush2.msra.mxu0 0.0
    %2556 = vmatprep.subr.mxu0 0.0
    %2557 = vmatpush2.msra.mxu0 0.0
    %2558 = vmatprep.mubr.f32.mxu0 0.0
    %2559 = vmatmul.mubr.f32.gmra.mxu0 %v2486
    %v2560 = vpop.f32.mrf.mxu0
    %v2561 = vadd.f32 0.0, %v2560
    %v2562 = vpop.f32.mrf.mxu0
    %2563 = vmatprep.mubr.f32.mxu0 0.0
    %2564 = vmatmul.mubr.f32.gmra.mxu0 %v2489
    %v2565 = vpop.f32.mrf.mxu0
    %v2566 = vadd.f32 0.0, %v2565
    %v2567 = vpop.f32.mrf.mxu0
    %2568 = vmatprep.mubr.f32.mxu0 0.0
    %2569 = vmatmul.mubr.f32.gmra.mxu0 %v2492
    %v2570 = vpop.f32.mrf.mxu0
    %v2571 = vadd.f32 0.0, %v2570
    %v2572 = vpop.f32.mrf.mxu0
    %2573 = vdwg.mxu0
    %2577 = vrot.lane.b32.xlu0 %v2383, 8
    %v2578 = vpop.permute.xlu0 %2577
    %2579 = vrot.lane.b32.xlu0 %v2388, 8
    %v2580 = vpop.permute.xlu0 %2579
    %2581 = vrot.lane.b32.xlu0 %v2393, 8
    %v2582 = vpop.permute.xlu0 %2581
    %2589 = vrot.lane.b32.xlu0 %v2472, 16
    %v2590 = vpop.permute.xlu0 %2589
    %2591 = vrot.lane.b32.xlu0 %v2477, 16
    %v2592 = vpop.permute.xlu0 %2591
    %2593 = vrot.lane.b32.xlu0 %v2482, 16
    %v2594 = vpop.permute.xlu0 %2593
    %2601 = vrot.lane.b32.xlu0 %v2561, 24
    %v2602 = vpop.permute.xlu0 %2601
    %2603 = vrot.lane.b32.xlu0 %v2566, 24
    %v2604 = vpop.permute.xlu0 %2603
    %2605 = vrot.lane.b32.xlu0 %v2571, 24
    %v2606 = vpop.permute.xlu0 %2605
    %v2610 = vsel %vm2207, %v2294, %v2578
    %v2611 = vsel %vm2207, %v2299, %v2580
    %v2612 = vsel %vm2207, %v2304, %v2582
    %v2613 = vsel %vm2211, %v2610, %v2590
    %v2614 = vsel %vm2211, %v2611, %v2592
    %v2615 = vsel %vm2211, %v2612, %v2594
    %v2616 = vsel %vm43, %v2613, %v2602
    %v2617 = vsel %vm43, %v2614, %v2604
    %v2618 = vsel %vm43, %v2615, %v2606
    %v2620 = vsel %vm43, %v1412, 0
    %v2623 = vsel %vm43, %v1413, 0
    %v2626 = vsel %vm43, %v1414, 0
    %2628 = vmatprep.subr.mxu0 0.0
    %2629 = vmatpush1.msra.mxu0 0.0
    %2630 = vmatprep.subr.mxu0 0.0
    %2631 = vmatpush1.msra.mxu0 0.0
    %2632 = vmatprep.subr.mxu0 0.0
    %2633 = vmatpush1.msra.mxu0 0.0
    %2634 = vmatprep.subr.mxu0 0.0
    %2635 = vmatpush1.msra.mxu0 0.0
    %2636 = vmatprep.subr.mxu0 0.0
    %2637 = vmatpush1.msra.mxu0 0.0
    %2638 = vmatprep.subr.mxu0 0.0
    %2639 = vmatpush1.msra.mxu0 0.0
    %2640 = vmatprep.subr.mxu0 0.0
    %2641 = vmatpush1.msra.mxu0 0.0
    %2642 = vmatprep.subr.mxu0 0.0
    %2643 = vmatpush1.msra.mxu0 0.0
    %2644 = vmatprep.subr.mxu0 0.0
    %2645 = vmatpush1.msra.mxu0 0.0
    %2646 = vmatprep.subr.mxu0 0.0
    %2647 = vmatpush1.msra.mxu0 0.0
    %2648 = vmatprep.subr.mxu0 0.0
    %2649 = vmatpush1.msra.mxu0 0.0
    %2650 = vmatprep.subr.mxu0 0.0
    %2651 = vmatpush1.msra.mxu0 0.0
    %2652 = vmatprep.subr.mxu0 0.0
    %2653 = vmatpush1.msra.mxu0 0.0
    %2654 = vmatprep.subr.mxu0 0.0
    %2655 = vmatpush1.msra.mxu0 %v1722
    %2656 = vmatprep.subr.mxu0 0.0
    %2657 = vmatpush1.msra.mxu0 %v1717
    %2658 = vmatprep.subr.mxu0 0.0
    %2659 = vmatpush1.msra.mxu0 %v1712
    %2660 = vmatprep.subr.mxu0 0.0
    %2661 = vmatpush2.msra.mxu0 0.0
    %2662 = vmatprep.subr.mxu0 0.0
    %2663 = vmatpush2.msra.mxu0 0.0
    %2664 = vmatprep.subr.mxu0 0.0
    %2665 = vmatpush2.msra.mxu0 0.0
    %2666 = vmatprep.subr.mxu0 0.0
    %2667 = vmatpush2.msra.mxu0 0.0
    %2668 = vmatprep.subr.mxu0 0.0
    %2669 = vmatpush2.msra.mxu0 0.0
    %2670 = vmatprep.subr.mxu0 0.0
    %2671 = vmatpush2.msra.mxu0 0.0
    %2672 = vmatprep.subr.mxu0 0.0
    %2673 = vmatpush2.msra.mxu0 0.0
    %2674 = vmatprep.subr.mxu0 0.0
    %2675 = vmatpush2.msra.mxu0 0.0
    %2676 = vmatprep.subr.mxu0 0.0
    %2677 = vmatpush2.msra.mxu0 0.0
    %2678 = vmatprep.subr.mxu0 0.0
    %2679 = vmatpush2.msra.mxu0 0.0
    %2680 = vmatprep.subr.mxu0 0.0
    %2681 = vmatpush2.msra.mxu0 0.0
    %2682 = vmatprep.subr.mxu0 0.0
    %2683 = vmatpush2.msra.mxu0 0.0
    %2684 = vmatprep.subr.mxu0 0.0
    %2685 = vmatpush2.msra.mxu0 0.0
    %2686 = vmatprep.subr.mxu0 0.0
    %2687 = vmatpush2.msra.mxu0 0.0
    %2688 = vmatprep.subr.mxu0 0.0
    %2689 = vmatpush2.msra.mxu0 0.0
    %2690 = vmatprep.subr.mxu0 0.0
    %2691 = vmatpush2.msra.mxu0 0.0
    %2692 = vmatprep.mubr.f32.mxu0 0.0
    %2693 = vmatmul.mubr.f32.gmra.mxu0 %v2620
    %v2694 = vpop.f32.mrf.mxu0
    %v2695 = vadd.f32 0.0, %v2694
    %v2696 = vpop.f32.mrf.mxu0
    %2697 = vmatprep.mubr.f32.mxu0 0.0
    %2698 = vmatmul.mubr.f32.gmra.mxu0 %v2623
    %v2699 = vpop.f32.mrf.mxu0
    %v2700 = vadd.f32 0.0, %v2699
    %v2701 = vpop.f32.mrf.mxu0
    %2702 = vmatprep.mubr.f32.mxu0 0.0
    %2703 = vmatmul.mubr.f32.gmra.mxu0 %v2626
    %v2704 = vpop.f32.mrf.mxu0
    %v2705 = vadd.f32 0.0, %v2704
    %v2706 = vpop.f32.mrf.mxu0
    %2707 = vdwg.mxu0
    %v2709 = vsel %vm43, %v1415, 0
    %v2712 = vsel %vm43, %v1416, 0
    %v2715 = vsel %vm43, %v1417, 0
    %2717 = vmatprep.subr.mxu0 0.0
    %2718 = vmatpush1.msra.mxu0 0.0
    %2719 = vmatprep.subr.mxu0 0.0
    %2720 = vmatpush1.msra.mxu0 0.0
    %2721 = vmatprep.subr.mxu0 0.0
    %2722 = vmatpush1.msra.mxu0 0.0
    %2723 = vmatprep.subr.mxu0 0.0
    %2724 = vmatpush1.msra.mxu0 0.0
    %2725 = vmatprep.subr.mxu0 0.0
    %2726 = vmatpush1.msra.mxu0 0.0
    %2727 = vmatprep.subr.mxu0 0.0
    %2728 = vmatpush1.msra.mxu0 0.0
    %2729 = vmatprep.subr.mxu0 0.0
    %2730 = vmatpush1.msra.mxu0 0.0
    %2731 = vmatprep.subr.mxu0 0.0
    %2732 = vmatpush1.msra.mxu0 0.0
    %2733 = vmatprep.subr.mxu0 0.0
    %2734 = vmatpush1.msra.mxu0 0.0
    %2735 = vmatprep.subr.mxu0 0.0
    %2736 = vmatpush1.msra.mxu0 0.0
    %2737 = vmatprep.subr.mxu0 0.0
    %2738 = vmatpush1.msra.mxu0 0.0
    %2739 = vmatprep.subr.mxu0 0.0
    %2740 = vmatpush1.msra.mxu0 0.0
    %2741 = vmatprep.subr.mxu0 0.0
    %2742 = vmatpush1.msra.mxu0 0.0
    %2743 = vmatprep.subr.mxu0 0.0
    %2744 = vmatpush1.msra.mxu0 %v1751
    %2745 = vmatprep.subr.mxu0 0.0
    %2746 = vmatpush1.msra.mxu0 %v1749
    %2747 = vmatprep.subr.mxu0 0.0
    %2748 = vmatpush1.msra.mxu0 %v1747
    %2749 = vmatprep.subr.mxu0 0.0
    %2750 = vmatpush2.msra.mxu0 0.0
    %2751 = vmatprep.subr.mxu0 0.0
    %2752 = vmatpush2.msra.mxu0 0.0
    %2753 = vmatprep.subr.mxu0 0.0
    %2754 = vmatpush2.msra.mxu0 0.0
    %2755 = vmatprep.subr.mxu0 0.0
    %2756 = vmatpush2.msra.mxu0 0.0
    %2757 = vmatprep.subr.mxu0 0.0
    %2758 = vmatpush2.msra.mxu0 0.0
    %2759 = vmatprep.subr.mxu0 0.0
    %2760 = vmatpush2.msra.mxu0 0.0
    %2761 = vmatprep.subr.mxu0 0.0
    %2762 = vmatpush2.msra.mxu0 0.0
    %2763 = vmatprep.subr.mxu0 0.0
    %2764 = vmatpush2.msra.mxu0 0.0
    %2765 = vmatprep.subr.mxu0 0.0
    %2766 = vmatpush2.msra.mxu0 0.0
    %2767 = vmatprep.subr.mxu0 0.0
    %2768 = vmatpush2.msra.mxu0 0.0
    %2769 = vmatprep.subr.mxu0 0.0
    %2770 = vmatpush2.msra.mxu0 0.0
    %2771 = vmatprep.subr.mxu0 0.0
    %2772 = vmatpush2.msra.mxu0 0.0
    %2773 = vmatprep.subr.mxu0 0.0
    %2774 = vmatpush2.msra.mxu0 0.0
    %2775 = vmatprep.subr.mxu0 0.0
    %2776 = vmatpush2.msra.mxu0 0.0
    %2777 = vmatprep.subr.mxu0 0.0
    %2778 = vmatpush2.msra.mxu0 0.0
    %2779 = vmatprep.subr.mxu0 0.0
    %2780 = vmatpush2.msra.mxu0 0.0
    %2781 = vmatprep.mubr.f32.mxu0 0.0
    %2782 = vmatmul.mubr.f32.gmra.mxu0 %v2709
    %v2783 = vpop.f32.mrf.mxu0
    %v2784 = vadd.f32 0.0, %v2783
    %v2785 = vpop.f32.mrf.mxu0
    %2786 = vmatprep.mubr.f32.mxu0 0.0
    %2787 = vmatmul.mubr.f32.gmra.mxu0 %v2712
    %v2788 = vpop.f32.mrf.mxu0
    %v2789 = vadd.f32 0.0, %v2788
    %v2790 = vpop.f32.mrf.mxu0
    %2791 = vmatprep.mubr.f32.mxu0 0.0
    %2792 = vmatmul.mubr.f32.gmra.mxu0 %v2715
    %v2793 = vpop.f32.mrf.mxu0
    %v2794 = vadd.f32 0.0, %v2793
    %v2795 = vpop.f32.mrf.mxu0
    %2796 = vdwg.mxu0
    %v2798 = vsel %vm43, %v1418, 0
    %v2801 = vsel %vm43, %v1419, 0
    %v2804 = vsel %vm43, %v1420, 0
    %2806 = vmatprep.subr.mxu0 0.0
    %2807 = vmatpush1.msra.mxu0 0.0
    %2808 = vmatprep.subr.mxu0 0.0
    %2809 = vmatpush1.msra.mxu0 0.0
    %2810 = vmatprep.subr.mxu0 0.0
    %2811 = vmatpush1.msra.mxu0 0.0
    %2812 = vmatprep.subr.mxu0 0.0
    %2813 = vmatpush1.msra.mxu0 0.0
    %2814 = vmatprep.subr.mxu0 0.0
    %2815 = vmatpush1.msra.mxu0 0.0
    %2816 = vmatprep.subr.mxu0 0.0
    %2817 = vmatpush1.msra.mxu0 0.0
    %2818 = vmatprep.subr.mxu0 0.0
    %2819 = vmatpush1.msra.mxu0 0.0
    %2820 = vmatprep.subr.mxu0 0.0
    %2821 = vmatpush1.msra.mxu0 0.0
    %2822 = vmatprep.subr.mxu0 0.0
    %2823 = vmatpush1.msra.mxu0 0.0
    %2824 = vmatprep.subr.mxu0 0.0
    %2825 = vmatpush1.msra.mxu0 0.0
    %2826 = vmatprep.subr.mxu0 0.0
    %2827 = vmatpush1.msra.mxu0 0.0
    %2828 = vmatprep.subr.mxu0 0.0
    %2829 = vmatpush1.msra.mxu0 0.0
    %2830 = vmatprep.subr.mxu0 0.0
    %2831 = vmatpush1.msra.mxu0 0.0
    %2832 = vmatprep.subr.mxu0 0.0
    %2833 = vmatpush1.msra.mxu0 %v1778
    %2834 = vmatprep.subr.mxu0 0.0
    %2835 = vmatpush1.msra.mxu0 %v1776
    %2836 = vmatprep.subr.mxu0 0.0
    %2837 = vmatpush1.msra.mxu0 %v1774
    %2838 = vmatprep.subr.mxu0 0.0
    %2839 = vmatpush2.msra.mxu0 0.0
    %2840 = vmatprep.subr.mxu0 0.0
    %2841 = vmatpush2.msra.mxu0 0.0
    %2842 = vmatprep.subr.mxu0 0.0
    %2843 = vmatpush2.msra.mxu0 0.0
    %2844 = vmatprep.subr.mxu0 0.0
    %2845 = vmatpush2.msra.mxu0 0.0
    %2846 = vmatprep.subr.mxu0 0.0
    %2847 = vmatpush2.msra.mxu0 0.0
    %2848 = vmatprep.subr.mxu0 0.0
    %2849 = vmatpush2.msra.mxu0 0.0
    %2850 = vmatprep.subr.mxu0 0.0
    %2851 = vmatpush2.msra.mxu0 0.0
    %2852 = vmatprep.subr.mxu0 0.0
    %2853 = vmatpush2.msra.mxu0 0.0
    %2854 = vmatprep.subr.mxu0 0.0
    %2855 = vmatpush2.msra.mxu0 0.0
    %2856 = vmatprep.subr.mxu0 0.0
    %2857 = vmatpush2.msra.mxu0 0.0
    %2858 = vmatprep.subr.mxu0 0.0
    %2859 = vmatpush2.msra.mxu0 0.0
    %2860 = vmatprep.subr.mxu0 0.0
    %2861 = vmatpush2.msra.mxu0 0.0
    %2862 = vmatprep.subr.mxu0 0.0
    %2863 = vmatpush2.msra.mxu0 0.0
    %2864 = vmatprep.subr.mxu0 0.0
    %2865 = vmatpush2.msra.mxu0 0.0
    %2866 = vmatprep.subr.mxu0 0.0
    %2867 = vmatpush2.msra.mxu0 0.0
    %2868 = vmatprep.subr.mxu0 0.0
    %2869 = vmatpush2.msra.mxu0 0.0
    %2870 = vmatprep.mubr.f32.mxu0 0.0
    %2871 = vmatmul.mubr.f32.gmra.mxu0 %v2798
    %v2872 = vpop.f32.mrf.mxu0
    %v2873 = vadd.f32 0.0, %v2872
    %v2874 = vpop.f32.mrf.mxu0
    %2875 = vmatprep.mubr.f32.mxu0 0.0
    %2876 = vmatmul.mubr.f32.gmra.mxu0 %v2801
    %v2877 = vpop.f32.mrf.mxu0
    %v2878 = vadd.f32 0.0, %v2877
    %v2879 = vpop.f32.mrf.mxu0
    %2880 = vmatprep.mubr.f32.mxu0 0.0
    %2881 = vmatmul.mubr.f32.gmra.mxu0 %v2804
    %v2882 = vpop.f32.mrf.mxu0
    %v2883 = vadd.f32 0.0, %v2882
    %v2884 = vpop.f32.mrf.mxu0
    %2885 = vdwg.mxu0
    %v2887 = vsel %vm43, %v1421, 0
    %v2890 = vsel %vm43, %v1422, 0
    %v2893 = vsel %vm43, %v1423, 0
    %2895 = vmatprep.subr.mxu0 0.0
    %2896 = vmatpush1.msra.mxu0 0.0
    %2897 = vmatprep.subr.mxu0 0.0
    %2898 = vmatpush1.msra.mxu0 0.0
    %2899 = vmatprep.subr.mxu0 0.0
    %2900 = vmatpush1.msra.mxu0 0.0
    %2901 = vmatprep.subr.mxu0 0.0
    %2902 = vmatpush1.msra.mxu0 0.0
    %2903 = vmatprep.subr.mxu0 0.0
    %2904 = vmatpush1.msra.mxu0 0.0
    %2905 = vmatprep.subr.mxu0 0.0
    %2906 = vmatpush1.msra.mxu0 0.0
    %2907 = vmatprep.subr.mxu0 0.0
    %2908 = vmatpush1.msra.mxu0 0.0
    %2909 = vmatprep.subr.mxu0 0.0
    %2910 = vmatpush1.msra.mxu0 0.0
    %2911 = vmatprep.subr.mxu0 0.0
    %2912 = vmatpush1.msra.mxu0 0.0
    %2913 = vmatprep.subr.mxu0 0.0
    %2914 = vmatpush1.msra.mxu0 0.0
    %2915 = vmatprep.subr.mxu0 0.0
    %2916 = vmatpush1.msra.mxu0 0.0
    %2917 = vmatprep.subr.mxu0 0.0
    %2918 = vmatpush1.msra.mxu0 0.0
    %2919 = vmatprep.subr.mxu0 0.0
    %2920 = vmatpush1.msra.mxu0 0.0
    %2921 = vmatprep.subr.mxu0 0.0
    %2922 = vmatpush1.msra.mxu0 %v1805
    %2923 = vmatprep.subr.mxu0 0.0
    %2924 = vmatpush1.msra.mxu0 %v1803
    %2925 = vmatprep.subr.mxu0 0.0
    %2926 = vmatpush1.msra.mxu0 %v1801
    %2927 = vmatprep.subr.mxu0 0.0
    %2928 = vmatpush2.msra.mxu0 0.0
    %2929 = vmatprep.subr.mxu0 0.0
    %2930 = vmatpush2.msra.mxu0 0.0
    %2931 = vmatprep.subr.mxu0 0.0
    %2932 = vmatpush2.msra.mxu0 0.0
    %2933 = vmatprep.subr.mxu0 0.0
    %2934 = vmatpush2.msra.mxu0 0.0
    %2935 = vmatprep.subr.mxu0 0.0
    %2936 = vmatpush2.msra.mxu0 0.0
    %2937 = vmatprep.subr.mxu0 0.0
    %2938 = vmatpush2.msra.mxu0 0.0
    %2939 = vmatprep.subr.mxu0 0.0
    %2940 = vmatpush2.msra.mxu0 0.0
    %2941 = vmatprep.subr.mxu0 0.0
    %2942 = vmatpush2.msra.mxu0 0.0
    %2943 = vmatprep.subr.mxu0 0.0
    %2944 = vmatpush2.msra.mxu0 0.0
    %2945 = vmatprep.subr.mxu0 0.0
    %2946 = vmatpush2.msra.mxu0 0.0
    %2947 = vmatprep.subr.mxu0 0.0
    %2948 = vmatpush2.msra.mxu0 0.0
    %2949 = vmatprep.subr.mxu0 0.0
    %2950 = vmatpush2.msra.mxu0 0.0
    %2951 = vmatprep.subr.mxu0 0.0
    %2952 = vmatpush2.msra.mxu0 0.0
    %2953 = vmatprep.subr.mxu0 0.0
    %2954 = vmatpush2.msra.mxu0 0.0
    %2955 = vmatprep.subr.mxu0 0.0
    %2956 = vmatpush2.msra.mxu0 0.0
    %2957 = vmatprep.subr.mxu0 0.0
    %2958 = vmatpush2.msra.mxu0 0.0
    %2959 = vmatprep.mubr.f32.mxu0 0.0
    %2960 = vmatmul.mubr.f32.gmra.mxu0 %v2887
    %v2961 = vpop.f32.mrf.mxu0
    %v2962 = vadd.f32 0.0, %v2961
    %v2963 = vpop.f32.mrf.mxu0
    %2964 = vmatprep.mubr.f32.mxu0 0.0
    %2965 = vmatmul.mubr.f32.gmra.mxu0 %v2890
    %v2966 = vpop.f32.mrf.mxu0
    %v2967 = vadd.f32 0.0, %v2966
    %v2968 = vpop.f32.mrf.mxu0
    %2969 = vmatprep.mubr.f32.mxu0 0.0
    %2970 = vmatmul.mubr.f32.gmra.mxu0 %v2893
    %v2971 = vpop.f32.mrf.mxu0
    %v2972 = vadd.f32 0.0, %v2971
    %v2973 = vpop.f32.mrf.mxu0
    %2974 = vdwg.mxu0
    %2978 = vrot.lane.b32.xlu0 %v2784, 8
    %v2979 = vpop.permute.xlu0 %2978
    %2980 = vrot.lane.b32.xlu0 %v2789, 8
    %v2981 = vpop.permute.xlu0 %2980
    %2982 = vrot.lane.b32.xlu0 %v2794, 8
    %v2983 = vpop.permute.xlu0 %2982
    %2990 = vrot.lane.b32.xlu0 %v2873, 16
    %v2991 = vpop.permute.xlu0 %2990
    %2992 = vrot.lane.b32.xlu0 %v2878, 16
    %v2993 = vpop.permute.xlu0 %2992
    %2994 = vrot.lane.b32.xlu0 %v2883, 16
    %v2995 = vpop.permute.xlu0 %2994
    %3002 = vrot.lane.b32.xlu0 %v2962, 24
    %v3003 = vpop.permute.xlu0 %3002
    %3004 = vrot.lane.b32.xlu0 %v2967, 24
    %v3005 = vpop.permute.xlu0 %3004
    %3006 = vrot.lane.b32.xlu0 %v2972, 24
    %v3007 = vpop.permute.xlu0 %3006
    %v3011 = vsel %vm2207, %v2695, %v2979
    %v3012 = vsel %vm2207, %v2700, %v2981
    %v3013 = vsel %vm2207, %v2705, %v2983
    %v3014 = vsel %vm2211, %v3011, %v2991
    %v3015 = vsel %vm2211, %v3012, %v2993
    %v3016 = vsel %vm2211, %v3013, %v2995
    %v3017 = vsel %vm43, %v3014, %v3003
    %v3018 = vsel %vm43, %v3015, %v3005
    %v3019 = vsel %vm43, %v3016, %v3007
    %v3020 = vld [vmem:[%s4] sm:$0xff]
    %v3021 = vld [vmem:[%s4 + $0x8] sm:$0xff]
    %v3022 = vld [vmem:[%s4 + $0x10] sm:$0xff]
    %v3023 = vld [vmem:[%s4 + $0x18] sm:$0xff]
    %v3024 = vlaneseq
    %v3025 = vshrl.u32 %v3024, 7
    %v3026 = vsub.s32 3, %v3025
    %v3027 = vrot.slane %v30, %v3026
    %v3029 = vsel %vm1435, %v2215, 0
    %v3032 = vsel %vm1435, %v2216, 0
    %v3035 = vsel %vm1435, %v2217, 0
    %v3038 = vsel %vm1435, %v2616, 0
    %v3041 = vsel %vm1435, %v2617, 0
    %v3044 = vsel %vm1435, %v2618, 0
    %v3047 = vsel %vm1435, %v3017, 0
    %v3050 = vsel %vm1435, %v3018, 0
    %v3053 = vsel %vm1435, %v3019, 0
    %3055 = vmatprep.subr.mxu0 0.0
    %3056 = vmatpush1.msra.mxu0 0.0
    %3057 = vmatprep.subr.mxu0 0.0
    %3058 = vmatpush1.msra.mxu0 0.0
    %3059 = vmatprep.subr.mxu0 0.0
    %3060 = vmatpush1.msra.mxu0 0.0
    %3061 = vmatprep.subr.mxu0 0.0
    %3062 = vmatpush1.msra.mxu0 0.0
    %3063 = vmatprep.subr.mxu0 0.0
    %3064 = vmatpush1.msra.mxu0 0.0
    %3065 = vmatprep.subr.mxu0 0.0
    %3066 = vmatpush1.msra.mxu0 0.0
    %3067 = vmatprep.subr.mxu0 0.0
    %3068 = vmatpush1.msra.mxu0 0.0
    %3069 = vmatprep.subr.mxu0 0.0
    %3070 = vmatpush1.msra.mxu0 0.0
    %3071 = vmatprep.subr.mxu0 0.0
    %3072 = vmatpush1.msra.mxu0 0.0
    %3073 = vmatprep.subr.mxu0 0.0
    %3074 = vmatpush1.msra.mxu0 0.0
    %3075 = vmatprep.subr.mxu0 0.0
    %3076 = vmatpush1.msra.mxu0 0.0
    %3077 = vmatprep.subr.mxu0 0.0
    %3078 = vmatpush1.msra.mxu0 0.0
    %3079 = vmatprep.subr.mxu0 0.0
    %3080 = vmatpush1.msra.mxu0 %v3023
    %3081 = vmatprep.subr.mxu0 0.0
    %3082 = vmatpush1.msra.mxu0 %v3022
    %3083 = vmatprep.subr.mxu0 0.0
    %3084 = vmatpush1.msra.mxu0 %v3021
    %3085 = vmatprep.subr.mxu0 0.0
    %3086 = vmatpush1.msra.mxu0 %v3020
    %3087 = vmatprep.subr.mxu0 0.0
    %3088 = vmatpush2.msra.mxu0 0.0
    %3089 = vmatprep.subr.mxu0 0.0
    %3090 = vmatpush2.msra.mxu0 0.0
    %3091 = vmatprep.subr.mxu0 0.0
    %3092 = vmatpush2.msra.mxu0 0.0
    %3093 = vmatprep.subr.mxu0 0.0
    %3094 = vmatpush2.msra.mxu0 0.0
    %3095 = vmatprep.subr.mxu0 0.0
    %3096 = vmatpush2.msra.mxu0 0.0
    %3097 = vmatprep.subr.mxu0 0.0
    %3098 = vmatpush2.msra.mxu0 0.0
    %3099 = vmatprep.subr.mxu0 0.0
    %3100 = vmatpush2.msra.mxu0 0.0
    %3101 = vmatprep.subr.mxu0 0.0
    %3102 = vmatpush2.msra.mxu0 0.0
    %3103 = vmatprep.subr.mxu0 0.0
    %3104 = vmatpush2.msra.mxu0 0.0
    %3105 = vmatprep.subr.mxu0 0.0
    %3106 = vmatpush2.msra.mxu0 0.0
    %3107 = vmatprep.subr.mxu0 0.0
    %3108 = vmatpush2.msra.mxu0 0.0
    %3109 = vmatprep.subr.mxu0 0.0
    %3110 = vmatpush2.msra.mxu0 0.0
    %3111 = vmatprep.subr.mxu0 0.0
    %3112 = vmatpush2.msra.mxu0 0.0
    %3113 = vmatprep.subr.mxu0 0.0
    %3114 = vmatpush2.msra.mxu0 0.0
    %3115 = vmatprep.subr.mxu0 0.0
    %3116 = vmatpush2.msra.mxu0 0.0
    %3117 = vmatprep.subr.mxu0 0.0
    %3118 = vmatpush2.msra.mxu0 0.0
    %3119 = vmatprep.mubr.f32.mxu0 0.0
    %3120 = vmatmul.mubr.f32.gmra.mxu0 %v3029
    %v3121 = vpop.f32.mrf.mxu0
    %v3122 = vadd.f32 %v3027, %v3121
    %v3123 = vpop.f32.mrf.mxu0
    %3124 = vmatprep.mubr.f32.mxu0 0.0
    %3125 = vmatmul.mubr.f32.gmra.mxu0 %v3032
    %v3126 = vpop.f32.mrf.mxu0
    %v3127 = vadd.f32 %v3027, %v3126
    %v3128 = vpop.f32.mrf.mxu0
    %3129 = vmatprep.mubr.f32.mxu0 0.0
    %3130 = vmatmul.mubr.f32.gmra.mxu0 %v3035
    %v3131 = vpop.f32.mrf.mxu0
    %v3132 = vadd.f32 %v3027, %v3131
    %v3133 = vpop.f32.mrf.mxu0
    %3134 = vmatprep.mubr.f32.mxu0 0.0
    %3135 = vmatmul.mubr.f32.gmra.mxu0 %v3038
    %v3136 = vpop.f32.mrf.mxu0
    %v3137 = vadd.f32 %v3027, %v3136
    %v3138 = vpop.f32.mrf.mxu0
    %3139 = vmatprep.mubr.f32.mxu0 0.0
    %3140 = vmatmul.mubr.f32.gmra.mxu0 %v3041
    %v3141 = vpop.f32.mrf.mxu0
    %v3142 = vadd.f32 %v3027, %v3141
    %v3143 = vpop.f32.mrf.mxu0
    %3144 = vmatprep.mubr.f32.mxu0 0.0
    %3145 = vmatmul.mubr.f32.gmra.mxu0 %v3044
    %v3146 = vpop.f32.mrf.mxu0
    %v3147 = vadd.f32 %v3027, %v3146
    %v3148 = vpop.f32.mrf.mxu0
    %3149 = vmatprep.mubr.f32.mxu0 0.0
    %3150 = vmatmul.mubr.f32.gmra.mxu0 %v3047
    %v3151 = vpop.f32.mrf.mxu0
    %v3152 = vadd.f32 %v3027, %v3151
    %v3153 = vpop.f32.mrf.mxu0
    %3154 = vmatprep.mubr.f32.mxu0 0.0
    %3155 = vmatmul.mubr.f32.gmra.mxu0 %v3050
    %v3156 = vpop.f32.mrf.mxu0
    %v3157 = vadd.f32 %v3027, %v3156
    %v3158 = vpop.f32.mrf.mxu0
    %3159 = vmatprep.mubr.f32.mxu0 0.0
    %3160 = vmatmul.mubr.f32.gmra.mxu0 %v3053
    %v3161 = vpop.f32.mrf.mxu0
    %v3162 = vadd.f32 %v3027, %v3161
    %v3163 = vpop.f32.mrf.mxu0
    %3164 = vdwg.mxu0
    %v3165 = vsel %vm1435, %v3122, 0.0
    %3166 = vadd.xlane.f32.xlu0 %v3165
    %v3167 = vpop.xlane.xlu0 %3166
    %v3168 = vsel %vm1435, %v3127, 0.0
    %3169 = vadd.xlane.f32.xlu0 %v3168
    %v3170 = vpop.xlane.xlu0 %3169
    %v3171 = vsel %vm1435, %v3132, 0.0
    %3172 = vadd.xlane.f32.xlu0 %v3171
    %v3173 = vpop.xlane.xlu0 %3172
    %v3174 = vsel %vm1435, %v3137, 0.0
    %3175 = vadd.xlane.f32.xlu0 %v3174
    %v3176 = vpop.xlane.xlu0 %3175
    %v3177 = vsel %vm1435, %v3142, 0.0
    %3178 = vadd.xlane.f32.xlu0 %v3177
    %v3179 = vpop.xlane.xlu0 %3178
    %v3180 = vsel %vm1435, %v3147, 0.0
    %3181 = vadd.xlane.f32.xlu0 %v3180
    %v3182 = vpop.xlane.xlu0 %3181
    %v3183 = vsel %vm1435, %v3152, 0.0
    %3184 = vadd.xlane.f32.xlu0 %v3183
    %v3185 = vpop.xlane.xlu0 %3184
    %v3186 = vsel %vm1435, %v3157, 0.0
    %3187 = vadd.xlane.f32.xlu0 %v3186
    %v3188 = vpop.xlane.xlu0 %3187
    %v3189 = vsel %vm1435, %v3162, 0.0
    %3190 = vadd.xlane.f32.xlu0 %v3189
    %v3191 = vpop.xlane.xlu0 %3190
    %v3192 = vmul.f32 %v3167, %v1463
    %v3193 = vmul.f32 %v3170, %v1463
    %v3194 = vmul.f32 %v3173, %v1463
    %v3195 = vmul.f32 %v3176, %v1463
    %v3196 = vmul.f32 %v3179, %v1463
    %v3197 = vmul.f32 %v3182, %v1463
    %v3198 = vmul.f32 %v3185, %v1463
    %v3199 = vmul.f32 %v3188, %v1463
    %v3200 = vmul.f32 %v3191, %v1463
    %v3201 = vsub.f32 %v3122, %v3192
    %v3202 = vsub.f32 %v3127, %v3193
    %v3203 = vsub.f32 %v3132, %v3194
    %v3204 = vsub.f32 %v3137, %v3195
    %v3205 = vsub.f32 %v3142, %v3196
    %v3206 = vsub.f32 %v3147, %v3197
    %v3207 = vsub.f32 %v3152, %v3198
    %v3208 = vsub.f32 %v3157, %v3199
    %v3209 = vsub.f32 %v3162, %v3200
    %v3210 = vmul.f32 %v3201, %v3201
    %v3211 = vmul.f32 %v3202, %v3202
    %v3212 = vmul.f32 %v3203, %v3203
    %v3213 = vmul.f32 %v3204, %v3204
    %v3214 = vmul.f32 %v3205, %v3205
    %v3215 = vmul.f32 %v3206, %v3206
    %v3216 = vmul.f32 %v3207, %v3207
    %v3217 = vmul.f32 %v3208, %v3208
    %v3218 = vmul.f32 %v3209, %v3209
    %v3219 = vsel %vm1435, %v3210, 0.0
    %3220 = vadd.xlane.f32.xlu0 %v3219
    %v3221 = vpop.xlane.xlu0 %3220
    %v3222 = vsel %vm1435, %v3211, 0.0
    %3223 = vadd.xlane.f32.xlu0 %v3222
    %v3224 = vpop.xlane.xlu0 %3223
    %v3225 = vsel %vm1435, %v3212, 0.0
    %3226 = vadd.xlane.f32.xlu0 %v3225
    %v3227 = vpop.xlane.xlu0 %3226
    %v3228 = vsel %vm1435, %v3213, 0.0
    %3229 = vadd.xlane.f32.xlu0 %v3228
    %v3230 = vpop.xlane.xlu0 %3229
    %v3231 = vsel %vm1435, %v3214, 0.0
    %3232 = vadd.xlane.f32.xlu0 %v3231
    %v3233 = vpop.xlane.xlu0 %3232
    %v3234 = vsel %vm1435, %v3215, 0.0
    %3235 = vadd.xlane.f32.xlu0 %v3234
    %v3236 = vpop.xlane.xlu0 %3235
    %v3237 = vsel %vm1435, %v3216, 0.0
    %3238 = vadd.xlane.f32.xlu0 %v3237
    %v3239 = vpop.xlane.xlu0 %3238
    %v3240 = vsel %vm1435, %v3217, 0.0
    %3241 = vadd.xlane.f32.xlu0 %v3240
    %v3242 = vpop.xlane.xlu0 %3241
    %v3243 = vsel %vm1435, %v3218, 0.0
    %3244 = vadd.xlane.f32.xlu0 %v3243
    %v3245 = vpop.xlane.xlu0 %3244
    %v3246 = vmul.f32 %v3221, %v1463
    %v3247 = vmul.f32 %v3224, %v1463
    %v3248 = vmul.f32 %v3227, %v1463
    %v3249 = vmul.f32 %v3230, %v1463
    %v3250 = vmul.f32 %v3233, %v1463
    %v3251 = vmul.f32 %v3236, %v1463
    %v3252 = vmul.f32 %v3239, %v1463
    %v3253 = vmul.f32 %v3242, %v1463
    %v3254 = vmul.f32 %v3245, %v1463
    %v3255 = vadd.f32 %v3246, 1e-05
    %v3256 = vadd.f32 %v3247, 1e-05
    %v3257 = vadd.f32 %v3248, 1e-05
    %v3258 = vadd.f32 %v3249, 1e-05
    %v3259 = vadd.f32 %v3250, 1e-05
    %v3260 = vadd.f32 %v3251, 1e-05
    %v3261 = vadd.f32 %v3252, 1e-05
    %v3262 = vadd.f32 %v3253, 1e-05
    %v3263 = vadd.f32 %v3254, 1e-05
    %v3264 = vrsqrt.pop %v3255
    %v3265 = vrsqrt.pop %v3256
    %v3266 = vrsqrt.pop %v3257
    %v3267 = vrsqrt.pop %v3258
    %v3268 = vrsqrt.pop %v3259
    %v3269 = vrsqrt.pop %v3260
    %v3270 = vrsqrt.pop %v3261
    %v3271 = vrsqrt.pop %v3262
    %v3272 = vrsqrt.pop %v3263
    %v3273 = vmul.f32 %v3201, %v3264
    %v3274 = vmul.f32 %v3202, %v3265
    %v3275 = vmul.f32 %v3203, %v3266
    %v3276 = vmul.f32 %v3204, %v3267
    %v3277 = vmul.f32 %v3205, %v3268
    %v3278 = vmul.f32 %v3206, %v3269
    %v3279 = vmul.f32 %v3207, %v3270
    %v3280 = vmul.f32 %v3208, %v3271
    %v3281 = vmul.f32 %v3209, %v3272
    %v3282 = vlaneseq
    %v3283 = vshrl.u32 %v3282, 7
    %v3284 = vsub.s32 4, %v3283
    %v3285 = vrot.slane %v30, %v3284
    %v3286 = vmul.f32 %v3273, %v3285
    %v3287 = vmul.f32 %v3274, %v3285
    %v3288 = vmul.f32 %v3275, %v3285
    %v3289 = vmul.f32 %v3276, %v3285
    %v3290 = vmul.f32 %v3277, %v3285
    %v3291 = vmul.f32 %v3278, %v3285
    %v3292 = vmul.f32 %v3279, %v3285
    %v3293 = vmul.f32 %v3280, %v3285
    %v3294 = vmul.f32 %v3281, %v3285
    %v3295 = vlaneseq
    %v3296 = vshrl.u32 %v3295, 7
    %v3297 = vsub.s32 5, %v3296
    %v3298 = vrot.slane %v30, %v3297
    %v3299 = vadd.f32 %v3286, %v3298
    %v3300 = vadd.f32 %v3287, %v3298
    %v3301 = vadd.f32 %v3288, %v3298
    %v3302 = vadd.f32 %v3289, %v3298
    %v3303 = vadd.f32 %v3290, %v3298
    %v3304 = vadd.f32 %v3291, %v3298
    %v3305 = vadd.f32 %v3292, %v3298
    %v3306 = vadd.f32 %v3293, %v3298
    %v3307 = vadd.f32 %v3294, %v3298
    %v3308 = vld [vmem:[%s5] sm:$0xff]
    %v3309 = vld [vmem:[%s5 + $0x8] sm:$0xff]
    %v3310 = vld [vmem:[%s5 + $0x10] sm:$0xff]
    %v3311 = vld [vmem:[%s5 + $0x18] sm:$0xff]
    %v3313 = vsel %vm1435, %v3299, 0
    %v3316 = vsel %vm1435, %v3300, 0
    %v3319 = vsel %vm1435, %v3301, 0
    %v3322 = vsel %vm1435, %v3302, 0
    %v3325 = vsel %vm1435, %v3303, 0
    %v3328 = vsel %vm1435, %v3304, 0
    %v3331 = vsel %vm1435, %v3305, 0
    %v3334 = vsel %vm1435, %v3306, 0
    %v3337 = vsel %vm1435, %v3307, 0
    %3339 = vmatprep.subr.mxu0 0.0
    %3340 = vmatpush1.msra.mxu0 0.0
    %3341 = vmatprep.subr.mxu0 0.0
    %3342 = vmatpush1.msra.mxu0 0.0
    %3343 = vmatprep.subr.mxu0 0.0
    %3344 = vmatpush1.msra.mxu0 0.0
    %3345 = vmatprep.subr.mxu0 0.0
    %3346 = vmatpush1.msra.mxu0 0.0
    %3347 = vmatprep.subr.mxu0 0.0
    %3348 = vmatpush1.msra.mxu0 0.0
    %3349 = vmatprep.subr.mxu0 0.0
    %3350 = vmatpush1.msra.mxu0 0.0
    %3351 = vmatprep.subr.mxu0 0.0
    %3352 = vmatpush1.msra.mxu0 0.0
    %3353 = vmatprep.subr.mxu0 0.0
    %3354 = vmatpush1.msra.mxu0 0.0
    %3355 = vmatprep.subr.mxu0 0.0
    %3356 = vmatpush1.msra.mxu0 0.0
    %3357 = vmatprep.subr.mxu0 0.0
    %3358 = vmatpush1.msra.mxu0 0.0
    %3359 = vmatprep.subr.mxu0 0.0
    %3360 = vmatpush1.msra.mxu0 0.0
    %3361 = vmatprep.subr.mxu0 0.0
    %3362 = vmatpush1.msra.mxu0 0.0
    %3363 = vmatprep.subr.mxu0 0.0
    %3364 = vmatpush1.msra.mxu0 %v3311
    %3365 = vmatprep.subr.mxu0 0.0
    %3366 = vmatpush1.msra.mxu0 %v3310
    %3367 = vmatprep.subr.mxu0 0.0
    %3368 = vmatpush1.msra.mxu0 %v3309
    %3369 = vmatprep.subr.mxu0 0.0
    %3370 = vmatpush1.msra.mxu0 %v3308
    %3371 = vmatprep.subr.mxu0 0.0
    %3372 = vmatpush2.msra.mxu0 0.0
    %3373 = vmatprep.subr.mxu0 0.0
    %3374 = vmatpush2.msra.mxu0 0.0
    %3375 = vmatprep.subr.mxu0 0.0
    %3376 = vmatpush2.msra.mxu0 0.0
    %3377 = vmatprep.subr.mxu0 0.0
    %3378 = vmatpush2.msra.mxu0 0.0
    %3379 = vmatprep.subr.mxu0 0.0
    %3380 = vmatpush2.msra.mxu0 0.0
    %3381 = vmatprep.subr.mxu0 0.0
    %3382 = vmatpush2.msra.mxu0 0.0
    %3383 = vmatprep.subr.mxu0 0.0
    %3384 = vmatpush2.msra.mxu0 0.0
    %3385 = vmatprep.subr.mxu0 0.0
    %3386 = vmatpush2.msra.mxu0 0.0
    %3387 = vmatprep.subr.mxu0 0.0
    %3388 = vmatpush2.msra.mxu0 0.0
    %3389 = vmatprep.subr.mxu0 0.0
    %3390 = vmatpush2.msra.mxu0 0.0
    %3391 = vmatprep.subr.mxu0 0.0
    %3392 = vmatpush2.msra.mxu0 0.0
    %3393 = vmatprep.subr.mxu0 0.0
    %3394 = vmatpush2.msra.mxu0 0.0
    %3395 = vmatprep.subr.mxu0 0.0
    %3396 = vmatpush2.msra.mxu0 0.0
    %3397 = vmatprep.subr.mxu0 0.0
    %3398 = vmatpush2.msra.mxu0 0.0
    %3399 = vmatprep.subr.mxu0 0.0
    %3400 = vmatpush2.msra.mxu0 0.0
    %3401 = vmatprep.subr.mxu0 0.0
    %3402 = vmatpush2.msra.mxu0 0.0
    %3403 = vmatprep.mubr.f32.mxu0 0.0
    %3404 = vmatmul.mubr.f32.gmra.mxu0 %v3313
    %v3405 = vpop.f32.mrf.mxu0
    %v3406 = vadd.f32 0.0, %v3405
    %v3407 = vpop.f32.mrf.mxu0
    %3408 = vmatprep.mubr.f32.mxu0 0.0
    %3409 = vmatmul.mubr.f32.gmra.mxu0 %v3316
    %v3410 = vpop.f32.mrf.mxu0
    %v3411 = vadd.f32 0.0, %v3410
    %v3412 = vpop.f32.mrf.mxu0
    %3413 = vmatprep.mubr.f32.mxu0 0.0
    %3414 = vmatmul.mubr.f32.gmra.mxu0 %v3319
    %v3415 = vpop.f32.mrf.mxu0
    %v3416 = vadd.f32 0.0, %v3415
    %v3417 = vpop.f32.mrf.mxu0
    %3418 = vmatprep.mubr.f32.mxu0 0.0
    %3419 = vmatmul.mubr.f32.gmra.mxu0 %v3322
    %v3420 = vpop.f32.mrf.mxu0
    %v3421 = vadd.f32 0.0, %v3420
    %v3422 = vpop.f32.mrf.mxu0
    %3423 = vmatprep.mubr.f32.mxu0 0.0
    %3424 = vmatmul.mubr.f32.gmra.mxu0 %v3325
    %v3425 = vpop.f32.mrf.mxu0
    %v3426 = vadd.f32 0.0, %v3425
    %v3427 = vpop.f32.mrf.mxu0
    %3428 = vmatprep.mubr.f32.mxu0 0.0
    %3429 = vmatmul.mubr.f32.gmra.mxu0 %v3328
    %v3430 = vpop.f32.mrf.mxu0
    %v3431 = vadd.f32 0.0, %v3430
    %v3432 = vpop.f32.mrf.mxu0
    %3433 = vmatprep.mubr.f32.mxu0 0.0
    %3434 = vmatmul.mubr.f32.gmra.mxu0 %v3331
    %v3435 = vpop.f32.mrf.mxu0
    %v3436 = vadd.f32 0.0, %v3435
    %v3437 = vpop.f32.mrf.mxu0
    %3438 = vmatprep.mubr.f32.mxu0 0.0
    %3439 = vmatmul.mubr.f32.gmra.mxu0 %v3334
    %v3440 = vpop.f32.mrf.mxu0
    %v3441 = vadd.f32 0.0, %v3440
    %v3442 = vpop.f32.mrf.mxu0
    %3443 = vmatprep.mubr.f32.mxu0 0.0
    %3444 = vmatmul.mubr.f32.gmra.mxu0 %v3337
    %v3445 = vpop.f32.mrf.mxu0
    %v3446 = vadd.f32 0.0, %v3445
    %v3447 = vpop.f32.mrf.mxu0
    %3448 = vdwg.mxu0
    %3449 = vst.msk [vmem:[%s7] sm:$0xff] %vm2211, %v3406
    %3450 = vst.msk [vmem:[%s7 + $0x8] sm:$0xff] %vm2211, %v3411
    %3451 = vst.msk [vmem:[%s7 + $0x10] sm:$0xff] %vm2211, %v3416
    %3452 = vst.msk [vmem:[%s7 + $0x18] sm:$0xff] %vm2211, %v3421
    %3453 = vst.msk [vmem:[%s7 + $0x20] sm:$0xff] %vm2211, %v3426
    %3454 = vst.msk [vmem:[%s7 + $0x28] sm:$0xff] %vm2211, %v3431
    %3455 = vst.msk [vmem:[%s7 + $0x30] sm:$0xff] %vm2211, %v3436
    %3456 = vst.msk [vmem:[%s7 + $0x38] sm:$0xff] %vm2211, %v3441
    %3457 = vst.msk [vmem:[%s7 + $0x40] sm:$0xff] %vm2211, %v3446
    %v3458 = vmul.f32 %v3406, %v3406
    %v3459 = vmul.f32 %v3411, %v3411
    %v3460 = vmul.f32 %v3416, %v3416
    %v3461 = vmul.f32 %v3421, %v3421
    %v3462 = vmul.f32 %v3426, %v3426
    %v3463 = vmul.f32 %v3431, %v3431
    %v3464 = vmul.f32 %v3436, %v3436
    %v3465 = vmul.f32 %v3441, %v3441
    %v3466 = vmul.f32 %v3446, %v3446
    %v3467 = vsel %vm2211, %v3458, 0.0
    %3468 = vadd.xlane.f32.xlu0 %v3467
    %v3469 = vpop.xlane.xlu0 %3468
    %v3470 = vsel %vm2211, %v3459, 0.0
    %3471 = vadd.xlane.f32.xlu0 %v3470
    %v3472 = vpop.xlane.xlu0 %3471
    %v3473 = vsel %vm2211, %v3460, 0.0
    %3474 = vadd.xlane.f32.xlu0 %v3473
    %v3475 = vpop.xlane.xlu0 %3474
    %v3476 = vsel %vm2211, %v3461, 0.0
    %3477 = vadd.xlane.f32.xlu0 %v3476
    %v3478 = vpop.xlane.xlu0 %3477
    %v3479 = vsel %vm2211, %v3462, 0.0
    %3480 = vadd.xlane.f32.xlu0 %v3479
    %v3481 = vpop.xlane.xlu0 %3480
    %v3482 = vsel %vm2211, %v3463, 0.0
    %3483 = vadd.xlane.f32.xlu0 %v3482
    %v3484 = vpop.xlane.xlu0 %3483
    %v3485 = vsel %vm2211, %v3464, 0.0
    %3486 = vadd.xlane.f32.xlu0 %v3485
    %v3487 = vpop.xlane.xlu0 %3486
    %v3488 = vsel %vm2211, %v3465, 0.0
    %3489 = vadd.xlane.f32.xlu0 %v3488
    %v3490 = vpop.xlane.xlu0 %3489
    %v3491 = vsel %vm2211, %v3466, 0.0
    %3492 = vadd.xlane.f32.xlu0 %v3491
    %v3493 = vpop.xlane.xlu0 %3492
    %v3494 = vmax.f32 %v3469, 1e-12
    %v3495 = vmax.f32 %v3472, 1e-12
    %v3496 = vmax.f32 %v3475, 1e-12
    %v3497 = vmax.f32 %v3478, 1e-12
    %v3498 = vmax.f32 %v3481, 1e-12
    %v3499 = vmax.f32 %v3484, 1e-12
    %v3500 = vmax.f32 %v3487, 1e-12
    %v3501 = vmax.f32 %v3490, 1e-12
    %v3502 = vmax.f32 %v3493, 1e-12
    %v3503 = vrsqrt.pop %v3494
    %v3504 = vrsqrt.pop %v3495
    %v3505 = vrsqrt.pop %v3496
    %v3506 = vrsqrt.pop %v3497
    %v3507 = vrsqrt.pop %v3498
    %v3508 = vrsqrt.pop %v3499
    %v3509 = vrsqrt.pop %v3500
    %v3510 = vrsqrt.pop %v3501
    %v3511 = vrsqrt.pop %v3502
    %v3512 = vmul.f32 %v3406, %v3503
    %v3513 = vmul.f32 %v3411, %v3504
    %v3514 = vmul.f32 %v3416, %v3505
    %v3515 = vmul.f32 %v3421, %v3506
    %v3516 = vmul.f32 %v3426, %v3507
    %v3517 = vmul.f32 %v3431, %v3508
    %v3518 = vmul.f32 %v3436, %v3509
    %v3519 = vmul.f32 %v3441, %v3510
    %v3520 = vmul.f32 %v3446, %v3511
    %v3521 = vld [vmem:[%s6] sm:$0xff]
    %v3522 = vld [vmem:[%s6 + $0x8] sm:$0xff]
    %v3524 = vsel %vm2211, %v3512, 0
    %v3527 = vsel %vm2211, %v3513, 0
    %v3530 = vsel %vm2211, %v3514, 0
    %v3533 = vsel %vm2211, %v3515, 0
    %v3536 = vsel %vm2211, %v3516, 0
    %v3539 = vsel %vm2211, %v3517, 0
    %v3542 = vsel %vm2211, %v3518, 0
    %v3545 = vsel %vm2211, %v3519, 0
    %v3548 = vsel %vm2211, %v3520, 0
    %3550 = vmatprep.subr.mxu0 0.0
    %3551 = vmatpush1.msra.mxu0 0.0
    %3552 = vmatprep.subr.mxu0 0.0
    %3553 = vmatpush1.msra.mxu0 0.0
    %3554 = vmatprep.subr.mxu0 0.0
    %3555 = vmatpush1.msra.mxu0 0.0
    %3556 = vmatprep.subr.mxu0 0.0
    %3557 = vmatpush1.msra.mxu0 0.0
    %3558 = vmatprep.subr.mxu0 0.0
    %3559 = vmatpush1.msra.mxu0 0.0
    %3560 = vmatprep.subr.mxu0 0.0
    %3561 = vmatpush1.msra.mxu0 0.0
    %3562 = vmatprep.subr.mxu0 0.0
    %3563 = vmatpush1.msra.mxu0 0.0
    %3564 = vmatprep.subr.mxu0 0.0
    %3565 = vmatpush1.msra.mxu0 0.0
    %3566 = vmatprep.subr.mxu0 0.0
    %3567 = vmatpush1.msra.mxu0 0.0
    %3568 = vmatprep.subr.mxu0 0.0
    %3569 = vmatpush1.msra.mxu0 0.0
    %3570 = vmatprep.subr.mxu0 0.0
    %3571 = vmatpush1.msra.mxu0 0.0
    %3572 = vmatprep.subr.mxu0 0.0
    %3573 = vmatpush1.msra.mxu0 0.0
    %3574 = vmatprep.subr.mxu0 0.0
    %3575 = vmatpush1.msra.mxu0 0.0
    %3576 = vmatprep.subr.mxu0 0.0
    %3577 = vmatpush1.msra.mxu0 0.0
    %3578 = vmatprep.subr.mxu0 0.0
    %3579 = vmatpush1.msra.mxu0 %v3522
    %3580 = vmatprep.subr.mxu0 0.0
    %3581 = vmatpush1.msra.mxu0 %v3521
    %3582 = vmatprep.subr.mxu0 0.0
    %3583 = vmatpush2.msra.mxu0 0.0
    %3584 = vmatprep.subr.mxu0 0.0
    %3585 = vmatpush2.msra.mxu0 0.0
    %3586 = vmatprep.subr.mxu0 0.0
    %3587 = vmatpush2.msra.mxu0 0.0
    %3588 = vmatprep.subr.mxu0 0.0
    %3589 = vmatpush2.msra.mxu0 0.0
    %3590 = vmatprep.subr.mxu0 0.0
    %3591 = vmatpush2.msra.mxu0 0.0
    %3592 = vmatprep.subr.mxu0 0.0
    %3593 = vmatpush2.msra.mxu0 0.0
    %3594 = vmatprep.subr.mxu0 0.0
    %3595 = vmatpush2.msra.mxu0 0.0
    %3596 = vmatprep.subr.mxu0 0.0
    %3597 = vmatpush2.msra.mxu0 0.0
    %3598 = vmatprep.subr.mxu0 0.0
    %3599 = vmatpush2.msra.mxu0 0.0
    %3600 = vmatprep.subr.mxu0 0.0
    %3601 = vmatpush2.msra.mxu0 0.0
    %3602 = vmatprep.subr.mxu0 0.0
    %3603 = vmatpush2.msra.mxu0 0.0
    %3604 = vmatprep.subr.mxu0 0.0
    %3605 = vmatpush2.msra.mxu0 0.0
    %3606 = vmatprep.subr.mxu0 0.0
    %3607 = vmatpush2.msra.mxu0 0.0
    %3608 = vmatprep.subr.mxu0 0.0
    %3609 = vmatpush2.msra.mxu0 0.0
    %3610 = vmatprep.subr.mxu0 0.0
    %3611 = vmatpush2.msra.mxu0 0.0
    %3612 = vmatprep.subr.mxu0 0.0
    %3613 = vmatpush2.msra.mxu0 0.0
    %3614 = vmatprep.mubr.f32.mxu0 0.0
    %3615 = vmatmul.mubr.f32.gmra.mxu0 %v3524
    %v3616 = vpop.f32.mrf.mxu0
    %v3617 = vadd.f32 0.0, %v3616
    %v3618 = vpop.f32.mrf.mxu0
    %3619 = vmatprep.mubr.f32.mxu0 0.0
    %3620 = vmatmul.mubr.f32.gmra.mxu0 %v3527
    %v3621 = vpop.f32.mrf.mxu0
    %v3622 = vadd.f32 0.0, %v3621
    %v3623 = vpop.f32.mrf.mxu0
    %3624 = vmatprep.mubr.f32.mxu0 0.0
    %3625 = vmatmul.mubr.f32.gmra.mxu0 %v3530
    %v3626 = vpop.f32.mrf.mxu0
    %v3627 = vadd.f32 0.0, %v3626
    %v3628 = vpop.f32.mrf.mxu0
    %3629 = vmatprep.mubr.f32.mxu0 0.0
    %3630 = vmatmul.mubr.f32.gmra.mxu0 %v3533
    %v3631 = vpop.f32.mrf.mxu0
    %v3632 = vadd.f32 0.0, %v3631
    %v3633 = vpop.f32.mrf.mxu0
    %3634 = vmatprep.mubr.f32.mxu0 0.0
    %3635 = vmatmul.mubr.f32.gmra.mxu0 %v3536
    %v3636 = vpop.f32.mrf.mxu0
    %v3637 = vadd.f32 0.0, %v3636
    %v3638 = vpop.f32.mrf.mxu0
    %3639 = vmatprep.mubr.f32.mxu0 0.0
    %3640 = vmatmul.mubr.f32.gmra.mxu0 %v3539
    %v3641 = vpop.f32.mrf.mxu0
    %v3642 = vadd.f32 0.0, %v3641
    %v3643 = vpop.f32.mrf.mxu0
    %3644 = vmatprep.mubr.f32.mxu0 0.0
    %3645 = vmatmul.mubr.f32.gmra.mxu0 %v3542
    %v3646 = vpop.f32.mrf.mxu0
    %v3647 = vadd.f32 0.0, %v3646
    %v3648 = vpop.f32.mrf.mxu0
    %3649 = vmatprep.mubr.f32.mxu0 0.0
    %3650 = vmatmul.mubr.f32.gmra.mxu0 %v3545
    %v3651 = vpop.f32.mrf.mxu0
    %v3652 = vadd.f32 0.0, %v3651
    %v3653 = vpop.f32.mrf.mxu0
    %3654 = vmatprep.mubr.f32.mxu0 0.0
    %3655 = vmatmul.mubr.f32.gmra.mxu0 %v3548
    %v3656 = vpop.f32.mrf.mxu0
    %v3657 = vadd.f32 0.0, %v3656
    %v3658 = vpop.f32.mrf.mxu0
    %3659 = vdwg.mxu0
    %v3660 = vmul.f32 %v3617, 100.0
    %v3661 = vmul.f32 %v3622, 100.0
    %v3662 = vmul.f32 %v3627, 100.0
    %v3663 = vmul.f32 %v3632, 100.0
    %v3664 = vmul.f32 %v3637, 100.0
    %v3665 = vmul.f32 %v3642, 100.0
    %v3666 = vmul.f32 %v3647, 100.0
    %v3667 = vmul.f32 %v3652, 100.0
    %v3668 = vmul.f32 %v3657, 100.0
    %vm3669 = vcmask 48128
    %v3670 = vsel %vm3669, %v3660, -inf
    %3671 = vmax.xlane.f32.xlu0 %v3670
    %v3672 = vpop.xlane.xlu0 %3671
    %v3673 = vsel %vm3669, %v3661, -inf
    %3674 = vmax.xlane.f32.xlu0 %v3673
    %v3675 = vpop.xlane.xlu0 %3674
    %v3676 = vsel %vm3669, %v3662, -inf
    %3677 = vmax.xlane.f32.xlu0 %v3676
    %v3678 = vpop.xlane.xlu0 %3677
    %v3679 = vsel %vm3669, %v3663, -inf
    %3680 = vmax.xlane.f32.xlu0 %v3679
    %v3681 = vpop.xlane.xlu0 %3680
    %v3682 = vsel %vm3669, %v3664, -inf
    %3683 = vmax.xlane.f32.xlu0 %v3682
    %v3684 = vpop.xlane.xlu0 %3683
    %v3685 = vsel %vm3669, %v3665, -inf
    %3686 = vmax.xlane.f32.xlu0 %v3685
    %v3687 = vpop.xlane.xlu0 %3686
    %v3688 = vsel %vm3669, %v3666, -inf
    %3689 = vmax.xlane.f32.xlu0 %v3688
    %v3690 = vpop.xlane.xlu0 %3689
    %v3691 = vsel %vm3669, %v3667, -inf
    %3692 = vmax.xlane.f32.xlu0 %v3691
    %v3693 = vpop.xlane.xlu0 %3692
    %v3694 = vsel %vm3669, %v3668, -inf
    %3695 = vmax.xlane.f32.xlu0 %v3694
    %v3696 = vpop.xlane.xlu0 %3695
    %v3697 = vsub.f32 %v3660, %v3672
    %v3698 = vsub.f32 %v3661, %v3675
    %v3699 = vsub.f32 %v3662, %v3678
    %v3700 = vsub.f32 %v3663, %v3681
    %v3701 = vsub.f32 %v3664, %v3684
    %v3702 = vsub.f32 %v3665, %v3687
    %v3703 = vsub.f32 %v3666, %v3690
    %v3704 = vsub.f32 %v3667, %v3693
    %v3705 = vsub.f32 %v3668, %v3696
    %v3706 = vmul.f32 %v3697, 1.442695
    %v3707 = vpow.pop %v3706
    %v3708 = vmul.f32 %v3698, 1.442695
    %v3709 = vpow.pop %v3708
    %v3710 = vmul.f32 %v3699, 1.442695
    %v3711 = vpow.pop %v3710
    %v3712 = vmul.f32 %v3700, 1.442695
    %v3713 = vpow.pop %v3712
    %v3714 = vmul.f32 %v3701, 1.442695
    %v3715 = vpow.pop %v3714
    %v3716 = vmul.f32 %v3702, 1.442695
    %v3717 = vpow.pop %v3716
    %v3718 = vmul.f32 %v3703, 1.442695
    %v3719 = vpow.pop %v3718
    %v3720 = vmul.f32 %v3704, 1.442695
    %v3721 = vpow.pop %v3720
    %v3722 = vmul.f32 %v3705, 1.442695
    %v3723 = vpow.pop %v3722
    %v3724 = vsel %vm3669, %v3707, 0.0
    %3725 = vadd.xlane.f32.xlu0 %v3724
    %v3726 = vpop.xlane.xlu0 %3725
    %v3727 = vsel %vm3669, %v3709, 0.0
    %3728 = vadd.xlane.f32.xlu0 %v3727
    %v3729 = vpop.xlane.xlu0 %3728
    %v3730 = vsel %vm3669, %v3711, 0.0
    %3731 = vadd.xlane.f32.xlu0 %v3730
    %v3732 = vpop.xlane.xlu0 %3731
    %v3733 = vsel %vm3669, %v3713, 0.0
    %3734 = vadd.xlane.f32.xlu0 %v3733
    %v3735 = vpop.xlane.xlu0 %3734
    %v3736 = vsel %vm3669, %v3715, 0.0
    %3737 = vadd.xlane.f32.xlu0 %v3736
    %v3738 = vpop.xlane.xlu0 %3737
    %v3739 = vsel %vm3669, %v3717, 0.0
    %3740 = vadd.xlane.f32.xlu0 %v3739
    %v3741 = vpop.xlane.xlu0 %3740
    %v3742 = vsel %vm3669, %v3719, 0.0
    %3743 = vadd.xlane.f32.xlu0 %v3742
    %v3744 = vpop.xlane.xlu0 %3743
    %v3745 = vsel %vm3669, %v3721, 0.0
    %3746 = vadd.xlane.f32.xlu0 %v3745
    %v3747 = vpop.xlane.xlu0 %3746
    %v3748 = vsel %vm3669, %v3723, 0.0
    %3749 = vadd.xlane.f32.xlu0 %v3748
    %v3750 = vpop.xlane.xlu0 %3749
    %v3751 = vrcp.pop %v3726
    %v3752 = vrcp.pop %v3729
    %v3753 = vrcp.pop %v3732
    %v3754 = vrcp.pop %v3735
    %v3755 = vrcp.pop %v3738
    %v3756 = vrcp.pop %v3741
    %v3757 = vrcp.pop %v3744
    %v3758 = vrcp.pop %v3747
    %v3759 = vrcp.pop %v3750
    %v3760 = vmul.f32 %v3707, %v3751
    %v3761 = vmul.f32 %v3709, %v3752
    %v3762 = vmul.f32 %v3711, %v3753
    %v3763 = vmul.f32 %v3713, %v3754
    %v3764 = vmul.f32 %v3715, %v3755
    %v3765 = vmul.f32 %v3717, %v3756
    %v3766 = vmul.f32 %v3719, %v3757
    %v3767 = vmul.f32 %v3721, %v3758
    %v3768 = vmul.f32 %v3723, %v3759
    %vm3769 = vcmask 23553
    %v3770 = vsel %vm3769, %v3766, -inf
    %vm3771 = vcmask 23552
    %v3772 = vsel %vm3771, %v3767, -inf
    %vm3773 = vcmask 16384
    %v3774 = vsel %vm3773, %v3768, -inf
    %v3775 = vmax.f32 %v3770, %v3772
    %v3776 = vmax.f32 %v3775, %v3774
    %v3777 = vrot.slane %v3776, 4
    %v3778 = vmax.f32 %v3776, %v3777
    %v3779 = vrot.slane %v3778, 2
    %v3780 = vmax.f32 %v3778, %v3779
    %v3781 = vrot.slane %v3780, 1
    %v3782 = vmax.f32 %v3780, %v3781
    %v3783 = vmul.f32 %v3782, 0.2
    %vm3784 = vcmp.lt.f32.partialorder %v3766, %v3783
    %vm3785 = vcmp.lt.f32.partialorder %v3767, %v3783
    %vm3786 = vcmp.lt.f32.partialorder %v3768, %v3783
    %v3787 = vsel %vm3784, 0.0, %v3766
    %v3788 = vsel %vm3785, 0.0, %v3767
    %v3789 = vsel %vm3786, 0.0, %v3768
    %v3790 = vadd.f32 %v3760, %v3763
    %v3791 = vadd.f32 %v3761, %v3764
    %v3792 = vadd.f32 %v3762, %v3765
    %v3793 = vmul.f32 %v3790, 0.5
    %v3794 = vmul.f32 %v3791, 0.5
    %v3795 = vmul.f32 %v3792, 0.5
    %v3796 = vsel %vm43, %v1412, 0.0
    %v3797 = vsel %vm43, %v1415, 0.0
    %v3798 = vadd.f32 %v3796, %v3797
    %v3799 = vsel %vm43, %v1418, 0.0
    %v3800 = vadd.f32 %v3798, %v3799
    %v3801 = vsel %vm43, %v1421, 0.0
    %v3802 = vadd.f32 %v3800, %v3801
    %v3803 = vsel %vm43, %v1413, 0.0
    %v3804 = vsel %vm43, %v1416, 0.0
    %v3805 = vadd.f32 %v3803, %v3804
    %v3806 = vsel %vm43, %v1419, 0.0
    %v3807 = vadd.f32 %v3805, %v3806
    %v3808 = vsel %vm43, %v1422, 0.0
    %v3809 = vadd.f32 %v3807, %v3808
    %v3810 = vsel %vm43, %v1414, 0.0
    %v3811 = vsel %vm43, %v1417, 0.0
    %v3812 = vadd.f32 %v3810, %v3811
    %v3813 = vsel %vm43, %v1420, 0.0
    %v3814 = vadd.f32 %v3812, %v3813
    %v3815 = vsel %vm43, %v1423, 0.0
    %v3816 = vadd.f32 %v3814, %v3815
    %v3817 = vrcp.pop 4.0
    %v3818 = vmul.f32 %v3802, %v3817
    %v3819 = vmul.f32 %v3809, %v3817
    %v3820 = vmul.f32 %v3816, %v3817
    %3824 = vrot.lane.b32.xlu0 %v3818, 127
    %v3825 = vpop.permute.xlu0 %3824
    %3826 = vrot.lane.b32.xlu0 %v3819, 127
    %v3827 = vpop.permute.xlu0 %3826
    %3828 = vrot.lane.b32.xlu0 %v3820, 127
    %v3829 = vpop.permute.xlu0 %3828
    %vm3833 = vcmask 130049
    %3834 = vst.msk [vmem:[#allocation2 - $0x1] sm:$0xfe] %vm3833, %v3825
    %3835 = vst.msk [vmem:[#allocation2 + $0x7] sm:$0xff] %vm2211, %v3827
    %vm3836 = vcmask 122880
    %3837 = vst.msk [vmem:[#allocation2 + $0xf] sm:$0x1] %vm3836, %v3829
    %vm3838 = vcmask 1046528
    %v3839 = vrot.slane %v3818, 1
    %v3840 = vrot.slane %v3819, 1
    %v3841 = vsel %vm3838, %v3839, %v3840
    %v3842 = vrot.slane %v3820, 1
    %v3843 = vsel %vm3838, %v3840, %v3842
    %3844 = vrot.lane.b32.xlu0 %v3841, 127
    %v3845 = vpop.permute.xlu0 %3844
    %3846 = vrot.lane.b32.xlu0 %v3843, 127
    %v3847 = vpop.permute.xlu0 %3846
    %v3851 = vrot.slane %v3787, 1
    %v3852 = vrot.slane %v3788, 1
    %v3853 = vsel %vm3838, %v3851, %v3852
    %v3854 = vrot.slane %v3789, 1
    %v3855 = vsel %vm3838, %v3852, %v3854
    %v3861 = vrot.slane %v3793, 1
    %v3862 = vrot.slane %v3794, 1
    %v3863 = vsel %vm3838, %v3861, %v3862
    %v3864 = vrot.slane %v3795, 1
    %v3865 = vsel %vm3838, %v3862, %v3864
    %v3868 = vsel %vm2211, %v3845, 0
    %v3870 = vsel %vm2211, %v3847, 0
    %3872 = vmatprep.subr.mxu0 0.0
    %3873 = vmatpush1.msra.mxu0 0.0
    %3874 = vmatprep.subr.mxu0 0.0
    %3875 = vmatpush1.msra.mxu0 0.0
    %3876 = vmatprep.subr.mxu0 0.0
    %3877 = vmatpush1.msra.mxu0 0.0
    %3878 = vmatprep.subr.mxu0 0.0
    %3879 = vmatpush1.msra.mxu0 0.0
    %3880 = vmatprep.subr.mxu0 0.0
    %3881 = vmatpush1.msra.mxu0 0.0
    %3882 = vmatprep.subr.mxu0 0.0
    %3883 = vmatpush1.msra.mxu0 0.0
    %3884 = vmatprep.subr.mxu0 0.0
    %3885 = vmatpush1.msra.mxu0 0.0
    %3886 = vmatprep.subr.mxu0 0.0
    %3887 = vmatpush1.msra.mxu0 0.0
    %3888 = vmatprep.subr.mxu0 0.0
    %3889 = vmatpush1.msra.mxu0 0.0
    %3890 = vmatprep.subr.mxu0 0.0
    %3891 = vmatpush1.msra.mxu0 0.0
    %3892 = vmatprep.subr.mxu0 0.0
    %3893 = vmatpush1.msra.mxu0 0.0
    %3894 = vmatprep.subr.mxu0 0.0
    %3895 = vmatpush1.msra.mxu0 0.0
    %3896 = vmatprep.subr.mxu0 0.0
    %3897 = vmatpush1.msra.mxu0 0.0
    %3898 = vmatprep.subr.mxu0 0.0
    %3899 = vmatpush1.msra.mxu0 0.0
    %3900 = vmatprep.subr.mxu0 0.0
    %3901 = vmatpush1.msra.mxu0 %v3855
    %3902 = vmatprep.subr.mxu0 0.0
    %3903 = vmatpush1.msra.mxu0 %v3853
    %3904 = vmatprep.subr.mxu0 0.0
    %3905 = vmatpush2.msra.mxu0 0.0
    %3906 = vmatprep.subr.mxu0 0.0
    %3907 = vmatpush2.msra.mxu0 0.0
    %3908 = vmatprep.subr.mxu0 0.0
    %3909 = vmatpush2.msra.mxu0 0.0
    %3910 = vmatprep.subr.mxu0 0.0
    %3911 = vmatpush2.msra.mxu0 0.0
    %3912 = vmatprep.subr.mxu0 0.0
    %3913 = vmatpush2.msra.mxu0 0.0
    %3914 = vmatprep.subr.mxu0 0.0
    %3915 = vmatpush2.msra.mxu0 0.0
    %3916 = vmatprep.subr.mxu0 0.0
    %3917 = vmatpush2.msra.mxu0 0.0
    %3918 = vmatprep.subr.mxu0 0.0
    %3919 = vmatpush2.msra.mxu0 0.0
    %3920 = vmatprep.subr.mxu0 0.0
    %3921 = vmatpush2.msra.mxu0 0.0
    %3922 = vmatprep.subr.mxu0 0.0
    %3923 = vmatpush2.msra.mxu0 0.0
    %3924 = vmatprep.subr.mxu0 0.0
    %3925 = vmatpush2.msra.mxu0 0.0
    %3926 = vmatprep.subr.mxu0 0.0
    %3927 = vmatpush2.msra.mxu0 0.0
    %3928 = vmatprep.subr.mxu0 0.0
    %3929 = vmatpush2.msra.mxu0 0.0
    %3930 = vmatprep.subr.mxu0 0.0
    %3931 = vmatpush2.msra.mxu0 0.0
    %3932 = vmatprep.subr.mxu0 0.0
    %3933 = vmatpush2.msra.mxu0 0.0
    %3934 = vmatprep.subr.mxu0 0.0
    %3935 = vmatpush2.msra.mxu0 0.0
    %3936 = vmatprep.mubr.f32.mxu0 0.0
    %3937 = vmatmul.mubr.f32.gmra.mxu0 %v3868
    %v3938 = vpop.f32.mrf.mxu0
    %v3939 = vadd.f32 %v3863, %v3938
    %v3940 = vpop.f32.mrf.mxu0
    %3941 = vmatprep.mubr.f32.mxu0 0.0
    %3942 = vmatmul.mubr.f32.gmra.mxu0 %v3870
    %v3943 = vpop.f32.mrf.mxu0
    %v3944 = vadd.f32 %v3865, %v3943
    %v3945 = vpop.f32.mrf.mxu0
    %3946 = vdwg.mxu0
    %3947 = vst.msk [vmem:[%s8] sm:$0xff] %vm3771, %v3939
    %3948 = vst.msk [vmem:[%s8 + $0x8] sm:$0xff] %vm3771, %v3944
    // Predicated region
    $region30: #{_forward.3} parent=1 // pred_check
      _
    $region31: #{_forward.3} parent=1 // pred_check_branch
      %3950 = sbr.rel (0) target = $region33
    $region32: #{_forward.3} parent=1 // pred_region
      _
    $region33: #{_forward.3} parent=1 // pred_fallthru
      _
    // Predicated region
    $region34: #{_forward.3} parent=1 // pred_check
      _
    $region35: #{_forward.3} parent=1 // pred_check_branch
      %3952 = sbr.rel (0) target = $region37
    $region36: #{_forward.3} parent=1 // pred_region
      _
    $region37: #{_forward.3} parent=1 // pred_fallthru
      _
    // Predicated region
    $region38: #{_forward.3} parent=1 // pred_check
      _
    $region39: #{_forward.3} parent=1 // pred_check_branch
      %3954 = sbr.rel (0) target = $region41
    $region40: #{_forward.3} parent=1 // pred_region
      %s3956 = ssub.s32 256, 256
      %3957 = vsyncadd [#allocation3], %s3956
      %s3958 = sshll.u32 [#allocation2], 4
      %s3959 = int_to_ptr.vmem [resolvable:$true] %s3958
      %3964 = dma.vmem_to_hbm [thread:$0]  %s3959, 256, %s9, [#allocation3], 128, 128, 8
    $region41: #{_forward.3} parent=1 // pred_fallthru
      _
    // Predicated region
    $region42: #{_forward.3} parent=1 // pred_check
      _
    $region43: #{_forward.3} parent=1 // pred_check_branch
      %3966 = sbr.rel (0) target = $region45
    $region44: #{_forward.3} parent=1 // pred_region
      _
    $region45: #{_forward.3} parent=1 // pred_fallthru
      _
    // Predicated region
    $region46: #{_forward.3} parent=1 // pred_check
      _
    $region47: #{_forward.3} parent=1 // pred_check_branch
      %3968 = sbr.rel (0) target = $region49
    $region48: #{_forward.3} parent=1 // pred_region
      _
    $region49: #{_forward.3} parent=1 // pred_fallthru
      _
    // Predicated region
    $region50: #{_forward.3} parent=1 // pred_check
      _
    $region51: #{_forward.3} parent=1 // pred_check_branch
      %3970 = sbr.rel (0) target = $region53
    $region52: #{_forward.3} parent=1 // pred_region
      %3971 = dma.done [#allocation3], 256
    $region53: #{_forward.3} parent=1 // pred_fallthru
      _
    %3972 = vsyncpa [#allocation3], 1

</llo_original>
